<compile_context>
chip_gen: v6e
topology: v6e:2x2x1
jax: 0.10.0
libtpu: 0.0.40
codegen_flags: <defaults>
</compile_context>

<pallas_src>
import jax
import jax.numpy as jnp
from jax.experimental import pallas as pl
from jax.experimental.pallas import tpu as pltpu


def _round_up(n, m):
    return ((n + m - 1) // m) * m


def _vmem_limit_bytes():
    # v5e/v6e: 128 MiB physical VMEM/core -> allow ~96 MiB.  v7x: 64 MiB/TC -> stay <= 56 MiB.
    try:
        kind = jax.devices()[0].device_kind.lower()
    except Exception:
        kind = ""
    if "v7" in kind:
        return 56 * 1024 * 1024
    if "v5" in kind or "v6" in kind:
        return 96 * 1024 * 1024
    return 64 * 1024 * 1024


_VMEM_LIMIT = _vmem_limit_bytes()


def _pick_h_tile(ho, wo, max_rows=2048):
    """Largest divisor of Ho whose strip (th*Wo matmul rows) stays under max_rows."""
    cap = max(1, min(ho, max_rows // max(wo, 1)))
    for d in range(cap, 0, -1):
        if ho % d == 0:
            return d
    return 1


def _pick_row_tile(r, max_tile=1024):
    """Row tile for flattened-matmul kernels; prefer a divisor of R (no pad/slice HBM pass)."""
    for d in range(min(r, max_tile), 7, -1):
        if r % d == 0 and d % 8 == 0:
            return d
    return min(_round_up(r, 16), max_tile)


# ----------------------------- Pallas kernels --------------------------------------

def _make_direct_conv_kernel(k, th, wo, coutp):
    """Fused kxk stride-1 conv + bias + ReLU on one (th x Wo) strip of one image.

    The whole padded image lives in VMEM; the k*k tap views are formed with pl.ds slices
    and accumulated as K=Cinp matmuls in f32 (no HBM im2col).
    """
    def kernel(x_ref, w_ref, b_ref, o_ref):
        # x_ref: (Hp, Wp, Cinp) bf16    whole spatially padded image (halo included)
        # w_ref: (k*k, Cinp, Coutp) bf16; b_ref: (1, Coutp) f32
        # o_ref: (th, Wo, Coutp) bf16
        h0 = pl.multiple_of(pl.program_id(1) * th, th)
        acc = jnp.zeros((th * wo, coutp), jnp.float32)
        for kh in range(k):
            for kw in range(k):
                xs = x_ref[pl.ds(h0 + kh, th), pl.ds(kw, wo), :]
                acc = acc + jnp.dot(xs.reshape(th * wo, xs.shape[-1]),
                                    w_ref[kh * k + kw],
                                    preferred_element_type=jnp.float32)
        y = jnp.maximum(acc + b_ref[...], 0.0).astype(o_ref.dtype)
        o_ref[...] = y.reshape(th, wo, coutp)
    return kernel


def _matmul_bias_relu_kernel(x_ref, w_ref, b_ref, o_ref):
    """One R-tile of an im2col conv: (TR, Kp)bf16 @ (Kp, Coutp)bf16 -> relu(. + b)."""
    acc = jnp.dot(x_ref[...], w_ref[...], preferred_element_type=jnp.float32)
    o_ref[...] = jnp.maximum(acc + b_ref[...], 0.0).astype(o_ref.dtype)


def _make_head_kernel(cp):
    """Fused conv8 (1x1 P4ConvP4) + rotation max-pool + 1x1 class_conv + ReLU.

    One wide rotation-major matmul (TR, K8p) @ (K8p, 4*Cp); the rotation max is taken over
    four contiguous 128-aligned Cp lane slabs (cheap VPU max, no relayout).
    """
    def kernel(x_ref, w8_ref, b8_ref, wc_ref, bc_ref, o_ref):
        x = x_ref[...]
        m = jnp.dot(x, w8_ref[...], preferred_element_type=jnp.float32)     # (TR, 4*Cp)
        mx = jnp.maximum(jnp.maximum(m[:, 0 * cp:1 * cp], m[:, 1 * cp:2 * cp]),
                         jnp.maximum(m[:, 2 * cp:3 * cp], m[:, 3 * cp:4 * cp]))
        # relu(max_r(a_r) + b) == max_r(relu(a_r + b)): bias is rotation-invariant, relu monotone.
        pooled = jnp.maximum(mx + b8_ref[...], 0.0)                         # (TR, Cp) f32
        logits = jnp.dot(pooled.astype(jnp.bfloat16), wc_ref[...],
                         preferred_element_type=jnp.float32) + bc_ref[...]
        o_ref[...] = jnp.maximum(logits, 0.0)
    return kernel


# ------------------------------ layer wrappers --------------------------------------

def direct_conv_layer(x_nhwc, p, m, *, max_rows=2048):
    """Stride-1 kxk conv + bias + ReLU without HBM im2col (halo block + in-kernel taps)."""
    k, pad = m["ksize"], m["padding"]
    cinp, coutp = m["cin_pad"], m["cout_pad"]
    n, h, w, c = x_nhwc.shape
    assert m["stride"] == 1 and c <= cinp
    ho, wo = h + 2 * pad - k + 1, w + 2 * pad - k + 1

    xb = x_nhwc.astype(jnp.bfloat16)
    if c < cinp:
        xb = jnp.pad(xb, ((0, 0), (0, 0), (0, 0), (0, cinp - c)))
    # TODO(synk): handle the 1-pixel halo in-kernel (masked edge taps) to drop this pad pass.
    xp = jnp.pad(xb, ((0, 0), (pad, pad), (pad, pad), (0, 0)))
    hp, wp = h + 2 * pad, w + 2 * pad

    th = _pick_h_tile(ho, wo, max_rows)
    flops = 2 * n * ho * wo * (k * k * cinp) * coutp
    bytes_acc = xp.size * 2 + p["w"].size * 2 + p["b"].size * 4 + n * ho * wo * coutp * 2

    return pl.pallas_call(
        _make_direct_conv_kernel(k, th, wo, coutp),
        out_shape=jax.ShapeDtypeStruct((n, ho, wo, coutp), jnp.bfloat16),
        grid=(n, ho // th),
        in_specs=[
            pl.BlockSpec((None, hp, wp, cinp), lambda i, j: (i, 0, 0, 0)),
            # TODO(synk): pipeline_mode=pl.Buffered(1) on the constant weight/bias blocks
            # would save one resident buffer each on v7x (64 MiB VMEM).
            pl.BlockSpec((k * k, cinp, coutp), lambda i, j: (0, 0, 0)),
            pl.BlockSpec((1, coutp), lambda i, j: (0, 0)),
        ],
        out_specs=pl.BlockSpec((None, th, wo, coutp), lambda i, j: (i, j, 0, 0)),
        compiler_params=pltpu.CompilerParams(
            dimension_semantics=("parallel", "parallel"),
            vmem_limit_bytes=_VMEM_LIMIT),
        cost_estimate=pl.CostEstimate(flops=flops, transcendentals=0,
                                      bytes_accessed=bytes_acc),
    )(xp, p["w"], p["b"])


def im2col_conv_layer(x_nhwc, p, m, *, max_row_tile=1024):
    """Strided conv as one fused (R x Kp) @ (Kp x Coutp) matmul per row tile (+bias+ReLU)."""
    k, stride, pad = m["ksize"], m["stride"], m["padding"]
    cinp, coutp, kp = m["cin_pad"], m["cout_pad"], m["kp"]
    n, h, w, c = x_nhwc.shape
    assert c <= cinp
    ho = (h + 2 * pad - k) // stride + 1
    wo = (w + 2 * pad - k) // stride + 1
    r, kk = n * ho * wo, k * k * cinp

    xb = x_nhwc.astype(jnp.bfloat16)
    if c < cinp:
        xb = jnp.pad(xb, ((0, 0), (0, 0), (0, 0), (0, cinp - c)))
    xp = jnp.pad(xb, ((0, 0), (pad, pad), (pad, pad), (0, 0)))
    taps = [xp[:, kh:kh + (ho - 1) * stride + 1:stride,
               kw:kw + (wo - 1) * stride + 1:stride, :]
            for kh in range(k) for kw in range(k)]
    x_col = jnp.concatenate(taps, axis=-1).reshape(r, kk)      # K order = (kh, kw, cin)
    if kp > kk:
        x_col = jnp.pad(x_col, ((0, 0), (0, kp - kk)))

    tr = _pick_row_tile(r, max_row_tile)
    rp = _round_up(r, tr)
    if rp > r:
        x_col = jnp.pad(x_col, ((0, rp - r), (0, 0)))

    # TODO(synk): add a K-tiled ("arbitrary") grid axis + f32 accumulator scratch when the
    # (TR*Kp + Kp*Coutp + TR*Coutp) working set would exceed the VMEM budget (huge `filters`).
    flops = 2 * rp * kp * coutp
    bytes_acc = rp * kp * 2 + kp * coutp * 2 + rp * coutp * 2

    out = pl.pallas_call(
        _matmul_bias_relu_kernel,
        out_shape=jax.ShapeDtypeStruct((rp, coutp), jnp.bfloat16),
        grid=(rp // tr,),
        in_specs=[
            pl.BlockSpec((tr, kp), lambda i: (i, 0)),
            pl.BlockSpec((kp, coutp), lambda i: (0, 0)),
            pl.BlockSpec((1, coutp), lambda i: (0, 0)),
        ],
        out_specs=pl.BlockSpec((tr, coutp), lambda i: (i, 0)),
        compiler_params=pltpu.CompilerParams(
            dimension_semantics=("parallel",),
            vmem_limit_bytes=_VMEM_LIMIT),
        cost_estimate=pl.CostEstimate(flops=flops, transcendentals=0,
                                      bytes_accessed=bytes_acc),
    )(x_col, p["w"], p["b"])
    if rp > r:
        out = out[:r]
    return out.reshape(n, ho, wo, coutp)


def head_layer(x_nhwc, p, m, *, max_row_tile=1024):
    """Fused conv8 + rotation max-pool + class_conv + ReLU.  Returns (N, H, W, num_classes)."""
    n, h, w, c = x_nhwc.shape
    cp, ncp, nc = m["cp"], m["ncp"], m["num_classes"]
    assert c == m["cin_pad"]
    r = n * h * w
    x_flat = x_nhwc.reshape(r, c).astype(jnp.bfloat16)

    tr = _pick_row_tile(r, max_row_tile)
    rp = _round_up(r, tr)
    if rp > r:
        x_flat = jnp.pad(x_flat, ((0, rp - r), (0, 0)))

    flops = 2 * rp * c * 4 * cp + 2 * rp * cp * ncp
    bytes_acc = rp * c * 2 + c * 4 * cp * 2 + cp * ncp * 2 + rp * ncp * 4

    out = pl.pallas_call(
        _make_head_kernel(cp),
        out_shape=jax.ShapeDtypeStruct((rp, ncp), jnp.float32),
        grid=(rp // tr,),
        in_specs=[
            pl.BlockSpec((tr, c), lambda i: (i, 0)),
            pl.BlockSpec((c, 4 * cp), lambda i: (0, 0)),
            pl.BlockSpec((1, cp), lambda i: (0, 0)),
            pl.BlockSpec((cp, ncp), lambda i: (0, 0)),
            pl.BlockSpec((1, ncp), lambda i: (0, 0)),
        ],
        out_specs=pl.BlockSpec((tr, ncp), lambda i: (i, 0)),
        compiler_params=pltpu.CompilerParams(
            dimension_semantics=("parallel",),
            vmem_limit_bytes=_VMEM_LIMIT),
        cost_estimate=pl.CostEstimate(flops=flops, transcendentals=0,
                                      bytes_accessed=bytes_acc),
    )(x_flat, p["w8"], p["b8"], p["wc"], p["bc"])
    if rp > r:
        out = out[:r]
    return out[:, :nc].reshape(n, h, w, nc)


# --------------------------- p4 filter-bank expansion -------------------------------

def p4z2_expand(W, b):
    """P4ConvZ2 (Cout, Cin, KH, KW) -> HWIO (KH, KW, Cin, Cout*4), output index co*4+r."""
    Cout, Cin, KH, KW = W.shape
    tw = jnp.stack([jnp.rot90(W, k=r, axes=(2, 3)) for r in range(4)], axis=1)
    tw = tw.reshape(Cout * 4, Cin, KH, KW)
    return jnp.transpose(tw, (2, 3, 1, 0)), jnp.repeat(b, 4)


def p4p4_expand(W, b):
    """P4ConvP4 (Cout, Cin, 4, KH, KW) -> HWIO (KH, KW, Cin*4, Cout*4); in ci*4+s, out co*4+r."""
    Cout, Cin, _, KH, KW = W.shape
    tws = []
    for r in range(4):
        Wr = jnp.roll(W, shift=r, axis=2)          # shift input-rotation axis by r
        Wr = jnp.rot90(Wr, k=r, axes=(3, 4))       # rotate spatially by r
        tws.append(Wr)
    tw = jnp.stack(tws, axis=1)                    # (Cout, 4, Cin, 4, KH, KW)
    tw = tw.reshape(Cout * 4, Cin * 4, KH, KW)
    return jnp.transpose(tw, (2, 3, 1, 0)), jnp.repeat(b, 4)


def _make_direct_layer(w_hwio, b, *, cin_pad, cout_pad, padding):
    """Stride-1 layer params: taps-major weight (k*k, Cinp, Coutp) bf16 + f32 bias."""
    KH, KW, Cin, Cout = w_hwio.shape
    w = jnp.pad(w_hwio, ((0, 0), (0, 0), (0, cin_pad - Cin), (0, cout_pad - Cout)))
    w = w.reshape(KH * KW, cin_pad, cout_pad).astype(jnp.bfloat16)
    bias = jnp.pad(b, (0, cout_pad - Cout)).reshape(1, cout_pad).astype(jnp.float32)
    meta = dict(kind="direct", ksize=KH, stride=1, padding=padding,
                cin_pad=cin_pad, cout_pad=cout_pad)
    return {"w": w, "b": bias}, meta


def _make_im2col_layer(w_hwio, b, *, cin_pad, cout_pad, stride, padding):
    """Strided layer params: flattened (Kp, Coutp) bf16 weight (K order kh,kw,cin) + f32 bias."""
    KH, KW, Cin, Cout = w_hwio.shape
    w = jnp.pad(w_hwio, ((0, 0), (0, 0), (0, cin_pad - Cin), (0, cout_pad - Cout)))
    K = KH * KW * cin_pad
    Kp = _round_up(K, 128)                         # lane-dense contraction dim
    w = jnp.pad(w.reshape(K, cout_pad), ((0, Kp - K), (0, 0))).astype(jnp.bfloat16)
    bias = jnp.pad(b, (0, cout_pad - Cout)).reshape(1, cout_pad).astype(jnp.float32)
    meta = dict(kind="im2col", ksize=KH, stride=stride, padding=padding,
                cin_pad=cin_pad, cout_pad=cout_pad, kp=Kp)
    return {"w": w, "b": bias}, meta


def _make_head(w8_raw, b8_raw, wc_raw, bc_raw, *, cin_pad, num_classes):
    """conv8 packed as one wide rotation-major (cin_pad, 4*Cp) weight + 1x1 class conv."""
    Cout, Cin, _, KH, KW = w8_raw.shape            # 1x1 conv
    Cp = _round_up(Cout, 128)
    slabs = []
    for r in range(4):
        Wr = jnp.roll(w8_raw, shift=r, axis=2)
        Wr = jnp.rot90(Wr, k=r, axes=(3, 4))       # no-op for 1x1, kept for generality
        Wr = jnp.transpose(Wr[:, :, :, 0, 0], (1, 2, 0)).reshape(Cin * 4, Cout)
        Wr = jnp.pad(Wr, ((0, cin_pad - Cin * 4), (0, Cp - Cout)))
        slabs.append(Wr)
    w8 = jnp.concatenate(slabs, axis=1).astype(jnp.bfloat16)      # (cin_pad, 4*Cp)
    b8 = jnp.pad(b8_raw, (0, Cp - Cout)).reshape(1, Cp).astype(jnp.float32)

    ncp = _round_up(num_classes, 128)
    wc = jnp.transpose(wc_raw[:, :, 0, 0], (1, 0))                # (Cout, num_classes)
    wc = jnp.pad(wc, ((0, Cp - Cout), (0, ncp - num_classes))).astype(jnp.bfloat16)
    bc = jnp.pad(bc_raw, (0, ncp - num_classes)).reshape(1, ncp).astype(jnp.float32)
    params = {"w8": w8, "b8": b8, "wc": wc, "bc": bc}
    meta = dict(num_classes=num_classes, cp=Cp, ncp=ncp, cin_pad=cin_pad)
    return params, meta


# ------------------------------- parameters -----------------------------------------

def _init(key, shape, scale=0.1):
    return scale * jax.random.normal(key, shape, jnp.float32)


def init_params(key, input_shape, num_classes=10, filters=8):
    """Returns (params, meta): params holds arrays only (jit-safe); meta holds static config."""
    h, w, c = input_shape
    f, f2 = filters, filters * 2
    keys = iter(jax.random.split(key, 32))
    nxt = lambda: next(keys)
    c0 = _round_up(c, 128)            # conv1 input channels, lane-padded
    c1 = _round_up(4 * f, 128)        # lane-dense group-conv channel counts
    c2 = _round_up(4 * f2, 128)

    params, meta = {}, {}

    def add(name, pm):
        params[name], meta[name] = pm

    w1, b1 = p4z2_expand(_init(nxt(), (f, c, 3, 3)), _init(nxt(), (f,)))
    add("conv1", _make_direct_layer(w1, b1, cin_pad=c0, cout_pad=c1, padding=1))

    w2, b2 = p4p4_expand(_init(nxt(), (f, f, 4, 3, 3)), _init(nxt(), (f,)))
    add("conv2", _make_im2col_layer(w2, b2, cin_pad=c1, cout_pad=c1, stride=2, padding=1))

    w3, b3 = p4p4_expand(_init(nxt(), (f2, f, 4, 3, 3)), _init(nxt(), (f2,)))
    add("conv3", _make_direct_layer(w3, b3, cin_pad=c1, cout_pad=c2, padding=1))

    for name, stride in (("conv4", 1), ("conv5", 1), ("conv6", 2), ("conv7", 1)):
        wk, bk = p4p4_expand(_init(nxt(), (f2, f2, 4, 3, 3)), _init(nxt(), (f2,)))
        if stride == 1:
            add(name, _make_direct_layer(wk, bk, cin_pad=c2, cout_pad=c2, padding=1))
        else:
            add(name, _make_im2col_layer(wk, bk, cin_pad=c2, cout_pad=c2,
                                         stride=2, padding=1))

    add("head", _make_head(
        _init(nxt(), (f2, f2, 4, 1, 1)), _init(nxt(), (f2,)),             # conv8 (1x1)
        _init(nxt(), (num_classes, f2, 1, 1)), _init(nxt(), (num_classes,)),
        cin_pad=c2, num_classes=num_classes))
    return params, meta


# --------------------------------- forward ------------------------------------------

def forward(params, meta, x_nchw, dropout_key):
    x = jnp.transpose(x_nchw, (0, 2, 3, 1)).astype(jnp.float32)      # NCHW -> NHWC
    # F.dropout(x, 0.2): functional dropout defaults to training=True in the reference.
    # TODO(synk): torch's RNG stream cannot be reproduced; deterministic JAX key used.
    keep = jax.random.bernoulli(dropout_key, 0.8, x.shape).astype(x.dtype)
    x = x * keep / 0.8

    for name in ("conv1", "conv2", "conv3", "conv4", "conv5", "conv6", "conv7"):
        p, m = params[name], meta[name]
        if m["kind"] == "direct":
            x = direct_conv_layer(x, p, m)
        else:
            x = im2col_conv_layer(x, p, m)

    # fused conv8 + plane_group_rotation_max_pooling + class_conv + ReLU
    cls = head_layer(x, params["head"], meta["head"])                # (N, Ho, Wo, nc)
    pool = cls.mean(axis=(1, 2))                                     # global average pool
    return jax.nn.log_softmax(pool, axis=1)


# ----------------------------------- main --------------------------------------------

if __name__ == "__main__":
    key = jax.random.PRNGKey(0)
    pkey, xkey, dkey = jax.random.split(key, 3)

    N, H, W, C = 2, 16, 16, 3
    num_classes = 10
    filters = 8                      # small stand-in for 96

    params, meta = init_params(pkey, (H, W, C), num_classes=num_classes, filters=filters)
    x = jax.random.normal(xkey, (N, C, H, W), jnp.float32)

    fwd = jax.jit(lambda p, xx, k: forward(p, meta, xx, k))
    out = fwd(params, x, dkey)
    jax.block_until_ready(out)

    assert out.shape == (N, num_classes)
    assert bool(jnp.all(jnp.isfinite(out)))
    # log_softmax rows should exponentiate-sum to ~1
    assert bool(jnp.allclose(jnp.exp(out).sum(axis=1), 1.0, atol=1e-3))
    print("KERNEL_OK")
</pallas_src>

<mosaic_0001>
module attributes {stable_mosaic.version = 11 : i64} {
  func.func @kernel(%arg0: i32, %arg1: i32, %arg2: memref<1x18x18x128xbf16, #tpu.memory_space<vmem>>, %arg3: memref<9x128x128xbf16, #tpu.memory_space<vmem>>, %arg4: memref<1x128xf32, #tpu.memory_space<vmem>>, %arg5: memref<1x16x16x128xbf16, #tpu.memory_space<vmem>>) attributes {dimension_semantics = [#tpu.dimension_semantics<parallel>, #tpu.dimension_semantics<parallel>], iteration_bounds = array<i64: 2, 1>, scalar_prefetch = 0 : i64, scratch_operands = 0 : i64, tpu.core_type = #tpu.core_type<tc>, window_params = [{transform_indices = @transform_0, window_bounds = array<i64: 1, 18, 18, 128>}, {pipeline_mode = #tpu.pipeline_mode<synchronous>, transform_indices = @transform_1, window_bounds = array<i64: 9, 128, 128>}, {pipeline_mode = #tpu.pipeline_mode<synchronous>, transform_indices = @transform_2, window_bounds = array<i64: 1, 128>}, {transform_indices = @transform_3, window_bounds = array<i64: 1, 16, 16, 128>}]} {
    %c16_i32 = arith.constant 16 : i32
    %0 = arith.muli %arg1, %c16_i32 : i32
    %1 = tpu.assume_multiple %0, 16 : i32
    %cst = arith.constant 0.000000e+00 : f32
    %2 = vector.broadcast %cst : f32 to vector<256x128xf32>
    %c0_i32 = arith.constant 0 : i32
    %3 = arith.addi %1, %c0_i32 : i32
    %c0 = arith.constant 0 : index
    %4 = arith.index_cast %3 : i32 to index
    %c0_0 = arith.constant 0 : index
    %c0_1 = arith.constant 0 : index
    %5 = vector.load %arg2[%c0, %4, %c0_0, %c0_1] : memref<1x18x18x128xbf16, #tpu.memory_space<vmem>>, vector<1x16x16x128xbf16>
    %6 = vector.shape_cast %5 : vector<1x16x16x128xbf16> to vector<16x16x128xbf16>
    %7 = vector.shape_cast %6 : vector<16x16x128xbf16> to vector<256x128xbf16>
    %c0_2 = arith.constant 0 : index
    %c0_3 = arith.constant 0 : index
    %c0_4 = arith.constant 0 : index
    %8 = vector.load %arg3[%c0_2, %c0_3, %c0_4] : memref<9x128x128xbf16, #tpu.memory_space<vmem>>, vector<1x128x128xbf16>
    %9 = vector.shape_cast %8 : vector<1x128x128xbf16> to vector<128x128xbf16>
    %cst_5 = arith.constant dense<0.000000e+00> : vector<256x128xf32>
    %10 = tpu.matmul %7, %9, %cst_5 {dimension_numbers = #tpu.dot_dimension_numbers<[1], [0], [0], [1], [0, 0, 1, 1], [], []>} : vector<256x128xbf16>, vector<128x128xbf16>, vector<256x128xf32> -> vector<256x128xf32>
    %11 = arith.addf %2, %10 : vector<256x128xf32>
    %c0_i32_6 = arith.constant 0 : i32
    %12 = arith.addi %1, %c0_i32_6 : i32
    %c0_7 = arith.constant 0 : index
    %13 = arith.index_cast %12 : i32 to index
    %c1 = arith.constant 1 : index
    %c0_8 = arith.constant 0 : index
    %14 = vector.load %arg2[%c0_7, %13, %c1, %c0_8] : memref<1x18x18x128xbf16, #tpu.memory_space<vmem>>, vector<1x16x16x128xbf16>
    %15 = vector.shape_cast %14 : vector<1x16x16x128xbf16> to vector<16x16x128xbf16>
    %16 = vector.shape_cast %15 : vector<16x16x128xbf16> to vector<256x128xbf16>
    %c1_9 = arith.constant 1 : index
    %c0_10 = arith.constant 0 : index
    %c0_11 = arith.constant 0 : index
    %17 = vector.load %arg3[%c1_9, %c0_10, %c0_11] : memref<9x128x128xbf16, #tpu.memory_space<vmem>>, vector<1x128x128xbf16>
    %18 = vector.shape_cast %17 : vector<1x128x128xbf16> to vector<128x128xbf16>
    %cst_12 = arith.constant dense<0.000000e+00> : vector<256x128xf32>
    %19 = tpu.matmul %16, %18, %cst_12 {dimension_numbers = #tpu.dot_dimension_numbers<[1], [0], [0], [1], [0, 0, 1, 1], [], []>} : vector<256x128xbf16>, vector<128x128xbf16>, vector<256x128xf32> -> vector<256x128xf32>
    %20 = arith.addf %11, %19 : vector<256x128xf32>
    %c0_i32_13 = arith.constant 0 : i32
    %21 = arith.addi %1, %c0_i32_13 : i32
    %c0_14 = arith.constant 0 : index
    %22 = arith.index_cast %21 : i32 to index
    %c2 = arith.constant 2 : index
    %c0_15 = arith.constant 0 : index
    %23 = vector.load %arg2[%c0_14, %22, %c2, %c0_15] : memref<1x18x18x128xbf16, #tpu.memory_space<vmem>>, vector<1x16x16x128xbf16>
    %24 = vector.shape_cast %23 : vector<1x16x16x128xbf16> to vector<16x16x128xbf16>
    %25 = vector.shape_cast %24 : vector<16x16x128xbf16> to vector<256x128xbf16>
    %c2_16 = arith.constant 2 : index
    %c0_17 = arith.constant 0 : index
    %c0_18 = arith.constant 0 : index
    %26 = vector.load %arg3[%c2_16, %c0_17, %c0_18] : memref<9x128x128xbf16, #tpu.memory_space<vmem>>, vector<1x128x128xbf16>
    %27 = vector.shape_cast %26 : vector<1x128x128xbf16> to vector<128x128xbf16>
    %cst_19 = arith.constant dense<0.000000e+00> : vector<256x128xf32>
    %28 = tpu.matmul %25, %27, %cst_19 {dimension_numbers = #tpu.dot_dimension_numbers<[1], [0], [0], [1], [0, 0, 1, 1], [], []>} : vector<256x128xbf16>, vector<128x128xbf16>, vector<256x128xf32> -> vector<256x128xf32>
    %29 = arith.addf %20, %28 : vector<256x128xf32>
    %c1_i32 = arith.constant 1 : i32
    %30 = arith.addi %1, %c1_i32 : i32
    %c0_20 = arith.constant 0 : index
    %31 = arith.index_cast %30 : i32 to index
    %c0_21 = arith.constant 0 : index
    %c0_22 = arith.constant 0 : index
    %32 = vector.load %arg2[%c0_20, %31, %c0_21, %c0_22] : memref<1x18x18x128xbf16, #tpu.memory_space<vmem>>, vector<1x16x16x128xbf16>
    %33 = vector.shape_cast %32 : vector<1x16x16x128xbf16> to vector<16x16x128xbf16>
    %34 = vector.shape_cast %33 : vector<16x16x128xbf16> to vector<256x128xbf16>
    %c3 = arith.constant 3 : index
    %c0_23 = arith.constant 0 : index
    %c0_24 = arith.constant 0 : index
    %35 = vector.load %arg3[%c3, %c0_23, %c0_24] : memref<9x128x128xbf16, #tpu.memory_space<vmem>>, vector<1x128x128xbf16>
    %36 = vector.shape_cast %35 : vector<1x128x128xbf16> to vector<128x128xbf16>
    %cst_25 = arith.constant dense<0.000000e+00> : vector<256x128xf32>
    %37 = tpu.matmul %34, %36, %cst_25 {dimension_numbers = #tpu.dot_dimension_numbers<[1], [0], [0], [1], [0, 0, 1, 1], [], []>} : vector<256x128xbf16>, vector<128x128xbf16>, vector<256x128xf32> -> vector<256x128xf32>
    %38 = arith.addf %29, %37 : vector<256x128xf32>
    %c1_i32_26 = arith.constant 1 : i32
    %39 = arith.addi %1, %c1_i32_26 : i32
    %c0_27 = arith.constant 0 : index
    %40 = arith.index_cast %39 : i32 to index
    %c1_28 = arith.constant 1 : index
    %c0_29 = arith.constant 0 : index
    %41 = vector.load %arg2[%c0_27, %40, %c1_28, %c0_29] : memref<1x18x18x128xbf16, #tpu.memory_space<vmem>>, vector<1x16x16x128xbf16>
    %42 = vector.shape_cast %41 : vector<1x16x16x128xbf16> to vector<16x16x128xbf16>
    %43 = vector.shape_cast %42 : vector<16x16x128xbf16> to vector<256x128xbf16>
    %c4 = arith.constant 4 : index
    %c0_30 = arith.constant 0 : index
    %c0_31 = arith.constant 0 : index
    %44 = vector.load %arg3[%c4, %c0_30, %c0_31] : memref<9x128x128xbf16, #tpu.memory_space<vmem>>, vector<1x128x128xbf16>
    %45 = vector.shape_cast %44 : vector<1x128x128xbf16> to vector<128x128xbf16>
    %cst_32 = arith.constant dense<0.000000e+00> : vector<256x128xf32>
    %46 = tpu.matmul %43, %45, %cst_32 {dimension_numbers = #tpu.dot_dimension_numbers<[1], [0], [0], [1], [0, 0, 1, 1], [], []>} : vector<256x128xbf16>, vector<128x128xbf16>, vector<256x128xf32> -> vector<256x128xf32>
    %47 = arith.addf %38, %46 : vector<256x128xf32>
    %c1_i32_33 = arith.constant 1 : i32
    %48 = arith.addi %1, %c1_i32_33 : i32
    %c0_34 = arith.constant 0 : index
    %49 = arith.index_cast %48 : i32 to index
    %c2_35 = arith.constant 2 : index
    %c0_36 = arith.constant 0 : index
    %50 = vector.load %arg2[%c0_34, %49, %c2_35, %c0_36] : memref<1x18x18x128xbf16, #tpu.memory_space<vmem>>, vector<1x16x16x128xbf16>
    %51 = vector.shape_cast %50 : vector<1x16x16x128xbf16> to vector<16x16x128xbf16>
    %52 = vector.shape_cast %51 : vector<16x16x128xbf16> to vector<256x128xbf16>
    %c5 = arith.constant 5 : index
    %c0_37 = arith.constant 0 : index
    %c0_38 = arith.constant 0 : index
    %53 = vector.load %arg3[%c5, %c0_37, %c0_38] : memref<9x128x128xbf16, #tpu.memory_space<vmem>>, vector<1x128x128xbf16>
    %54 = vector.shape_cast %53 : vector<1x128x128xbf16> to vector<128x128xbf16>
    %cst_39 = arith.constant dense<0.000000e+00> : vector<256x128xf32>
    %55 = tpu.matmul %52, %54, %cst_39 {dimension_numbers = #tpu.dot_dimension_numbers<[1], [0], [0], [1], [0, 0, 1, 1], [], []>} : vector<256x128xbf16>, vector<128x128xbf16>, vector<256x128xf32> -> vector<256x128xf32>
    %56 = arith.addf %47, %55 : vector<256x128xf32>
    %c2_i32 = arith.constant 2 : i32
    %57 = arith.addi %1, %c2_i32 : i32
    %c0_40 = arith.constant 0 : index
    %58 = arith.index_cast %57 : i32 to index
    %c0_41 = arith.constant 0 : index
    %c0_42 = arith.constant 0 : index
    %59 = vector.load %arg2[%c0_40, %58, %c0_41, %c0_42] : memref<1x18x18x128xbf16, #tpu.memory_space<vmem>>, vector<1x16x16x128xbf16>
    %60 = vector.shape_cast %59 : vector<1x16x16x128xbf16> to vector<16x16x128xbf16>
    %61 = vector.shape_cast %60 : vector<16x16x128xbf16> to vector<256x128xbf16>
    %c6 = arith.constant 6 : index
    %c0_43 = arith.constant 0 : index
    %c0_44 = arith.constant 0 : index
    %62 = vector.load %arg3[%c6, %c0_43, %c0_44] : memref<9x128x128xbf16, #tpu.memory_space<vmem>>, vector<1x128x128xbf16>
    %63 = vector.shape_cast %62 : vector<1x128x128xbf16> to vector<128x128xbf16>
    %cst_45 = arith.constant dense<0.000000e+00> : vector<256x128xf32>
    %64 = tpu.matmul %61, %63, %cst_45 {dimension_numbers = #tpu.dot_dimension_numbers<[1], [0], [0], [1], [0, 0, 1, 1], [], []>} : vector<256x128xbf16>, vector<128x128xbf16>, vector<256x128xf32> -> vector<256x128xf32>
    %65 = arith.addf %56, %64 : vector<256x128xf32>
    %c2_i32_46 = arith.constant 2 : i32
    %66 = arith.addi %1, %c2_i32_46 : i32
    %c0_47 = arith.constant 0 : index
    %67 = arith.index_cast %66 : i32 to index
    %c1_48 = arith.constant 1 : index
    %c0_49 = arith.constant 0 : index
    %68 = vector.load %arg2[%c0_47, %67, %c1_48, %c0_49] : memref<1x18x18x128xbf16, #tpu.memory_space<vmem>>, vector<1x16x16x128xbf16>
    %69 = vector.shape_cast %68 : vector<1x16x16x128xbf16> to vector<16x16x128xbf16>
    %70 = vector.shape_cast %69 : vector<16x16x128xbf16> to vector<256x128xbf16>
    %c7 = arith.constant 7 : index
    %c0_50 = arith.constant 0 : index
    %c0_51 = arith.constant 0 : index
    %71 = vector.load %arg3[%c7, %c0_50, %c0_51] : memref<9x128x128xbf16, #tpu.memory_space<vmem>>, vector<1x128x128xbf16>
    %72 = vector.shape_cast %71 : vector<1x128x128xbf16> to vector<128x128xbf16>
    %cst_52 = arith.constant dense<0.000000e+00> : vector<256x128xf32>
    %73 = tpu.matmul %70, %72, %cst_52 {dimension_numbers = #tpu.dot_dimension_numbers<[1], [0], [0], [1], [0, 0, 1, 1], [], []>} : vector<256x128xbf16>, vector<128x128xbf16>, vector<256x128xf32> -> vector<256x128xf32>
    %74 = arith.addf %65, %73 : vector<256x128xf32>
    %c2_i32_53 = arith.constant 2 : i32
    %75 = arith.addi %1, %c2_i32_53 : i32
    %c0_54 = arith.constant 0 : index
    %76 = arith.index_cast %75 : i32 to index
    %c2_55 = arith.constant 2 : index
    %c0_56 = arith.constant 0 : index
    %77 = vector.load %arg2[%c0_54, %76, %c2_55, %c0_56] : memref<1x18x18x128xbf16, #tpu.memory_space<vmem>>, vector<1x16x16x128xbf16>
    %78 = vector.shape_cast %77 : vector<1x16x16x128xbf16> to vector<16x16x128xbf16>
    %79 = vector.shape_cast %78 : vector<16x16x128xbf16> to vector<256x128xbf16>
    %c8 = arith.constant 8 : index
    %c0_57 = arith.constant 0 : index
    %c0_58 = arith.constant 0 : index
    %80 = vector.load %arg3[%c8, %c0_57, %c0_58] : memref<9x128x128xbf16, #tpu.memory_space<vmem>>, vector<1x128x128xbf16>
    %81 = vector.shape_cast %80 : vector<1x128x128xbf16> to vector<128x128xbf16>
    %cst_59 = arith.constant dense<0.000000e+00> : vector<256x128xf32>
    %82 = tpu.matmul %79, %81, %cst_59 {dimension_numbers = #tpu.dot_dimension_numbers<[1], [0], [0], [1], [0, 0, 1, 1], [], []>} : vector<256x128xbf16>, vector<128x128xbf16>, vector<256x128xf32> -> vector<256x128xf32>
    %83 = arith.addf %74, %82 : vector<256x128xf32>
    %c0_60 = arith.constant 0 : index
    %c0_61 = arith.constant 0 : index
    %84 = vector.load %arg4[%c0_60, %c0_61] : memref<1x128xf32, #tpu.memory_space<vmem>>, vector<1x128xf32>
    %85 = vector.broadcast %84 : vector<1x128xf32> to vector<256x128xf32>
    %86 = arith.addf %83, %85 : vector<256x128xf32>
    %cst_62 = arith.constant 0.000000e+00 : f32
    %87 = vector.broadcast %cst_62 : f32 to vector<256x128xf32>
    %88 = arith.maximumf %86, %87 : vector<256x128xf32>
    %89 = arith.truncf %88 : vector<256x128xf32> to vector<256x128xbf16>
    %90 = vector.shape_cast %89 : vector<256x128xbf16> to vector<16x16x128xbf16>
    %c0_63 = arith.constant 0 : index
    %c0_64 = arith.constant 0 : index
    %c0_65 = arith.constant 0 : index
    %c0_66 = arith.constant 0 : index
    %91 = vector.load %arg5[%c0_63, %c0_64, %c0_65, %c0_66] : memref<1x16x16x128xbf16, #tpu.memory_space<vmem>>, vector<1x16x16x128xbf16>
    %92 = vector.shape_cast %91 : vector<1x16x16x128xbf16> to vector<16x16x128xbf16>
    %93 = vector.shape_cast %90 : vector<16x16x128xbf16> to vector<1x16x16x128xbf16>
    tpu.vector_store %arg5[%c0_63, %c0_64, %c0_65, %c0_66], %93 {strides = array<i32>} : memref<1x16x16x128xbf16, #tpu.memory_space<vmem>>, vector<1x16x16x128xbf16>,
    return
  }
  func.func @transform_0(%arg0: i32, %arg1: i32) -> (i32, i32, i32, i32) {
    %c0_i32 = arith.constant 0 : i32
    %c0_i32_0 = arith.constant 0 : i32
    %c0_i32_1 = arith.constant 0 : i32
    %c0_i32_2 = arith.constant 0 : i32
    return %arg0, %c0_i32, %c0_i32_0, %c0_i32_1 : i32, i32, i32, i32
  }
  func.func @transform_1(%arg0: i32, %arg1: i32) -> (i32, i32, i32) {
    %c0_i32 = arith.constant 0 : i32
    %c0_i32_0 = arith.constant 0 : i32
    %c0_i32_1 = arith.constant 0 : i32
    %c0_i32_2 = arith.constant 0 : i32
    return %c0_i32, %c0_i32_0, %c0_i32_1 : i32, i32, i32
  }
  func.func @transform_2(%arg0: i32, %arg1: i32) -> (i32, i32) {
    %c0_i32 = arith.constant 0 : i32
    %c0_i32_0 = arith.constant 0 : i32
    %c0_i32_1 = arith.constant 0 : i32
    return %c0_i32, %c0_i32_0 : i32, i32
  }
  func.func @transform_3(%arg0: i32, %arg1: i32) -> (i32, i32, i32, i32) {
    %c0_i32 = arith.constant 0 : i32
    %c0_i32_0 = arith.constant 0 : i32
    %c0_i32_1 = arith.constant 0 : i32
    return %arg0, %arg1, %c0_i32, %c0_i32_0 : i32, i32, i32, i32
  }
}

module attributes {stable_mosaic.version = 11 : i64} {
  func.func @_matmul_bias_relu_kernel(%arg0: i32, %arg1: memref<128x1152xbf16, #tpu.memory_space<vmem>>, %arg2: memref<1152x128xbf16, #tpu.memory_space<vmem>>, %arg3: memref<1x128xf32, #tpu.memory_space<vmem>>, %arg4: memref<128x128xbf16, #tpu.memory_space<vmem>>) attributes {dimension_semantics = [#tpu.dimension_semantics<parallel>], iteration_bounds = array<i64: 1>, scalar_prefetch = 0 : i64, scratch_operands = 0 : i64, tpu.core_type = #tpu.core_type<tc>, window_params = [{transform_indices = @transform_0, window_bounds = array<i64: 128, 1152>}, {pipeline_mode = #tpu.pipeline_mode<synchronous>, transform_indices = @transform_1, window_bounds = array<i64: 1152, 128>}, {pipeline_mode = #tpu.pipeline_mode<synchronous>, transform_indices = @transform_2, window_bounds = array<i64: 1, 128>}, {transform_indices = @transform_3, window_bounds = array<i64: 128, 128>}]} {
    %c0 = arith.constant 0 : index
    %c0_0 = arith.constant 0 : index
    %0 = vector.load %arg1[%c0, %c0_0] : memref<128x1152xbf16, #tpu.memory_space<vmem>>, vector<128x1152xbf16>
    %c0_1 = arith.constant 0 : index
    %c0_2 = arith.constant 0 : index
    %1 = vector.load %arg2[%c0_1, %c0_2] : memref<1152x128xbf16, #tpu.memory_space<vmem>>, vector<1152x128xbf16>
    %cst = arith.constant dense<0.000000e+00> : vector<128x128xf32>
    %2 = tpu.matmul %0, %1, %cst {dimension_numbers = #tpu.dot_dimension_numbers<[1], [0], [0], [1], [0, 0, 1, 1], [], []>} : vector<128x1152xbf16>, vector<1152x128xbf16>, vector<128x128xf32> -> vector<128x128xf32>
    %c0_3 = arith.constant 0 : index
    %c0_4 = arith.constant 0 : index
    %3 = vector.load %arg3[%c0_3, %c0_4] : memref<1x128xf32, #tpu.memory_space<vmem>>, vector<1x128xf32>
    %4 = vector.broadcast %3 : vector<1x128xf32> to vector<128x128xf32>
    %5 = arith.addf %2, %4 : vector<128x128xf32>
    %cst_5 = arith.constant 0.000000e+00 : f32
    %6 = vector.broadcast %cst_5 : f32 to vector<128x128xf32>
    %7 = arith.maximumf %5, %6 : vector<128x128xf32>
    %8 = arith.truncf %7 : vector<128x128xf32> to vector<128x128xbf16>
    %c0_6 = arith.constant 0 : index
    %c0_7 = arith.constant 0 : index
    %9 = vector.load %arg4[%c0_6, %c0_7] : memref<128x128xbf16, #tpu.memory_space<vmem>>, vector<128x128xbf16>
    tpu.vector_store %arg4[%c0_6, %c0_7], %8 {strides = array<i32>} : memref<128x128xbf16, #tpu.memory_space<vmem>>, vector<128x128xbf16>,
    return
  }
  func.func @transform_0(%arg0: i32) -> (i32, i32) {
    %c0_i32 = arith.constant 0 : i32
    %c0_i32_0 = arith.constant 0 : i32
    return %arg0, %c0_i32 : i32, i32
  }
  func.func @transform_1(%arg0: i32) -> (i32, i32) {
    %c0_i32 = arith.constant 0 : i32
    %c0_i32_0 = arith.constant 0 : i32
    %c0_i32_1 = arith.constant 0 : i32
    return %c0_i32, %c0_i32_0 : i32, i32
  }
  func.func @transform_2(%arg0: i32) -> (i32, i32) {
    %c0_i32 = arith.constant 0 : i32
    %c0_i32_0 = arith.constant 0 : i32
    %c0_i32_1 = arith.constant 0 : i32
    return %c0_i32, %c0_i32_0 : i32, i32
  }
  func.func @transform_3(%arg0: i32) -> (i32, i32) {
    %c0_i32 = arith.constant 0 : i32
    %c0_i32_0 = arith.constant 0 : i32
    return %arg0, %c0_i32 : i32, i32
  }
}

module attributes {stable_mosaic.version = 11 : i64} {
  func.func @kernel(%arg0: i32, %arg1: i32, %arg2: memref<1x10x10x128xbf16, #tpu.memory_space<vmem>>, %arg3: memref<9x128x128xbf16, #tpu.memory_space<vmem>>, %arg4: memref<1x128xf32, #tpu.memory_space<vmem>>, %arg5: memref<1x8x8x128xbf16, #tpu.memory_space<vmem>>) attributes {dimension_semantics = [#tpu.dimension_semantics<parallel>, #tpu.dimension_semantics<parallel>], iteration_bounds = array<i64: 2, 1>, scalar_prefetch = 0 : i64, scratch_operands = 0 : i64, tpu.core_type = #tpu.core_type<tc>, window_params = [{transform_indices = @transform_0, window_bounds = array<i64: 1, 10, 10, 128>}, {pipeline_mode = #tpu.pipeline_mode<synchronous>, transform_indices = @transform_1, window_bounds = array<i64: 9, 128, 128>}, {pipeline_mode = #tpu.pipeline_mode<synchronous>, transform_indices = @transform_2, window_bounds = array<i64: 1, 128>}, {transform_indices = @transform_3, window_bounds = array<i64: 1, 8, 8, 128>}]} {
    %c8_i32 = arith.constant 8 : i32
    %0 = arith.muli %arg1, %c8_i32 : i32
    %1 = tpu.assume_multiple %0, 8 : i32
    %cst = arith.constant 0.000000e+00 : f32
    %2 = vector.broadcast %cst : f32 to vector<64x128xf32>
    %c0_i32 = arith.constant 0 : i32
    %3 = arith.addi %1, %c0_i32 : i32
    %c0 = arith.constant 0 : index
    %4 = arith.index_cast %3 : i32 to index
    %c0_0 = arith.constant 0 : index
    %c0_1 = arith.constant 0 : index
    %5 = vector.load %arg2[%c0, %4, %c0_0, %c0_1] : memref<1x10x10x128xbf16, #tpu.memory_space<vmem>>, vector<1x8x8x128xbf16>
    %6 = vector.shape_cast %5 : vector<1x8x8x128xbf16> to vector<8x8x128xbf16>
    %7 = vector.shape_cast %6 : vector<8x8x128xbf16> to vector<64x128xbf16>
    %c0_2 = arith.constant 0 : index
    %c0_3 = arith.constant 0 : index
    %c0_4 = arith.constant 0 : index
    %8 = vector.load %arg3[%c0_2, %c0_3, %c0_4] : memref<9x128x128xbf16, #tpu.memory_space<vmem>>, vector<1x128x128xbf16>
    %9 = vector.shape_cast %8 : vector<1x128x128xbf16> to vector<128x128xbf16>
    %cst_5 = arith.constant dense<0.000000e+00> : vector<64x128xf32>
    %10 = tpu.matmul %7, %9, %cst_5 {dimension_numbers = #tpu.dot_dimension_numbers<[1], [0], [0], [1], [0, 0, 1, 1], [], []>} : vector<64x128xbf16>, vector<128x128xbf16>, vector<64x128xf32> -> vector<64x128xf32>
    %11 = arith.addf %2, %10 : vector<64x128xf32>
    %c0_i32_6 = arith.constant 0 : i32
    %12 = arith.addi %1, %c0_i32_6 : i32
    %c0_7 = arith.constant 0 : index
    %13 = arith.index_cast %12 : i32 to index
    %c1 = arith.constant 1 : index
    %c0_8 = arith.constant 0 : index
    %14 = vector.load %arg2[%c0_7, %13, %c1, %c0_8] : memref<1x10x10x128xbf16, #tpu.memory_space<vmem>>, vector<1x8x8x128xbf16>
    %15 = vector.shape_cast %14 : vector<1x8x8x128xbf16> to vector<8x8x128xbf16>
    %16 = vector.shape_cast %15 : vector<8x8x128xbf16> to vector<64x128xbf16>
    %c1_9 = arith.constant 1 : index
    %c0_10 = arith.constant 0 : index
    %c0_11 = arith.constant 0 : index
    %17 = vector.load %arg3[%c1_9, %c0_10, %c0_11] : memref<9x128x128xbf16, #tpu.memory_space<vmem>>, vector<1x128x128xbf16>
    %18 = vector.shape_cast %17 : vector<1x128x128xbf16> to vector<128x128xbf16>
    %cst_12 = arith.constant dense<0.000000e+00> : vector<64x128xf32>
    %19 = tpu.matmul %16, %18, %cst_12 {dimension_numbers = #tpu.dot_dimension_numbers<[1], [0], [0], [1], [0, 0, 1, 1], [], []>} : vector<64x128xbf16>, vector<128x128xbf16>, vector<64x128xf32> -> vector<64x128xf32>
    %20 = arith.addf %11, %19 : vector<64x128xf32>
    %c0_i32_13 = arith.constant 0 : i32
    %21 = arith.addi %1, %c0_i32_13 : i32
    %c0_14 = arith.constant 0 : index
    %22 = arith.index_cast %21 : i32 to index
    %c2 = arith.constant 2 : index
    %c0_15 = arith.constant 0 : index
    %23 = vector.load %arg2[%c0_14, %22, %c2, %c0_15] : memref<1x10x10x128xbf16, #tpu.memory_space<vmem>>, vector<1x8x8x128xbf16>
    %24 = vector.shape_cast %23 : vector<1x8x8x128xbf16> to vector<8x8x128xbf16>
    %25 = vector.shape_cast %24 : vector<8x8x128xbf16> to vector<64x128xbf16>
    %c2_16 = arith.constant 2 : index
    %c0_17 = arith.constant 0 : index
    %c0_18 = arith.constant 0 : index
    %26 = vector.load %arg3[%c2_16, %c0_17, %c0_18] : memref<9x128x128xbf16, #tpu.memory_space<vmem>>, vector<1x128x128xbf16>
    %27 = vector.shape_cast %26 : vector<1x128x128xbf16> to vector<128x128xbf16>
    %cst_19 = arith.constant dense<0.000000e+00> : vector<64x128xf32>
    %28 = tpu.matmul %25, %27, %cst_19 {dimension_numbers = #tpu.dot_dimension_numbers<[1], [0], [0], [1], [0, 0, 1, 1], [], []>} : vector<64x128xbf16>, vector<128x128xbf16>, vector<64x128xf32> -> vector<64x128xf32>
    %29 = arith.addf %20, %28 : vector<64x128xf32>
    %c1_i32 = arith.constant 1 : i32
    %30 = arith.addi %1, %c1_i32 : i32
    %c0_20 = arith.constant 0 : index
    %31 = arith.index_cast %30 : i32 to index
    %c0_21 = arith.constant 0 : index
    %c0_22 = arith.constant 0 : index
    %32 = vector.load %arg2[%c0_20, %31, %c0_21, %c0_22] : memref<1x10x10x128xbf16, #tpu.memory_space<vmem>>, vector<1x8x8x128xbf16>
    %33 = vector.shape_cast %32 : vector<1x8x8x128xbf16> to vector<8x8x128xbf16>
    %34 = vector.shape_cast %33 : vector<8x8x128xbf16> to vector<64x128xbf16>
    %c3 = arith.constant 3 : index
    %c0_23 = arith.constant 0 : index
    %c0_24 = arith.constant 0 : index
    %35 = vector.load %arg3[%c3, %c0_23, %c0_24] : memref<9x128x128xbf16, #tpu.memory_space<vmem>>, vector<1x128x128xbf16>
    %36 = vector.shape_cast %35 : vector<1x128x128xbf16> to vector<128x128xbf16>
    %cst_25 = arith.constant dense<0.000000e+00> : vector<64x128xf32>
    %37 = tpu.matmul %34, %36, %cst_25 {dimension_numbers = #tpu.dot_dimension_numbers<[1], [0], [0], [1], [0, 0, 1, 1], [], []>} : vector<64x128xbf16>, vector<128x128xbf16>, vector<64x128xf32> -> vector<64x128xf32>
    %38 = arith.addf %29, %37 : vector<64x128xf32>
    %c1_i32_26 = arith.constant 1 : i32
    %39 = arith.addi %1, %c1_i32_26 : i32
    %c0_27 = arith.constant 0 : index
    %40 = arith.index_cast %39 : i32 to index
    %c1_28 = arith.constant 1 : index
    %c0_29 = arith.constant 0 : index
    %41 = vector.load %arg2[%c0_27, %40, %c1_28, %c0_29] : memref<1x10x10x128xbf16, #tpu.memory_space<vmem>>, vector<1x8x8x128xbf16>
    %42 = vector.shape_cast %41 : vector<1x8x8x128xbf16> to vector<8x8x128xbf16>
    %43 = vector.shape_cast %42 : vector<8x8x128xbf16> to vector<64x128xbf16>
    %c4 = arith.constant 4 : index
    %c0_30 = arith.constant 0 : index
    %c0_31 = arith.constant 0 : index
    %44 = vector.load %arg3[%c4, %c0_30, %c0_31] : memref<9x128x128xbf16, #tpu.memory_space<vmem>>, vector<1x128x128xbf16>
    %45 = vector.shape_cast %44 : vector<1x128x128xbf16> to vector<128x128xbf16>
    %cst_32 = arith.constant dense<0.000000e+00> : vector<64x128xf32>
    %46 = tpu.matmul %43, %45, %cst_32 {dimension_numbers = #tpu.dot_dimension_numbers<[1], [0], [0], [1], [0, 0, 1, 1], [], []>} : vector<64x128xbf16>, vector<128x128xbf16>, vector<64x128xf32> -> vector<64x128xf32>
    %47 = arith.addf %38, %46 : vector<64x128xf32>
    %c1_i32_33 = arith.constant 1 : i32
    %48 = arith.addi %1, %c1_i32_33 : i32
    %c0_34 = arith.constant 0 : index
    %49 = arith.index_cast %48 : i32 to index
    %c2_35 = arith.constant 2 : index
    %c0_36 = arith.constant 0 : index
    %50 = vector.load %arg2[%c0_34, %49, %c2_35, %c0_36] : memref<1x10x10x128xbf16, #tpu.memory_space<vmem>>, vector<1x8x8x128xbf16>
    %51 = vector.shape_cast %50 : vector<1x8x8x128xbf16> to vector<8x8x128xbf16>
    %52 = vector.shape_cast %51 : vector<8x8x128xbf16> to vector<64x128xbf16>
    %c5 = arith.constant 5 : index
    %c0_37 = arith.constant 0 : index
    %c0_38 = arith.constant 0 : index
    %53 = vector.load %arg3[%c5, %c0_37, %c0_38] : memref<9x128x128xbf16, #tpu.memory_space<vmem>>, vector<1x128x128xbf16>
    %54 = vector.shape_cast %53 : vector<1x128x128xbf16> to vector<128x128xbf16>
    %cst_39 = arith.constant dense<0.000000e+00> : vector<64x128xf32>
    %55 = tpu.matmul %52, %54, %cst_39 {dimension_numbers = #tpu.dot_dimension_numbers<[1], [0], [0], [1], [0, 0, 1, 1], [], []>} : vector<64x128xbf16>, vector<128x128xbf16>, vector<64x128xf32> -> vector<64x128xf32>
    %56 = arith.addf %47, %55 : vector<64x128xf32>
    %c2_i32 = arith.constant 2 : i32
    %57 = arith.addi %1, %c2_i32 : i32
    %c0_40 = arith.constant 0 : index
    %58 = arith.index_cast %57 : i32 to index
    %c0_41 = arith.constant 0 : index
    %c0_42 = arith.constant 0 : index
    %59 = vector.load %arg2[%c0_40, %58, %c0_41, %c0_42] : memref<1x10x10x128xbf16, #tpu.memory_space<vmem>>, vector<1x8x8x128xbf16>
    %60 = vector.shape_cast %59 : vector<1x8x8x128xbf16> to vector<8x8x128xbf16>
    %61 = vector.shape_cast %60 : vector<8x8x128xbf16> to vector<64x128xbf16>
    %c6 = arith.constant 6 : index
    %c0_43 = arith.constant 0 : index
    %c0_44 = arith.constant 0 : index
    %62 = vector.load %arg3[%c6, %c0_43, %c0_44] : memref<9x128x128xbf16, #tpu.memory_space<vmem>>, vector<1x128x128xbf16>
    %63 = vector.shape_cast %62 : vector<1x128x128xbf16> to vector<128x128xbf16>
    %cst_45 = arith.constant dense<0.000000e+00> : vector<64x128xf32>
    %64 = tpu.matmul %61, %63, %cst_45 {dimension_numbers = #tpu.dot_dimension_numbers<[1], [0], [0], [1], [0, 0, 1, 1], [], []>} : vector<64x128xbf16>, vector<128x128xbf16>, vector<64x128xf32> -> vector<64x128xf32>
    %65 = arith.addf %56, %64 : vector<64x128xf32>
    %c2_i32_46 = arith.constant 2 : i32
    %66 = arith.addi %1, %c2_i32_46 : i32
    %c0_47 = arith.constant 0 : index
    %67 = arith.index_cast %66 : i32 to index
    %c1_48 = arith.constant 1 : index
    %c0_49 = arith.constant 0 : index
    %68 = vector.load %arg2[%c0_47, %67, %c1_48, %c0_49] : memref<1x10x10x128xbf16, #tpu.memory_space<vmem>>, vector<1x8x8x128xbf16>
    %69 = vector.shape_cast %68 : vector<1x8x8x128xbf16> to vector<8x8x128xbf16>
    %70 = vector.shape_cast %69 : vector<8x8x128xbf16> to vector<64x128xbf16>
    %c7 = arith.constant 7 : index
    %c0_50 = arith.constant 0 : index
    %c0_51 = arith.constant 0 : index
    %71 = vector.load %arg3[%c7, %c0_50, %c0_51] : memref<9x128x128xbf16, #tpu.memory_space<vmem>>, vector<1x128x128xbf16>
    %72 = vector.shape_cast %71 : vector<1x128x128xbf16> to vector<128x128xbf16>
    %cst_52 = arith.constant dense<0.000000e+00> : vector<64x128xf32>
    %73 = tpu.matmul %70, %72, %cst_52 {dimension_numbers = #tpu.dot_dimension_numbers<[1], [0], [0], [1], [0, 0, 1, 1], [], []>} : vector<64x128xbf16>, vector<128x128xbf16>, vector<64x128xf32> -> vector<64x128xf32>
    %74 = arith.addf %65, %73 : vector<64x128xf32>
    %c2_i32_53 = arith.constant 2 : i32
    %75 = arith.addi %1, %c2_i32_53 : i32
    %c0_54 = arith.constant 0 : index
    %76 = arith.index_cast %75 : i32 to index
    %c2_55 = arith.constant 2 : index
    %c0_56 = arith.constant 0 : index
    %77 = vector.load %arg2[%c0_54, %76, %c2_55, %c0_56] : memref<1x10x10x128xbf16, #tpu.memory_space<vmem>>, vector<1x8x8x128xbf16>
    %78 = vector.shape_cast %77 : vector<1x8x8x128xbf16> to vector<8x8x128xbf16>
    %79 = vector.shape_cast %78 : vector<8x8x128xbf16> to vector<64x128xbf16>
    %c8 = arith.constant 8 : index
    %c0_57 = arith.constant 0 : index
    %c0_58 = arith.constant 0 : index
    %80 = vector.load %arg3[%c8, %c0_57, %c0_58] : memref<9x128x128xbf16, #tpu.memory_space<vmem>>, vector<1x128x128xbf16>
    %81 = vector.shape_cast %80 : vector<1x128x128xbf16> to vector<128x128xbf16>
    %cst_59 = arith.constant dense<0.000000e+00> : vector<64x128xf32>
    %82 = tpu.matmul %79, %81, %cst_59 {dimension_numbers = #tpu.dot_dimension_numbers<[1], [0], [0], [1], [0, 0, 1, 1], [], []>} : vector<64x128xbf16>, vector<128x128xbf16>, vector<64x128xf32> -> vector<64x128xf32>
    %83 = arith.addf %74, %82 : vector<64x128xf32>
    %c0_60 = arith.constant 0 : index
    %c0_61 = arith.constant 0 : index
    %84 = vector.load %arg4[%c0_60, %c0_61] : memref<1x128xf32, #tpu.memory_space<vmem>>, vector<1x128xf32>
    %85 = vector.broadcast %84 : vector<1x128xf32> to vector<64x128xf32>
    %86 = arith.addf %83, %85 : vector<64x128xf32>
    %cst_62 = arith.constant 0.000000e+00 : f32
    %87 = vector.broadcast %cst_62 : f32 to vector<64x128xf32>
    %88 = arith.maximumf %86, %87 : vector<64x128xf32>
    %89 = arith.truncf %88 : vector<64x128xf32> to vector<64x128xbf16>
    %90 = vector.shape_cast %89 : vector<64x128xbf16> to vector<8x8x128xbf16>
    %c0_63 = arith.constant 0 : index
    %c0_64 = arith.constant 0 : index
    %c0_65 = arith.constant 0 : index
    %c0_66 = arith.constant 0 : index
    %91 = vector.load %arg5[%c0_63, %c0_64, %c0_65, %c0_66] : memref<1x8x8x128xbf16, #tpu.memory_space<vmem>>, vector<1x8x8x128xbf16>
    %92 = vector.shape_cast %91 : vector<1x8x8x128xbf16> to vector<8x8x128xbf16>
    %93 = vector.shape_cast %90 : vector<8x8x128xbf16> to vector<1x8x8x128xbf16>
    tpu.vector_store %arg5[%c0_63, %c0_64, %c0_65, %c0_66], %93 {strides = array<i32>} : memref<1x8x8x128xbf16, #tpu.memory_space<vmem>>, vector<1x8x8x128xbf16>,
    return
  }
  func.func @transform_0(%arg0: i32, %arg1: i32) -> (i32, i32, i32, i32) {
    %c0_i32 = arith.constant 0 : i32
    %c0_i32_0 = arith.constant 0 : i32
    %c0_i32_1 = arith.constant 0 : i32
    %c0_i32_2 = arith.constant 0 : i32
    return %arg0, %c0_i32, %c0_i32_0, %c0_i32_1 : i32, i32, i32, i32
  }
  func.func @transform_1(%arg0: i32, %arg1: i32) -> (i32, i32, i32) {
    %c0_i32 = arith.constant 0 : i32
    %c0_i32_0 = arith.constant 0 : i32
    %c0_i32_1 = arith.constant 0 : i32
    %c0_i32_2 = arith.constant 0 : i32
    return %c0_i32, %c0_i32_0, %c0_i32_1 : i32, i32, i32
  }
  func.func @transform_2(%arg0: i32, %arg1: i32) -> (i32, i32) {
    %c0_i32 = arith.constant 0 : i32
    %c0_i32_0 = arith.constant 0 : i32
    %c0_i32_1 = arith.constant 0 : i32
    return %c0_i32, %c0_i32_0 : i32, i32
  }
  func.func @transform_3(%arg0: i32, %arg1: i32) -> (i32, i32, i32, i32) {
    %c0_i32 = arith.constant 0 : i32
    %c0_i32_0 = arith.constant 0 : i32
    %c0_i32_1 = arith.constant 0 : i32
    return %arg0, %arg1, %c0_i32, %c0_i32_0 : i32, i32, i32, i32
  }
}

module attributes {stable_mosaic.version = 11 : i64} {
  func.func @_matmul_bias_relu_kernel(%arg0: i32, %arg1: memref<32x1152xbf16, #tpu.memory_space<vmem>>, %arg2: memref<1152x128xbf16, #tpu.memory_space<vmem>>, %arg3: memref<1x128xf32, #tpu.memory_space<vmem>>, %arg4: memref<32x128xbf16, #tpu.memory_space<vmem>>) attributes {dimension_semantics = [#tpu.dimension_semantics<parallel>], iteration_bounds = array<i64: 1>, scalar_prefetch = 0 : i64, scratch_operands = 0 : i64, tpu.core_type = #tpu.core_type<tc>, window_params = [{transform_indices = @transform_0, window_bounds = array<i64: 32, 1152>}, {pipeline_mode = #tpu.pipeline_mode<synchronous>, transform_indices = @transform_1, window_bounds = array<i64: 1152, 128>}, {pipeline_mode = #tpu.pipeline_mode<synchronous>, transform_indices = @transform_2, window_bounds = array<i64: 1, 128>}, {transform_indices = @transform_3, window_bounds = array<i64: 32, 128>}]} {
    %c0 = arith.constant 0 : index
    %c0_0 = arith.constant 0 : index
    %0 = vector.load %arg1[%c0, %c0_0] : memref<32x1152xbf16, #tpu.memory_space<vmem>>, vector<32x1152xbf16>
    %c0_1 = arith.constant 0 : index
    %c0_2 = arith.constant 0 : index
    %1 = vector.load %arg2[%c0_1, %c0_2] : memref<1152x128xbf16, #tpu.memory_space<vmem>>, vector<1152x128xbf16>
    %cst = arith.constant dense<0.000000e+00> : vector<32x128xf32>
    %2 = tpu.matmul %0, %1, %cst {dimension_numbers = #tpu.dot_dimension_numbers<[1], [0], [0], [1], [0, 0, 1, 1], [], []>} : vector<32x1152xbf16>, vector<1152x128xbf16>, vector<32x128xf32> -> vector<32x128xf32>
    %c0_3 = arith.constant 0 : index
    %c0_4 = arith.constant 0 : index
    %3 = vector.load %arg3[%c0_3, %c0_4] : memref<1x128xf32, #tpu.memory_space<vmem>>, vector<1x128xf32>
    %4 = vector.broadcast %3 : vector<1x128xf32> to vector<32x128xf32>
    %5 = arith.addf %2, %4 : vector<32x128xf32>
    %cst_5 = arith.constant 0.000000e+00 : f32
    %6 = vector.broadcast %cst_5 : f32 to vector<32x128xf32>
    %7 = arith.maximumf %5, %6 : vector<32x128xf32>
    %8 = arith.truncf %7 : vector<32x128xf32> to vector<32x128xbf16>
    %c0_6 = arith.constant 0 : index
    %c0_7 = arith.constant 0 : index
    %9 = vector.load %arg4[%c0_6, %c0_7] : memref<32x128xbf16, #tpu.memory_space<vmem>>, vector<32x128xbf16>
    tpu.vector_store %arg4[%c0_6, %c0_7], %8 {strides = array<i32>} : memref<32x128xbf16, #tpu.memory_space<vmem>>, vector<32x128xbf16>,
    return
  }
  func.func @transform_0(%arg0: i32) -> (i32, i32) {
    %c0_i32 = arith.constant 0 : i32
    %c0_i32_0 = arith.constant 0 : i32
    return %arg0, %c0_i32 : i32, i32
  }
  func.func @transform_1(%arg0: i32) -> (i32, i32) {
    %c0_i32 = arith.constant 0 : i32
    %c0_i32_0 = arith.constant 0 : i32
    %c0_i32_1 = arith.constant 0 : i32
    return %c0_i32, %c0_i32_0 : i32, i32
  }
  func.func @transform_2(%arg0: i32) -> (i32, i32) {
    %c0_i32 = arith.constant 0 : i32
    %c0_i32_0 = arith.constant 0 : i32
    %c0_i32_1 = arith.constant 0 : i32
    return %c0_i32, %c0_i32_0 : i32, i32
  }
  func.func @transform_3(%arg0: i32) -> (i32, i32) {
    %c0_i32 = arith.constant 0 : i32
    %c0_i32_0 = arith.constant 0 : i32
    return %arg0, %c0_i32 : i32, i32
  }
}

module attributes {stable_mosaic.version = 11 : i64} {
  func.func @kernel(%arg0: i32, %arg1: memref<32x128xbf16, #tpu.memory_space<vmem>>, %arg2: memref<128x512xbf16, #tpu.memory_space<vmem>>, %arg3: memref<1x128xf32, #tpu.memory_space<vmem>>, %arg4: memref<128x128xbf16, #tpu.memory_space<vmem>>, %arg5: memref<1x128xf32, #tpu.memory_space<vmem>>, %arg6: memref<32x128xf32, #tpu.memory_space<vmem>>) attributes {dimension_semantics = [#tpu.dimension_semantics<parallel>], iteration_bounds = array<i64: 1>, scalar_prefetch = 0 : i64, scratch_operands = 0 : i64, tpu.core_type = #tpu.core_type<tc>, window_params = [{transform_indices = @transform_0, window_bounds = array<i64: 32, 128>}, {pipeline_mode = #tpu.pipeline_mode<synchronous>, transform_indices = @transform_1, window_bounds = array<i64: 128, 512>}, {pipeline_mode = #tpu.pipeline_mode<synchronous>, transform_indices = @transform_2, window_bounds = array<i64: 1, 128>}, {pipeline_mode = #tpu.pipeline_mode<synchronous>, transform_indices = @transform_3, window_bounds = array<i64: 128, 128>}, {pipeline_mode = #tpu.pipeline_mode<synchronous>, transform_indices = @transform_4, window_bounds = array<i64: 1, 128>}, {transform_indices = @transform_5, window_bounds = array<i64: 32, 128>}]} {
    %c0 = arith.constant 0 : index
    %c0_0 = arith.constant 0 : index
    %0 = vector.load %arg1[%c0, %c0_0] : memref<32x128xbf16, #tpu.memory_space<vmem>>, vector<32x128xbf16>
    %c0_1 = arith.constant 0 : index
    %c0_2 = arith.constant 0 : index
    %1 = vector.load %arg2[%c0_1, %c0_2] : memref<128x512xbf16, #tpu.memory_space<vmem>>, vector<128x512xbf16>
    %cst = arith.constant dense<0.000000e+00> : vector<32x512xf32>
    %2 = tpu.matmul %0, %1, %cst {dimension_numbers = #tpu.dot_dimension_numbers<[1], [0], [0], [1], [0, 0, 1, 1], [], []>} : vector<32x128xbf16>, vector<128x512xbf16>, vector<32x512xf32> -> vector<32x512xf32>
    %3 = vector.extract_strided_slice %2 {offsets = [0, 0], sizes = [32, 128], strides = [1, 1]} : vector<32x512xf32> to vector<32x128xf32>
    %4 = vector.extract_strided_slice %2 {offsets = [0, 128], sizes = [32, 128], strides = [1, 1]} : vector<32x512xf32> to vector<32x128xf32>
    %5 = arith.maximumf %3, %4 : vector<32x128xf32>
    %6 = vector.extract_strided_slice %2 {offsets = [0, 256], sizes = [32, 128], strides = [1, 1]} : vector<32x512xf32> to vector<32x128xf32>
    %7 = vector.extract_strided_slice %2 {offsets = [0, 384], sizes = [32, 128], strides = [1, 1]} : vector<32x512xf32> to vector<32x128xf32>
    %8 = arith.maximumf %6, %7 : vector<32x128xf32>
    %9 = arith.maximumf %5, %8 : vector<32x128xf32>
    %c0_3 = arith.constant 0 : index
    %c0_4 = arith.constant 0 : index
    %10 = vector.load %arg3[%c0_3, %c0_4] : memref<1x128xf32, #tpu.memory_space<vmem>>, vector<1x128xf32>
    %11 = vector.broadcast %10 : vector<1x128xf32> to vector<32x128xf32>
    %12 = arith.addf %9, %11 : vector<32x128xf32>
    %cst_5 = arith.constant 0.000000e+00 : f32
    %13 = vector.broadcast %cst_5 : f32 to vector<32x128xf32>
    %14 = arith.maximumf %12, %13 : vector<32x128xf32>
    %15 = arith.truncf %14 : vector<32x128xf32> to vector<32x128xbf16>
    %c0_6 = arith.constant 0 : index
    %c0_7 = arith.constant 0 : index
    %16 = vector.load %arg4[%c0_6, %c0_7] : memref<128x128xbf16, #tpu.memory_space<vmem>>, vector<128x128xbf16>
    %cst_8 = arith.constant dense<0.000000e+00> : vector<32x128xf32>
    %17 = tpu.matmul %15, %16, %cst_8 {dimension_numbers = #tpu.dot_dimension_numbers<[1], [0], [0], [1], [0, 0, 1, 1], [], []>} : vector<32x128xbf16>, vector<128x128xbf16>, vector<32x128xf32> -> vector<32x128xf32>
    %c0_9 = arith.constant 0 : index
    %c0_10 = arith.constant 0 : index
    %18 = vector.load %arg5[%c0_9, %c0_10] : memref<1x128xf32, #tpu.memory_space<vmem>>, vector<1x128xf32>
    %19 = vector.broadcast %18 : vector<1x128xf32> to vector<32x128xf32>
    %20 = arith.addf %17, %19 : vector<32x128xf32>
    %cst_11 = arith.constant 0.000000e+00 : f32
    %21 = vector.broadcast %cst_11 : f32 to vector<32x128xf32>
    %22 = arith.maximumf %20, %21 : vector<32x128xf32>
    %c0_12 = arith.constant 0 : index
    %c0_13 = arith.constant 0 : index
    %23 = vector.load %arg6[%c0_12, %c0_13] : memref<32x128xf32, #tpu.memory_space<vmem>>, vector<32x128xf32>
    tpu.vector_store %arg6[%c0_12, %c0_13], %22 {strides = array<i32>} : memref<32x128xf32, #tpu.memory_space<vmem>>, vector<32x128xf32>,
    return
  }
  func.func @transform_0(%arg0: i32) -> (i32, i32) {
    %c0_i32 = arith.constant 0 : i32
    %c0_i32_0 = arith.constant 0 : i32
    return %arg0, %c0_i32 : i32, i32
  }
  func.func @transform_1(%arg0: i32) -> (i32, i32) {
    %c0_i32 = arith.constant 0 : i32
    %c0_i32_0 = arith.constant 0 : i32
    %c0_i32_1 = arith.constant 0 : i32
    return %c0_i32, %c0_i32_0 : i32, i32
  }
  func.func @transform_2(%arg0: i32) -> (i32, i32) {
    %c0_i32 = arith.constant 0 : i32
    %c0_i32_0 = arith.constant 0 : i32
    %c0_i32_1 = arith.constant 0 : i32
    return %c0_i32, %c0_i32_0 : i32, i32
  }
  func.func @transform_3(%arg0: i32) -> (i32, i32) {
    %c0_i32 = arith.constant 0 : i32
    %c0_i32_0 = arith.constant 0 : i32
    %c0_i32_1 = arith.constant 0 : i32
    return %c0_i32, %c0_i32_0 : i32, i32
  }
  func.func @transform_4(%arg0: i32) -> (i32, i32) {
    %c0_i32 = arith.constant 0 : i32
    %c0_i32_0 = arith.constant 0 : i32
    %c0_i32_1 = arith.constant 0 : i32
    return %c0_i32, %c0_i32_0 : i32, i32
  }
  func.func @transform_5(%arg0: i32) -> (i32, i32) {
    %c0_i32 = arith.constant 0 : i32
    %c0_i32_0 = arith.constant 0 : i32
    return %arg0, %c0_i32 : i32, i32
  }
}

module attributes {stable_mosaic.version = 11 : i64} {
  func.func @kernel(%arg0: i32, %arg1: i32, %arg2: memref<1x6x6x128xbf16, #tpu.memory_space<vmem>>, %arg3: memref<9x128x128xbf16, #tpu.memory_space<vmem>>, %arg4: memref<1x128xf32, #tpu.memory_space<vmem>>, %arg5: memref<1x4x4x128xbf16, #tpu.memory_space<vmem>>) attributes {dimension_semantics = [#tpu.dimension_semantics<parallel>, #tpu.dimension_semantics<parallel>], iteration_bounds = array<i64: 2, 1>, scalar_prefetch = 0 : i64, scratch_operands = 0 : i64, tpu.core_type = #tpu.core_type<tc>, window_params = [{transform_indices = @transform_0, window_bounds = array<i64: 1, 6, 6, 128>}, {pipeline_mode = #tpu.pipeline_mode<synchronous>, transform_indices = @transform_1, window_bounds = array<i64: 9, 128, 128>}, {pipeline_mode = #tpu.pipeline_mode<synchronous>, transform_indices = @transform_2, window_bounds = array<i64: 1, 128>}, {transform_indices = @transform_3, window_bounds = array<i64: 1, 4, 4, 128>}]} {
    %c4_i32 = arith.constant 4 : i32
    %0 = arith.muli %arg1, %c4_i32 : i32
    %1 = tpu.assume_multiple %0, 4 : i32
    %cst = arith.constant 0.000000e+00 : f32
    %2 = vector.broadcast %cst : f32 to vector<16x128xf32>
    %c0_i32 = arith.constant 0 : i32
    %3 = arith.addi %1, %c0_i32 : i32
    %c0 = arith.constant 0 : index
    %4 = arith.index_cast %3 : i32 to index
    %c0_0 = arith.constant 0 : index
    %c0_1 = arith.constant 0 : index
    %5 = vector.load %arg2[%c0, %4, %c0_0, %c0_1] : memref<1x6x6x128xbf16, #tpu.memory_space<vmem>>, vector<1x4x4x128xbf16>
    %6 = vector.shape_cast %5 : vector<1x4x4x128xbf16> to vector<4x4x128xbf16>
    %7 = vector.shape_cast %6 : vector<4x4x128xbf16> to vector<16x128xbf16>
    %c0_2 = arith.constant 0 : index
    %c0_3 = arith.constant 0 : index
    %c0_4 = arith.constant 0 : index
    %8 = vector.load %arg3[%c0_2, %c0_3, %c0_4] : memref<9x128x128xbf16, #tpu.memory_space<vmem>>, vector<1x128x128xbf16>
    %9 = vector.shape_cast %8 : vector<1x128x128xbf16> to vector<128x128xbf16>
    %cst_5 = arith.constant dense<0.000000e+00> : vector<16x128xf32>
    %10 = tpu.matmul %7, %9, %cst_5 {dimension_numbers = #tpu.dot_dimension_numbers<[1], [0], [0], [1], [0, 0, 1, 1], [], []>} : vector<16x128xbf16>, vector<128x128xbf16>, vector<16x128xf32> -> vector<16x128xf32>
    %11 = arith.addf %2, %10 : vector<16x128xf32>
    %c0_i32_6 = arith.constant 0 : i32
    %12 = arith.addi %1, %c0_i32_6 : i32
    %c0_7 = arith.constant 0 : index
    %13 = arith.index_cast %12 : i32 to index
    %c1 = arith.constant 1 : index
    %c0_8 = arith.constant 0 : index
    %14 = vector.load %arg2[%c0_7, %13, %c1, %c0_8] : memref<1x6x6x128xbf16, #tpu.memory_space<vmem>>, vector<1x4x4x128xbf16>
    %15 = vector.shape_cast %14 : vector<1x4x4x128xbf16> to vector<4x4x128xbf16>
    %16 = vector.shape_cast %15 : vector<4x4x128xbf16> to vector<16x128xbf16>
    %c1_9 = arith.constant 1 : index
    %c0_10 = arith.constant 0 : index
    %c0_11 = arith.constant 0 : index
    %17 = vector.load %arg3[%c1_9, %c0_10, %c0_11] : memref<9x128x128xbf16, #tpu.memory_space<vmem>>, vector<1x128x128xbf16>
    %18 = vector.shape_cast %17 : vector<1x128x128xbf16> to vector<128x128xbf16>
    %cst_12 = arith.constant dense<0.000000e+00> : vector<16x128xf32>
    %19 = tpu.matmul %16, %18, %cst_12 {dimension_numbers = #tpu.dot_dimension_numbers<[1], [0], [0], [1], [0, 0, 1, 1], [], []>} : vector<16x128xbf16>, vector<128x128xbf16>, vector<16x128xf32> -> vector<16x128xf32>
    %20 = arith.addf %11, %19 : vector<16x128xf32>
    %c0_i32_13 = arith.constant 0 : i32
    %21 = arith.addi %1, %c0_i32_13 : i32
    %c0_14 = arith.constant 0 : index
    %22 = arith.index_cast %21 : i32 to index
    %c2 = arith.constant 2 : index
    %c0_15 = arith.constant 0 : index
    %23 = vector.load %arg2[%c0_14, %22, %c2, %c0_15] : memref<1x6x6x128xbf16, #tpu.memory_space<vmem>>, vector<1x4x4x128xbf16>
    %24 = vector.shape_cast %23 : vector<1x4x4x128xbf16> to vector<4x4x128xbf16>
    %25 = vector.shape_cast %24 : vector<4x4x128xbf16> to vector<16x128xbf16>
    %c2_16 = arith.constant 2 : index
    %c0_17 = arith.constant 0 : index
    %c0_18 = arith.constant 0 : index
    %26 = vector.load %arg3[%c2_16, %c0_17, %c0_18] : memref<9x128x128xbf16, #tpu.memory_space<vmem>>, vector<1x128x128xbf16>
    %27 = vector.shape_cast %26 : vector<1x128x128xbf16> to vector<128x128xbf16>
    %cst_19 = arith.constant dense<0.000000e+00> : vector<16x128xf32>
    %28 = tpu.matmul %25, %27, %cst_19 {dimension_numbers = #tpu.dot_dimension_numbers<[1], [0], [0], [1], [0, 0, 1, 1], [], []>} : vector<16x128xbf16>, vector<128x128xbf16>, vector<16x128xf32> -> vector<16x128xf32>
    %29 = arith.addf %20, %28 : vector<16x128xf32>
    %c1_i32 = arith.constant 1 : i32
    %30 = arith.addi %1, %c1_i32 : i32
    %c0_20 = arith.constant 0 : index
    %31 = arith.index_cast %30 : i32 to index
    %c0_21 = arith.constant 0 : index
    %c0_22 = arith.constant 0 : index
    %32 = vector.load %arg2[%c0_20, %31, %c0_21, %c0_22] : memref<1x6x6x128xbf16, #tpu.memory_space<vmem>>, vector<1x4x4x128xbf16>
    %33 = vector.shape_cast %32 : vector<1x4x4x128xbf16> to vector<4x4x128xbf16>
    %34 = vector.shape_cast %33 : vector<4x4x128xbf16> to vector<16x128xbf16>
    %c3 = arith.constant 3 : index
    %c0_23 = arith.constant 0 : index
    %c0_24 = arith.constant 0 : index
    %35 = vector.load %arg3[%c3, %c0_23, %c0_24] : memref<9x128x128xbf16, #tpu.memory_space<vmem>>, vector<1x128x128xbf16>
    %36 = vector.shape_cast %35 : vector<1x128x128xbf16> to vector<128x128xbf16>
    %cst_25 = arith.constant dense<0.000000e+00> : vector<16x128xf32>
    %37 = tpu.matmul %34, %36, %cst_25 {dimension_numbers = #tpu.dot_dimension_numbers<[1], [0], [0], [1], [0, 0, 1, 1], [], []>} : vector<16x128xbf16>, vector<128x128xbf16>, vector<16x128xf32> -> vector<16x128xf32>
    %38 = arith.addf %29, %37 : vector<16x128xf32>
    %c1_i32_26 = arith.constant 1 : i32
    %39 = arith.addi %1, %c1_i32_26 : i32
    %c0_27 = arith.constant 0 : index
    %40 = arith.index_cast %39 : i32 to index
    %c1_28 = arith.constant 1 : index
    %c0_29 = arith.constant 0 : index
    %41 = vector.load %arg2[%c0_27, %40, %c1_28, %c0_29] : memref<1x6x6x128xbf16, #tpu.memory_space<vmem>>, vector<1x4x4x128xbf16>
    %42 = vector.shape_cast %41 : vector<1x4x4x128xbf16> to vector<4x4x128xbf16>
    %43 = vector.shape_cast %42 : vector<4x4x128xbf16> to vector<16x128xbf16>
    %c4 = arith.constant 4 : index
    %c0_30 = arith.constant 0 : index
    %c0_31 = arith.constant 0 : index
    %44 = vector.load %arg3[%c4, %c0_30, %c0_31] : memref<9x128x128xbf16, #tpu.memory_space<vmem>>, vector<1x128x128xbf16>
    %45 = vector.shape_cast %44 : vector<1x128x128xbf16> to vector<128x128xbf16>
    %cst_32 = arith.constant dense<0.000000e+00> : vector<16x128xf32>
    %46 = tpu.matmul %43, %45, %cst_32 {dimension_numbers = #tpu.dot_dimension_numbers<[1], [0], [0], [1], [0, 0, 1, 1], [], []>} : vector<16x128xbf16>, vector<128x128xbf16>, vector<16x128xf32> -> vector<16x128xf32>
    %47 = arith.addf %38, %46 : vector<16x128xf32>
    %c1_i32_33 = arith.constant 1 : i32
    %48 = arith.addi %1, %c1_i32_33 : i32
    %c0_34 = arith.constant 0 : index
    %49 = arith.index_cast %48 : i32 to index
    %c2_35 = arith.constant 2 : index
    %c0_36 = arith.constant 0 : index
    %50 = vector.load %arg2[%c0_34, %49, %c2_35, %c0_36] : memref<1x6x6x128xbf16, #tpu.memory_space<vmem>>, vector<1x4x4x128xbf16>
    %51 = vector.shape_cast %50 : vector<1x4x4x128xbf16> to vector<4x4x128xbf16>
    %52 = vector.shape_cast %51 : vector<4x4x128xbf16> to vector<16x128xbf16>
    %c5 = arith.constant 5 : index
    %c0_37 = arith.constant 0 : index
    %c0_38 = arith.constant 0 : index
    %53 = vector.load %arg3[%c5, %c0_37, %c0_38] : memref<9x128x128xbf16, #tpu.memory_space<vmem>>, vector<1x128x128xbf16>
    %54 = vector.shape_cast %53 : vector<1x128x128xbf16> to vector<128x128xbf16>
    %cst_39 = arith.constant dense<0.000000e+00> : vector<16x128xf32>
    %55 = tpu.matmul %52, %54, %cst_39 {dimension_numbers = #tpu.dot_dimension_numbers<[1], [0], [0], [1], [0, 0, 1, 1], [], []>} : vector<16x128xbf16>, vector<128x128xbf16>, vector<16x128xf32> -> vector<16x128xf32>
    %56 = arith.addf %47, %55 : vector<16x128xf32>
    %c2_i32 = arith.constant 2 : i32
    %57 = arith.addi %1, %c2_i32 : i32
    %c0_40 = arith.constant 0 : index
    %58 = arith.index_cast %57 : i32 to index
    %c0_41 = arith.constant 0 : index
    %c0_42 = arith.constant 0 : index
    %59 = vector.load %arg2[%c0_40, %58, %c0_41, %c0_42] : memref<1x6x6x128xbf16, #tpu.memory_space<vmem>>, vector<1x4x4x128xbf16>
    %60 = vector.shape_cast %59 : vector<1x4x4x128xbf16> to vector<4x4x128xbf16>
    %61 = vector.shape_cast %60 : vector<4x4x128xbf16> to vector<16x128xbf16>
    %c6 = arith.constant 6 : index
    %c0_43 = arith.constant 0 : index
    %c0_44 = arith.constant 0 : index
    %62 = vector.load %arg3[%c6, %c0_43, %c0_44] : memref<9x128x128xbf16, #tpu.memory_space<vmem>>, vector<1x128x128xbf16>
    %63 = vector.shape_cast %62 : vector<1x128x128xbf16> to vector<128x128xbf16>
    %cst_45 = arith.constant dense<0.000000e+00> : vector<16x128xf32>
    %64 = tpu.matmul %61, %63, %cst_45 {dimension_numbers = #tpu.dot_dimension_numbers<[1], [0], [0], [1], [0, 0, 1, 1], [], []>} : vector<16x128xbf16>, vector<128x128xbf16>, vector<16x128xf32> -> vector<16x128xf32>
    %65 = arith.addf %56, %64 : vector<16x128xf32>
    %c2_i32_46 = arith.constant 2 : i32
    %66 = arith.addi %1, %c2_i32_46 : i32
    %c0_47 = arith.constant 0 : index
    %67 = arith.index_cast %66 : i32 to index
    %c1_48 = arith.constant 1 : index
    %c0_49 = arith.constant 0 : index
    %68 = vector.load %arg2[%c0_47, %67, %c1_48, %c0_49] : memref<1x6x6x128xbf16, #tpu.memory_space<vmem>>, vector<1x4x4x128xbf16>
    %69 = vector.shape_cast %68 : vector<1x4x4x128xbf16> to vector<4x4x128xbf16>
    %70 = vector.shape_cast %69 : vector<4x4x128xbf16> to vector<16x128xbf16>
    %c7 = arith.constant 7 : index
    %c0_50 = arith.constant 0 : index
    %c0_51 = arith.constant 0 : index
    %71 = vector.load %arg3[%c7, %c0_50, %c0_51] : memref<9x128x128xbf16, #tpu.memory_space<vmem>>, vector<1x128x128xbf16>
    %72 = vector.shape_cast %71 : vector<1x128x128xbf16> to vector<128x128xbf16>
    %cst_52 = arith.constant dense<0.000000e+00> : vector<16x128xf32>
    %73 = tpu.matmul %70, %72, %cst_52 {dimension_numbers = #tpu.dot_dimension_numbers<[1], [0], [0], [1], [0, 0, 1, 1], [], []>} : vector<16x128xbf16>, vector<128x128xbf16>, vector<16x128xf32> -> vector<16x128xf32>
    %74 = arith.addf %65, %73 : vector<16x128xf32>
    %c2_i32_53 = arith.constant 2 : i32
    %75 = arith.addi %1, %c2_i32_53 : i32
    %c0_54 = arith.constant 0 : index
    %76 = arith.index_cast %75 : i32 to index
    %c2_55 = arith.constant 2 : index
    %c0_56 = arith.constant 0 : index
    %77 = vector.load %arg2[%c0_54, %76, %c2_55, %c0_56] : memref<1x6x6x128xbf16, #tpu.memory_space<vmem>>, vector<1x4x4x128xbf16>
    %78 = vector.shape_cast %77 : vector<1x4x4x128xbf16> to vector<4x4x128xbf16>
    %79 = vector.shape_cast %78 : vector<4x4x128xbf16> to vector<16x128xbf16>
    %c8 = arith.constant 8 : index
    %c0_57 = arith.constant 0 : index
    %c0_58 = arith.constant 0 : index
    %80 = vector.load %arg3[%c8, %c0_57, %c0_58] : memref<9x128x128xbf16, #tpu.memory_space<vmem>>, vector<1x128x128xbf16>
    %81 = vector.shape_cast %80 : vector<1x128x128xbf16> to vector<128x128xbf16>
    %cst_59 = arith.constant dense<0.000000e+00> : vector<16x128xf32>
    %82 = tpu.matmul %79, %81, %cst_59 {dimension_numbers = #tpu.dot_dimension_numbers<[1], [0], [0], [1], [0, 0, 1, 1], [], []>} : vector<16x128xbf16>, vector<128x128xbf16>, vector<16x128xf32> -> vector<16x128xf32>
    %83 = arith.addf %74, %82 : vector<16x128xf32>
    %c0_60 = arith.constant 0 : index
    %c0_61 = arith.constant 0 : index
    %84 = vector.load %arg4[%c0_60, %c0_61] : memref<1x128xf32, #tpu.memory_space<vmem>>, vector<1x128xf32>
    %85 = vector.broadcast %84 : vector<1x128xf32> to vector<16x128xf32>
    %86 = arith.addf %83, %85 : vector<16x128xf32>
    %cst_62 = arith.constant 0.000000e+00 : f32
    %87 = vector.broadcast %cst_62 : f32 to vector<16x128xf32>
    %88 = arith.maximumf %86, %87 : vector<16x128xf32>
    %89 = arith.truncf %88 : vector<16x128xf32> to vector<16x128xbf16>
    %90 = vector.shape_cast %89 : vector<16x128xbf16> to vector<4x4x128xbf16>
    %c0_63 = arith.constant 0 : index
    %c0_64 = arith.constant 0 : index
    %c0_65 = arith.constant 0 : index
    %c0_66 = arith.constant 0 : index
    %91 = vector.load %arg5[%c0_63, %c0_64, %c0_65, %c0_66] : memref<1x4x4x128xbf16, #tpu.memory_space<vmem>>, vector<1x4x4x128xbf16>
    %92 = vector.shape_cast %91 : vector<1x4x4x128xbf16> to vector<4x4x128xbf16>
    %93 = vector.shape_cast %90 : vector<4x4x128xbf16> to vector<1x4x4x128xbf16>
    tpu.vector_store %arg5[%c0_63, %c0_64, %c0_65, %c0_66], %93 {strides = array<i32>} : memref<1x4x4x128xbf16, #tpu.memory_space<vmem>>, vector<1x4x4x128xbf16>,
    return
  }
  func.func @transform_0(%arg0: i32, %arg1: i32) -> (i32, i32, i32, i32) {
    %c0_i32 = arith.constant 0 : i32
    %c0_i32_0 = arith.constant 0 : i32
    %c0_i32_1 = arith.constant 0 : i32
    %c0_i32_2 = arith.constant 0 : i32
    return %arg0, %c0_i32, %c0_i32_0, %c0_i32_1 : i32, i32, i32, i32
  }
  func.func @transform_1(%arg0: i32, %arg1: i32) -> (i32, i32, i32) {
    %c0_i32 = arith.constant 0 : i32
    %c0_i32_0 = arith.constant 0 : i32
    %c0_i32_1 = arith.constant 0 : i32
    %c0_i32_2 = arith.constant 0 : i32
    return %c0_i32, %c0_i32_0, %c0_i32_1 : i32, i32, i32
  }
  func.func @transform_2(%arg0: i32, %arg1: i32) -> (i32, i32) {
    %c0_i32 = arith.constant 0 : i32
    %c0_i32_0 = arith.constant 0 : i32
    %c0_i32_1 = arith.constant 0 : i32
    return %c0_i32, %c0_i32_0 : i32, i32
  }
  func.func @transform_3(%arg0: i32, %arg1: i32) -> (i32, i32, i32, i32) {
    %c0_i32 = arith.constant 0 : i32
    %c0_i32_0 = arith.constant 0 : i32
    %c0_i32_1 = arith.constant 0 : i32
    return %arg0, %arg1, %c0_i32, %c0_i32_0 : i32, i32, i32, i32
  }
}

</mosaic_0001>

<llo_original>
// kernel: _lambda_.9
$region0: #{_lambda_.9}
  #allocation0 [shape = 'u32[]', space=smem, size = 0x4, offset = 0x4, fixed_abs, tag = 'smem constant byte address 0x4 - core index']
  #allocation1 [shape = 'u32[144,128]{1,0:T(1,128)}', space=vmem, size = 0x12000, scoped, tag = 'internal scratch']
  %s0 = inlined_call_operand.vmem [shape: bf16[128,1152], index: 0, kind: input, shape index: {}]
  %s1 = inlined_call_operand.vmem [shape: bf16[1152,128], index: 1, kind: input, shape index: {}]
  %s2 = inlined_call_operand.vmem [shape: f32[1,128], index: 2, kind: input, shape index: {}]
  %s3 = inlined_call_operand.vmem [shape: bf16[128,128], index: 3, kind: output, shape index: {}]
  %s4 = sld [smem:[#allocation0]]
  $region22: #{_lambda_.9} parent=0
    _
  %s6 = ssub.s32 1, %s4
  %s7 = scalar_select 0, %s6, %s4
  // Predicated region
  $region2: #{_lambda_.9} parent=0 // pred_check
    _
  $region3: #{_lambda_.9} parent=0 // pred_check_branch
    %9 = sbr.rel (0) target = $region5
  $region4: #{_lambda_.9} parent=0 // pred_region
    _
  $region5: #{_lambda_.9} parent=0 // pred_fallthru
    _
  // Predicated region
  $region6: #{_lambda_.9} parent=0 // pred_check
    _
  $region7: #{_lambda_.9} parent=0 // pred_check_branch
    %11 = sbr.rel (0) target = $region9
  $region8: #{_lambda_.9} parent=0 // pred_region
    _
  $region9: #{_lambda_.9} parent=0 // pred_fallthru
    _
  // Predicated region
  $region10: #{_lambda_.9} parent=0 // pred_check
    _
  $region11: #{_lambda_.9} parent=0 // pred_check_branch
    %13 = sbr.rel (0) target = $region13
  $region12: #{_lambda_.9} parent=0 // pred_region
    _
  $region13: #{_lambda_.9} parent=0 // pred_fallthru
    _
  %v15 = vld [vmem:[%s0] sm:$0xff]
  %v16 = vld [vmem:[%s0 + $0x8] sm:$0xff]
  %v17 = vld [vmem:[%s0 + $0x10] sm:$0xff]
  %v18 = vld [vmem:[%s0 + $0x18] sm:$0xff]
  %v19 = vld [vmem:[%s0 + $0x20] sm:$0xf]
  %v20 = vld [vmem:[%s0 + $0x24] sm:$0xff]
  %v21 = vld [vmem:[%s0 + $0x2c] sm:$0xff]
  %v22 = vld [vmem:[%s0 + $0x34] sm:$0xff]
  %v23 = vld [vmem:[%s0 + $0x3c] sm:$0xff]
  %v24 = vld [vmem:[%s0 + $0x44] sm:$0xf]
  %v25 = vld [vmem:[%s0 + $0x48] sm:$0xff]
  %v26 = vld [vmem:[%s0 + $0x50] sm:$0xff]
  %v27 = vld [vmem:[%s0 + $0x58] sm:$0xff]
  %v28 = vld [vmem:[%s0 + $0x60] sm:$0xff]
  %v29 = vld [vmem:[%s0 + $0x68] sm:$0xf]
  %v30 = vld [vmem:[%s0 + $0x6c] sm:$0xff]
  %v31 = vld [vmem:[%s0 + $0x74] sm:$0xff]
  %v32 = vld [vmem:[%s0 + $0x7c] sm:$0xff]
  %v33 = vld [vmem:[%s0 + $0x84] sm:$0xff]
  %v34 = vld [vmem:[%s0 + $0x8c] sm:$0xf]
  %v35 = vld [vmem:[%s0 + $0x90] sm:$0xff]
  %v36 = vld [vmem:[%s0 + $0x98] sm:$0xff]
  %v37 = vld [vmem:[%s0 + $0xa0] sm:$0xff]
  %v38 = vld [vmem:[%s0 + $0xa8] sm:$0xff]
  %v39 = vld [vmem:[%s0 + $0xb0] sm:$0xf]
  %v40 = vld [vmem:[%s0 + $0xb4] sm:$0xff]
  %v41 = vld [vmem:[%s0 + $0xbc] sm:$0xff]
  %v42 = vld [vmem:[%s0 + $0xc4] sm:$0xff]
  %v43 = vld [vmem:[%s0 + $0xcc] sm:$0xff]
  %v44 = vld [vmem:[%s0 + $0xd4] sm:$0xf]
  %v45 = vld [vmem:[%s0 + $0xd8] sm:$0xff]
  %v46 = vld [vmem:[%s0 + $0xe0] sm:$0xff]
  %v47 = vld [vmem:[%s0 + $0xe8] sm:$0xff]
  %v48 = vld [vmem:[%s0 + $0xf0] sm:$0xff]
  %v49 = vld [vmem:[%s0 + $0xf8] sm:$0xf]
  %v50 = vld [vmem:[%s0 + $0xfc] sm:$0xff]
  %v51 = vld [vmem:[%s0 + $0x104] sm:$0xff]
  %v52 = vld [vmem:[%s0 + $0x10c] sm:$0xff]
  %v53 = vld [vmem:[%s0 + $0x114] sm:$0xff]
  %v54 = vld [vmem:[%s0 + $0x11c] sm:$0xf]
  %v55 = vld [vmem:[%s0 + $0x120] sm:$0xff]
  %v56 = vld [vmem:[%s0 + $0x128] sm:$0xff]
  %v57 = vld [vmem:[%s0 + $0x130] sm:$0xff]
  %v58 = vld [vmem:[%s0 + $0x138] sm:$0xff]
  %v59 = vld [vmem:[%s0 + $0x140] sm:$0xf]
  %v60 = vld [vmem:[%s0 + $0x144] sm:$0xff]
  %v61 = vld [vmem:[%s0 + $0x14c] sm:$0xff]
  %v62 = vld [vmem:[%s0 + $0x154] sm:$0xff]
  %v63 = vld [vmem:[%s0 + $0x15c] sm:$0xff]
  %v64 = vld [vmem:[%s0 + $0x164] sm:$0xf]
  %v65 = vld [vmem:[%s0 + $0x168] sm:$0xff]
  %v66 = vld [vmem:[%s0 + $0x170] sm:$0xff]
  %v67 = vld [vmem:[%s0 + $0x178] sm:$0xff]
  %v68 = vld [vmem:[%s0 + $0x180] sm:$0xff]
  %v69 = vld [vmem:[%s0 + $0x188] sm:$0xf]
  %v70 = vld [vmem:[%s0 + $0x18c] sm:$0xff]
  %v71 = vld [vmem:[%s0 + $0x194] sm:$0xff]
  %v72 = vld [vmem:[%s0 + $0x19c] sm:$0xff]
  %v73 = vld [vmem:[%s0 + $0x1a4] sm:$0xff]
  %v74 = vld [vmem:[%s0 + $0x1ac] sm:$0xf]
  %v75 = vld [vmem:[%s0 + $0x1b0] sm:$0xff]
  %v76 = vld [vmem:[%s0 + $0x1b8] sm:$0xff]
  %v77 = vld [vmem:[%s0 + $0x1c0] sm:$0xff]
  %v78 = vld [vmem:[%s0 + $0x1c8] sm:$0xff]
  %v79 = vld [vmem:[%s0 + $0x1d0] sm:$0xf]
  %v80 = vld [vmem:[%s0 + $0x1d4] sm:$0xff]
  %v81 = vld [vmem:[%s0 + $0x1dc] sm:$0xff]
  %v82 = vld [vmem:[%s0 + $0x1e4] sm:$0xff]
  %v83 = vld [vmem:[%s0 + $0x1ec] sm:$0xff]
  %v84 = vld [vmem:[%s0 + $0x1f4] sm:$0xf]
  %v85 = vld [vmem:[%s0 + $0x1f8] sm:$0xff]
  %v86 = vld [vmem:[%s0 + $0x200] sm:$0xff]
  %v87 = vld [vmem:[%s0 + $0x208] sm:$0xff]
  %v88 = vld [vmem:[%s0 + $0x210] sm:$0xff]
  %v89 = vld [vmem:[%s0 + $0x218] sm:$0xf]
  %v90 = vld [vmem:[%s0 + $0x21c] sm:$0xff]
  %v91 = vld [vmem:[%s0 + $0x224] sm:$0xff]
  %v92 = vld [vmem:[%s0 + $0x22c] sm:$0xff]
  %v93 = vld [vmem:[%s0 + $0x234] sm:$0xff]
  %v94 = vld [vmem:[%s0 + $0x23c] sm:$0xf]
  %v95 = vld [vmem:[%s1] sm:$0xf]
  %v96 = vld [vmem:[%s1 + $0x4] sm:$0xf]
  %v97 = vld [vmem:[%s1 + $0x8] sm:$0xf]
  %v98 = vld [vmem:[%s1 + $0xc] sm:$0xf]
  %v99 = vld [vmem:[%s1 + $0x10] sm:$0xf]
  %v100 = vld [vmem:[%s1 + $0x14] sm:$0xf]
  %v101 = vld [vmem:[%s1 + $0x18] sm:$0xf]
  %v102 = vld [vmem:[%s1 + $0x1c] sm:$0xf]
  %v103 = vld [vmem:[%s1 + $0x20] sm:$0xf]
  %v104 = vld [vmem:[%s1 + $0x24] sm:$0xf]
  %v105 = vld [vmem:[%s1 + $0x28] sm:$0xf]
  %v106 = vld [vmem:[%s1 + $0x2c] sm:$0xf]
  %v107 = vld [vmem:[%s1 + $0x30] sm:$0xf]
  %v108 = vld [vmem:[%s1 + $0x34] sm:$0xf]
  %v109 = vld [vmem:[%s1 + $0x38] sm:$0xf]
  %v110 = vld [vmem:[%s1 + $0x3c] sm:$0xf]
  %v111 = vld [vmem:[%s1 + $0x40] sm:$0xf]
  %v112 = vld [vmem:[%s1 + $0x44] sm:$0xf]
  %v113 = vld [vmem:[%s1 + $0x48] sm:$0xf]
  %v114 = vld [vmem:[%s1 + $0x4c] sm:$0xf]
  %v115 = vld [vmem:[%s1 + $0x50] sm:$0xf]
  %v116 = vld [vmem:[%s1 + $0x54] sm:$0xf]
  %v117 = vld [vmem:[%s1 + $0x58] sm:$0xf]
  %v118 = vld [vmem:[%s1 + $0x5c] sm:$0xf]
  %v119 = vld [vmem:[%s1 + $0x60] sm:$0xf]
  %v120 = vld [vmem:[%s1 + $0x64] sm:$0xf]
  %v121 = vld [vmem:[%s1 + $0x68] sm:$0xf]
  %v122 = vld [vmem:[%s1 + $0x6c] sm:$0xf]
  %v123 = vld [vmem:[%s1 + $0x70] sm:$0xf]
  %v124 = vld [vmem:[%s1 + $0x74] sm:$0xf]
  %v125 = vld [vmem:[%s1 + $0x78] sm:$0xf]
  %v126 = vld [vmem:[%s1 + $0x7c] sm:$0xf]
  %v127 = vld [vmem:[%s1 + $0x80] sm:$0xf]
  %v128 = vld [vmem:[%s1 + $0x84] sm:$0xf]
  %v129 = vld [vmem:[%s1 + $0x88] sm:$0xf]
  %v130 = vld [vmem:[%s1 + $0x8c] sm:$0xf]
  %v131 = vld [vmem:[%s1 + $0x90] sm:$0xf]
  %v132 = vld [vmem:[%s1 + $0x94] sm:$0xf]
  %v133 = vld [vmem:[%s1 + $0x98] sm:$0xf]
  %v134 = vld [vmem:[%s1 + $0x9c] sm:$0xf]
  %v135 = vld [vmem:[%s1 + $0xa0] sm:$0xf]
  %v136 = vld [vmem:[%s1 + $0xa4] sm:$0xf]
  %v137 = vld [vmem:[%s1 + $0xa8] sm:$0xf]
  %v138 = vld [vmem:[%s1 + $0xac] sm:$0xf]
  %v139 = vld [vmem:[%s1 + $0xb0] sm:$0xf]
  %v140 = vld [vmem:[%s1 + $0xb4] sm:$0xf]
  %v141 = vld [vmem:[%s1 + $0xb8] sm:$0xf]
  %v142 = vld [vmem:[%s1 + $0xbc] sm:$0xf]
  %v143 = vld [vmem:[%s1 + $0xc0] sm:$0xf]
  %v144 = vld [vmem:[%s1 + $0xc4] sm:$0xf]
  %v145 = vld [vmem:[%s1 + $0xc8] sm:$0xf]
  %v146 = vld [vmem:[%s1 + $0xcc] sm:$0xf]
  %v147 = vld [vmem:[%s1 + $0xd0] sm:$0xf]
  %v148 = vld [vmem:[%s1 + $0xd4] sm:$0xf]
  %v149 = vld [vmem:[%s1 + $0xd8] sm:$0xf]
  %v150 = vld [vmem:[%s1 + $0xdc] sm:$0xf]
  %v151 = vld [vmem:[%s1 + $0xe0] sm:$0xf]
  %v152 = vld [vmem:[%s1 + $0xe4] sm:$0xf]
  %v153 = vld [vmem:[%s1 + $0xe8] sm:$0xf]
  %v154 = vld [vmem:[%s1 + $0xec] sm:$0xf]
  %v155 = vld [vmem:[%s1 + $0xf0] sm:$0xf]
  %v156 = vld [vmem:[%s1 + $0xf4] sm:$0xf]
  %v157 = vld [vmem:[%s1 + $0xf8] sm:$0xf]
  %v158 = vld [vmem:[%s1 + $0xfc] sm:$0xf]
  %v159 = vld [vmem:[%s1 + $0x100] sm:$0xf]
  %v160 = vld [vmem:[%s1 + $0x104] sm:$0xf]
  %v161 = vld [vmem:[%s1 + $0x108] sm:$0xf]
  %v162 = vld [vmem:[%s1 + $0x10c] sm:$0xf]
  %v163 = vld [vmem:[%s1 + $0x110] sm:$0xf]
  %v164 = vld [vmem:[%s1 + $0x114] sm:$0xf]
  %v165 = vld [vmem:[%s1 + $0x118] sm:$0xf]
  %v166 = vld [vmem:[%s1 + $0x11c] sm:$0xf]
  %v167 = vld [vmem:[%s1 + $0x120] sm:$0xf]
  %v168 = vld [vmem:[%s1 + $0x124] sm:$0xf]
  %v169 = vld [vmem:[%s1 + $0x128] sm:$0xf]
  %v170 = vld [vmem:[%s1 + $0x12c] sm:$0xf]
  %v171 = vld [vmem:[%s1 + $0x130] sm:$0xf]
  %v172 = vld [vmem:[%s1 + $0x134] sm:$0xf]
  %v173 = vld [vmem:[%s1 + $0x138] sm:$0xf]
  %v174 = vld [vmem:[%s1 + $0x13c] sm:$0xf]
  %v175 = vld [vmem:[%s1 + $0x140] sm:$0xf]
  %v176 = vld [vmem:[%s1 + $0x144] sm:$0xf]
  %v177 = vld [vmem:[%s1 + $0x148] sm:$0xf]
  %v178 = vld [vmem:[%s1 + $0x14c] sm:$0xf]
  %v179 = vld [vmem:[%s1 + $0x150] sm:$0xf]
  %v180 = vld [vmem:[%s1 + $0x154] sm:$0xf]
  %v181 = vld [vmem:[%s1 + $0x158] sm:$0xf]
  %v182 = vld [vmem:[%s1 + $0x15c] sm:$0xf]
  %v183 = vld [vmem:[%s1 + $0x160] sm:$0xf]
  %v184 = vld [vmem:[%s1 + $0x164] sm:$0xf]
  %v185 = vld [vmem:[%s1 + $0x168] sm:$0xf]
  %v186 = vld [vmem:[%s1 + $0x16c] sm:$0xf]
  %v187 = vld [vmem:[%s1 + $0x170] sm:$0xf]
  %v188 = vld [vmem:[%s1 + $0x174] sm:$0xf]
  %v189 = vld [vmem:[%s1 + $0x178] sm:$0xf]
  %v190 = vld [vmem:[%s1 + $0x17c] sm:$0xf]
  %v191 = vld [vmem:[%s1 + $0x180] sm:$0xf]
  %v192 = vld [vmem:[%s1 + $0x184] sm:$0xf]
  %v193 = vld [vmem:[%s1 + $0x188] sm:$0xf]
  %v194 = vld [vmem:[%s1 + $0x18c] sm:$0xf]
  %v195 = vld [vmem:[%s1 + $0x190] sm:$0xf]
  %v196 = vld [vmem:[%s1 + $0x194] sm:$0xf]
  %v197 = vld [vmem:[%s1 + $0x198] sm:$0xf]
  %v198 = vld [vmem:[%s1 + $0x19c] sm:$0xf]
  %v199 = vld [vmem:[%s1 + $0x1a0] sm:$0xf]
  %v200 = vld [vmem:[%s1 + $0x1a4] sm:$0xf]
  %v201 = vld [vmem:[%s1 + $0x1a8] sm:$0xf]
  %v202 = vld [vmem:[%s1 + $0x1ac] sm:$0xf]
  %v203 = vld [vmem:[%s1 + $0x1b0] sm:$0xf]
  %v204 = vld [vmem:[%s1 + $0x1b4] sm:$0xf]
  %v205 = vld [vmem:[%s1 + $0x1b8] sm:$0xf]
  %v206 = vld [vmem:[%s1 + $0x1bc] sm:$0xf]
  %v207 = vld [vmem:[%s1 + $0x1c0] sm:$0xf]
  %v208 = vld [vmem:[%s1 + $0x1c4] sm:$0xf]
  %v209 = vld [vmem:[%s1 + $0x1c8] sm:$0xf]
  %v210 = vld [vmem:[%s1 + $0x1cc] sm:$0xf]
  %v211 = vld [vmem:[%s1 + $0x1d0] sm:$0xf]
  %v212 = vld [vmem:[%s1 + $0x1d4] sm:$0xf]
  %v213 = vld [vmem:[%s1 + $0x1d8] sm:$0xf]
  %v214 = vld [vmem:[%s1 + $0x1dc] sm:$0xf]
  %v215 = vld [vmem:[%s1 + $0x1e0] sm:$0xf]
  %v216 = vld [vmem:[%s1 + $0x1e4] sm:$0xf]
  %v217 = vld [vmem:[%s1 + $0x1e8] sm:$0xf]
  %v218 = vld [vmem:[%s1 + $0x1ec] sm:$0xf]
  %v219 = vld [vmem:[%s1 + $0x1f0] sm:$0xf]
  %v220 = vld [vmem:[%s1 + $0x1f4] sm:$0xf]
  %v221 = vld [vmem:[%s1 + $0x1f8] sm:$0xf]
  %v222 = vld [vmem:[%s1 + $0x1fc] sm:$0xf]
  %v223 = vld [vmem:[%s1 + $0x200] sm:$0xf]
  %v224 = vld [vmem:[%s1 + $0x204] sm:$0xf]
  %v225 = vld [vmem:[%s1 + $0x208] sm:$0xf]
  %v226 = vld [vmem:[%s1 + $0x20c] sm:$0xf]
  %v227 = vld [vmem:[%s1 + $0x210] sm:$0xf]
  %v228 = vld [vmem:[%s1 + $0x214] sm:$0xf]
  %v229 = vld [vmem:[%s1 + $0x218] sm:$0xf]
  %v230 = vld [vmem:[%s1 + $0x21c] sm:$0xf]
  %v231 = vld [vmem:[%s1 + $0x220] sm:$0xf]
  %v232 = vld [vmem:[%s1 + $0x224] sm:$0xf]
  %v233 = vld [vmem:[%s1 + $0x228] sm:$0xf]
  %v234 = vld [vmem:[%s1 + $0x22c] sm:$0xf]
  %v235 = vld [vmem:[%s1 + $0x230] sm:$0xf]
  %v236 = vld [vmem:[%s1 + $0x234] sm:$0xf]
  %v237 = vld [vmem:[%s1 + $0x238] sm:$0xf]
  %v238 = vld [vmem:[%s1 + $0x23c] sm:$0xf]
  %v239 = vld [vmem:[%s2] sm:$0x1]
  %v241 = vlaneseq
  %v242 = vshrl.u32 %v241, 7
  %v243 = vsub.s32 0, %v242
  %v244 = vrot.slane %v239, %v243
  %v326 = vunpack.c.l.b16 %v15
  %v327 = vunpack.c.h.b16 %v15
  %v328 = vunpack.c.l.b16 %v16
  %v329 = vunpack.c.h.b16 %v16
  %v330 = vunpack.c.l.b16 %v17
  %v331 = vunpack.c.h.b16 %v17
  %v332 = vunpack.c.l.b16 %v18
  %v333 = vunpack.c.h.b16 %v18
  %v334 = vunpack.c.l.b16 %v19
  %v335 = vunpack.c.l.b16 %v20
  %v336 = vunpack.c.h.b16 %v20
  %v337 = vunpack.c.l.b16 %v21
  %v338 = vunpack.c.h.b16 %v21
  %v339 = vunpack.c.l.b16 %v22
  %v340 = vunpack.c.h.b16 %v22
  %v341 = vunpack.c.l.b16 %v23
  %v342 = vunpack.c.h.b16 %v23
  %v343 = vunpack.c.l.b16 %v24
  %v344 = vunpack.c.l.b16 %v25
  %v345 = vunpack.c.h.b16 %v25
  %v346 = vunpack.c.l.b16 %v26
  %v347 = vunpack.c.h.b16 %v26
  %v348 = vunpack.c.l.b16 %v27
  %v349 = vunpack.c.h.b16 %v27
  %v350 = vunpack.c.l.b16 %v28
  %v351 = vunpack.c.h.b16 %v28
  %v352 = vunpack.c.l.b16 %v29
  %v353 = vunpack.c.l.b16 %v30
  %v354 = vunpack.c.h.b16 %v30
  %v355 = vunpack.c.l.b16 %v31
  %v356 = vunpack.c.h.b16 %v31
  %v357 = vunpack.c.l.b16 %v32
  %v358 = vunpack.c.h.b16 %v32
  %v359 = vunpack.c.l.b16 %v33
  %v360 = vunpack.c.h.b16 %v33
  %v361 = vunpack.c.l.b16 %v34
  %v362 = vunpack.c.l.b16 %v35
  %v363 = vunpack.c.h.b16 %v35
  %v364 = vunpack.c.l.b16 %v36
  %v365 = vunpack.c.h.b16 %v36
  %v366 = vunpack.c.l.b16 %v37
  %v367 = vunpack.c.h.b16 %v37
  %v368 = vunpack.c.l.b16 %v38
  %v369 = vunpack.c.h.b16 %v38
  %v370 = vunpack.c.l.b16 %v39
  %v371 = vunpack.c.l.b16 %v40
  %v372 = vunpack.c.h.b16 %v40
  %v373 = vunpack.c.l.b16 %v41
  %v374 = vunpack.c.h.b16 %v41
  %v375 = vunpack.c.l.b16 %v42
  %v376 = vunpack.c.h.b16 %v42
  %v377 = vunpack.c.l.b16 %v43
  %v378 = vunpack.c.h.b16 %v43
  %v379 = vunpack.c.l.b16 %v44
  %v380 = vunpack.c.l.b16 %v45
  %v381 = vunpack.c.h.b16 %v45
  %v382 = vunpack.c.l.b16 %v46
  %v383 = vunpack.c.h.b16 %v46
  %v384 = vunpack.c.l.b16 %v47
  %v385 = vunpack.c.h.b16 %v47
  %v386 = vunpack.c.l.b16 %v48
  %v387 = vunpack.c.h.b16 %v48
  %v388 = vunpack.c.l.b16 %v49
  %v389 = vunpack.c.l.b16 %v50
  %v390 = vunpack.c.h.b16 %v50
  %v391 = vunpack.c.l.b16 %v51
  %v392 = vunpack.c.h.b16 %v51
  %v393 = vunpack.c.l.b16 %v52
  %v394 = vunpack.c.h.b16 %v52
  %v395 = vunpack.c.l.b16 %v53
  %v396 = vunpack.c.h.b16 %v53
  %v397 = vunpack.c.l.b16 %v54
  %v398 = vunpack.c.l.b16 %v55
  %v399 = vunpack.c.h.b16 %v55
  %v400 = vunpack.c.l.b16 %v56
  %v401 = vunpack.c.h.b16 %v56
  %v402 = vunpack.c.l.b16 %v57
  %v403 = vunpack.c.h.b16 %v57
  %v404 = vunpack.c.l.b16 %v58
  %v405 = vunpack.c.h.b16 %v58
  %v406 = vunpack.c.l.b16 %v59
  %v407 = vunpack.c.l.b16 %v60
  %v408 = vunpack.c.h.b16 %v60
  %v409 = vunpack.c.l.b16 %v61
  %v410 = vunpack.c.h.b16 %v61
  %v411 = vunpack.c.l.b16 %v62
  %v412 = vunpack.c.h.b16 %v62
  %v413 = vunpack.c.l.b16 %v63
  %v414 = vunpack.c.h.b16 %v63
  %v415 = vunpack.c.l.b16 %v64
  %v416 = vunpack.c.l.b16 %v65
  %v417 = vunpack.c.h.b16 %v65
  %v418 = vunpack.c.l.b16 %v66
  %v419 = vunpack.c.h.b16 %v66
  %v420 = vunpack.c.l.b16 %v67
  %v421 = vunpack.c.h.b16 %v67
  %v422 = vunpack.c.l.b16 %v68
  %v423 = vunpack.c.h.b16 %v68
  %v424 = vunpack.c.l.b16 %v69
  %v425 = vunpack.c.l.b16 %v70
  %v426 = vunpack.c.h.b16 %v70
  %v427 = vunpack.c.l.b16 %v71
  %v428 = vunpack.c.h.b16 %v71
  %v429 = vunpack.c.l.b16 %v72
  %v430 = vunpack.c.h.b16 %v72
  %v431 = vunpack.c.l.b16 %v73
  %v432 = vunpack.c.h.b16 %v73
  %v433 = vunpack.c.l.b16 %v74
  %v434 = vunpack.c.l.b16 %v75
  %v435 = vunpack.c.h.b16 %v75
  %v436 = vunpack.c.l.b16 %v76
  %v437 = vunpack.c.h.b16 %v76
  %v438 = vunpack.c.l.b16 %v77
  %v439 = vunpack.c.h.b16 %v77
  %v440 = vunpack.c.l.b16 %v78
  %v441 = vunpack.c.h.b16 %v78
  %v442 = vunpack.c.l.b16 %v79
  %v443 = vunpack.c.l.b16 %v80
  %v444 = vunpack.c.h.b16 %v80
  %v445 = vunpack.c.l.b16 %v81
  %v446 = vunpack.c.h.b16 %v81
  %v447 = vunpack.c.l.b16 %v82
  %v448 = vunpack.c.h.b16 %v82
  %v449 = vunpack.c.l.b16 %v83
  %v450 = vunpack.c.h.b16 %v83
  %v451 = vunpack.c.l.b16 %v84
  %v452 = vunpack.c.l.b16 %v85
  %v453 = vunpack.c.h.b16 %v85
  %v454 = vunpack.c.l.b16 %v86
  %v455 = vunpack.c.h.b16 %v86
  %v456 = vunpack.c.l.b16 %v87
  %v457 = vunpack.c.h.b16 %v87
  %v458 = vunpack.c.l.b16 %v88
  %v459 = vunpack.c.h.b16 %v88
  %v460 = vunpack.c.l.b16 %v89
  %v461 = vunpack.c.l.b16 %v90
  %v462 = vunpack.c.h.b16 %v90
  %v463 = vunpack.c.l.b16 %v91
  %v464 = vunpack.c.h.b16 %v91
  %v465 = vunpack.c.l.b16 %v92
  %v466 = vunpack.c.h.b16 %v92
  %v467 = vunpack.c.l.b16 %v93
  %v468 = vunpack.c.h.b16 %v93
  %v469 = vunpack.c.l.b16 %v94
  %v470 = vpack.c.b16 %v335, %v326
  %v471 = vpack.c.b16 %v336, %v327
  %v472 = vpack.c.b16 %v337, %v328
  %v473 = vpack.c.b16 %v338, %v329
  %v474 = vpack.c.b16 %v339, %v330
  %v475 = vpack.c.b16 %v340, %v331
  %v476 = vpack.c.b16 %v341, %v332
  %v477 = vpack.c.b16 %v342, %v333
  %v478 = vpack.c.b16 %v343, %v334
  %v479 = vpack.c.b16 %v353, %v344
  %v480 = vpack.c.b16 %v354, %v345
  %v481 = vpack.c.b16 %v355, %v346
  %v482 = vpack.c.b16 %v356, %v347
  %v483 = vpack.c.b16 %v357, %v348
  %v484 = vpack.c.b16 %v358, %v349
  %v485 = vpack.c.b16 %v359, %v350
  %v486 = vpack.c.b16 %v360, %v351
  %v487 = vpack.c.b16 %v361, %v352
  %v488 = vpack.c.b16 %v371, %v362
  %v489 = vpack.c.b16 %v372, %v363
  %v490 = vpack.c.b16 %v373, %v364
  %v491 = vpack.c.b16 %v374, %v365
  %v492 = vpack.c.b16 %v375, %v366
  %v493 = vpack.c.b16 %v376, %v367
  %v494 = vpack.c.b16 %v377, %v368
  %v495 = vpack.c.b16 %v378, %v369
  %v496 = vpack.c.b16 %v379, %v370
  %v497 = vpack.c.b16 %v389, %v380
  %v498 = vpack.c.b16 %v390, %v381
  %v499 = vpack.c.b16 %v391, %v382
  %v500 = vpack.c.b16 %v392, %v383
  %v501 = vpack.c.b16 %v393, %v384
  %v502 = vpack.c.b16 %v394, %v385
  %v503 = vpack.c.b16 %v395, %v386
  %v504 = vpack.c.b16 %v396, %v387
  %v505 = vpack.c.b16 %v397, %v388
  %v506 = vpack.c.b16 %v407, %v398
  %v507 = vpack.c.b16 %v408, %v399
  %v508 = vpack.c.b16 %v409, %v400
  %v509 = vpack.c.b16 %v410, %v401
  %v510 = vpack.c.b16 %v411, %v402
  %v511 = vpack.c.b16 %v412, %v403
  %v512 = vpack.c.b16 %v413, %v404
  %v513 = vpack.c.b16 %v414, %v405
  %v514 = vpack.c.b16 %v415, %v406
  %v515 = vpack.c.b16 %v425, %v416
  %v516 = vpack.c.b16 %v426, %v417
  %v517 = vpack.c.b16 %v427, %v418
  %v518 = vpack.c.b16 %v428, %v419
  %v519 = vpack.c.b16 %v429, %v420
  %v520 = vpack.c.b16 %v430, %v421
  %v521 = vpack.c.b16 %v431, %v422
  %v522 = vpack.c.b16 %v432, %v423
  %v523 = vpack.c.b16 %v433, %v424
  %v524 = vpack.c.b16 %v443, %v434
  %v525 = vpack.c.b16 %v444, %v435
  %v526 = vpack.c.b16 %v445, %v436
  %v527 = vpack.c.b16 %v446, %v437
  %v528 = vpack.c.b16 %v447, %v438
  %v529 = vpack.c.b16 %v448, %v439
  %v530 = vpack.c.b16 %v449, %v440
  %v531 = vpack.c.b16 %v450, %v441
  %v532 = vpack.c.b16 %v451, %v442
  %v533 = vpack.c.b16 %v461, %v452
  %v534 = vpack.c.b16 %v462, %v453
  %v535 = vpack.c.b16 %v463, %v454
  %v536 = vpack.c.b16 %v464, %v455
  %v537 = vpack.c.b16 %v465, %v456
  %v538 = vpack.c.b16 %v466, %v457
  %v539 = vpack.c.b16 %v467, %v458
  %v540 = vpack.c.b16 %v468, %v459
  %v541 = vpack.c.b16 %v469, %v460
  %v758 = vunpack.c.l.b16 %v95
  %v759 = vunpack.c.l.b16 %v96
  %v760 = vunpack.c.l.b16 %v97
  %v761 = vunpack.c.l.b16 %v98
  %v762 = vunpack.c.l.b16 %v99
  %v763 = vunpack.c.l.b16 %v100
  %v764 = vunpack.c.l.b16 %v101
  %v765 = vunpack.c.l.b16 %v102
  %v766 = vunpack.c.l.b16 %v103
  %v767 = vunpack.c.l.b16 %v104
  %v768 = vunpack.c.l.b16 %v105
  %v769 = vunpack.c.l.b16 %v106
  %v770 = vunpack.c.l.b16 %v107
  %v771 = vunpack.c.l.b16 %v108
  %v772 = vunpack.c.l.b16 %v109
  %v773 = vunpack.c.l.b16 %v110
  %v774 = vunpack.c.l.b16 %v111
  %v775 = vunpack.c.l.b16 %v112
  %v776 = vunpack.c.l.b16 %v113
  %v777 = vunpack.c.l.b16 %v114
  %v778 = vunpack.c.l.b16 %v115
  %v779 = vunpack.c.l.b16 %v116
  %v780 = vunpack.c.l.b16 %v117
  %v781 = vunpack.c.l.b16 %v118
  %v782 = vunpack.c.l.b16 %v119
  %v783 = vunpack.c.l.b16 %v120
  %v784 = vunpack.c.l.b16 %v121
  %v785 = vunpack.c.l.b16 %v122
  %v786 = vunpack.c.l.b16 %v123
  %v787 = vunpack.c.l.b16 %v124
  %v788 = vunpack.c.l.b16 %v125
  %v789 = vunpack.c.l.b16 %v126
  %v790 = vunpack.c.l.b16 %v127
  %v791 = vunpack.c.l.b16 %v128
  %v792 = vunpack.c.l.b16 %v129
  %v793 = vunpack.c.l.b16 %v130
  %v794 = vunpack.c.l.b16 %v131
  %v795 = vunpack.c.l.b16 %v132
  %v796 = vunpack.c.l.b16 %v133
  %v797 = vunpack.c.l.b16 %v134
  %v798 = vunpack.c.l.b16 %v135
  %v799 = vunpack.c.l.b16 %v136
  %v800 = vunpack.c.l.b16 %v137
  %v801 = vunpack.c.l.b16 %v138
  %v802 = vunpack.c.l.b16 %v139
  %v803 = vunpack.c.l.b16 %v140
  %v804 = vunpack.c.l.b16 %v141
  %v805 = vunpack.c.l.b16 %v142
  %v806 = vunpack.c.l.b16 %v143
  %v807 = vunpack.c.l.b16 %v144
  %v808 = vunpack.c.l.b16 %v145
  %v809 = vunpack.c.l.b16 %v146
  %v810 = vunpack.c.l.b16 %v147
  %v811 = vunpack.c.l.b16 %v148
  %v812 = vunpack.c.l.b16 %v149
  %v813 = vunpack.c.l.b16 %v150
  %v814 = vunpack.c.l.b16 %v151
  %v815 = vunpack.c.l.b16 %v152
  %v816 = vunpack.c.l.b16 %v153
  %v817 = vunpack.c.l.b16 %v154
  %v818 = vunpack.c.l.b16 %v155
  %v819 = vunpack.c.l.b16 %v156
  %v820 = vunpack.c.l.b16 %v157
  %v821 = vunpack.c.l.b16 %v158
  %v822 = vunpack.c.l.b16 %v159
  %v823 = vunpack.c.l.b16 %v160
  %v824 = vunpack.c.l.b16 %v161
  %v825 = vunpack.c.l.b16 %v162
  %v826 = vunpack.c.l.b16 %v163
  %v827 = vunpack.c.l.b16 %v164
  %v828 = vunpack.c.l.b16 %v165
  %v829 = vunpack.c.l.b16 %v166
  %v830 = vunpack.c.l.b16 %v167
  %v831 = vunpack.c.l.b16 %v168
  %v832 = vunpack.c.l.b16 %v169
  %v833 = vunpack.c.l.b16 %v170
  %v834 = vunpack.c.l.b16 %v171
  %v835 = vunpack.c.l.b16 %v172
  %v836 = vunpack.c.l.b16 %v173
  %v837 = vunpack.c.l.b16 %v174
  %v838 = vunpack.c.l.b16 %v175
  %v839 = vunpack.c.l.b16 %v176
  %v840 = vunpack.c.l.b16 %v177
  %v841 = vunpack.c.l.b16 %v178
  %v842 = vunpack.c.l.b16 %v179
  %v843 = vunpack.c.l.b16 %v180
  %v844 = vunpack.c.l.b16 %v181
  %v845 = vunpack.c.l.b16 %v182
  %v846 = vunpack.c.l.b16 %v183
  %v847 = vunpack.c.l.b16 %v184
  %v848 = vunpack.c.l.b16 %v185
  %v849 = vunpack.c.l.b16 %v186
  %v850 = vunpack.c.l.b16 %v187
  %v851 = vunpack.c.l.b16 %v188
  %v852 = vunpack.c.l.b16 %v189
  %v853 = vunpack.c.l.b16 %v190
  %v854 = vunpack.c.l.b16 %v191
  %v855 = vunpack.c.l.b16 %v192
  %v856 = vunpack.c.l.b16 %v193
  %v857 = vunpack.c.l.b16 %v194
  %v858 = vunpack.c.l.b16 %v195
  %v859 = vunpack.c.l.b16 %v196
  %v860 = vunpack.c.l.b16 %v197
  %v861 = vunpack.c.l.b16 %v198
  %v862 = vunpack.c.l.b16 %v199
  %v863 = vunpack.c.l.b16 %v200
  %v864 = vunpack.c.l.b16 %v201
  %v865 = vunpack.c.l.b16 %v202
  %v866 = vunpack.c.l.b16 %v203
  %v867 = vunpack.c.l.b16 %v204
  %v868 = vunpack.c.l.b16 %v205
  %v869 = vunpack.c.l.b16 %v206
  %v870 = vunpack.c.l.b16 %v207
  %v871 = vunpack.c.l.b16 %v208
  %v872 = vunpack.c.l.b16 %v209
  %v873 = vunpack.c.l.b16 %v210
  %v874 = vunpack.c.l.b16 %v211
  %v875 = vunpack.c.l.b16 %v212
  %v876 = vunpack.c.l.b16 %v213
  %v877 = vunpack.c.l.b16 %v214
  %v878 = vunpack.c.l.b16 %v215
  %v879 = vunpack.c.l.b16 %v216
  %v880 = vunpack.c.l.b16 %v217
  %v881 = vunpack.c.l.b16 %v218
  %v882 = vunpack.c.l.b16 %v219
  %v883 = vunpack.c.l.b16 %v220
  %v884 = vunpack.c.l.b16 %v221
  %v885 = vunpack.c.l.b16 %v222
  %v886 = vunpack.c.l.b16 %v223
  %v887 = vunpack.c.l.b16 %v224
  %v888 = vunpack.c.l.b16 %v225
  %v889 = vunpack.c.l.b16 %v226
  %v890 = vunpack.c.l.b16 %v227
  %v891 = vunpack.c.l.b16 %v228
  %v892 = vunpack.c.l.b16 %v229
  %v893 = vunpack.c.l.b16 %v230
  %v894 = vunpack.c.l.b16 %v231
  %v895 = vunpack.c.l.b16 %v232
  %v896 = vunpack.c.l.b16 %v233
  %v897 = vunpack.c.l.b16 %v234
  %v898 = vunpack.c.l.b16 %v235
  %v899 = vunpack.c.l.b16 %v236
  %v900 = vunpack.c.l.b16 %v237
  %v901 = vunpack.c.l.b16 %v238
  %v902 = vpack.c.b16 %v759, %v758
  %v903 = vpack.c.b16 %v761, %v760
  %v904 = vpack.c.b16 %v763, %v762
  %v905 = vpack.c.b16 %v765, %v764
  %v906 = vpack.c.b16 %v767, %v766
  %v907 = vpack.c.b16 %v769, %v768
  %v908 = vpack.c.b16 %v771, %v770
  %v909 = vpack.c.b16 %v773, %v772
  %v910 = vpack.c.b16 %v775, %v774
  %v911 = vpack.c.b16 %v777, %v776
  %v912 = vpack.c.b16 %v779, %v778
  %v913 = vpack.c.b16 %v781, %v780
  %v914 = vpack.c.b16 %v783, %v782
  %v915 = vpack.c.b16 %v785, %v784
  %v916 = vpack.c.b16 %v787, %v786
  %v917 = vpack.c.b16 %v789, %v788
  %v918 = vpack.c.b16 %v791, %v790
  %v919 = vpack.c.b16 %v793, %v792
  %v920 = vpack.c.b16 %v795, %v794
  %v921 = vpack.c.b16 %v797, %v796
  %v922 = vpack.c.b16 %v799, %v798
  %v923 = vpack.c.b16 %v801, %v800
  %v924 = vpack.c.b16 %v803, %v802
  %v925 = vpack.c.b16 %v805, %v804
  %v926 = vpack.c.b16 %v807, %v806
  %v927 = vpack.c.b16 %v809, %v808
  %v928 = vpack.c.b16 %v811, %v810
  %v929 = vpack.c.b16 %v813, %v812
  %v930 = vpack.c.b16 %v815, %v814
  %v931 = vpack.c.b16 %v817, %v816
  %v932 = vpack.c.b16 %v819, %v818
  %v933 = vpack.c.b16 %v821, %v820
  %v934 = vpack.c.b16 %v823, %v822
  %v935 = vpack.c.b16 %v825, %v824
  %v936 = vpack.c.b16 %v827, %v826
  %v937 = vpack.c.b16 %v829, %v828
  %v938 = vpack.c.b16 %v831, %v830
  %v939 = vpack.c.b16 %v833, %v832
  %v940 = vpack.c.b16 %v835, %v834
  %v941 = vpack.c.b16 %v837, %v836
  %v942 = vpack.c.b16 %v839, %v838
  %v943 = vpack.c.b16 %v841, %v840
  %v944 = vpack.c.b16 %v843, %v842
  %v945 = vpack.c.b16 %v845, %v844
  %v946 = vpack.c.b16 %v847, %v846
  %v947 = vpack.c.b16 %v849, %v848
  %v948 = vpack.c.b16 %v851, %v850
  %v949 = vpack.c.b16 %v853, %v852
  %v950 = vpack.c.b16 %v855, %v854
  %v951 = vpack.c.b16 %v857, %v856
  %v952 = vpack.c.b16 %v859, %v858
  %v953 = vpack.c.b16 %v861, %v860
  %v954 = vpack.c.b16 %v863, %v862
  %v955 = vpack.c.b16 %v865, %v864
  %v956 = vpack.c.b16 %v867, %v866
  %v957 = vpack.c.b16 %v869, %v868
  %v958 = vpack.c.b16 %v871, %v870
  %v959 = vpack.c.b16 %v873, %v872
  %v960 = vpack.c.b16 %v875, %v874
  %v961 = vpack.c.b16 %v877, %v876
  %v962 = vpack.c.b16 %v879, %v878
  %v963 = vpack.c.b16 %v881, %v880
  %v964 = vpack.c.b16 %v883, %v882
  %v965 = vpack.c.b16 %v885, %v884
  %v966 = vpack.c.b16 %v887, %v886
  %v967 = vpack.c.b16 %v889, %v888
  %v968 = vpack.c.b16 %v891, %v890
  %v969 = vpack.c.b16 %v893, %v892
  %v970 = vpack.c.b16 %v895, %v894
  %v971 = vpack.c.b16 %v897, %v896
  %v972 = vpack.c.b16 %v899, %v898
  %v973 = vpack.c.b16 %v901, %v900
  %1046 = vmatprep.subr.bf16.mxu0 0
  %1047 = vmatpush1.bf16.msra.mxu0 %v909
  %1048 = vmatprep.subr.bf16.mxu0 0
  %1049 = vmatpush1.bf16.msra.mxu0 %v908
  %1050 = vmatprep.subr.bf16.mxu0 0
  %1051 = vmatpush1.bf16.msra.mxu0 %v907
  %1052 = vmatprep.subr.bf16.mxu0 0
  %1053 = vmatpush1.bf16.msra.mxu0 %v906
  %1054 = vmatprep.subr.bf16.mxu0 0
  %1055 = vmatpush1.bf16.msra.mxu0 %v905
  %1056 = vmatprep.subr.bf16.mxu0 0
  %1057 = vmatpush1.bf16.msra.mxu0 %v904
  %1058 = vmatprep.subr.bf16.mxu0 0
  %1059 = vmatpush1.bf16.msra.mxu0 %v903
  %1060 = vmatprep.subr.bf16.mxu0 0
  %1061 = vmatpush1.bf16.msra.mxu0 %v902
  %1062 = vmatprep.subr.bf16.mxu0 0
  %1063 = vmatpush2.bf16.msra.mxu0 %v917
  %1064 = vmatprep.subr.bf16.mxu0 0
  %1065 = vmatpush2.bf16.msra.mxu0 %v916
  %1066 = vmatprep.subr.bf16.mxu0 0
  %1067 = vmatpush2.bf16.msra.mxu0 %v915
  %1068 = vmatprep.subr.bf16.mxu0 0
  %1069 = vmatpush2.bf16.msra.mxu0 %v914
  %1070 = vmatprep.subr.bf16.mxu0 0
  %1071 = vmatpush2.bf16.msra.mxu0 %v913
  %1072 = vmatprep.subr.bf16.mxu0 0
  %1073 = vmatpush2.bf16.msra.mxu0 %v912
  %1074 = vmatprep.subr.bf16.mxu0 0
  %1075 = vmatpush2.bf16.msra.mxu0 %v911
  %1076 = vmatprep.subr.bf16.mxu0 0
  %1077 = vmatpush2.bf16.msra.mxu0 %v910
  %1078 = vmatprep.mubr.bf16.mxu0 %v471
  %1079 = vmatmul.mubr.bf16.gmra.mxu0 %v470
  %v1080 = vpop.f32.mrf.mxu0
  %v1081 = vadd.f32 %v244, %v1080
  %v1082 = vpop.f32.mrf.mxu0
  %v1083 = vpop.f32.mrf.mxu0
  %v1084 = vadd.f32 %v244, %v1083
  %v1085 = vpop.f32.mrf.mxu0
  %1086 = vmatprep.mubr.bf16.mxu0 %v480
  %1087 = vmatmul.mubr.bf16.gmra.mxu0 %v479
  %v1088 = vpop.f32.mrf.mxu0
  %v1089 = vadd.f32 %v244, %v1088
  %v1090 = vpop.f32.mrf.mxu0
  %v1091 = vpop.f32.mrf.mxu0
  %v1092 = vadd.f32 %v244, %v1091
  %v1093 = vpop.f32.mrf.mxu0
  %1094 = vmatprep.mubr.bf16.mxu0 %v489
  %1095 = vmatmul.mubr.bf16.gmra.mxu0 %v488
  %v1096 = vpop.f32.mrf.mxu0
  %v1097 = vadd.f32 %v244, %v1096
  %v1098 = vpop.f32.mrf.mxu0
  %v1099 = vpop.f32.mrf.mxu0
  %v1100 = vadd.f32 %v244, %v1099
  %v1101 = vpop.f32.mrf.mxu0
  %1102 = vmatprep.mubr.bf16.mxu0 %v498
  %1103 = vmatmul.mubr.bf16.gmra.mxu0 %v497
  %v1104 = vpop.f32.mrf.mxu0
  %v1105 = vadd.f32 %v244, %v1104
  %v1106 = vpop.f32.mrf.mxu0
  %v1107 = vpop.f32.mrf.mxu0
  %v1108 = vadd.f32 %v244, %v1107
  %v1109 = vpop.f32.mrf.mxu0
  %1110 = vmatprep.mubr.bf16.mxu0 %v507
  %1111 = vmatmul.mubr.bf16.gmra.mxu0 %v506
  %v1112 = vpop.f32.mrf.mxu0
  %v1113 = vadd.f32 %v244, %v1112
  %v1114 = vpop.f32.mrf.mxu0
  %v1115 = vpop.f32.mrf.mxu0
  %v1116 = vadd.f32 %v244, %v1115
  %v1117 = vpop.f32.mrf.mxu0
  %1118 = vmatprep.mubr.bf16.mxu0 %v516
  %1119 = vmatmul.mubr.bf16.gmra.mxu0 %v515
  %v1120 = vpop.f32.mrf.mxu0
  %v1121 = vadd.f32 %v244, %v1120
  %v1122 = vpop.f32.mrf.mxu0
  %v1123 = vpop.f32.mrf.mxu0
  %v1124 = vadd.f32 %v244, %v1123
  %v1125 = vpop.f32.mrf.mxu0
  %1126 = vmatprep.mubr.bf16.mxu0 %v525
  %1127 = vmatmul.mubr.bf16.gmra.mxu0 %v524
  %v1128 = vpop.f32.mrf.mxu0
  %v1129 = vadd.f32 %v244, %v1128
  %v1130 = vpop.f32.mrf.mxu0
  %v1131 = vpop.f32.mrf.mxu0
  %v1132 = vadd.f32 %v244, %v1131
  %v1133 = vpop.f32.mrf.mxu0
  %1134 = vmatprep.mubr.bf16.mxu0 %v534
  %1135 = vmatmul.mubr.bf16.gmra.mxu0 %v533
  %v1136 = vpop.f32.mrf.mxu0
  %v1137 = vadd.f32 %v244, %v1136
  %v1138 = vpop.f32.mrf.mxu0
  %v1139 = vpop.f32.mrf.mxu0
  %v1140 = vadd.f32 %v244, %v1139
  %v1141 = vpop.f32.mrf.mxu0
  %1142 = vdwg.mxu0
  %1143 = vmatprep.subr.bf16.mxu0 0
  %1144 = vmatpush1.bf16.msra.mxu0 %v925
  %1145 = vmatprep.subr.bf16.mxu0 0
  %1146 = vmatpush1.bf16.msra.mxu0 %v924
  %1147 = vmatprep.subr.bf16.mxu0 0
  %1148 = vmatpush1.bf16.msra.mxu0 %v923
  %1149 = vmatprep.subr.bf16.mxu0 0
  %1150 = vmatpush1.bf16.msra.mxu0 %v922
  %1151 = vmatprep.subr.bf16.mxu0 0
  %1152 = vmatpush1.bf16.msra.mxu0 %v921
  %1153 = vmatprep.subr.bf16.mxu0 0
  %1154 = vmatpush1.bf16.msra.mxu0 %v920
  %1155 = vmatprep.subr.bf16.mxu0 0
  %1156 = vmatpush1.bf16.msra.mxu0 %v919
  %1157 = vmatprep.subr.bf16.mxu0 0
  %1158 = vmatpush1.bf16.msra.mxu0 %v918
  %1159 = vmatprep.subr.bf16.mxu0 0
  %1160 = vmatpush2.bf16.msra.mxu0 %v933
  %1161 = vmatprep.subr.bf16.mxu0 0
  %1162 = vmatpush2.bf16.msra.mxu0 %v932
  %1163 = vmatprep.subr.bf16.mxu0 0
  %1164 = vmatpush2.bf16.msra.mxu0 %v931
  %1165 = vmatprep.subr.bf16.mxu0 0
  %1166 = vmatpush2.bf16.msra.mxu0 %v930
  %1167 = vmatprep.subr.bf16.mxu0 0
  %1168 = vmatpush2.bf16.msra.mxu0 %v929
  %1169 = vmatprep.subr.bf16.mxu0 0
  %1170 = vmatpush2.bf16.msra.mxu0 %v928
  %1171 = vmatprep.subr.bf16.mxu0 0
  %1172 = vmatpush2.bf16.msra.mxu0 %v927
  %1173 = vmatprep.subr.bf16.mxu0 0
  %1174 = vmatpush2.bf16.msra.mxu0 %v926
  %1175 = vmatprep.mubr.bf16.mxu0 %v473
  %1176 = vmatmul.mubr.bf16.gmra.mxu0 %v472
  %v1177 = vpop.f32.mrf.mxu0
  %v1178 = vadd.f32 %v1081, %v1177
  %v1179 = vpop.f32.mrf.mxu0
  %v1180 = vpop.f32.mrf.mxu0
  %v1181 = vadd.f32 %v1084, %v1180
  %v1182 = vpop.f32.mrf.mxu0
  %1183 = vmatprep.mubr.bf16.mxu0 %v482
  %1184 = vmatmul.mubr.bf16.gmra.mxu0 %v481
  %v1185 = vpop.f32.mrf.mxu0
  %v1186 = vadd.f32 %v1089, %v1185
  %v1187 = vpop.f32.mrf.mxu0
  %v1188 = vpop.f32.mrf.mxu0
  %v1189 = vadd.f32 %v1092, %v1188
  %v1190 = vpop.f32.mrf.mxu0
  %1191 = vmatprep.mubr.bf16.mxu0 %v491
  %1192 = vmatmul.mubr.bf16.gmra.mxu0 %v490
  %v1193 = vpop.f32.mrf.mxu0
  %v1194 = vadd.f32 %v1097, %v1193
  %v1195 = vpop.f32.mrf.mxu0
  %v1196 = vpop.f32.mrf.mxu0
  %v1197 = vadd.f32 %v1100, %v1196
  %v1198 = vpop.f32.mrf.mxu0
  %1199 = vmatprep.mubr.bf16.mxu0 %v500
  %1200 = vmatmul.mubr.bf16.gmra.mxu0 %v499
  %v1201 = vpop.f32.mrf.mxu0
  %v1202 = vadd.f32 %v1105, %v1201
  %v1203 = vpop.f32.mrf.mxu0
  %v1204 = vpop.f32.mrf.mxu0
  %v1205 = vadd.f32 %v1108, %v1204
  %v1206 = vpop.f32.mrf.mxu0
  %1207 = vmatprep.mubr.bf16.mxu0 %v509
  %1208 = vmatmul.mubr.bf16.gmra.mxu0 %v508
  %v1209 = vpop.f32.mrf.mxu0
  %v1210 = vadd.f32 %v1113, %v1209
  %v1211 = vpop.f32.mrf.mxu0
  %v1212 = vpop.f32.mrf.mxu0
  %v1213 = vadd.f32 %v1116, %v1212
  %v1214 = vpop.f32.mrf.mxu0
  %1215 = vmatprep.mubr.bf16.mxu0 %v518
  %1216 = vmatmul.mubr.bf16.gmra.mxu0 %v517
  %v1217 = vpop.f32.mrf.mxu0
  %v1218 = vadd.f32 %v1121, %v1217
  %v1219 = vpop.f32.mrf.mxu0
  %v1220 = vpop.f32.mrf.mxu0
  %v1221 = vadd.f32 %v1124, %v1220
  %v1222 = vpop.f32.mrf.mxu0
  %1223 = vmatprep.mubr.bf16.mxu0 %v527
  %1224 = vmatmul.mubr.bf16.gmra.mxu0 %v526
  %v1225 = vpop.f32.mrf.mxu0
  %v1226 = vadd.f32 %v1129, %v1225
  %v1227 = vpop.f32.mrf.mxu0
  %v1228 = vpop.f32.mrf.mxu0
  %v1229 = vadd.f32 %v1132, %v1228
  %v1230 = vpop.f32.mrf.mxu0
  %1231 = vmatprep.mubr.bf16.mxu0 %v536
  %1232 = vmatmul.mubr.bf16.gmra.mxu0 %v535
  %v1233 = vpop.f32.mrf.mxu0
  %v1234 = vadd.f32 %v1137, %v1233
  %v1235 = vpop.f32.mrf.mxu0
  %v1236 = vpop.f32.mrf.mxu0
  %v1237 = vadd.f32 %v1140, %v1236
  %v1238 = vpop.f32.mrf.mxu0
  %1239 = vdwg.mxu0
  %1240 = vmatprep.subr.bf16.mxu0 0
  %1241 = vmatpush1.bf16.msra.mxu0 %v941
  %1242 = vmatprep.subr.bf16.mxu0 0
  %1243 = vmatpush1.bf16.msra.mxu0 %v940
  %1244 = vmatprep.subr.bf16.mxu0 0
  %1245 = vmatpush1.bf16.msra.mxu0 %v939
  %1246 = vmatprep.subr.bf16.mxu0 0
  %1247 = vmatpush1.bf16.msra.mxu0 %v938
  %1248 = vmatprep.subr.bf16.mxu0 0
  %1249 = vmatpush1.bf16.msra.mxu0 %v937
  %1250 = vmatprep.subr.bf16.mxu0 0
  %1251 = vmatpush1.bf16.msra.mxu0 %v936
  %1252 = vmatprep.subr.bf16.mxu0 0
  %1253 = vmatpush1.bf16.msra.mxu0 %v935
  %1254 = vmatprep.subr.bf16.mxu0 0
  %1255 = vmatpush1.bf16.msra.mxu0 %v934
  %1256 = vmatprep.subr.bf16.mxu0 0
  %1257 = vmatpush2.bf16.msra.mxu0 %v949
  %1258 = vmatprep.subr.bf16.mxu0 0
  %1259 = vmatpush2.bf16.msra.mxu0 %v948
  %1260 = vmatprep.subr.bf16.mxu0 0
  %1261 = vmatpush2.bf16.msra.mxu0 %v947
  %1262 = vmatprep.subr.bf16.mxu0 0
  %1263 = vmatpush2.bf16.msra.mxu0 %v946
  %1264 = vmatprep.subr.bf16.mxu0 0
  %1265 = vmatpush2.bf16.msra.mxu0 %v945
  %1266 = vmatprep.subr.bf16.mxu0 0
  %1267 = vmatpush2.bf16.msra.mxu0 %v944
  %1268 = vmatprep.subr.bf16.mxu0 0
  %1269 = vmatpush2.bf16.msra.mxu0 %v943
  %1270 = vmatprep.subr.bf16.mxu0 0
  %1271 = vmatpush2.bf16.msra.mxu0 %v942
  %1272 = vmatprep.mubr.bf16.mxu0 %v475
  %1273 = vmatmul.mubr.bf16.gmra.mxu0 %v474
  %v1274 = vpop.f32.mrf.mxu0
  %v1275 = vadd.f32 %v1178, %v1274
  %v1276 = vpop.f32.mrf.mxu0
  %v1277 = vpop.f32.mrf.mxu0
  %v1278 = vadd.f32 %v1181, %v1277
  %v1279 = vpop.f32.mrf.mxu0
  %1280 = vmatprep.mubr.bf16.mxu0 %v484
  %1281 = vmatmul.mubr.bf16.gmra.mxu0 %v483
  %v1282 = vpop.f32.mrf.mxu0
  %v1283 = vadd.f32 %v1186, %v1282
  %v1284 = vpop.f32.mrf.mxu0
  %v1285 = vpop.f32.mrf.mxu0
  %v1286 = vadd.f32 %v1189, %v1285
  %v1287 = vpop.f32.mrf.mxu0
  %1288 = vmatprep.mubr.bf16.mxu0 %v493
  %1289 = vmatmul.mubr.bf16.gmra.mxu0 %v492
  %v1290 = vpop.f32.mrf.mxu0
  %v1291 = vadd.f32 %v1194, %v1290
  %v1292 = vpop.f32.mrf.mxu0
  %v1293 = vpop.f32.mrf.mxu0
  %v1294 = vadd.f32 %v1197, %v1293
  %v1295 = vpop.f32.mrf.mxu0
  %1296 = vmatprep.mubr.bf16.mxu0 %v502
  %1297 = vmatmul.mubr.bf16.gmra.mxu0 %v501
  %v1298 = vpop.f32.mrf.mxu0
  %v1299 = vadd.f32 %v1202, %v1298
  %v1300 = vpop.f32.mrf.mxu0
  %v1301 = vpop.f32.mrf.mxu0
  %v1302 = vadd.f32 %v1205, %v1301
  %v1303 = vpop.f32.mrf.mxu0
  %1304 = vmatprep.mubr.bf16.mxu0 %v511
  %1305 = vmatmul.mubr.bf16.gmra.mxu0 %v510
  %v1306 = vpop.f32.mrf.mxu0
  %v1307 = vadd.f32 %v1210, %v1306
  %v1308 = vpop.f32.mrf.mxu0
  %v1309 = vpop.f32.mrf.mxu0
  %v1310 = vadd.f32 %v1213, %v1309
  %v1311 = vpop.f32.mrf.mxu0
  %1312 = vmatprep.mubr.bf16.mxu0 %v520
  %1313 = vmatmul.mubr.bf16.gmra.mxu0 %v519
  %v1314 = vpop.f32.mrf.mxu0
  %v1315 = vadd.f32 %v1218, %v1314
  %v1316 = vpop.f32.mrf.mxu0
  %v1317 = vpop.f32.mrf.mxu0
  %v1318 = vadd.f32 %v1221, %v1317
  %v1319 = vpop.f32.mrf.mxu0
  %1320 = vmatprep.mubr.bf16.mxu0 %v529
  %1321 = vmatmul.mubr.bf16.gmra.mxu0 %v528
  %v1322 = vpop.f32.mrf.mxu0
  %v1323 = vadd.f32 %v1226, %v1322
  %v1324 = vpop.f32.mrf.mxu0
  %v1325 = vpop.f32.mrf.mxu0
  %v1326 = vadd.f32 %v1229, %v1325
  %v1327 = vpop.f32.mrf.mxu0
  %1328 = vmatprep.mubr.bf16.mxu0 %v538
  %1329 = vmatmul.mubr.bf16.gmra.mxu0 %v537
  %v1330 = vpop.f32.mrf.mxu0
  %v1331 = vadd.f32 %v1234, %v1330
  %v1332 = vpop.f32.mrf.mxu0
  %v1333 = vpop.f32.mrf.mxu0
  %v1334 = vadd.f32 %v1237, %v1333
  %v1335 = vpop.f32.mrf.mxu0
  %1336 = vdwg.mxu0
  %1337 = vmatprep.subr.bf16.mxu0 0
  %1338 = vmatpush1.bf16.msra.mxu0 %v957
  %1339 = vmatprep.subr.bf16.mxu0 0
  %1340 = vmatpush1.bf16.msra.mxu0 %v956
  %1341 = vmatprep.subr.bf16.mxu0 0
  %1342 = vmatpush1.bf16.msra.mxu0 %v955
  %1343 = vmatprep.subr.bf16.mxu0 0
  %1344 = vmatpush1.bf16.msra.mxu0 %v954
  %1345 = vmatprep.subr.bf16.mxu0 0
  %1346 = vmatpush1.bf16.msra.mxu0 %v953
  %1347 = vmatprep.subr.bf16.mxu0 0
  %1348 = vmatpush1.bf16.msra.mxu0 %v952
  %1349 = vmatprep.subr.bf16.mxu0 0
  %1350 = vmatpush1.bf16.msra.mxu0 %v951
  %1351 = vmatprep.subr.bf16.mxu0 0
  %1352 = vmatpush1.bf16.msra.mxu0 %v950
  %1353 = vmatprep.subr.bf16.mxu0 0
  %1354 = vmatpush2.bf16.msra.mxu0 %v965
  %1355 = vmatprep.subr.bf16.mxu0 0
  %1356 = vmatpush2.bf16.msra.mxu0 %v964
  %1357 = vmatprep.subr.bf16.mxu0 0
  %1358 = vmatpush2.bf16.msra.mxu0 %v963
  %1359 = vmatprep.subr.bf16.mxu0 0
  %1360 = vmatpush2.bf16.msra.mxu0 %v962
  %1361 = vmatprep.subr.bf16.mxu0 0
  %1362 = vmatpush2.bf16.msra.mxu0 %v961
  %1363 = vmatprep.subr.bf16.mxu0 0
  %1364 = vmatpush2.bf16.msra.mxu0 %v960
  %1365 = vmatprep.subr.bf16.mxu0 0
  %1366 = vmatpush2.bf16.msra.mxu0 %v959
  %1367 = vmatprep.subr.bf16.mxu0 0
  %1368 = vmatpush2.bf16.msra.mxu0 %v958
  %1369 = vmatprep.mubr.bf16.mxu0 %v477
  %1370 = vmatmul.mubr.bf16.gmra.mxu0 %v476
  %v1371 = vpop.f32.mrf.mxu0
  %v1372 = vadd.f32 %v1275, %v1371
  %v1373 = vpop.f32.mrf.mxu0
  %v1374 = vpop.f32.mrf.mxu0
  %v1375 = vadd.f32 %v1278, %v1374
  %v1376 = vpop.f32.mrf.mxu0
  %1377 = vmatprep.mubr.bf16.mxu0 %v486
  %1378 = vmatmul.mubr.bf16.gmra.mxu0 %v485
  %v1379 = vpop.f32.mrf.mxu0
  %v1380 = vadd.f32 %v1283, %v1379
  %v1381 = vpop.f32.mrf.mxu0
  %v1382 = vpop.f32.mrf.mxu0
  %v1383 = vadd.f32 %v1286, %v1382
  %v1384 = vpop.f32.mrf.mxu0
  %1385 = vmatprep.mubr.bf16.mxu0 %v495
  %1386 = vmatmul.mubr.bf16.gmra.mxu0 %v494
  %v1387 = vpop.f32.mrf.mxu0
  %v1388 = vadd.f32 %v1291, %v1387
  %v1389 = vpop.f32.mrf.mxu0
  %v1390 = vpop.f32.mrf.mxu0
  %v1391 = vadd.f32 %v1294, %v1390
  %v1392 = vpop.f32.mrf.mxu0
  %1393 = vmatprep.mubr.bf16.mxu0 %v504
  %1394 = vmatmul.mubr.bf16.gmra.mxu0 %v503
  %v1395 = vpop.f32.mrf.mxu0
  %v1396 = vadd.f32 %v1299, %v1395
  %v1397 = vpop.f32.mrf.mxu0
  %v1398 = vpop.f32.mrf.mxu0
  %v1399 = vadd.f32 %v1302, %v1398
  %v1400 = vpop.f32.mrf.mxu0
  %1401 = vmatprep.mubr.bf16.mxu0 %v513
  %1402 = vmatmul.mubr.bf16.gmra.mxu0 %v512
  %v1403 = vpop.f32.mrf.mxu0
  %v1404 = vadd.f32 %v1307, %v1403
  %v1405 = vpop.f32.mrf.mxu0
  %v1406 = vpop.f32.mrf.mxu0
  %v1407 = vadd.f32 %v1310, %v1406
  %v1408 = vpop.f32.mrf.mxu0
  %1409 = vmatprep.mubr.bf16.mxu0 %v522
  %1410 = vmatmul.mubr.bf16.gmra.mxu0 %v521
  %v1411 = vpop.f32.mrf.mxu0
  %v1412 = vadd.f32 %v1315, %v1411
  %v1413 = vpop.f32.mrf.mxu0
  %v1414 = vpop.f32.mrf.mxu0
  %v1415 = vadd.f32 %v1318, %v1414
  %v1416 = vpop.f32.mrf.mxu0
  %1417 = vmatprep.mubr.bf16.mxu0 %v531
  %1418 = vmatmul.mubr.bf16.gmra.mxu0 %v530
  %v1419 = vpop.f32.mrf.mxu0
  %v1420 = vadd.f32 %v1323, %v1419
  %v1421 = vpop.f32.mrf.mxu0
  %v1422 = vpop.f32.mrf.mxu0
  %v1423 = vadd.f32 %v1326, %v1422
  %v1424 = vpop.f32.mrf.mxu0
  %1425 = vmatprep.mubr.bf16.mxu0 %v540
  %1426 = vmatmul.mubr.bf16.gmra.mxu0 %v539
  %v1427 = vpop.f32.mrf.mxu0
  %v1428 = vadd.f32 %v1331, %v1427
  %v1429 = vpop.f32.mrf.mxu0
  %v1430 = vpop.f32.mrf.mxu0
  %v1431 = vadd.f32 %v1334, %v1430
  %v1432 = vpop.f32.mrf.mxu0
  %1433 = vdwg.mxu0
  %1434 = vmatprep.subr.bf16.mxu0 0
  %1435 = vmatpush1.bf16.msra.mxu0 %v973
  %1436 = vmatprep.subr.bf16.mxu0 0
  %1437 = vmatpush1.bf16.msra.mxu0 %v972
  %1438 = vmatprep.subr.bf16.mxu0 0
  %1439 = vmatpush1.bf16.msra.mxu0 %v971
  %1440 = vmatprep.subr.bf16.mxu0 0
  %1441 = vmatpush1.bf16.msra.mxu0 %v970
  %1442 = vmatprep.subr.bf16.mxu0 0
  %1443 = vmatpush1.bf16.msra.mxu0 %v969
  %1444 = vmatprep.subr.bf16.mxu0 0
  %1445 = vmatpush1.bf16.msra.mxu0 %v968
  %1446 = vmatprep.subr.bf16.mxu0 0
  %1447 = vmatpush1.bf16.msra.mxu0 %v967
  %1448 = vmatprep.subr.bf16.mxu0 0
  %1449 = vmatpush1.bf16.msra.mxu0 %v966
  %1450 = vmatprep.subr.bf16.mxu0 0
  %1451 = vmatpush2.bf16.msra.mxu0 0
  %1452 = vmatprep.subr.bf16.mxu0 0
  %1453 = vmatpush2.bf16.msra.mxu0 0
  %1454 = vmatprep.subr.bf16.mxu0 0
  %1455 = vmatpush2.bf16.msra.mxu0 0
  %1456 = vmatprep.subr.bf16.mxu0 0
  %1457 = vmatpush2.bf16.msra.mxu0 0
  %1458 = vmatprep.subr.bf16.mxu0 0
  %1459 = vmatpush2.bf16.msra.mxu0 0
  %1460 = vmatprep.subr.bf16.mxu0 0
  %1461 = vmatpush2.bf16.msra.mxu0 0
  %1462 = vmatprep.subr.bf16.mxu0 0
  %1463 = vmatpush2.bf16.msra.mxu0 0
  %1464 = vmatprep.subr.bf16.mxu0 0
  %1465 = vmatpush2.bf16.msra.mxu0 0
  %1466 = vmatprep.mubr.bf16.mxu0 0
  %1467 = vmatmul.mubr.bf16.gmra.mxu0 %v478
  %v1468 = vpop.f32.mrf.mxu0
  %v1469 = vadd.f32 %v1372, %v1468
  %v1470 = vpop.f32.mrf.mxu0
  %v1471 = vpop.f32.mrf.mxu0
  %v1472 = vadd.f32 %v1375, %v1471
  %v1473 = vpop.f32.mrf.mxu0
  %1474 = vmatprep.mubr.bf16.mxu0 0
  %1475 = vmatmul.mubr.bf16.gmra.mxu0 %v487
  %v1476 = vpop.f32.mrf.mxu0
  %v1477 = vadd.f32 %v1380, %v1476
  %v1478 = vpop.f32.mrf.mxu0
  %v1479 = vpop.f32.mrf.mxu0
  %v1480 = vadd.f32 %v1383, %v1479
  %v1481 = vpop.f32.mrf.mxu0
  %1482 = vmatprep.mubr.bf16.mxu0 0
  %1483 = vmatmul.mubr.bf16.gmra.mxu0 %v496
  %v1484 = vpop.f32.mrf.mxu0
  %v1485 = vadd.f32 %v1388, %v1484
  %v1486 = vpop.f32.mrf.mxu0
  %v1487 = vpop.f32.mrf.mxu0
  %v1488 = vadd.f32 %v1391, %v1487
  %v1489 = vpop.f32.mrf.mxu0
  %1490 = vmatprep.mubr.bf16.mxu0 0
  %1491 = vmatmul.mubr.bf16.gmra.mxu0 %v505
  %v1492 = vpop.f32.mrf.mxu0
  %v1493 = vadd.f32 %v1396, %v1492
  %v1494 = vpop.f32.mrf.mxu0
  %v1495 = vpop.f32.mrf.mxu0
  %v1496 = vadd.f32 %v1399, %v1495
  %v1497 = vpop.f32.mrf.mxu0
  %1498 = vmatprep.mubr.bf16.mxu0 0
  %1499 = vmatmul.mubr.bf16.gmra.mxu0 %v514
  %v1500 = vpop.f32.mrf.mxu0
  %v1501 = vadd.f32 %v1404, %v1500
  %v1502 = vpop.f32.mrf.mxu0
  %v1503 = vpop.f32.mrf.mxu0
  %v1504 = vadd.f32 %v1407, %v1503
  %v1505 = vpop.f32.mrf.mxu0
  %1506 = vmatprep.mubr.bf16.mxu0 0
  %1507 = vmatmul.mubr.bf16.gmra.mxu0 %v523
  %v1508 = vpop.f32.mrf.mxu0
  %v1509 = vadd.f32 %v1412, %v1508
  %v1510 = vpop.f32.mrf.mxu0
  %v1511 = vpop.f32.mrf.mxu0
  %v1512 = vadd.f32 %v1415, %v1511
  %v1513 = vpop.f32.mrf.mxu0
  %1514 = vmatprep.mubr.bf16.mxu0 0
  %1515 = vmatmul.mubr.bf16.gmra.mxu0 %v532
  %v1516 = vpop.f32.mrf.mxu0
  %v1517 = vadd.f32 %v1420, %v1516
  %v1518 = vpop.f32.mrf.mxu0
  %v1519 = vpop.f32.mrf.mxu0
  %v1520 = vadd.f32 %v1423, %v1519
  %v1521 = vpop.f32.mrf.mxu0
  %1522 = vmatprep.mubr.bf16.mxu0 0
  %1523 = vmatmul.mubr.bf16.gmra.mxu0 %v541
  %v1524 = vpop.f32.mrf.mxu0
  %v1525 = vadd.f32 %v1428, %v1524
  %v1526 = vpop.f32.mrf.mxu0
  %v1527 = vpop.f32.mrf.mxu0
  %v1528 = vadd.f32 %v1431, %v1527
  %v1529 = vpop.f32.mrf.mxu0
  %1530 = vdwg.mxu0
  %v1531 = vmax.f32 %v1469, 0.0
  %v1532 = vmax.f32 %v1472, 0.0
  %v1533 = vmax.f32 %v1477, 0.0
  %v1534 = vmax.f32 %v1480, 0.0
  %v1535 = vmax.f32 %v1485, 0.0
  %v1536 = vmax.f32 %v1488, 0.0
  %v1537 = vmax.f32 %v1493, 0.0
  %v1538 = vmax.f32 %v1496, 0.0
  %v1539 = vmax.f32 %v1501, 0.0
  %v1540 = vmax.f32 %v1504, 0.0
  %v1541 = vmax.f32 %v1509, 0.0
  %v1542 = vmax.f32 %v1512, 0.0
  %v1543 = vmax.f32 %v1517, 0.0
  %v1544 = vmax.f32 %v1520, 0.0
  %v1545 = vmax.f32 %v1525, 0.0
  %v1546 = vmax.f32 %v1528, 0.0
  %v1547 = vpack.c.bf16 %v1532, %v1531
  %v1548 = vpack.c.bf16 %v1534, %v1533
  %v1549 = vpack.c.bf16 %v1536, %v1535
  %v1550 = vpack.c.bf16 %v1538, %v1537
  %v1551 = vpack.c.bf16 %v1540, %v1539
  %v1552 = vpack.c.bf16 %v1542, %v1541
  %v1553 = vpack.c.bf16 %v1544, %v1543
  %v1554 = vpack.c.bf16 %v1546, %v1545
  %v1563 = vunpack.c.l.b16 %v1547
  %v1564 = vunpack.c.h.b16 %v1547
  %v1565 = vunpack.c.l.b16 %v1548
  %v1566 = vunpack.c.h.b16 %v1548
  %v1567 = vunpack.c.l.b16 %v1549
  %v1568 = vunpack.c.h.b16 %v1549
  %v1569 = vunpack.c.l.b16 %v1550
  %v1570 = vunpack.c.h.b16 %v1550
  %v1571 = vunpack.c.l.b16 %v1551
  %v1572 = vunpack.c.h.b16 %v1551
  %v1573 = vunpack.c.l.b16 %v1552
  %v1574 = vunpack.c.h.b16 %v1552
  %v1575 = vunpack.c.l.b16 %v1553
  %v1576 = vunpack.c.h.b16 %v1553
  %v1577 = vunpack.c.l.b16 %v1554
  %v1578 = vunpack.c.h.b16 %v1554
  %v1579 = vpack.c.b16 %v1563, %v1563
  %v1580 = vpack.c.b16 %v1564, %v1564
  %v1581 = vpack.c.b16 %v1565, %v1565
  %v1582 = vpack.c.b16 %v1566, %v1566
  %v1583 = vpack.c.b16 %v1567, %v1567
  %v1584 = vpack.c.b16 %v1568, %v1568
  %v1585 = vpack.c.b16 %v1569, %v1569
  %v1586 = vpack.c.b16 %v1570, %v1570
  %v1587 = vpack.c.b16 %v1571, %v1571
  %v1588 = vpack.c.b16 %v1572, %v1572
  %v1589 = vpack.c.b16 %v1573, %v1573
  %v1590 = vpack.c.b16 %v1574, %v1574
  %v1591 = vpack.c.b16 %v1575, %v1575
  %v1592 = vpack.c.b16 %v1576, %v1576
  %v1593 = vpack.c.b16 %v1577, %v1577
  %v1594 = vpack.c.b16 %v1578, %v1578
  %1611 = vst [vmem:[%s3] sm:$0xf] %v1579
  %1612 = vst [vmem:[%s3 + $0x4] sm:$0xf] %v1580
  %1613 = vst [vmem:[%s3 + $0x8] sm:$0xf] %v1581
  %1614 = vst [vmem:[%s3 + $0xc] sm:$0xf] %v1582
  %1615 = vst [vmem:[%s3 + $0x10] sm:$0xf] %v1583
  %1616 = vst [vmem:[%s3 + $0x14] sm:$0xf] %v1584
  %1617 = vst [vmem:[%s3 + $0x18] sm:$0xf] %v1585
  %1618 = vst [vmem:[%s3 + $0x1c] sm:$0xf] %v1586
  %1619 = vst [vmem:[%s3 + $0x20] sm:$0xf] %v1587
  %1620 = vst [vmem:[%s3 + $0x24] sm:$0xf] %v1588
  %1621 = vst [vmem:[%s3 + $0x28] sm:$0xf] %v1589
  %1622 = vst [vmem:[%s3 + $0x2c] sm:$0xf] %v1590
  %1623 = vst [vmem:[%s3 + $0x30] sm:$0xf] %v1591
  %1624 = vst [vmem:[%s3 + $0x34] sm:$0xf] %v1592
  %1625 = vst [vmem:[%s3 + $0x38] sm:$0xf] %v1593
  %1626 = vst [vmem:[%s3 + $0x3c] sm:$0xf] %v1594
  // Predicated region
  $region14: #{_lambda_.9} parent=0 // pred_check
    _
  $region15: #{_lambda_.9} parent=0 // pred_check_branch
    %1628 = sbr.rel (0) target = $region17
  $region16: #{_lambda_.9} parent=0 // pred_region
    _
  $region17: #{_lambda_.9} parent=0 // pred_fallthru
    _
  // Predicated region
  $region18: #{_lambda_.9} parent=0 // pred_check
    _
  $region19: #{_lambda_.9} parent=0 // pred_check_branch
    %1630 = sbr.rel (0) target = $region21
  $region20: #{_lambda_.9} parent=0 // pred_region
    _
  $region21: #{_lambda_.9} parent=0 // pred_fallthru
    _

// kernel: _lambda_.10
$region0: #{_lambda_.10}
  #allocation0 [shape = 'u32[]', space=smem, size = 0x4, offset = 0x4, fixed_abs, tag = 'smem constant byte address 0x4 - core index']
  #allocation1 [shape = 'u32[144,128]{1,0:T(1,128)}', space=vmem, size = 0x12000, scoped, tag = 'internal scratch']
  %s0 = inlined_call_operand.vmem [shape: bf16[2,10,10,128], index: 0, kind: input, shape index: {}]
  %s1 = inlined_call_operand.vmem [shape: bf16[9,128,128], index: 1, kind: input, shape index: {}]
  %s2 = inlined_call_operand.vmem [shape: f32[1,128], index: 2, kind: input, shape index: {}]
  %s3 = inlined_call_operand.vmem [shape: bf16[2,8,8,128], index: 3, kind: output, shape index: {}]
  %s4 = sld [smem:[#allocation0]]
  $region45: #{_lambda_.10} parent=0
    _
  %s6 = ssub.s32 1, %s4
  %s7 = scalar_select 0, %s6, %s4
  loop: start=0, step=1, limit=4
  $region2: #{_lambda_.10} parent=0 // loop_pre_header
    _
  $region3: #{_lambda_.10} parent=0 // loop_header
    %s9 = sphi 0, %s13
    %p10 = scmp.ge.s32.totalorder %s9, 4
    %s16 = sphi 0, %s28
    %s17 = sphi 0, %s24
    %s18 = sphi 0, %s16
    %s19 = sphi 0, %s17
    %s20 = sphi 0, %s18
    %s21 = sphi 0, %s19
    %s31 = sphi 0, %s33
    %s34 = sphi 0, %s31
    %s35 = sphi 0, %s34
    %s51 = sphi 0, %s35
    %s55 = sphi 0, %s55
    %s57 = sphi 0, %s55
    %s58 = sphi 0, %s57
    %s72 = sphi 0, %s58
    %s76 = sphi 0, %s76
    %s78 = sphi 0, %s76
    %s79 = sphi 0, %s78
    %s93 = sphi 0, %s79
    %s101 = sphi 0, %s103
    %s104 = sphi 0, %s101
    %s105 = sphi 0, %s104
    %s121 = sphi 0, %s105
  $region4: #{_lambda_.10} parent=0 // loop_header_branch
    %12 = sbr.rel (%p10) target = $region8
  $region5: #{_lambda_.10} parent=0 // loop_body
    %s14 = ssub.s32 %s9, 1
    %s15 = ssub.s32 %s9, 2
    %s22 = sadd.s32 1, %s17
    %p23 = scmp.ge.s32.totalorder %s22, 1
    %s24 = scalar_select %p23, 0, %s22
    %s25 = sadd.s32 1, %s16
    %s26 = scalar_select %p23, %s25, %s16
    %p27 = scmp.ge.s32.totalorder %s26, 2
    %s28 = scalar_select %p27, 0, %s26
    %s29 = ssub.s32 %s16, %s28
    %p30 = scmp.eq.s32.totalorder %s29, 0
    %s32 = sadd.s32 %s31, 1
    %s33 = scalar_select %p30, %s31, %s32
    %p36 = pneg %p30
    %p37 = scmp.eq.s32.totalorder %s9, 1
    %p38 = por %p36, %p37
    %p39 = scmp.ne.s32.totalorder %s31, %s34
    %p40 = scmp.eq.s32.totalorder %s9, 0
    %p41 = por %p39, %p40
    %p42 = scmp.ne.s32.totalorder %s31, %s34
    %p43 = scmp.eq.s32.totalorder %s14, 1
    %p44 = por %p42, %p43
    %p45 = scmp.ne.s32.totalorder %s34, %s35
    %p46 = scmp.eq.s32.totalorder %s14, 0
    %p47 = por %p45, %p46
    %p48 = scmp.ne.s32.totalorder %s34, %s35
    %p49 = scmp.eq.s32.totalorder %s15, 1
    %p50 = por %p48, %p49
    %p52 = scmp.ne.s32.totalorder %s35, %s51
    %p53 = scmp.eq.s32.totalorder %s15, 0
    %p54 = por %p52, %p53
    %s56 = sadd.s32 %s55, 1
    %p59 = scmp.eq.s32.totalorder %s9, 1
    %p60 = scmp.ne.s32.totalorder %s55, %s57
    %p61 = scmp.eq.s32.totalorder %s9, 0
    %p62 = por %p60, %p61
    %p63 = scmp.ne.s32.totalorder %s55, %s57
    %p64 = scmp.eq.s32.totalorder %s14, 1
    %p65 = por %p63, %p64
    %p66 = scmp.ne.s32.totalorder %s57, %s58
    %p67 = scmp.eq.s32.totalorder %s14, 0
    %p68 = por %p66, %p67
    %p69 = scmp.ne.s32.totalorder %s57, %s58
    %p70 = scmp.eq.s32.totalorder %s15, 1
    %p71 = por %p69, %p70
    %p73 = scmp.ne.s32.totalorder %s58, %s72
    %p74 = scmp.eq.s32.totalorder %s15, 0
    %p75 = por %p73, %p74
    %s77 = sadd.s32 %s76, 1
    %p80 = scmp.eq.s32.totalorder %s9, 1
    %p81 = scmp.ne.s32.totalorder %s76, %s78
    %p82 = scmp.eq.s32.totalorder %s9, 0
    %p83 = por %p81, %p82
    %p84 = scmp.ne.s32.totalorder %s76, %s78
    %p85 = scmp.eq.s32.totalorder %s14, 1
    %p86 = por %p84, %p85
    %p87 = scmp.ne.s32.totalorder %s78, %s79
    %p88 = scmp.eq.s32.totalorder %s14, 0
    %p89 = por %p87, %p88
    %p90 = scmp.ne.s32.totalorder %s78, %s79
    %p91 = scmp.eq.s32.totalorder %s15, 1
    %p92 = por %p90, %p91
    %p94 = scmp.ne.s32.totalorder %s79, %s93
    %p95 = scmp.eq.s32.totalorder %s15, 0
    %p96 = por %p94, %p95
    %s97 = ssub.s32 %s16, %s28
    %s98 = ssub.s32 %s17, %s24
    %s99 = sor.u32 %s97, %s98
    %p100 = scmp.eq.s32.totalorder %s99, 0
    %s102 = sadd.s32 %s101, 1
    %s103 = scalar_select %p100, %s101, %s102
    %p106 = pneg %p100
    %p107 = scmp.eq.s32.totalorder %s9, 1
    %p108 = por %p106, %p107
    %p109 = scmp.ne.s32.totalorder %s101, %s104
    %p110 = scmp.eq.s32.totalorder %s9, 0
    %p111 = por %p109, %p110
    %p112 = scmp.ne.s32.totalorder %s101, %s104
    %p113 = scmp.eq.s32.totalorder %s14, 1
    %p114 = por %p112, %p113
    %p115 = scmp.ne.s32.totalorder %s104, %s105
    %p116 = scmp.eq.s32.totalorder %s14, 0
    %p117 = por %p115, %p116
    %p118 = scmp.ne.s32.totalorder %s104, %s105
    %p119 = scmp.eq.s32.totalorder %s15, 1
    %p120 = por %p118, %p119
    %p122 = scmp.ne.s32.totalorder %s105, %s121
    %p123 = scmp.eq.s32.totalorder %s15, 0
    %p124 = por %p122, %p123
    %p125 = scmp.le.s32.totalorder 1, %s9
    %p126 = scmp.lt.s32.totalorder %s9, 3
    %p127 = pnand %p125, %p126
    %p128 = pneg %p127
    // Predicated region
    $region9: #{_lambda_.10} parent=5 // pred_check
      _
    $region10: #{_lambda_.10} parent=5 // pred_check_branch
      %130 = sbr.rel (%p127) target = $region12
    $region11: #{_lambda_.10} parent=5 // pred_region
      %s131 = ssub.s32 %s9, 1
      // Predicated region
      $region13: #{_lambda_.10} parent=11 // pred_check
        %p132 = pneg %p68
      $region14: #{_lambda_.10} parent=11 // pred_check_branch
        %134 = sbr.rel (%p132) target = $region16
      $region15: #{_lambda_.10} parent=11 // pred_region
        _
      $region16: #{_lambda_.10} parent=11 // pred_fallthru
        _
      // Predicated region
      $region17: #{_lambda_.10} parent=11 // pred_check
        %p135 = pneg %p89
      $region18: #{_lambda_.10} parent=11 // pred_check_branch
        %137 = sbr.rel (%p135) target = $region20
      $region19: #{_lambda_.10} parent=11 // pred_region
        _
      $region20: #{_lambda_.10} parent=11 // pred_fallthru
        _
    $region12: #{_lambda_.10} parent=5 // pred_fallthru
      _
    %p138 = scmp.lt.s32.totalorder %s9, 2
    // Predicated region
    $region21: #{_lambda_.10} parent=5 // pred_check
      %p139 = pneg %p138
    $region22: #{_lambda_.10} parent=5 // pred_check_branch
      %141 = sbr.rel (%p139) target = $region24
    $region23: #{_lambda_.10} parent=5 // pred_region
      // Predicated region
      $region25: #{_lambda_.10} parent=23 // pred_check
        %p142 = pneg %p41
      $region26: #{_lambda_.10} parent=23 // pred_check_branch
        %144 = sbr.rel (%p142) target = $region28
      $region27: #{_lambda_.10} parent=23 // pred_region
        %p145 = scmp.lt.s32.totalorder %s16, 1
        %s146 = scalar_select %p145, %s16, 1
        %s147 = smul.addr %s146, 20
        %s148 = smul.addr %s147, 4
        %s149 = scalar_lea.vmem %s0, %s148
      $region28: #{_lambda_.10} parent=23 // pred_fallthru
        _
    $region24: #{_lambda_.10} parent=5 // pred_fallthru
      _
    %p150 = scmp.le.s32.totalorder 1, %s9
    %p151 = scmp.lt.s32.totalorder %s9, 3
    %p152 = pnand %p150, %p151
    %p153 = pneg %p152
    // Predicated region
    $region29: #{_lambda_.10} parent=5 // pred_check
      _
    $region30: #{_lambda_.10} parent=5 // pred_check_branch
      %155 = sbr.rel (%p152) target = $region32
    $region31: #{_lambda_.10} parent=5 // pred_region
      %s156 = ssub.s32 %s9, 1
      %p157 = scmp.lt.s32.totalorder %s18, 1
      %s158 = scalar_select %p157, %s18, 1
      %s159 = smul.addr %s158, 20
      %s160 = smul.addr %s159, 4
      %s161 = scalar_lea.vmem %s0, %s160
      %p162 = pneg %p47
      %p163 = pneg %p44
      %p164 = pneg %p68
      %p165 = pneg %p65
      %p166 = pneg %p89
      %p167 = pneg %p86
      %p168 = pneg %p117
      %p169 = pneg %p114
      %s170 = smul.u32 8, %s19
      %p171 = scmp.lt.s32.totalorder %s18, 1
      %s172 = scalar_select %p171, %s18, 1
      %p173 = scmp.lt.s32.totalorder %s170, 7
      %s174 = scalar_select %p173, %s170, 7
      %s175 = smul.addr %s172, 8
      %s176 = sadd.s32 %s174, %s175
      %s177 = smul.addr %s176, 4
      %s178 = scalar_lea.vmem %s3, %s177
      %p179 = scmp.lt.s32.totalorder %s18, 1
      %s180 = scalar_select %p179, %s18, 1
      %s181 = smul.addr %s180, 20
      %s182 = smul.addr %s181, 4
      %s183 = scalar_lea.vmem %s0, %s182
      %s184 = smul.u32 8, %s19
      %p185 = scmp.lt.s32.totalorder %s18, 1
      %s186 = scalar_select %p185, %s18, 1
      %p187 = scmp.lt.s32.totalorder %s184, 7
      %s188 = scalar_select %p187, %s184, 7
      %s189 = smul.addr %s186, 8
      %s190 = sadd.s32 %s188, %s189
      %s191 = smul.addr %s190, 4
      %s192 = scalar_lea.vmem %s3, %s191
      %s193 = smul.u32 8, %s19
      %s195 = smul.u32 %s19, 8
      %s196 = smul.u32 %s195, 2
      %s197 = smul.addr %s196, 4
      %s198 = scalar_lea.vmem %s183, %s197
      %v199 = vld [vmem:[%s198] sm:$0xf]
      %v200 = vld [vmem:[%s198 + $0x8] sm:$0xf]
      %v201 = vld [vmem:[%s198 + $0x10] sm:$0xf]
      %v202 = vld [vmem:[%s198 + $0x18] sm:$0xf]
      %v203 = vld [vmem:[%s198 + $0x20] sm:$0xf]
      %v204 = vld [vmem:[%s198 + $0x28] sm:$0xf]
      %v205 = vld [vmem:[%s198 + $0x30] sm:$0xf]
      %v206 = vld [vmem:[%s198 + $0x38] sm:$0xf]
      %v207 = vld [vmem:[%s1] sm:$0xf]
      %v208 = vld [vmem:[%s1 + $0x4] sm:$0xf]
      %v209 = vld [vmem:[%s1 + $0x8] sm:$0xf]
      %v210 = vld [vmem:[%s1 + $0xc] sm:$0xf]
      %v211 = vld [vmem:[%s1 + $0x10] sm:$0xf]
      %v212 = vld [vmem:[%s1 + $0x14] sm:$0xf]
      %v213 = vld [vmem:[%s1 + $0x18] sm:$0xf]
      %v214 = vld [vmem:[%s1 + $0x1c] sm:$0xf]
      %v215 = vld [vmem:[%s1 + $0x20] sm:$0xf]
      %v216 = vld [vmem:[%s1 + $0x24] sm:$0xf]
      %v217 = vld [vmem:[%s1 + $0x28] sm:$0xf]
      %v218 = vld [vmem:[%s1 + $0x2c] sm:$0xf]
      %v219 = vld [vmem:[%s1 + $0x30] sm:$0xf]
      %v220 = vld [vmem:[%s1 + $0x34] sm:$0xf]
      %v221 = vld [vmem:[%s1 + $0x38] sm:$0xf]
      %v222 = vld [vmem:[%s1 + $0x3c] sm:$0xf]
      %v223 = vld [vmem:[%s198 + $0x4] sm:$0x1]
      %v224 = vld [vmem:[%s198 + $0xc] sm:$0x1]
      %v225 = vld [vmem:[%s198 + $0x14] sm:$0x1]
      %v226 = vld [vmem:[%s198 + $0x1c] sm:$0x1]
      %v227 = vld [vmem:[%s198 + $0x24] sm:$0x1]
      %v228 = vld [vmem:[%s198 + $0x2c] sm:$0x1]
      %v229 = vld [vmem:[%s198 + $0x34] sm:$0x1]
      %v230 = vld [vmem:[%s198 + $0x3c] sm:$0x1]
      %vm231 = vsmask.f32 3328
      %vm232 = vsmask.f32 7440
      %vm233 = vmor %vm231, %vm232
      %v235 = vshrl.u32 %v199, 16
      %v237 = vrot.slane %v235, 4
      %v238 = vshll.u32 %v199, 16
      %v240 = vrot.slane %v238, 5
      %v241 = vor.u32 %v237, %v240
      %v242 = vrot.slane %v241, 4
      %v244 = vshll.u32 %v223, 16
      %v246 = vrot.slane %v244, 5
      %v247 = vsel %vm233, %v242, %v246
      %v249 = vshrl.u32 %v200, 16
      %v251 = vrot.slane %v249, 4
      %v252 = vshll.u32 %v200, 16
      %v254 = vrot.slane %v252, 5
      %v255 = vor.u32 %v251, %v254
      %v256 = vrot.slane %v255, 4
      %v258 = vshll.u32 %v224, 16
      %v260 = vrot.slane %v258, 5
      %v261 = vsel %vm233, %v256, %v260
      %v263 = vshrl.u32 %v201, 16
      %v265 = vrot.slane %v263, 4
      %v266 = vshll.u32 %v201, 16
      %v268 = vrot.slane %v266, 5
      %v269 = vor.u32 %v265, %v268
      %v270 = vrot.slane %v269, 4
      %v272 = vshll.u32 %v225, 16
      %v274 = vrot.slane %v272, 5
      %v275 = vsel %vm233, %v270, %v274
      %v277 = vshrl.u32 %v202, 16
      %v279 = vrot.slane %v277, 4
      %v280 = vshll.u32 %v202, 16
      %v282 = vrot.slane %v280, 5
      %v283 = vor.u32 %v279, %v282
      %v284 = vrot.slane %v283, 4
      %v286 = vshll.u32 %v226, 16
      %v288 = vrot.slane %v286, 5
      %v289 = vsel %vm233, %v284, %v288
      %v291 = vshrl.u32 %v203, 16
      %v293 = vrot.slane %v291, 4
      %v294 = vshll.u32 %v203, 16
      %v296 = vrot.slane %v294, 5
      %v297 = vor.u32 %v293, %v296
      %v298 = vrot.slane %v297, 4
      %v300 = vshll.u32 %v227, 16
      %v302 = vrot.slane %v300, 5
      %v303 = vsel %vm233, %v298, %v302
      %v305 = vshrl.u32 %v204, 16
      %v307 = vrot.slane %v305, 4
      %v308 = vshll.u32 %v204, 16
      %v310 = vrot.slane %v308, 5
      %v311 = vor.u32 %v307, %v310
      %v312 = vrot.slane %v311, 4
      %v314 = vshll.u32 %v228, 16
      %v316 = vrot.slane %v314, 5
      %v317 = vsel %vm233, %v312, %v316
      %v319 = vshrl.u32 %v205, 16
      %v321 = vrot.slane %v319, 4
      %v322 = vshll.u32 %v205, 16
      %v324 = vrot.slane %v322, 5
      %v325 = vor.u32 %v321, %v324
      %v326 = vrot.slane %v325, 4
      %v328 = vshll.u32 %v229, 16
      %v330 = vrot.slane %v328, 5
      %v331 = vsel %vm233, %v326, %v330
      %v333 = vshrl.u32 %v206, 16
      %v335 = vrot.slane %v333, 4
      %v336 = vshll.u32 %v206, 16
      %v338 = vrot.slane %v336, 5
      %v339 = vor.u32 %v335, %v338
      %v340 = vrot.slane %v339, 4
      %v342 = vshll.u32 %v230, 16
      %v344 = vrot.slane %v342, 5
      %v345 = vsel %vm233, %v340, %v344
      %s346 = scalar_lea.vmem %s1, 64
      %v347 = vld [vmem:[%s346] sm:$0xf]
      %v348 = vld [vmem:[%s346 + $0x4] sm:$0xf]
      %v349 = vld [vmem:[%s346 + $0x8] sm:$0xf]
      %v350 = vld [vmem:[%s346 + $0xc] sm:$0xf]
      %v351 = vld [vmem:[%s346 + $0x10] sm:$0xf]
      %v352 = vld [vmem:[%s346 + $0x14] sm:$0xf]
      %v353 = vld [vmem:[%s346 + $0x18] sm:$0xf]
      %v354 = vld [vmem:[%s346 + $0x1c] sm:$0xf]
      %v355 = vld [vmem:[%s346 + $0x20] sm:$0xf]
      %v356 = vld [vmem:[%s346 + $0x24] sm:$0xf]
      %v357 = vld [vmem:[%s346 + $0x28] sm:$0xf]
      %v358 = vld [vmem:[%s346 + $0x2c] sm:$0xf]
      %v359 = vld [vmem:[%s346 + $0x30] sm:$0xf]
      %v360 = vld [vmem:[%s346 + $0x34] sm:$0xf]
      %v361 = vld [vmem:[%s346 + $0x38] sm:$0xf]
      %v362 = vld [vmem:[%s346 + $0x3c] sm:$0xf]
      %v363 = vunpack.c.l.b16 %v247
      %v364 = vunpack.c.l.b16 %v261
      %v365 = vunpack.c.l.b16 %v275
      %v366 = vunpack.c.l.b16 %v289
      %v367 = vunpack.c.l.b16 %v303
      %v368 = vunpack.c.l.b16 %v317
      %v369 = vunpack.c.l.b16 %v331
      %v370 = vunpack.c.l.b16 %v345
      %v371 = vpack.c.b16 %v364, %v363
      %v372 = vpack.c.b16 %v366, %v365
      %v373 = vpack.c.b16 %v368, %v367
      %v374 = vpack.c.b16 %v370, %v369
      %v395 = vunpack.c.l.b16 %v347
      %v396 = vunpack.c.l.b16 %v348
      %v397 = vunpack.c.l.b16 %v349
      %v398 = vunpack.c.l.b16 %v350
      %v399 = vunpack.c.l.b16 %v351
      %v400 = vunpack.c.l.b16 %v352
      %v401 = vunpack.c.l.b16 %v353
      %v402 = vunpack.c.l.b16 %v354
      %v403 = vunpack.c.l.b16 %v355
      %v404 = vunpack.c.l.b16 %v356
      %v405 = vunpack.c.l.b16 %v357
      %v406 = vunpack.c.l.b16 %v358
      %v407 = vunpack.c.l.b16 %v359
      %v408 = vunpack.c.l.b16 %v360
      %v409 = vunpack.c.l.b16 %v361
      %v410 = vunpack.c.l.b16 %v362
      %v411 = vpack.c.b16 %v396, %v395
      %v412 = vpack.c.b16 %v398, %v397
      %v413 = vpack.c.b16 %v400, %v399
      %v414 = vpack.c.b16 %v402, %v401
      %v415 = vpack.c.b16 %v404, %v403
      %v416 = vpack.c.b16 %v406, %v405
      %v417 = vpack.c.b16 %v408, %v407
      %v418 = vpack.c.b16 %v410, %v409
      %427 = vmatprep.subr.bf16.mxu0 0
      %428 = vmatpush1.bf16.msra.mxu0 %v418
      %429 = vmatprep.subr.bf16.mxu0 0
      %430 = vmatpush1.bf16.msra.mxu0 %v417
      %431 = vmatprep.subr.bf16.mxu0 0
      %432 = vmatpush1.bf16.msra.mxu0 %v416
      %433 = vmatprep.subr.bf16.mxu0 0
      %434 = vmatpush1.bf16.msra.mxu0 %v415
      %435 = vmatprep.subr.bf16.mxu0 0
      %436 = vmatpush1.bf16.msra.mxu0 %v414
      %437 = vmatprep.subr.bf16.mxu0 0
      %438 = vmatpush1.bf16.msra.mxu0 %v413
      %439 = vmatprep.subr.bf16.mxu0 0
      %440 = vmatpush1.bf16.msra.mxu0 %v412
      %441 = vmatprep.subr.bf16.mxu0 0
      %442 = vmatpush1.bf16.msra.mxu0 %v411
      %443 = vmatprep.subr.bf16.mxu0 0
      %444 = vmatpush2.bf16.msra.mxu0 0
      %445 = vmatprep.subr.bf16.mxu0 0
      %446 = vmatpush2.bf16.msra.mxu0 0
      %447 = vmatprep.subr.bf16.mxu0 0
      %448 = vmatpush2.bf16.msra.mxu0 0
      %449 = vmatprep.subr.bf16.mxu0 0
      %450 = vmatpush2.bf16.msra.mxu0 0
      %451 = vmatprep.subr.bf16.mxu0 0
      %452 = vmatpush2.bf16.msra.mxu0 0
      %453 = vmatprep.subr.bf16.mxu0 0
      %454 = vmatpush2.bf16.msra.mxu0 0
      %455 = vmatprep.subr.bf16.mxu0 0
      %456 = vmatpush2.bf16.msra.mxu0 0
      %457 = vmatprep.subr.bf16.mxu0 0
      %458 = vmatpush2.bf16.msra.mxu0 0
      %459 = vmatprep.mubr.bf16.mxu0 0
      %460 = vmatmul.mubr.bf16.gmra.mxu0 %v371
      %v461 = vpop.f32.mrf.mxu0
      %v462 = vadd.f32 0.0, %v461
      %v463 = vpop.f32.mrf.mxu0
      %v464 = vpop.f32.mrf.mxu0
      %v465 = vadd.f32 0.0, %v464
      %v466 = vpop.f32.mrf.mxu0
      %467 = vmatprep.mubr.bf16.mxu0 0
      %468 = vmatmul.mubr.bf16.gmra.mxu0 %v372
      %v469 = vpop.f32.mrf.mxu0
      %v470 = vadd.f32 0.0, %v469
      %v471 = vpop.f32.mrf.mxu0
      %v472 = vpop.f32.mrf.mxu0
      %v473 = vadd.f32 0.0, %v472
      %v474 = vpop.f32.mrf.mxu0
      %475 = vmatprep.mubr.bf16.mxu0 0
      %476 = vmatmul.mubr.bf16.gmra.mxu0 %v373
      %v477 = vpop.f32.mrf.mxu0
      %v478 = vadd.f32 0.0, %v477
      %v479 = vpop.f32.mrf.mxu0
      %v480 = vpop.f32.mrf.mxu0
      %v481 = vadd.f32 0.0, %v480
      %v482 = vpop.f32.mrf.mxu0
      %483 = vmatprep.mubr.bf16.mxu0 0
      %484 = vmatmul.mubr.bf16.gmra.mxu0 %v374
      %v485 = vpop.f32.mrf.mxu0
      %v486 = vadd.f32 0.0, %v485
      %v487 = vpop.f32.mrf.mxu0
      %v488 = vpop.f32.mrf.mxu0
      %v489 = vadd.f32 0.0, %v488
      %v490 = vpop.f32.mrf.mxu0
      %491 = vdwg.mxu0
      %v500 = vunpack.c.l.b16 %v199
      %v501 = vunpack.c.l.b16 %v200
      %v502 = vunpack.c.l.b16 %v201
      %v503 = vunpack.c.l.b16 %v202
      %v504 = vunpack.c.l.b16 %v203
      %v505 = vunpack.c.l.b16 %v204
      %v506 = vunpack.c.l.b16 %v205
      %v507 = vunpack.c.l.b16 %v206
      %v508 = vpack.c.b16 %v501, %v500
      %v509 = vpack.c.b16 %v503, %v502
      %v510 = vpack.c.b16 %v505, %v504
      %v511 = vpack.c.b16 %v507, %v506
      %v532 = vunpack.c.l.b16 %v207
      %v533 = vunpack.c.l.b16 %v208
      %v534 = vunpack.c.l.b16 %v209
      %v535 = vunpack.c.l.b16 %v210
      %v536 = vunpack.c.l.b16 %v211
      %v537 = vunpack.c.l.b16 %v212
      %v538 = vunpack.c.l.b16 %v213
      %v539 = vunpack.c.l.b16 %v214
      %v540 = vunpack.c.l.b16 %v215
      %v541 = vunpack.c.l.b16 %v216
      %v542 = vunpack.c.l.b16 %v217
      %v543 = vunpack.c.l.b16 %v218
      %v544 = vunpack.c.l.b16 %v219
      %v545 = vunpack.c.l.b16 %v220
      %v546 = vunpack.c.l.b16 %v221
      %v547 = vunpack.c.l.b16 %v222
      %v548 = vpack.c.b16 %v533, %v532
      %v549 = vpack.c.b16 %v535, %v534
      %v550 = vpack.c.b16 %v537, %v536
      %v551 = vpack.c.b16 %v539, %v538
      %v552 = vpack.c.b16 %v541, %v540
      %v553 = vpack.c.b16 %v543, %v542
      %v554 = vpack.c.b16 %v545, %v544
      %v555 = vpack.c.b16 %v547, %v546
      %564 = vmatprep.subr.bf16.mxu0 0
      %565 = vmatpush1.bf16.msra.mxu0 %v555
      %566 = vmatprep.subr.bf16.mxu0 0
      %567 = vmatpush1.bf16.msra.mxu0 %v554
      %568 = vmatprep.subr.bf16.mxu0 0
      %569 = vmatpush1.bf16.msra.mxu0 %v553
      %570 = vmatprep.subr.bf16.mxu0 0
      %571 = vmatpush1.bf16.msra.mxu0 %v552
      %572 = vmatprep.subr.bf16.mxu0 0
      %573 = vmatpush1.bf16.msra.mxu0 %v551
      %574 = vmatprep.subr.bf16.mxu0 0
      %575 = vmatpush1.bf16.msra.mxu0 %v550
      %576 = vmatprep.subr.bf16.mxu0 0
      %577 = vmatpush1.bf16.msra.mxu0 %v549
      %578 = vmatprep.subr.bf16.mxu0 0
      %579 = vmatpush1.bf16.msra.mxu0 %v548
      %580 = vmatprep.subr.bf16.mxu0 0
      %581 = vmatpush2.bf16.msra.mxu0 0
      %582 = vmatprep.subr.bf16.mxu0 0
      %583 = vmatpush2.bf16.msra.mxu0 0
      %584 = vmatprep.subr.bf16.mxu0 0
      %585 = vmatpush2.bf16.msra.mxu0 0
      %586 = vmatprep.subr.bf16.mxu0 0
      %587 = vmatpush2.bf16.msra.mxu0 0
      %588 = vmatprep.subr.bf16.mxu0 0
      %589 = vmatpush2.bf16.msra.mxu0 0
      %590 = vmatprep.subr.bf16.mxu0 0
      %591 = vmatpush2.bf16.msra.mxu0 0
      %592 = vmatprep.subr.bf16.mxu0 0
      %593 = vmatpush2.bf16.msra.mxu0 0
      %594 = vmatprep.subr.bf16.mxu0 0
      %595 = vmatpush2.bf16.msra.mxu0 0
      %596 = vmatprep.mubr.bf16.mxu0 0
      %597 = vmatmul.mubr.bf16.gmra.mxu0 %v508
      %v598 = vpop.f32.mrf.mxu0
      %v599 = vadd.f32 %v462, %v598
      %v600 = vpop.f32.mrf.mxu0
      %v601 = vpop.f32.mrf.mxu0
      %v602 = vadd.f32 %v465, %v601
      %v603 = vpop.f32.mrf.mxu0
      %604 = vmatprep.mubr.bf16.mxu0 0
      %605 = vmatmul.mubr.bf16.gmra.mxu0 %v509
      %v606 = vpop.f32.mrf.mxu0
      %v607 = vadd.f32 %v470, %v606
      %v608 = vpop.f32.mrf.mxu0
      %v609 = vpop.f32.mrf.mxu0
      %v610 = vadd.f32 %v473, %v609
      %v611 = vpop.f32.mrf.mxu0
      %612 = vmatprep.mubr.bf16.mxu0 0
      %613 = vmatmul.mubr.bf16.gmra.mxu0 %v510
      %v614 = vpop.f32.mrf.mxu0
      %v615 = vadd.f32 %v478, %v614
      %v616 = vpop.f32.mrf.mxu0
      %v617 = vpop.f32.mrf.mxu0
      %v618 = vadd.f32 %v481, %v617
      %v619 = vpop.f32.mrf.mxu0
      %620 = vmatprep.mubr.bf16.mxu0 0
      %621 = vmatmul.mubr.bf16.gmra.mxu0 %v511
      %v622 = vpop.f32.mrf.mxu0
      %v623 = vadd.f32 %v486, %v622
      %v624 = vpop.f32.mrf.mxu0
      %v625 = vpop.f32.mrf.mxu0
      %v626 = vadd.f32 %v489, %v625
      %v627 = vpop.f32.mrf.mxu0
      %628 = vdwg.mxu0
      %v629 = vld [vmem:[%s198] sm:$0xe]
      %v630 = vld [vmem:[%s198 + $0x8] sm:$0xe]
      %v631 = vld [vmem:[%s198 + $0x10] sm:$0xe]
      %v632 = vld [vmem:[%s198 + $0x18] sm:$0xe]
      %v633 = vld [vmem:[%s198 + $0x20] sm:$0xe]
      %v634 = vld [vmem:[%s198 + $0x28] sm:$0xe]
      %v635 = vld [vmem:[%s198 + $0x30] sm:$0xe]
      %v636 = vld [vmem:[%s198 + $0x38] sm:$0xe]
      %vm653 = vcmask 1042432
      %vm654 = vcmask 1046532
      %vm655 = vmor %vm653, %vm654
      %v656 = vrot.slane %v629, 5
      %v657 = vrot.slane %v656, 4
      %v658 = vrot.slane %v223, 5
      %v659 = vsel %vm655, %v657, %v658
      %v660 = vrot.slane %v630, 5
      %v661 = vrot.slane %v660, 4
      %v662 = vrot.slane %v224, 5
      %v663 = vsel %vm655, %v661, %v662
      %v664 = vrot.slane %v631, 5
      %v665 = vrot.slane %v664, 4
      %v666 = vrot.slane %v225, 5
      %v667 = vsel %vm655, %v665, %v666
      %v668 = vrot.slane %v632, 5
      %v669 = vrot.slane %v668, 4
      %v670 = vrot.slane %v226, 5
      %v671 = vsel %vm655, %v669, %v670
      %v672 = vrot.slane %v633, 5
      %v673 = vrot.slane %v672, 4
      %v674 = vrot.slane %v227, 5
      %v675 = vsel %vm655, %v673, %v674
      %v676 = vrot.slane %v634, 5
      %v677 = vrot.slane %v676, 4
      %v678 = vrot.slane %v228, 5
      %v679 = vsel %vm655, %v677, %v678
      %v680 = vrot.slane %v635, 5
      %v681 = vrot.slane %v680, 4
      %v682 = vrot.slane %v229, 5
      %v683 = vsel %vm655, %v681, %v682
      %v684 = vrot.slane %v636, 5
      %v685 = vrot.slane %v684, 4
      %v686 = vrot.slane %v230, 5
      %v687 = vsel %vm655, %v685, %v686
      %s688 = scalar_lea.vmem %s1, 128
      %v689 = vld [vmem:[%s688] sm:$0xf]
      %v690 = vld [vmem:[%s688 + $0x4] sm:$0xf]
      %v691 = vld [vmem:[%s688 + $0x8] sm:$0xf]
      %v692 = vld [vmem:[%s688 + $0xc] sm:$0xf]
      %v693 = vld [vmem:[%s688 + $0x10] sm:$0xf]
      %v694 = vld [vmem:[%s688 + $0x14] sm:$0xf]
      %v695 = vld [vmem:[%s688 + $0x18] sm:$0xf]
      %v696 = vld [vmem:[%s688 + $0x1c] sm:$0xf]
      %v697 = vld [vmem:[%s688 + $0x20] sm:$0xf]
      %v698 = vld [vmem:[%s688 + $0x24] sm:$0xf]
      %v699 = vld [vmem:[%s688 + $0x28] sm:$0xf]
      %v700 = vld [vmem:[%s688 + $0x2c] sm:$0xf]
      %v701 = vld [vmem:[%s688 + $0x30] sm:$0xf]
      %v702 = vld [vmem:[%s688 + $0x34] sm:$0xf]
      %v703 = vld [vmem:[%s688 + $0x38] sm:$0xf]
      %v704 = vld [vmem:[%s688 + $0x3c] sm:$0xf]
      %v705 = vunpack.c.l.b16 %v659
      %v706 = vunpack.c.l.b16 %v663
      %v707 = vunpack.c.l.b16 %v667
      %v708 = vunpack.c.l.b16 %v671
      %v709 = vunpack.c.l.b16 %v675
      %v710 = vunpack.c.l.b16 %v679
      %v711 = vunpack.c.l.b16 %v683
      %v712 = vunpack.c.l.b16 %v687
      %v713 = vpack.c.b16 %v706, %v705
      %v714 = vpack.c.b16 %v708, %v707
      %v715 = vpack.c.b16 %v710, %v709
      %v716 = vpack.c.b16 %v712, %v711
      %v737 = vunpack.c.l.b16 %v689
      %v738 = vunpack.c.l.b16 %v690
      %v739 = vunpack.c.l.b16 %v691
      %v740 = vunpack.c.l.b16 %v692
      %v741 = vunpack.c.l.b16 %v693
      %v742 = vunpack.c.l.b16 %v694
      %v743 = vunpack.c.l.b16 %v695
      %v744 = vunpack.c.l.b16 %v696
      %v745 = vunpack.c.l.b16 %v697
      %v746 = vunpack.c.l.b16 %v698
      %v747 = vunpack.c.l.b16 %v699
      %v748 = vunpack.c.l.b16 %v700
      %v749 = vunpack.c.l.b16 %v701
      %v750 = vunpack.c.l.b16 %v702
      %v751 = vunpack.c.l.b16 %v703
      %v752 = vunpack.c.l.b16 %v704
      %v753 = vpack.c.b16 %v738, %v737
      %v754 = vpack.c.b16 %v740, %v739
      %v755 = vpack.c.b16 %v742, %v741
      %v756 = vpack.c.b16 %v744, %v743
      %v757 = vpack.c.b16 %v746, %v745
      %v758 = vpack.c.b16 %v748, %v747
      %v759 = vpack.c.b16 %v750, %v749
      %v760 = vpack.c.b16 %v752, %v751
      %769 = vmatprep.subr.bf16.mxu0 0
      %770 = vmatpush1.bf16.msra.mxu0 %v760
      %771 = vmatprep.subr.bf16.mxu0 0
      %772 = vmatpush1.bf16.msra.mxu0 %v759
      %773 = vmatprep.subr.bf16.mxu0 0
      %774 = vmatpush1.bf16.msra.mxu0 %v758
      %775 = vmatprep.subr.bf16.mxu0 0
      %776 = vmatpush1.bf16.msra.mxu0 %v757
      %777 = vmatprep.subr.bf16.mxu0 0
      %778 = vmatpush1.bf16.msra.mxu0 %v756
      %779 = vmatprep.subr.bf16.mxu0 0
      %780 = vmatpush1.bf16.msra.mxu0 %v755
      %781 = vmatprep.subr.bf16.mxu0 0
      %782 = vmatpush1.bf16.msra.mxu0 %v754
      %783 = vmatprep.subr.bf16.mxu0 0
      %784 = vmatpush1.bf16.msra.mxu0 %v753
      %785 = vmatprep.subr.bf16.mxu0 0
      %786 = vmatpush2.bf16.msra.mxu0 0
      %787 = vmatprep.subr.bf16.mxu0 0
      %788 = vmatpush2.bf16.msra.mxu0 0
      %789 = vmatprep.subr.bf16.mxu0 0
      %790 = vmatpush2.bf16.msra.mxu0 0
      %791 = vmatprep.subr.bf16.mxu0 0
      %792 = vmatpush2.bf16.msra.mxu0 0
      %793 = vmatprep.subr.bf16.mxu0 0
      %794 = vmatpush2.bf16.msra.mxu0 0
      %795 = vmatprep.subr.bf16.mxu0 0
      %796 = vmatpush2.bf16.msra.mxu0 0
      %797 = vmatprep.subr.bf16.mxu0 0
      %798 = vmatpush2.bf16.msra.mxu0 0
      %799 = vmatprep.subr.bf16.mxu0 0
      %800 = vmatpush2.bf16.msra.mxu0 0
      %801 = vmatprep.mubr.bf16.mxu0 0
      %802 = vmatmul.mubr.bf16.gmra.mxu0 %v713
      %v803 = vpop.f32.mrf.mxu0
      %v804 = vadd.f32 0.0, %v803
      %v805 = vpop.f32.mrf.mxu0
      %v806 = vpop.f32.mrf.mxu0
      %v807 = vadd.f32 0.0, %v806
      %v808 = vpop.f32.mrf.mxu0
      %809 = vmatprep.mubr.bf16.mxu0 0
      %810 = vmatmul.mubr.bf16.gmra.mxu0 %v714
      %v811 = vpop.f32.mrf.mxu0
      %v812 = vadd.f32 0.0, %v811
      %v813 = vpop.f32.mrf.mxu0
      %v814 = vpop.f32.mrf.mxu0
      %v815 = vadd.f32 0.0, %v814
      %v816 = vpop.f32.mrf.mxu0
      %817 = vmatprep.mubr.bf16.mxu0 0
      %818 = vmatmul.mubr.bf16.gmra.mxu0 %v715
      %v819 = vpop.f32.mrf.mxu0
      %v820 = vadd.f32 0.0, %v819
      %v821 = vpop.f32.mrf.mxu0
      %v822 = vpop.f32.mrf.mxu0
      %v823 = vadd.f32 0.0, %v822
      %v824 = vpop.f32.mrf.mxu0
      %825 = vmatprep.mubr.bf16.mxu0 0
      %826 = vmatmul.mubr.bf16.gmra.mxu0 %v716
      %v827 = vpop.f32.mrf.mxu0
      %v828 = vadd.f32 0.0, %v827
      %v829 = vpop.f32.mrf.mxu0
      %v830 = vpop.f32.mrf.mxu0
      %v831 = vadd.f32 0.0, %v830
      %v832 = vpop.f32.mrf.mxu0
      %833 = vdwg.mxu0
      %v834 = vadd.f32 %v599, %v804
      %v835 = vadd.f32 %v602, %v807
      %v836 = vadd.f32 %v607, %v812
      %v837 = vadd.f32 %v610, %v815
      %v838 = vadd.f32 %v615, %v820
      %v839 = vadd.f32 %v618, %v823
      %v840 = vadd.f32 %v623, %v828
      %v841 = vadd.f32 %v626, %v831
      %s842 = sadd.s32 %s195, 1
      %s843 = smul.u32 %s842, 2
      %s844 = smul.addr %s843, 4
      %s845 = scalar_lea.vmem %s183, %s844
      %v846 = vld [vmem:[%s845] sm:$0xf]
      %v847 = vld [vmem:[%s845 + $0x8] sm:$0xf]
      %v848 = vld [vmem:[%s845 + $0x10] sm:$0xf]
      %v849 = vld [vmem:[%s845 + $0x18] sm:$0xf]
      %v850 = vld [vmem:[%s845 + $0x20] sm:$0xf]
      %v851 = vld [vmem:[%s845 + $0x28] sm:$0xf]
      %v852 = vld [vmem:[%s845 + $0x30] sm:$0xf]
      %v853 = vld [vmem:[%s845 + $0x38] sm:$0xf]
      %s854 = scalar_lea.vmem %s1, 192
      %v855 = vld [vmem:[%s854] sm:$0xf]
      %v856 = vld [vmem:[%s854 + $0x4] sm:$0xf]
      %v857 = vld [vmem:[%s854 + $0x8] sm:$0xf]
      %v858 = vld [vmem:[%s854 + $0xc] sm:$0xf]
      %v859 = vld [vmem:[%s854 + $0x10] sm:$0xf]
      %v860 = vld [vmem:[%s854 + $0x14] sm:$0xf]
      %v861 = vld [vmem:[%s854 + $0x18] sm:$0xf]
      %v862 = vld [vmem:[%s854 + $0x1c] sm:$0xf]
      %v863 = vld [vmem:[%s854 + $0x20] sm:$0xf]
      %v864 = vld [vmem:[%s854 + $0x24] sm:$0xf]
      %v865 = vld [vmem:[%s854 + $0x28] sm:$0xf]
      %v866 = vld [vmem:[%s854 + $0x2c] sm:$0xf]
      %v867 = vld [vmem:[%s854 + $0x30] sm:$0xf]
      %v868 = vld [vmem:[%s854 + $0x34] sm:$0xf]
      %v869 = vld [vmem:[%s854 + $0x38] sm:$0xf]
      %v870 = vld [vmem:[%s854 + $0x3c] sm:$0xf]
      %v879 = vunpack.c.l.b16 %v846
      %v880 = vunpack.c.l.b16 %v847
      %v881 = vunpack.c.l.b16 %v848
      %v882 = vunpack.c.l.b16 %v849
      %v883 = vunpack.c.l.b16 %v850
      %v884 = vunpack.c.l.b16 %v851
      %v885 = vunpack.c.l.b16 %v852
      %v886 = vunpack.c.l.b16 %v853
      %v887 = vpack.c.b16 %v880, %v879
      %v888 = vpack.c.b16 %v882, %v881
      %v889 = vpack.c.b16 %v884, %v883
      %v890 = vpack.c.b16 %v886, %v885
      %v911 = vunpack.c.l.b16 %v855
      %v912 = vunpack.c.l.b16 %v856
      %v913 = vunpack.c.l.b16 %v857
      %v914 = vunpack.c.l.b16 %v858
      %v915 = vunpack.c.l.b16 %v859
      %v916 = vunpack.c.l.b16 %v860
      %v917 = vunpack.c.l.b16 %v861
      %v918 = vunpack.c.l.b16 %v862
      %v919 = vunpack.c.l.b16 %v863
      %v920 = vunpack.c.l.b16 %v864
      %v921 = vunpack.c.l.b16 %v865
      %v922 = vunpack.c.l.b16 %v866
      %v923 = vunpack.c.l.b16 %v867
      %v924 = vunpack.c.l.b16 %v868
      %v925 = vunpack.c.l.b16 %v869
      %v926 = vunpack.c.l.b16 %v870
      %v927 = vpack.c.b16 %v912, %v911
      %v928 = vpack.c.b16 %v914, %v913
      %v929 = vpack.c.b16 %v916, %v915
      %v930 = vpack.c.b16 %v918, %v917
      %v931 = vpack.c.b16 %v920, %v919
      %v932 = vpack.c.b16 %v922, %v921
      %v933 = vpack.c.b16 %v924, %v923
      %v934 = vpack.c.b16 %v926, %v925
      %943 = vmatprep.subr.bf16.mxu0 0
      %944 = vmatpush1.bf16.msra.mxu0 %v934
      %945 = vmatprep.subr.bf16.mxu0 0
      %946 = vmatpush1.bf16.msra.mxu0 %v933
      %947 = vmatprep.subr.bf16.mxu0 0
      %948 = vmatpush1.bf16.msra.mxu0 %v932
      %949 = vmatprep.subr.bf16.mxu0 0
      %950 = vmatpush1.bf16.msra.mxu0 %v931
      %951 = vmatprep.subr.bf16.mxu0 0
      %952 = vmatpush1.bf16.msra.mxu0 %v930
      %953 = vmatprep.subr.bf16.mxu0 0
      %954 = vmatpush1.bf16.msra.mxu0 %v929
      %955 = vmatprep.subr.bf16.mxu0 0
      %956 = vmatpush1.bf16.msra.mxu0 %v928
      %957 = vmatprep.subr.bf16.mxu0 0
      %958 = vmatpush1.bf16.msra.mxu0 %v927
      %959 = vmatprep.subr.bf16.mxu0 0
      %960 = vmatpush2.bf16.msra.mxu0 0
      %961 = vmatprep.subr.bf16.mxu0 0
      %962 = vmatpush2.bf16.msra.mxu0 0
      %963 = vmatprep.subr.bf16.mxu0 0
      %964 = vmatpush2.bf16.msra.mxu0 0
      %965 = vmatprep.subr.bf16.mxu0 0
      %966 = vmatpush2.bf16.msra.mxu0 0
      %967 = vmatprep.subr.bf16.mxu0 0
      %968 = vmatpush2.bf16.msra.mxu0 0
      %969 = vmatprep.subr.bf16.mxu0 0
      %970 = vmatpush2.bf16.msra.mxu0 0
      %971 = vmatprep.subr.bf16.mxu0 0
      %972 = vmatpush2.bf16.msra.mxu0 0
      %973 = vmatprep.subr.bf16.mxu0 0
      %974 = vmatpush2.bf16.msra.mxu0 0
      %975 = vmatprep.mubr.bf16.mxu0 0
      %976 = vmatmul.mubr.bf16.gmra.mxu0 %v887
      %v977 = vpop.f32.mrf.mxu0
      %v978 = vadd.f32 0.0, %v977
      %v979 = vpop.f32.mrf.mxu0
      %v980 = vpop.f32.mrf.mxu0
      %v981 = vadd.f32 0.0, %v980
      %v982 = vpop.f32.mrf.mxu0
      %983 = vmatprep.mubr.bf16.mxu0 0
      %984 = vmatmul.mubr.bf16.gmra.mxu0 %v888
      %v985 = vpop.f32.mrf.mxu0
      %v986 = vadd.f32 0.0, %v985
      %v987 = vpop.f32.mrf.mxu0
      %v988 = vpop.f32.mrf.mxu0
      %v989 = vadd.f32 0.0, %v988
      %v990 = vpop.f32.mrf.mxu0
      %991 = vmatprep.mubr.bf16.mxu0 0
      %992 = vmatmul.mubr.bf16.gmra.mxu0 %v889
      %v993 = vpop.f32.mrf.mxu0
      %v994 = vadd.f32 0.0, %v993
      %v995 = vpop.f32.mrf.mxu0
      %v996 = vpop.f32.mrf.mxu0
      %v997 = vadd.f32 0.0, %v996
      %v998 = vpop.f32.mrf.mxu0
      %999 = vmatprep.mubr.bf16.mxu0 0
      %1000 = vmatmul.mubr.bf16.gmra.mxu0 %v890
      %v1001 = vpop.f32.mrf.mxu0
      %v1002 = vadd.f32 0.0, %v1001
      %v1003 = vpop.f32.mrf.mxu0
      %v1004 = vpop.f32.mrf.mxu0
      %v1005 = vadd.f32 0.0, %v1004
      %v1006 = vpop.f32.mrf.mxu0
      %1007 = vdwg.mxu0
      %v1008 = vadd.f32 %v834, %v978
      %v1009 = vadd.f32 %v835, %v981
      %v1010 = vadd.f32 %v836, %v986
      %v1011 = vadd.f32 %v837, %v989
      %v1012 = vadd.f32 %v838, %v994
      %v1013 = vadd.f32 %v839, %v997
      %v1014 = vadd.f32 %v840, %v1002
      %v1015 = vadd.f32 %v841, %v1005
      %v1016 = vld [vmem:[%s845] sm:$0xf]
      %v1017 = vld [vmem:[%s845 + $0x4] sm:$0x1]
      %v1018 = vld [vmem:[%s845 + $0x8] sm:$0xf]
      %v1019 = vld [vmem:[%s845 + $0xc] sm:$0x1]
      %v1020 = vld [vmem:[%s845 + $0x10] sm:$0xf]
      %v1021 = vld [vmem:[%s845 + $0x14] sm:$0x1]
      %v1022 = vld [vmem:[%s845 + $0x18] sm:$0xf]
      %v1023 = vld [vmem:[%s845 + $0x1c] sm:$0x1]
      %v1024 = vld [vmem:[%s845 + $0x20] sm:$0xf]
      %v1025 = vld [vmem:[%s845 + $0x24] sm:$0x1]
      %v1026 = vld [vmem:[%s845 + $0x28] sm:$0xf]
      %v1027 = vld [vmem:[%s845 + $0x2c] sm:$0x1]
      %v1028 = vld [vmem:[%s845 + $0x30] sm:$0xf]
      %v1029 = vld [vmem:[%s845 + $0x34] sm:$0x1]
      %v1030 = vld [vmem:[%s845 + $0x38] sm:$0xf]
      %v1031 = vld [vmem:[%s845 + $0x3c] sm:$0x1]
      %v1033 = vshrl.u32 %v1016, 16
      %v1035 = vrot.slane %v1033, 4
      %v1036 = vshll.u32 %v1016, 16
      %v1038 = vrot.slane %v1036, 5
      %v1039 = vor.u32 %v1035, %v1038
      %v1040 = vrot.slane %v1039, 4
      %v1042 = vshll.u32 %v1017, 16
      %v1044 = vrot.slane %v1042, 5
      %v1045 = vsel %vm233, %v1040, %v1044
      %v1047 = vshrl.u32 %v1018, 16
      %v1049 = vrot.slane %v1047, 4
      %v1050 = vshll.u32 %v1018, 16
      %v1052 = vrot.slane %v1050, 5
      %v1053 = vor.u32 %v1049, %v1052
      %v1054 = vrot.slane %v1053, 4
      %v1056 = vshll.u32 %v1019, 16
      %v1058 = vrot.slane %v1056, 5
      %v1059 = vsel %vm233, %v1054, %v1058
      %v1061 = vshrl.u32 %v1020, 16
      %v1063 = vrot.slane %v1061, 4
      %v1064 = vshll.u32 %v1020, 16
      %v1066 = vrot.slane %v1064, 5
      %v1067 = vor.u32 %v1063, %v1066
      %v1068 = vrot.slane %v1067, 4
      %v1070 = vshll.u32 %v1021, 16
      %v1072 = vrot.slane %v1070, 5
      %v1073 = vsel %vm233, %v1068, %v1072
      %v1075 = vshrl.u32 %v1022, 16
      %v1077 = vrot.slane %v1075, 4
      %v1078 = vshll.u32 %v1022, 16
      %v1080 = vrot.slane %v1078, 5
      %v1081 = vor.u32 %v1077, %v1080
      %v1082 = vrot.slane %v1081, 4
      %v1084 = vshll.u32 %v1023, 16
      %v1086 = vrot.slane %v1084, 5
      %v1087 = vsel %vm233, %v1082, %v1086
      %v1089 = vshrl.u32 %v1024, 16
      %v1091 = vrot.slane %v1089, 4
      %v1092 = vshll.u32 %v1024, 16
      %v1094 = vrot.slane %v1092, 5
      %v1095 = vor.u32 %v1091, %v1094
      %v1096 = vrot.slane %v1095, 4
      %v1098 = vshll.u32 %v1025, 16
      %v1100 = vrot.slane %v1098, 5
      %v1101 = vsel %vm233, %v1096, %v1100
      %v1103 = vshrl.u32 %v1026, 16
      %v1105 = vrot.slane %v1103, 4
      %v1106 = vshll.u32 %v1026, 16
      %v1108 = vrot.slane %v1106, 5
      %v1109 = vor.u32 %v1105, %v1108
      %v1110 = vrot.slane %v1109, 4
      %v1112 = vshll.u32 %v1027, 16
      %v1114 = vrot.slane %v1112, 5
      %v1115 = vsel %vm233, %v1110, %v1114
      %v1117 = vshrl.u32 %v1028, 16
      %v1119 = vrot.slane %v1117, 4
      %v1120 = vshll.u32 %v1028, 16
      %v1122 = vrot.slane %v1120, 5
      %v1123 = vor.u32 %v1119, %v1122
      %v1124 = vrot.slane %v1123, 4
      %v1126 = vshll.u32 %v1029, 16
      %v1128 = vrot.slane %v1126, 5
      %v1129 = vsel %vm233, %v1124, %v1128
      %v1131 = vshrl.u32 %v1030, 16
      %v1133 = vrot.slane %v1131, 4
      %v1134 = vshll.u32 %v1030, 16
      %v1136 = vrot.slane %v1134, 5
      %v1137 = vor.u32 %v1133, %v1136
      %v1138 = vrot.slane %v1137, 4
      %v1140 = vshll.u32 %v1031, 16
      %v1142 = vrot.slane %v1140, 5
      %v1143 = vsel %vm233, %v1138, %v1142
      %s1144 = scalar_lea.vmem %s1, 256
      %v1145 = vld [vmem:[%s1144] sm:$0xf]
      %v1146 = vld [vmem:[%s1144 + $0x4] sm:$0xf]
      %v1147 = vld [vmem:[%s1144 + $0x8] sm:$0xf]
      %v1148 = vld [vmem:[%s1144 + $0xc] sm:$0xf]
      %v1149 = vld [vmem:[%s1144 + $0x10] sm:$0xf]
      %v1150 = vld [vmem:[%s1144 + $0x14] sm:$0xf]
      %v1151 = vld [vmem:[%s1144 + $0x18] sm:$0xf]
      %v1152 = vld [vmem:[%s1144 + $0x1c] sm:$0xf]
      %v1153 = vld [vmem:[%s1144 + $0x20] sm:$0xf]
      %v1154 = vld [vmem:[%s1144 + $0x24] sm:$0xf]
      %v1155 = vld [vmem:[%s1144 + $0x28] sm:$0xf]
      %v1156 = vld [vmem:[%s1144 + $0x2c] sm:$0xf]
      %v1157 = vld [vmem:[%s1144 + $0x30] sm:$0xf]
      %v1158 = vld [vmem:[%s1144 + $0x34] sm:$0xf]
      %v1159 = vld [vmem:[%s1144 + $0x38] sm:$0xf]
      %v1160 = vld [vmem:[%s1144 + $0x3c] sm:$0xf]
      %v1161 = vunpack.c.l.b16 %v1045
      %v1162 = vunpack.c.l.b16 %v1059
      %v1163 = vunpack.c.l.b16 %v1073
      %v1164 = vunpack.c.l.b16 %v1087
      %v1165 = vunpack.c.l.b16 %v1101
      %v1166 = vunpack.c.l.b16 %v1115
      %v1167 = vunpack.c.l.b16 %v1129
      %v1168 = vunpack.c.l.b16 %v1143
      %v1169 = vpack.c.b16 %v1162, %v1161
      %v1170 = vpack.c.b16 %v1164, %v1163
      %v1171 = vpack.c.b16 %v1166, %v1165
      %v1172 = vpack.c.b16 %v1168, %v1167
      %v1193 = vunpack.c.l.b16 %v1145
      %v1194 = vunpack.c.l.b16 %v1146
      %v1195 = vunpack.c.l.b16 %v1147
      %v1196 = vunpack.c.l.b16 %v1148
      %v1197 = vunpack.c.l.b16 %v1149
      %v1198 = vunpack.c.l.b16 %v1150
      %v1199 = vunpack.c.l.b16 %v1151
      %v1200 = vunpack.c.l.b16 %v1152
      %v1201 = vunpack.c.l.b16 %v1153
      %v1202 = vunpack.c.l.b16 %v1154
      %v1203 = vunpack.c.l.b16 %v1155
      %v1204 = vunpack.c.l.b16 %v1156
      %v1205 = vunpack.c.l.b16 %v1157
      %v1206 = vunpack.c.l.b16 %v1158
      %v1207 = vunpack.c.l.b16 %v1159
      %v1208 = vunpack.c.l.b16 %v1160
      %v1209 = vpack.c.b16 %v1194, %v1193
      %v1210 = vpack.c.b16 %v1196, %v1195
      %v1211 = vpack.c.b16 %v1198, %v1197
      %v1212 = vpack.c.b16 %v1200, %v1199
      %v1213 = vpack.c.b16 %v1202, %v1201
      %v1214 = vpack.c.b16 %v1204, %v1203
      %v1215 = vpack.c.b16 %v1206, %v1205
      %v1216 = vpack.c.b16 %v1208, %v1207
      %1225 = vmatprep.subr.bf16.mxu0 0
      %1226 = vmatpush1.bf16.msra.mxu0 %v1216
      %1227 = vmatprep.subr.bf16.mxu0 0
      %1228 = vmatpush1.bf16.msra.mxu0 %v1215
      %1229 = vmatprep.subr.bf16.mxu0 0
      %1230 = vmatpush1.bf16.msra.mxu0 %v1214
      %1231 = vmatprep.subr.bf16.mxu0 0
      %1232 = vmatpush1.bf16.msra.mxu0 %v1213
      %1233 = vmatprep.subr.bf16.mxu0 0
      %1234 = vmatpush1.bf16.msra.mxu0 %v1212
      %1235 = vmatprep.subr.bf16.mxu0 0
      %1236 = vmatpush1.bf16.msra.mxu0 %v1211
      %1237 = vmatprep.subr.bf16.mxu0 0
      %1238 = vmatpush1.bf16.msra.mxu0 %v1210
      %1239 = vmatprep.subr.bf16.mxu0 0
      %1240 = vmatpush1.bf16.msra.mxu0 %v1209
      %1241 = vmatprep.subr.bf16.mxu0 0
      %1242 = vmatpush2.bf16.msra.mxu0 0
      %1243 = vmatprep.subr.bf16.mxu0 0
      %1244 = vmatpush2.bf16.msra.mxu0 0
      %1245 = vmatprep.subr.bf16.mxu0 0
      %1246 = vmatpush2.bf16.msra.mxu0 0
      %1247 = vmatprep.subr.bf16.mxu0 0
      %1248 = vmatpush2.bf16.msra.mxu0 0
      %1249 = vmatprep.subr.bf16.mxu0 0
      %1250 = vmatpush2.bf16.msra.mxu0 0
      %1251 = vmatprep.subr.bf16.mxu0 0
      %1252 = vmatpush2.bf16.msra.mxu0 0
      %1253 = vmatprep.subr.bf16.mxu0 0
      %1254 = vmatpush2.bf16.msra.mxu0 0
      %1255 = vmatprep.subr.bf16.mxu0 0
      %1256 = vmatpush2.bf16.msra.mxu0 0
      %1257 = vmatprep.mubr.bf16.mxu0 0
      %1258 = vmatmul.mubr.bf16.gmra.mxu0 %v1169
      %v1259 = vpop.f32.mrf.mxu0
      %v1260 = vadd.f32 0.0, %v1259
      %v1261 = vpop.f32.mrf.mxu0
      %v1262 = vpop.f32.mrf.mxu0
      %v1263 = vadd.f32 0.0, %v1262
      %v1264 = vpop.f32.mrf.mxu0
      %1265 = vmatprep.mubr.bf16.mxu0 0
      %1266 = vmatmul.mubr.bf16.gmra.mxu0 %v1170
      %v1267 = vpop.f32.mrf.mxu0
      %v1268 = vadd.f32 0.0, %v1267
      %v1269 = vpop.f32.mrf.mxu0
      %v1270 = vpop.f32.mrf.mxu0
      %v1271 = vadd.f32 0.0, %v1270
      %v1272 = vpop.f32.mrf.mxu0
      %1273 = vmatprep.mubr.bf16.mxu0 0
      %1274 = vmatmul.mubr.bf16.gmra.mxu0 %v1171
      %v1275 = vpop.f32.mrf.mxu0
      %v1276 = vadd.f32 0.0, %v1275
      %v1277 = vpop.f32.mrf.mxu0
      %v1278 = vpop.f32.mrf.mxu0
      %v1279 = vadd.f32 0.0, %v1278
      %v1280 = vpop.f32.mrf.mxu0
      %1281 = vmatprep.mubr.bf16.mxu0 0
      %1282 = vmatmul.mubr.bf16.gmra.mxu0 %v1172
      %v1283 = vpop.f32.mrf.mxu0
      %v1284 = vadd.f32 0.0, %v1283
      %v1285 = vpop.f32.mrf.mxu0
      %v1286 = vpop.f32.mrf.mxu0
      %v1287 = vadd.f32 0.0, %v1286
      %v1288 = vpop.f32.mrf.mxu0
      %1289 = vdwg.mxu0
      %v1290 = vadd.f32 %v1008, %v1260
      %v1291 = vadd.f32 %v1009, %v1263
      %v1292 = vadd.f32 %v1010, %v1268
      %v1293 = vadd.f32 %v1011, %v1271
      %v1294 = vadd.f32 %v1012, %v1276
      %v1295 = vadd.f32 %v1013, %v1279
      %v1296 = vadd.f32 %v1014, %v1284
      %v1297 = vadd.f32 %v1015, %v1287
      %v1298 = vld [vmem:[%s845] sm:$0xe]
      %v1299 = vld [vmem:[%s845 + $0x8] sm:$0xe]
      %v1300 = vld [vmem:[%s845 + $0x10] sm:$0xe]
      %v1301 = vld [vmem:[%s845 + $0x18] sm:$0xe]
      %v1302 = vld [vmem:[%s845 + $0x20] sm:$0xe]
      %v1303 = vld [vmem:[%s845 + $0x28] sm:$0xe]
      %v1304 = vld [vmem:[%s845 + $0x30] sm:$0xe]
      %v1305 = vld [vmem:[%s845 + $0x38] sm:$0xe]
      %v1322 = vrot.slane %v1298, 5
      %v1323 = vrot.slane %v1322, 4
      %v1324 = vrot.slane %v1017, 5
      %v1325 = vsel %vm655, %v1323, %v1324
      %v1326 = vrot.slane %v1299, 5
      %v1327 = vrot.slane %v1326, 4
      %v1328 = vrot.slane %v1019, 5
      %v1329 = vsel %vm655, %v1327, %v1328
      %v1330 = vrot.slane %v1300, 5
      %v1331 = vrot.slane %v1330, 4
      %v1332 = vrot.slane %v1021, 5
      %v1333 = vsel %vm655, %v1331, %v1332
      %v1334 = vrot.slane %v1301, 5
      %v1335 = vrot.slane %v1334, 4
      %v1336 = vrot.slane %v1023, 5
      %v1337 = vsel %vm655, %v1335, %v1336
      %v1338 = vrot.slane %v1302, 5
      %v1339 = vrot.slane %v1338, 4
      %v1340 = vrot.slane %v1025, 5
      %v1341 = vsel %vm655, %v1339, %v1340
      %v1342 = vrot.slane %v1303, 5
      %v1343 = vrot.slane %v1342, 4
      %v1344 = vrot.slane %v1027, 5
      %v1345 = vsel %vm655, %v1343, %v1344
      %v1346 = vrot.slane %v1304, 5
      %v1347 = vrot.slane %v1346, 4
      %v1348 = vrot.slane %v1029, 5
      %v1349 = vsel %vm655, %v1347, %v1348
      %v1350 = vrot.slane %v1305, 5
      %v1351 = vrot.slane %v1350, 4
      %v1352 = vrot.slane %v1031, 5
      %v1353 = vsel %vm655, %v1351, %v1352
      %s1354 = scalar_lea.vmem %s1, 320
      %v1355 = vld [vmem:[%s1354] sm:$0xf]
      %v1356 = vld [vmem:[%s1354 + $0x4] sm:$0xf]
      %v1357 = vld [vmem:[%s1354 + $0x8] sm:$0xf]
      %v1358 = vld [vmem:[%s1354 + $0xc] sm:$0xf]
      %v1359 = vld [vmem:[%s1354 + $0x10] sm:$0xf]
      %v1360 = vld [vmem:[%s1354 + $0x14] sm:$0xf]
      %v1361 = vld [vmem:[%s1354 + $0x18] sm:$0xf]
      %v1362 = vld [vmem:[%s1354 + $0x1c] sm:$0xf]
      %v1363 = vld [vmem:[%s1354 + $0x20] sm:$0xf]
      %v1364 = vld [vmem:[%s1354 + $0x24] sm:$0xf]
      %v1365 = vld [vmem:[%s1354 + $0x28] sm:$0xf]
      %v1366 = vld [vmem:[%s1354 + $0x2c] sm:$0xf]
      %v1367 = vld [vmem:[%s1354 + $0x30] sm:$0xf]
      %v1368 = vld [vmem:[%s1354 + $0x34] sm:$0xf]
      %v1369 = vld [vmem:[%s1354 + $0x38] sm:$0xf]
      %v1370 = vld [vmem:[%s1354 + $0x3c] sm:$0xf]
      %v1371 = vunpack.c.l.b16 %v1325
      %v1372 = vunpack.c.l.b16 %v1329
      %v1373 = vunpack.c.l.b16 %v1333
      %v1374 = vunpack.c.l.b16 %v1337
      %v1375 = vunpack.c.l.b16 %v1341
      %v1376 = vunpack.c.l.b16 %v1345
      %v1377 = vunpack.c.l.b16 %v1349
      %v1378 = vunpack.c.l.b16 %v1353
      %v1379 = vpack.c.b16 %v1372, %v1371
      %v1380 = vpack.c.b16 %v1374, %v1373
      %v1381 = vpack.c.b16 %v1376, %v1375
      %v1382 = vpack.c.b16 %v1378, %v1377
      %v1403 = vunpack.c.l.b16 %v1355
      %v1404 = vunpack.c.l.b16 %v1356
      %v1405 = vunpack.c.l.b16 %v1357
      %v1406 = vunpack.c.l.b16 %v1358
      %v1407 = vunpack.c.l.b16 %v1359
      %v1408 = vunpack.c.l.b16 %v1360
      %v1409 = vunpack.c.l.b16 %v1361
      %v1410 = vunpack.c.l.b16 %v1362
      %v1411 = vunpack.c.l.b16 %v1363
      %v1412 = vunpack.c.l.b16 %v1364
      %v1413 = vunpack.c.l.b16 %v1365
      %v1414 = vunpack.c.l.b16 %v1366
      %v1415 = vunpack.c.l.b16 %v1367
      %v1416 = vunpack.c.l.b16 %v1368
      %v1417 = vunpack.c.l.b16 %v1369
      %v1418 = vunpack.c.l.b16 %v1370
      %v1419 = vpack.c.b16 %v1404, %v1403
      %v1420 = vpack.c.b16 %v1406, %v1405
      %v1421 = vpack.c.b16 %v1408, %v1407
      %v1422 = vpack.c.b16 %v1410, %v1409
      %v1423 = vpack.c.b16 %v1412, %v1411
      %v1424 = vpack.c.b16 %v1414, %v1413
      %v1425 = vpack.c.b16 %v1416, %v1415
      %v1426 = vpack.c.b16 %v1418, %v1417
      %1435 = vmatprep.subr.bf16.mxu0 0
      %1436 = vmatpush1.bf16.msra.mxu0 %v1426
      %1437 = vmatprep.subr.bf16.mxu0 0
      %1438 = vmatpush1.bf16.msra.mxu0 %v1425
      %1439 = vmatprep.subr.bf16.mxu0 0
      %1440 = vmatpush1.bf16.msra.mxu0 %v1424
      %1441 = vmatprep.subr.bf16.mxu0 0
      %1442 = vmatpush1.bf16.msra.mxu0 %v1423
      %1443 = vmatprep.subr.bf16.mxu0 0
      %1444 = vmatpush1.bf16.msra.mxu0 %v1422
      %1445 = vmatprep.subr.bf16.mxu0 0
      %1446 = vmatpush1.bf16.msra.mxu0 %v1421
      %1447 = vmatprep.subr.bf16.mxu0 0
      %1448 = vmatpush1.bf16.msra.mxu0 %v1420
      %1449 = vmatprep.subr.bf16.mxu0 0
      %1450 = vmatpush1.bf16.msra.mxu0 %v1419
      %1451 = vmatprep.subr.bf16.mxu0 0
      %1452 = vmatpush2.bf16.msra.mxu0 0
      %1453 = vmatprep.subr.bf16.mxu0 0
      %1454 = vmatpush2.bf16.msra.mxu0 0
      %1455 = vmatprep.subr.bf16.mxu0 0
      %1456 = vmatpush2.bf16.msra.mxu0 0
      %1457 = vmatprep.subr.bf16.mxu0 0
      %1458 = vmatpush2.bf16.msra.mxu0 0
      %1459 = vmatprep.subr.bf16.mxu0 0
      %1460 = vmatpush2.bf16.msra.mxu0 0
      %1461 = vmatprep.subr.bf16.mxu0 0
      %1462 = vmatpush2.bf16.msra.mxu0 0
      %1463 = vmatprep.subr.bf16.mxu0 0
      %1464 = vmatpush2.bf16.msra.mxu0 0
      %1465 = vmatprep.subr.bf16.mxu0 0
      %1466 = vmatpush2.bf16.msra.mxu0 0
      %1467 = vmatprep.mubr.bf16.mxu0 0
      %1468 = vmatmul.mubr.bf16.gmra.mxu0 %v1379
      %v1469 = vpop.f32.mrf.mxu0
      %v1470 = vadd.f32 0.0, %v1469
      %v1471 = vpop.f32.mrf.mxu0
      %v1472 = vpop.f32.mrf.mxu0
      %v1473 = vadd.f32 0.0, %v1472
      %v1474 = vpop.f32.mrf.mxu0
      %1475 = vmatprep.mubr.bf16.mxu0 0
      %1476 = vmatmul.mubr.bf16.gmra.mxu0 %v1380
      %v1477 = vpop.f32.mrf.mxu0
      %v1478 = vadd.f32 0.0, %v1477
      %v1479 = vpop.f32.mrf.mxu0
      %v1480 = vpop.f32.mrf.mxu0
      %v1481 = vadd.f32 0.0, %v1480
      %v1482 = vpop.f32.mrf.mxu0
      %1483 = vmatprep.mubr.bf16.mxu0 0
      %1484 = vmatmul.mubr.bf16.gmra.mxu0 %v1381
      %v1485 = vpop.f32.mrf.mxu0
      %v1486 = vadd.f32 0.0, %v1485
      %v1487 = vpop.f32.mrf.mxu0
      %v1488 = vpop.f32.mrf.mxu0
      %v1489 = vadd.f32 0.0, %v1488
      %v1490 = vpop.f32.mrf.mxu0
      %1491 = vmatprep.mubr.bf16.mxu0 0
      %1492 = vmatmul.mubr.bf16.gmra.mxu0 %v1382
      %v1493 = vpop.f32.mrf.mxu0
      %v1494 = vadd.f32 0.0, %v1493
      %v1495 = vpop.f32.mrf.mxu0
      %v1496 = vpop.f32.mrf.mxu0
      %v1497 = vadd.f32 0.0, %v1496
      %v1498 = vpop.f32.mrf.mxu0
      %1499 = vdwg.mxu0
      %v1500 = vadd.f32 %v1290, %v1470
      %v1501 = vadd.f32 %v1291, %v1473
      %v1502 = vadd.f32 %v1292, %v1478
      %v1503 = vadd.f32 %v1293, %v1481
      %v1504 = vadd.f32 %v1294, %v1486
      %v1505 = vadd.f32 %v1295, %v1489
      %v1506 = vadd.f32 %v1296, %v1494
      %v1507 = vadd.f32 %v1297, %v1497
      %s1508 = sadd.s32 %s195, 2
      %s1509 = smul.u32 %s1508, 2
      %s1510 = smul.addr %s1509, 4
      %s1511 = scalar_lea.vmem %s183, %s1510
      %v1512 = vld [vmem:[%s1511] sm:$0xf]
      %v1513 = vld [vmem:[%s1511 + $0x8] sm:$0xf]
      %v1514 = vld [vmem:[%s1511 + $0x10] sm:$0xf]
      %v1515 = vld [vmem:[%s1511 + $0x18] sm:$0xf]
      %v1516 = vld [vmem:[%s1511 + $0x20] sm:$0xf]
      %v1517 = vld [vmem:[%s1511 + $0x28] sm:$0xf]
      %v1518 = vld [vmem:[%s1511 + $0x30] sm:$0xf]
      %v1519 = vld [vmem:[%s1511 + $0x38] sm:$0xf]
      %s1520 = scalar_lea.vmem %s1, 384
      %v1521 = vld [vmem:[%s1520] sm:$0xf]
      %v1522 = vld [vmem:[%s1520 + $0x4] sm:$0xf]
      %v1523 = vld [vmem:[%s1520 + $0x8] sm:$0xf]
      %v1524 = vld [vmem:[%s1520 + $0xc] sm:$0xf]
      %v1525 = vld [vmem:[%s1520 + $0x10] sm:$0xf]
      %v1526 = vld [vmem:[%s1520 + $0x14] sm:$0xf]
      %v1527 = vld [vmem:[%s1520 + $0x18] sm:$0xf]
      %v1528 = vld [vmem:[%s1520 + $0x1c] sm:$0xf]
      %v1529 = vld [vmem:[%s1520 + $0x20] sm:$0xf]
      %v1530 = vld [vmem:[%s1520 + $0x24] sm:$0xf]
      %v1531 = vld [vmem:[%s1520 + $0x28] sm:$0xf]
      %v1532 = vld [vmem:[%s1520 + $0x2c] sm:$0xf]
      %v1533 = vld [vmem:[%s1520 + $0x30] sm:$0xf]
      %v1534 = vld [vmem:[%s1520 + $0x34] sm:$0xf]
      %v1535 = vld [vmem:[%s1520 + $0x38] sm:$0xf]
      %v1536 = vld [vmem:[%s1520 + $0x3c] sm:$0xf]
      %v1545 = vunpack.c.l.b16 %v1512
      %v1546 = vunpack.c.l.b16 %v1513
      %v1547 = vunpack.c.l.b16 %v1514
      %v1548 = vunpack.c.l.b16 %v1515
      %v1549 = vunpack.c.l.b16 %v1516
      %v1550 = vunpack.c.l.b16 %v1517
      %v1551 = vunpack.c.l.b16 %v1518
      %v1552 = vunpack.c.l.b16 %v1519
      %v1553 = vpack.c.b16 %v1546, %v1545
      %v1554 = vpack.c.b16 %v1548, %v1547
      %v1555 = vpack.c.b16 %v1550, %v1549
      %v1556 = vpack.c.b16 %v1552, %v1551
      %v1577 = vunpack.c.l.b16 %v1521
      %v1578 = vunpack.c.l.b16 %v1522
      %v1579 = vunpack.c.l.b16 %v1523
      %v1580 = vunpack.c.l.b16 %v1524
      %v1581 = vunpack.c.l.b16 %v1525
      %v1582 = vunpack.c.l.b16 %v1526
      %v1583 = vunpack.c.l.b16 %v1527
      %v1584 = vunpack.c.l.b16 %v1528
      %v1585 = vunpack.c.l.b16 %v1529
      %v1586 = vunpack.c.l.b16 %v1530
      %v1587 = vunpack.c.l.b16 %v1531
      %v1588 = vunpack.c.l.b16 %v1532
      %v1589 = vunpack.c.l.b16 %v1533
      %v1590 = vunpack.c.l.b16 %v1534
      %v1591 = vunpack.c.l.b16 %v1535
      %v1592 = vunpack.c.l.b16 %v1536
      %v1593 = vpack.c.b16 %v1578, %v1577
      %v1594 = vpack.c.b16 %v1580, %v1579
      %v1595 = vpack.c.b16 %v1582, %v1581
      %v1596 = vpack.c.b16 %v1584, %v1583
      %v1597 = vpack.c.b16 %v1586, %v1585
      %v1598 = vpack.c.b16 %v1588, %v1587
      %v1599 = vpack.c.b16 %v1590, %v1589
      %v1600 = vpack.c.b16 %v1592, %v1591
      %1609 = vmatprep.subr.bf16.mxu0 0
      %1610 = vmatpush1.bf16.msra.mxu0 %v1600
      %1611 = vmatprep.subr.bf16.mxu0 0
      %1612 = vmatpush1.bf16.msra.mxu0 %v1599
      %1613 = vmatprep.subr.bf16.mxu0 0
      %1614 = vmatpush1.bf16.msra.mxu0 %v1598
      %1615 = vmatprep.subr.bf16.mxu0 0
      %1616 = vmatpush1.bf16.msra.mxu0 %v1597
      %1617 = vmatprep.subr.bf16.mxu0 0
      %1618 = vmatpush1.bf16.msra.mxu0 %v1596
      %1619 = vmatprep.subr.bf16.mxu0 0
      %1620 = vmatpush1.bf16.msra.mxu0 %v1595
      %1621 = vmatprep.subr.bf16.mxu0 0
      %1622 = vmatpush1.bf16.msra.mxu0 %v1594
      %1623 = vmatprep.subr.bf16.mxu0 0
      %1624 = vmatpush1.bf16.msra.mxu0 %v1593
      %1625 = vmatprep.subr.bf16.mxu0 0
      %1626 = vmatpush2.bf16.msra.mxu0 0
      %1627 = vmatprep.subr.bf16.mxu0 0
      %1628 = vmatpush2.bf16.msra.mxu0 0
      %1629 = vmatprep.subr.bf16.mxu0 0
      %1630 = vmatpush2.bf16.msra.mxu0 0
      %1631 = vmatprep.subr.bf16.mxu0 0
      %1632 = vmatpush2.bf16.msra.mxu0 0
      %1633 = vmatprep.subr.bf16.mxu0 0
      %1634 = vmatpush2.bf16.msra.mxu0 0
      %1635 = vmatprep.subr.bf16.mxu0 0
      %1636 = vmatpush2.bf16.msra.mxu0 0
      %1637 = vmatprep.subr.bf16.mxu0 0
      %1638 = vmatpush2.bf16.msra.mxu0 0
      %1639 = vmatprep.subr.bf16.mxu0 0
      %1640 = vmatpush2.bf16.msra.mxu0 0
      %1641 = vmatprep.mubr.bf16.mxu0 0
      %1642 = vmatmul.mubr.bf16.gmra.mxu0 %v1553
      %v1643 = vpop.f32.mrf.mxu0
      %v1644 = vadd.f32 0.0, %v1643
      %v1645 = vpop.f32.mrf.mxu0
      %v1646 = vpop.f32.mrf.mxu0
      %v1647 = vadd.f32 0.0, %v1646
      %v1648 = vpop.f32.mrf.mxu0
      %1649 = vmatprep.mubr.bf16.mxu0 0
      %1650 = vmatmul.mubr.bf16.gmra.mxu0 %v1554
      %v1651 = vpop.f32.mrf.mxu0
      %v1652 = vadd.f32 0.0, %v1651
      %v1653 = vpop.f32.mrf.mxu0
      %v1654 = vpop.f32.mrf.mxu0
      %v1655 = vadd.f32 0.0, %v1654
      %v1656 = vpop.f32.mrf.mxu0
      %1657 = vmatprep.mubr.bf16.mxu0 0
      %1658 = vmatmul.mubr.bf16.gmra.mxu0 %v1555
      %v1659 = vpop.f32.mrf.mxu0
      %v1660 = vadd.f32 0.0, %v1659
      %v1661 = vpop.f32.mrf.mxu0
      %v1662 = vpop.f32.mrf.mxu0
      %v1663 = vadd.f32 0.0, %v1662
      %v1664 = vpop.f32.mrf.mxu0
      %1665 = vmatprep.mubr.bf16.mxu0 0
      %1666 = vmatmul.mubr.bf16.gmra.mxu0 %v1556
      %v1667 = vpop.f32.mrf.mxu0
      %v1668 = vadd.f32 0.0, %v1667
      %v1669 = vpop.f32.mrf.mxu0
      %v1670 = vpop.f32.mrf.mxu0
      %v1671 = vadd.f32 0.0, %v1670
      %v1672 = vpop.f32.mrf.mxu0
      %1673 = vdwg.mxu0
      %v1674 = vadd.f32 %v1500, %v1644
      %v1675 = vadd.f32 %v1501, %v1647
      %v1676 = vadd.f32 %v1502, %v1652
      %v1677 = vadd.f32 %v1503, %v1655
      %v1678 = vadd.f32 %v1504, %v1660
      %v1679 = vadd.f32 %v1505, %v1663
      %v1680 = vadd.f32 %v1506, %v1668
      %v1681 = vadd.f32 %v1507, %v1671
      %v1682 = vld [vmem:[%s1511] sm:$0xf]
      %v1683 = vld [vmem:[%s1511 + $0x4] sm:$0x1]
      %v1684 = vld [vmem:[%s1511 + $0x8] sm:$0xf]
      %v1685 = vld [vmem:[%s1511 + $0xc] sm:$0x1]
      %v1686 = vld [vmem:[%s1511 + $0x10] sm:$0xf]
      %v1687 = vld [vmem:[%s1511 + $0x14] sm:$0x1]
      %v1688 = vld [vmem:[%s1511 + $0x18] sm:$0xf]
      %v1689 = vld [vmem:[%s1511 + $0x1c] sm:$0x1]
      %v1690 = vld [vmem:[%s1511 + $0x20] sm:$0xf]
      %v1691 = vld [vmem:[%s1511 + $0x24] sm:$0x1]
      %v1692 = vld [vmem:[%s1511 + $0x28] sm:$0xf]
      %v1693 = vld [vmem:[%s1511 + $0x2c] sm:$0x1]
      %v1694 = vld [vmem:[%s1511 + $0x30] sm:$0xf]
      %v1695 = vld [vmem:[%s1511 + $0x34] sm:$0x1]
      %v1696 = vld [vmem:[%s1511 + $0x38] sm:$0xf]
      %v1697 = vld [vmem:[%s1511 + $0x3c] sm:$0x1]
      %v1699 = vshrl.u32 %v1682, 16
      %v1701 = vrot.slane %v1699, 4
      %v1702 = vshll.u32 %v1682, 16
      %v1704 = vrot.slane %v1702, 5
      %v1705 = vor.u32 %v1701, %v1704
      %v1706 = vrot.slane %v1705, 4
      %v1708 = vshll.u32 %v1683, 16
      %v1710 = vrot.slane %v1708, 5
      %v1711 = vsel %vm233, %v1706, %v1710
      %v1713 = vshrl.u32 %v1684, 16
      %v1715 = vrot.slane %v1713, 4
      %v1716 = vshll.u32 %v1684, 16
      %v1718 = vrot.slane %v1716, 5
      %v1719 = vor.u32 %v1715, %v1718
      %v1720 = vrot.slane %v1719, 4
      %v1722 = vshll.u32 %v1685, 16
      %v1724 = vrot.slane %v1722, 5
      %v1725 = vsel %vm233, %v1720, %v1724
      %v1727 = vshrl.u32 %v1686, 16
      %v1729 = vrot.slane %v1727, 4
      %v1730 = vshll.u32 %v1686, 16
      %v1732 = vrot.slane %v1730, 5
      %v1733 = vor.u32 %v1729, %v1732
      %v1734 = vrot.slane %v1733, 4
      %v1736 = vshll.u32 %v1687, 16
      %v1738 = vrot.slane %v1736, 5
      %v1739 = vsel %vm233, %v1734, %v1738
      %v1741 = vshrl.u32 %v1688, 16
      %v1743 = vrot.slane %v1741, 4
      %v1744 = vshll.u32 %v1688, 16
      %v1746 = vrot.slane %v1744, 5
      %v1747 = vor.u32 %v1743, %v1746
      %v1748 = vrot.slane %v1747, 4
      %v1750 = vshll.u32 %v1689, 16
      %v1752 = vrot.slane %v1750, 5
      %v1753 = vsel %vm233, %v1748, %v1752
      %v1755 = vshrl.u32 %v1690, 16
      %v1757 = vrot.slane %v1755, 4
      %v1758 = vshll.u32 %v1690, 16
      %v1760 = vrot.slane %v1758, 5
      %v1761 = vor.u32 %v1757, %v1760
      %v1762 = vrot.slane %v1761, 4
      %v1764 = vshll.u32 %v1691, 16
      %v1766 = vrot.slane %v1764, 5
      %v1767 = vsel %vm233, %v1762, %v1766
      %v1769 = vshrl.u32 %v1692, 16
      %v1771 = vrot.slane %v1769, 4
      %v1772 = vshll.u32 %v1692, 16
      %v1774 = vrot.slane %v1772, 5
      %v1775 = vor.u32 %v1771, %v1774
      %v1776 = vrot.slane %v1775, 4
      %v1778 = vshll.u32 %v1693, 16
      %v1780 = vrot.slane %v1778, 5
      %v1781 = vsel %vm233, %v1776, %v1780
      %v1783 = vshrl.u32 %v1694, 16
      %v1785 = vrot.slane %v1783, 4
      %v1786 = vshll.u32 %v1694, 16
      %v1788 = vrot.slane %v1786, 5
      %v1789 = vor.u32 %v1785, %v1788
      %v1790 = vrot.slane %v1789, 4
      %v1792 = vshll.u32 %v1695, 16
      %v1794 = vrot.slane %v1792, 5
      %v1795 = vsel %vm233, %v1790, %v1794
      %v1797 = vshrl.u32 %v1696, 16
      %v1799 = vrot.slane %v1797, 4
      %v1800 = vshll.u32 %v1696, 16
      %v1802 = vrot.slane %v1800, 5
      %v1803 = vor.u32 %v1799, %v1802
      %v1804 = vrot.slane %v1803, 4
      %v1806 = vshll.u32 %v1697, 16
      %v1808 = vrot.slane %v1806, 5
      %v1809 = vsel %vm233, %v1804, %v1808
      %s1810 = scalar_lea.vmem %s1, 448
      %v1811 = vld [vmem:[%s1810] sm:$0xf]
      %v1812 = vld [vmem:[%s1810 + $0x4] sm:$0xf]
      %v1813 = vld [vmem:[%s1810 + $0x8] sm:$0xf]
      %v1814 = vld [vmem:[%s1810 + $0xc] sm:$0xf]
      %v1815 = vld [vmem:[%s1810 + $0x10] sm:$0xf]
      %v1816 = vld [vmem:[%s1810 + $0x14] sm:$0xf]
      %v1817 = vld [vmem:[%s1810 + $0x18] sm:$0xf]
      %v1818 = vld [vmem:[%s1810 + $0x1c] sm:$0xf]
      %v1819 = vld [vmem:[%s1810 + $0x20] sm:$0xf]
      %v1820 = vld [vmem:[%s1810 + $0x24] sm:$0xf]
      %v1821 = vld [vmem:[%s1810 + $0x28] sm:$0xf]
      %v1822 = vld [vmem:[%s1810 + $0x2c] sm:$0xf]
      %v1823 = vld [vmem:[%s1810 + $0x30] sm:$0xf]
      %v1824 = vld [vmem:[%s1810 + $0x34] sm:$0xf]
      %v1825 = vld [vmem:[%s1810 + $0x38] sm:$0xf]
      %v1826 = vld [vmem:[%s1810 + $0x3c] sm:$0xf]
      %v1827 = vunpack.c.l.b16 %v1711
      %v1828 = vunpack.c.l.b16 %v1725
      %v1829 = vunpack.c.l.b16 %v1739
      %v1830 = vunpack.c.l.b16 %v1753
      %v1831 = vunpack.c.l.b16 %v1767
      %v1832 = vunpack.c.l.b16 %v1781
      %v1833 = vunpack.c.l.b16 %v1795
      %v1834 = vunpack.c.l.b16 %v1809
      %v1835 = vpack.c.b16 %v1828, %v1827
      %v1836 = vpack.c.b16 %v1830, %v1829
      %v1837 = vpack.c.b16 %v1832, %v1831
      %v1838 = vpack.c.b16 %v1834, %v1833
      %v1859 = vunpack.c.l.b16 %v1811
      %v1860 = vunpack.c.l.b16 %v1812
      %v1861 = vunpack.c.l.b16 %v1813
      %v1862 = vunpack.c.l.b16 %v1814
      %v1863 = vunpack.c.l.b16 %v1815
      %v1864 = vunpack.c.l.b16 %v1816
      %v1865 = vunpack.c.l.b16 %v1817
      %v1866 = vunpack.c.l.b16 %v1818
      %v1867 = vunpack.c.l.b16 %v1819
      %v1868 = vunpack.c.l.b16 %v1820
      %v1869 = vunpack.c.l.b16 %v1821
      %v1870 = vunpack.c.l.b16 %v1822
      %v1871 = vunpack.c.l.b16 %v1823
      %v1872 = vunpack.c.l.b16 %v1824
      %v1873 = vunpack.c.l.b16 %v1825
      %v1874 = vunpack.c.l.b16 %v1826
      %v1875 = vpack.c.b16 %v1860, %v1859
      %v1876 = vpack.c.b16 %v1862, %v1861
      %v1877 = vpack.c.b16 %v1864, %v1863
      %v1878 = vpack.c.b16 %v1866, %v1865
      %v1879 = vpack.c.b16 %v1868, %v1867
      %v1880 = vpack.c.b16 %v1870, %v1869
      %v1881 = vpack.c.b16 %v1872, %v1871
      %v1882 = vpack.c.b16 %v1874, %v1873
      %1891 = vmatprep.subr.bf16.mxu0 0
      %1892 = vmatpush1.bf16.msra.mxu0 %v1882
      %1893 = vmatprep.subr.bf16.mxu0 0
      %1894 = vmatpush1.bf16.msra.mxu0 %v1881
      %1895 = vmatprep.subr.bf16.mxu0 0
      %1896 = vmatpush1.bf16.msra.mxu0 %v1880
      %1897 = vmatprep.subr.bf16.mxu0 0
      %1898 = vmatpush1.bf16.msra.mxu0 %v1879
      %1899 = vmatprep.subr.bf16.mxu0 0
      %1900 = vmatpush1.bf16.msra.mxu0 %v1878
      %1901 = vmatprep.subr.bf16.mxu0 0
      %1902 = vmatpush1.bf16.msra.mxu0 %v1877
      %1903 = vmatprep.subr.bf16.mxu0 0
      %1904 = vmatpush1.bf16.msra.mxu0 %v1876
      %1905 = vmatprep.subr.bf16.mxu0 0
      %1906 = vmatpush1.bf16.msra.mxu0 %v1875
      %1907 = vmatprep.subr.bf16.mxu0 0
      %1908 = vmatpush2.bf16.msra.mxu0 0
      %1909 = vmatprep.subr.bf16.mxu0 0
      %1910 = vmatpush2.bf16.msra.mxu0 0
      %1911 = vmatprep.subr.bf16.mxu0 0
      %1912 = vmatpush2.bf16.msra.mxu0 0
      %1913 = vmatprep.subr.bf16.mxu0 0
      %1914 = vmatpush2.bf16.msra.mxu0 0
      %1915 = vmatprep.subr.bf16.mxu0 0
      %1916 = vmatpush2.bf16.msra.mxu0 0
      %1917 = vmatprep.subr.bf16.mxu0 0
      %1918 = vmatpush2.bf16.msra.mxu0 0
      %1919 = vmatprep.subr.bf16.mxu0 0
      %1920 = vmatpush2.bf16.msra.mxu0 0
      %1921 = vmatprep.subr.bf16.mxu0 0
      %1922 = vmatpush2.bf16.msra.mxu0 0
      %1923 = vmatprep.mubr.bf16.mxu0 0
      %1924 = vmatmul.mubr.bf16.gmra.mxu0 %v1835
      %v1925 = vpop.f32.mrf.mxu0
      %v1926 = vadd.f32 0.0, %v1925
      %v1927 = vpop.f32.mrf.mxu0
      %v1928 = vpop.f32.mrf.mxu0
      %v1929 = vadd.f32 0.0, %v1928
      %v1930 = vpop.f32.mrf.mxu0
      %1931 = vmatprep.mubr.bf16.mxu0 0
      %1932 = vmatmul.mubr.bf16.gmra.mxu0 %v1836
      %v1933 = vpop.f32.mrf.mxu0
      %v1934 = vadd.f32 0.0, %v1933
      %v1935 = vpop.f32.mrf.mxu0
      %v1936 = vpop.f32.mrf.mxu0
      %v1937 = vadd.f32 0.0, %v1936
      %v1938 = vpop.f32.mrf.mxu0
      %1939 = vmatprep.mubr.bf16.mxu0 0
      %1940 = vmatmul.mubr.bf16.gmra.mxu0 %v1837
      %v1941 = vpop.f32.mrf.mxu0
      %v1942 = vadd.f32 0.0, %v1941
      %v1943 = vpop.f32.mrf.mxu0
      %v1944 = vpop.f32.mrf.mxu0
      %v1945 = vadd.f32 0.0, %v1944
      %v1946 = vpop.f32.mrf.mxu0
      %1947 = vmatprep.mubr.bf16.mxu0 0
      %1948 = vmatmul.mubr.bf16.gmra.mxu0 %v1838
      %v1949 = vpop.f32.mrf.mxu0
      %v1950 = vadd.f32 0.0, %v1949
      %v1951 = vpop.f32.mrf.mxu0
      %v1952 = vpop.f32.mrf.mxu0
      %v1953 = vadd.f32 0.0, %v1952
      %v1954 = vpop.f32.mrf.mxu0
      %1955 = vdwg.mxu0
      %v1956 = vadd.f32 %v1674, %v1926
      %v1957 = vadd.f32 %v1675, %v1929
      %v1958 = vadd.f32 %v1676, %v1934
      %v1959 = vadd.f32 %v1677, %v1937
      %v1960 = vadd.f32 %v1678, %v1942
      %v1961 = vadd.f32 %v1679, %v1945
      %v1962 = vadd.f32 %v1680, %v1950
      %v1963 = vadd.f32 %v1681, %v1953
      %v1964 = vld [vmem:[%s1511] sm:$0xe]
      %v1965 = vld [vmem:[%s1511 + $0x8] sm:$0xe]
      %v1966 = vld [vmem:[%s1511 + $0x10] sm:$0xe]
      %v1967 = vld [vmem:[%s1511 + $0x18] sm:$0xe]
      %v1968 = vld [vmem:[%s1511 + $0x20] sm:$0xe]
      %v1969 = vld [vmem:[%s1511 + $0x28] sm:$0xe]
      %v1970 = vld [vmem:[%s1511 + $0x30] sm:$0xe]
      %v1971 = vld [vmem:[%s1511 + $0x38] sm:$0xe]
      %v1988 = vrot.slane %v1964, 5
      %v1989 = vrot.slane %v1988, 4
      %v1990 = vrot.slane %v1683, 5
      %v1991 = vsel %vm655, %v1989, %v1990
      %v1992 = vrot.slane %v1965, 5
      %v1993 = vrot.slane %v1992, 4
      %v1994 = vrot.slane %v1685, 5
      %v1995 = vsel %vm655, %v1993, %v1994
      %v1996 = vrot.slane %v1966, 5
      %v1997 = vrot.slane %v1996, 4
      %v1998 = vrot.slane %v1687, 5
      %v1999 = vsel %vm655, %v1997, %v1998
      %v2000 = vrot.slane %v1967, 5
      %v2001 = vrot.slane %v2000, 4
      %v2002 = vrot.slane %v1689, 5
      %v2003 = vsel %vm655, %v2001, %v2002
      %v2004 = vrot.slane %v1968, 5
      %v2005 = vrot.slane %v2004, 4
      %v2006 = vrot.slane %v1691, 5
      %v2007 = vsel %vm655, %v2005, %v2006
      %v2008 = vrot.slane %v1969, 5
      %v2009 = vrot.slane %v2008, 4
      %v2010 = vrot.slane %v1693, 5
      %v2011 = vsel %vm655, %v2009, %v2010
      %v2012 = vrot.slane %v1970, 5
      %v2013 = vrot.slane %v2012, 4
      %v2014 = vrot.slane %v1695, 5
      %v2015 = vsel %vm655, %v2013, %v2014
      %v2016 = vrot.slane %v1971, 5
      %v2017 = vrot.slane %v2016, 4
      %v2018 = vrot.slane %v1697, 5
      %v2019 = vsel %vm655, %v2017, %v2018
      %s2020 = scalar_lea.vmem %s1, 512
      %v2021 = vld [vmem:[%s2020] sm:$0xf]
      %v2022 = vld [vmem:[%s2020 + $0x4] sm:$0xf]
      %v2023 = vld [vmem:[%s2020 + $0x8] sm:$0xf]
      %v2024 = vld [vmem:[%s2020 + $0xc] sm:$0xf]
      %v2025 = vld [vmem:[%s2020 + $0x10] sm:$0xf]
      %v2026 = vld [vmem:[%s2020 + $0x14] sm:$0xf]
      %v2027 = vld [vmem:[%s2020 + $0x18] sm:$0xf]
      %v2028 = vld [vmem:[%s2020 + $0x1c] sm:$0xf]
      %v2029 = vld [vmem:[%s2020 + $0x20] sm:$0xf]
      %v2030 = vld [vmem:[%s2020 + $0x24] sm:$0xf]
      %v2031 = vld [vmem:[%s2020 + $0x28] sm:$0xf]
      %v2032 = vld [vmem:[%s2020 + $0x2c] sm:$0xf]
      %v2033 = vld [vmem:[%s2020 + $0x30] sm:$0xf]
      %v2034 = vld [vmem:[%s2020 + $0x34] sm:$0xf]
      %v2035 = vld [vmem:[%s2020 + $0x38] sm:$0xf]
      %v2036 = vld [vmem:[%s2020 + $0x3c] sm:$0xf]
      %v2037 = vunpack.c.l.b16 %v1991
      %v2038 = vunpack.c.l.b16 %v1995
      %v2039 = vunpack.c.l.b16 %v1999
      %v2040 = vunpack.c.l.b16 %v2003
      %v2041 = vunpack.c.l.b16 %v2007
      %v2042 = vunpack.c.l.b16 %v2011
      %v2043 = vunpack.c.l.b16 %v2015
      %v2044 = vunpack.c.l.b16 %v2019
      %v2045 = vpack.c.b16 %v2038, %v2037
      %v2046 = vpack.c.b16 %v2040, %v2039
      %v2047 = vpack.c.b16 %v2042, %v2041
      %v2048 = vpack.c.b16 %v2044, %v2043
      %v2069 = vunpack.c.l.b16 %v2021
      %v2070 = vunpack.c.l.b16 %v2022
      %v2071 = vunpack.c.l.b16 %v2023
      %v2072 = vunpack.c.l.b16 %v2024
      %v2073 = vunpack.c.l.b16 %v2025
      %v2074 = vunpack.c.l.b16 %v2026
      %v2075 = vunpack.c.l.b16 %v2027
      %v2076 = vunpack.c.l.b16 %v2028
      %v2077 = vunpack.c.l.b16 %v2029
      %v2078 = vunpack.c.l.b16 %v2030
      %v2079 = vunpack.c.l.b16 %v2031
      %v2080 = vunpack.c.l.b16 %v2032
      %v2081 = vunpack.c.l.b16 %v2033
      %v2082 = vunpack.c.l.b16 %v2034
      %v2083 = vunpack.c.l.b16 %v2035
      %v2084 = vunpack.c.l.b16 %v2036
      %v2085 = vpack.c.b16 %v2070, %v2069
      %v2086 = vpack.c.b16 %v2072, %v2071
      %v2087 = vpack.c.b16 %v2074, %v2073
      %v2088 = vpack.c.b16 %v2076, %v2075
      %v2089 = vpack.c.b16 %v2078, %v2077
      %v2090 = vpack.c.b16 %v2080, %v2079
      %v2091 = vpack.c.b16 %v2082, %v2081
      %v2092 = vpack.c.b16 %v2084, %v2083
      %2101 = vmatprep.subr.bf16.mxu0 0
      %2102 = vmatpush1.bf16.msra.mxu0 %v2092
      %2103 = vmatprep.subr.bf16.mxu0 0
      %2104 = vmatpush1.bf16.msra.mxu0 %v2091
      %2105 = vmatprep.subr.bf16.mxu0 0
      %2106 = vmatpush1.bf16.msra.mxu0 %v2090
      %2107 = vmatprep.subr.bf16.mxu0 0
      %2108 = vmatpush1.bf16.msra.mxu0 %v2089
      %2109 = vmatprep.subr.bf16.mxu0 0
      %2110 = vmatpush1.bf16.msra.mxu0 %v2088
      %2111 = vmatprep.subr.bf16.mxu0 0
      %2112 = vmatpush1.bf16.msra.mxu0 %v2087
      %2113 = vmatprep.subr.bf16.mxu0 0
      %2114 = vmatpush1.bf16.msra.mxu0 %v2086
      %2115 = vmatprep.subr.bf16.mxu0 0
      %2116 = vmatpush1.bf16.msra.mxu0 %v2085
      %2117 = vmatprep.subr.bf16.mxu0 0
      %2118 = vmatpush2.bf16.msra.mxu0 0
      %2119 = vmatprep.subr.bf16.mxu0 0
      %2120 = vmatpush2.bf16.msra.mxu0 0
      %2121 = vmatprep.subr.bf16.mxu0 0
      %2122 = vmatpush2.bf16.msra.mxu0 0
      %2123 = vmatprep.subr.bf16.mxu0 0
      %2124 = vmatpush2.bf16.msra.mxu0 0
      %2125 = vmatprep.subr.bf16.mxu0 0
      %2126 = vmatpush2.bf16.msra.mxu0 0
      %2127 = vmatprep.subr.bf16.mxu0 0
      %2128 = vmatpush2.bf16.msra.mxu0 0
      %2129 = vmatprep.subr.bf16.mxu0 0
      %2130 = vmatpush2.bf16.msra.mxu0 0
      %2131 = vmatprep.subr.bf16.mxu0 0
      %2132 = vmatpush2.bf16.msra.mxu0 0
      %2133 = vmatprep.mubr.bf16.mxu0 0
      %2134 = vmatmul.mubr.bf16.gmra.mxu0 %v2045
      %v2135 = vpop.f32.mrf.mxu0
      %v2136 = vadd.f32 0.0, %v2135
      %v2137 = vpop.f32.mrf.mxu0
      %v2138 = vpop.f32.mrf.mxu0
      %v2139 = vadd.f32 0.0, %v2138
      %v2140 = vpop.f32.mrf.mxu0
      %2141 = vmatprep.mubr.bf16.mxu0 0
      %2142 = vmatmul.mubr.bf16.gmra.mxu0 %v2046
      %v2143 = vpop.f32.mrf.mxu0
      %v2144 = vadd.f32 0.0, %v2143
      %v2145 = vpop.f32.mrf.mxu0
      %v2146 = vpop.f32.mrf.mxu0
      %v2147 = vadd.f32 0.0, %v2146
      %v2148 = vpop.f32.mrf.mxu0
      %2149 = vmatprep.mubr.bf16.mxu0 0
      %2150 = vmatmul.mubr.bf16.gmra.mxu0 %v2047
      %v2151 = vpop.f32.mrf.mxu0
      %v2152 = vadd.f32 0.0, %v2151
      %v2153 = vpop.f32.mrf.mxu0
      %v2154 = vpop.f32.mrf.mxu0
      %v2155 = vadd.f32 0.0, %v2154
      %v2156 = vpop.f32.mrf.mxu0
      %2157 = vmatprep.mubr.bf16.mxu0 0
      %2158 = vmatmul.mubr.bf16.gmra.mxu0 %v2048
      %v2159 = vpop.f32.mrf.mxu0
      %v2160 = vadd.f32 0.0, %v2159
      %v2161 = vpop.f32.mrf.mxu0
      %v2162 = vpop.f32.mrf.mxu0
      %v2163 = vadd.f32 0.0, %v2162
      %v2164 = vpop.f32.mrf.mxu0
      %2165 = vdwg.mxu0
      %v2166 = vadd.f32 %v1956, %v2136
      %v2167 = vadd.f32 %v1957, %v2139
      %v2168 = vadd.f32 %v1958, %v2144
      %v2169 = vadd.f32 %v1959, %v2147
      %v2170 = vadd.f32 %v1960, %v2152
      %v2171 = vadd.f32 %v1961, %v2155
      %v2172 = vadd.f32 %v1962, %v2160
      %v2173 = vadd.f32 %v1963, %v2163
      %v2174 = vld [vmem:[%s2] sm:$0x1]
      %v2176 = vlaneseq
      %v2177 = vshrl.u32 %v2176, 7
      %v2178 = vsub.s32 0, %v2177
      %v2179 = vrot.slane %v2174, %v2178
      %v2181 = vadd.f32 %v2166, %v2179
      %v2182 = vadd.f32 %v2167, %v2179
      %v2183 = vadd.f32 %v2168, %v2179
      %v2184 = vadd.f32 %v2169, %v2179
      %v2185 = vadd.f32 %v2170, %v2179
      %v2186 = vadd.f32 %v2171, %v2179
      %v2187 = vadd.f32 %v2172, %v2179
      %v2188 = vadd.f32 %v2173, %v2179
      %v2189 = vmax.f32 %v2181, 0.0
      %v2190 = vmax.f32 %v2182, 0.0
      %v2191 = vmax.f32 %v2183, 0.0
      %v2192 = vmax.f32 %v2184, 0.0
      %v2193 = vmax.f32 %v2185, 0.0
      %v2194 = vmax.f32 %v2186, 0.0
      %v2195 = vmax.f32 %v2187, 0.0
      %v2196 = vmax.f32 %v2188, 0.0
      %v2197 = vpack.c.bf16 %v2190, %v2189
      %v2198 = vpack.c.bf16 %v2192, %v2191
      %v2199 = vpack.c.bf16 %v2194, %v2193
      %v2200 = vpack.c.bf16 %v2196, %v2195
      %v2205 = vunpack.c.l.b16 %v2197
      %v2206 = vunpack.c.h.b16 %v2197
      %v2207 = vunpack.c.l.b16 %v2198
      %v2208 = vunpack.c.h.b16 %v2198
      %v2209 = vunpack.c.l.b16 %v2199
      %v2210 = vunpack.c.h.b16 %v2199
      %v2211 = vunpack.c.l.b16 %v2200
      %v2212 = vunpack.c.h.b16 %v2200
      %v2213 = vpack.c.b16 %v2205, %v2205
      %v2214 = vpack.c.b16 %v2206, %v2206
      %v2215 = vpack.c.b16 %v2207, %v2207
      %v2216 = vpack.c.b16 %v2208, %v2208
      %v2217 = vpack.c.b16 %v2209, %v2209
      %v2218 = vpack.c.b16 %v2210, %v2210
      %v2219 = vpack.c.b16 %v2211, %v2211
      %v2220 = vpack.c.b16 %v2212, %v2212
      %2229 = vst [vmem:[%s192] sm:$0xf] %v2213
      %2230 = vst [vmem:[%s192 + $0x4] sm:$0xf] %v2214
      %2231 = vst [vmem:[%s192 + $0x8] sm:$0xf] %v2215
      %2232 = vst [vmem:[%s192 + $0xc] sm:$0xf] %v2216
      %2233 = vst [vmem:[%s192 + $0x10] sm:$0xf] %v2217
      %2234 = vst [vmem:[%s192 + $0x14] sm:$0xf] %v2218
      %2235 = vst [vmem:[%s192 + $0x18] sm:$0xf] %v2219
      %2236 = vst [vmem:[%s192 + $0x1c] sm:$0xf] %v2220
      %s2237 = smul.u32 8, %s19
      %p2238 = scmp.lt.s32.totalorder %s18, 1
      %s2239 = scalar_select %p2238, %s18, 1
      %p2240 = scmp.lt.s32.totalorder %s2237, 7
      %s2241 = scalar_select %p2240, %s2237, 7
      %s2242 = smul.addr %s2239, 8
      %s2243 = sadd.s32 %s2241, %s2242
      %s2244 = smul.addr %s2243, 4
      %s2245 = scalar_lea.vmem %s3, %s2244
      // Predicated region
      $region33: #{_lambda_.10} parent=31 // pred_check
        %p2246 = pneg %p114
      $region34: #{_lambda_.10} parent=31 // pred_check_branch
        %2248 = sbr.rel (%p2246) target = $region36
      $region35: #{_lambda_.10} parent=31 // pred_region
        %s2249 = smul.u32 8, %s19
      $region36: #{_lambda_.10} parent=31 // pred_fallthru
        _
    $region32: #{_lambda_.10} parent=5 // pred_fallthru
      _
    %p2250 = scmp.le.s32.totalorder 2, %s9
    // Predicated region
    $region37: #{_lambda_.10} parent=5 // pred_check
      %p2251 = pneg %p2250
    $region38: #{_lambda_.10} parent=5 // pred_check_branch
      %2253 = sbr.rel (%p2251) target = $region40
    $region39: #{_lambda_.10} parent=5 // pred_region
      %s2254 = ssub.s32 %s9, 2
      // Predicated region
      $region41: #{_lambda_.10} parent=39 // pred_check
        %p2255 = pneg %p120
      $region42: #{_lambda_.10} parent=39 // pred_check_branch
        %2257 = sbr.rel (%p2255) target = $region44
      $region43: #{_lambda_.10} parent=39 // pred_region
        %s2258 = smul.u32 8, %s21
        %p2259 = scmp.lt.s32.totalorder %s20, 1
        %s2260 = scalar_select %p2259, %s20, 1
        %p2261 = scmp.lt.s32.totalorder %s2258, 7
        %s2262 = scalar_select %p2261, %s2258, 7
        %s2263 = smul.addr %s2260, 8
        %s2264 = sadd.s32 %s2262, %s2263
        %s2265 = smul.addr %s2264, 4
        %s2266 = scalar_lea.vmem %s3, %s2265
      $region44: #{_lambda_.10} parent=39 // pred_fallthru
        _
    $region40: #{_lambda_.10} parent=5 // pred_fallthru
      _
  $region6: #{_lambda_.10} parent=0 // loop_footer
    %s13 = sadd.s32 1, %s9
  $region7: #{_lambda_.10} parent=0 // loop_footer_branch
    %8 = sbr.rel target = $region3
  $region8: #{_lambda_.10} parent=0 // loop_exit
    _

// kernel: _lambda_.8
$region0: #{_lambda_.8}
  #allocation0 [shape = 'u32[]', space=smem, size = 0x4, offset = 0x4, fixed_abs, tag = 'smem constant byte address 0x4 - core index']
  #allocation1 [shape = 'u32[144,128]{1,0:T(1,128)}', space=vmem, size = 0x12000, scoped, tag = 'internal scratch']
  %s0 = inlined_call_operand.vmem [shape: bf16[2,18,18,128], index: 0, kind: input, shape index: {}]
  %s1 = inlined_call_operand.vmem [shape: bf16[9,128,128], index: 1, kind: input, shape index: {}]
  %s2 = inlined_call_operand.vmem [shape: f32[1,128], index: 2, kind: input, shape index: {}]
  %s3 = inlined_call_operand.vmem [shape: bf16[2,16,16,128], index: 3, kind: output, shape index: {}]
  %s4 = sld [smem:[#allocation0]]
  $region45: #{_lambda_.8} parent=0
    _
  %s6 = ssub.s32 1, %s4
  %s7 = scalar_select 0, %s6, %s4
  loop: start=0, step=1, limit=4
  $region2: #{_lambda_.8} parent=0 // loop_pre_header
    _
  $region3: #{_lambda_.8} parent=0 // loop_header
    %s9 = sphi 0, %s13
    %p10 = scmp.ge.s32.totalorder %s9, 4
    %s16 = sphi 0, %s28
    %s17 = sphi 0, %s24
    %s18 = sphi 0, %s16
    %s19 = sphi 0, %s17
    %s20 = sphi 0, %s18
    %s21 = sphi 0, %s19
    %s31 = sphi 0, %s33
    %s34 = sphi 0, %s31
    %s35 = sphi 0, %s34
    %s51 = sphi 0, %s35
    %s55 = sphi 0, %s55
    %s57 = sphi 0, %s55
    %s58 = sphi 0, %s57
    %s72 = sphi 0, %s58
    %s76 = sphi 0, %s76
    %s78 = sphi 0, %s76
    %s79 = sphi 0, %s78
    %s93 = sphi 0, %s79
    %s101 = sphi 0, %s103
    %s104 = sphi 0, %s101
    %s105 = sphi 0, %s104
    %s121 = sphi 0, %s105
  $region4: #{_lambda_.8} parent=0 // loop_header_branch
    %12 = sbr.rel (%p10) target = $region8
  $region5: #{_lambda_.8} parent=0 // loop_body
    %s14 = ssub.s32 %s9, 1
    %s15 = ssub.s32 %s9, 2
    %s22 = sadd.s32 1, %s17
    %p23 = scmp.ge.s32.totalorder %s22, 1
    %s24 = scalar_select %p23, 0, %s22
    %s25 = sadd.s32 1, %s16
    %s26 = scalar_select %p23, %s25, %s16
    %p27 = scmp.ge.s32.totalorder %s26, 2
    %s28 = scalar_select %p27, 0, %s26
    %s29 = ssub.s32 %s16, %s28
    %p30 = scmp.eq.s32.totalorder %s29, 0
    %s32 = sadd.s32 %s31, 1
    %s33 = scalar_select %p30, %s31, %s32
    %p36 = pneg %p30
    %p37 = scmp.eq.s32.totalorder %s9, 1
    %p38 = por %p36, %p37
    %p39 = scmp.ne.s32.totalorder %s31, %s34
    %p40 = scmp.eq.s32.totalorder %s9, 0
    %p41 = por %p39, %p40
    %p42 = scmp.ne.s32.totalorder %s31, %s34
    %p43 = scmp.eq.s32.totalorder %s14, 1
    %p44 = por %p42, %p43
    %p45 = scmp.ne.s32.totalorder %s34, %s35
    %p46 = scmp.eq.s32.totalorder %s14, 0
    %p47 = por %p45, %p46
    %p48 = scmp.ne.s32.totalorder %s34, %s35
    %p49 = scmp.eq.s32.totalorder %s15, 1
    %p50 = por %p48, %p49
    %p52 = scmp.ne.s32.totalorder %s35, %s51
    %p53 = scmp.eq.s32.totalorder %s15, 0
    %p54 = por %p52, %p53
    %s56 = sadd.s32 %s55, 1
    %p59 = scmp.eq.s32.totalorder %s9, 1
    %p60 = scmp.ne.s32.totalorder %s55, %s57
    %p61 = scmp.eq.s32.totalorder %s9, 0
    %p62 = por %p60, %p61
    %p63 = scmp.ne.s32.totalorder %s55, %s57
    %p64 = scmp.eq.s32.totalorder %s14, 1
    %p65 = por %p63, %p64
    %p66 = scmp.ne.s32.totalorder %s57, %s58
    %p67 = scmp.eq.s32.totalorder %s14, 0
    %p68 = por %p66, %p67
    %p69 = scmp.ne.s32.totalorder %s57, %s58
    %p70 = scmp.eq.s32.totalorder %s15, 1
    %p71 = por %p69, %p70
    %p73 = scmp.ne.s32.totalorder %s58, %s72
    %p74 = scmp.eq.s32.totalorder %s15, 0
    %p75 = por %p73, %p74
    %s77 = sadd.s32 %s76, 1
    %p80 = scmp.eq.s32.totalorder %s9, 1
    %p81 = scmp.ne.s32.totalorder %s76, %s78
    %p82 = scmp.eq.s32.totalorder %s9, 0
    %p83 = por %p81, %p82
    %p84 = scmp.ne.s32.totalorder %s76, %s78
    %p85 = scmp.eq.s32.totalorder %s14, 1
    %p86 = por %p84, %p85
    %p87 = scmp.ne.s32.totalorder %s78, %s79
    %p88 = scmp.eq.s32.totalorder %s14, 0
    %p89 = por %p87, %p88
    %p90 = scmp.ne.s32.totalorder %s78, %s79
    %p91 = scmp.eq.s32.totalorder %s15, 1
    %p92 = por %p90, %p91
    %p94 = scmp.ne.s32.totalorder %s79, %s93
    %p95 = scmp.eq.s32.totalorder %s15, 0
    %p96 = por %p94, %p95
    %s97 = ssub.s32 %s16, %s28
    %s98 = ssub.s32 %s17, %s24
    %s99 = sor.u32 %s97, %s98
    %p100 = scmp.eq.s32.totalorder %s99, 0
    %s102 = sadd.s32 %s101, 1
    %s103 = scalar_select %p100, %s101, %s102
    %p106 = pneg %p100
    %p107 = scmp.eq.s32.totalorder %s9, 1
    %p108 = por %p106, %p107
    %p109 = scmp.ne.s32.totalorder %s101, %s104
    %p110 = scmp.eq.s32.totalorder %s9, 0
    %p111 = por %p109, %p110
    %p112 = scmp.ne.s32.totalorder %s101, %s104
    %p113 = scmp.eq.s32.totalorder %s14, 1
    %p114 = por %p112, %p113
    %p115 = scmp.ne.s32.totalorder %s104, %s105
    %p116 = scmp.eq.s32.totalorder %s14, 0
    %p117 = por %p115, %p116
    %p118 = scmp.ne.s32.totalorder %s104, %s105
    %p119 = scmp.eq.s32.totalorder %s15, 1
    %p120 = por %p118, %p119
    %p122 = scmp.ne.s32.totalorder %s105, %s121
    %p123 = scmp.eq.s32.totalorder %s15, 0
    %p124 = por %p122, %p123
    %p125 = scmp.le.s32.totalorder 1, %s9
    %p126 = scmp.lt.s32.totalorder %s9, 3
    %p127 = pnand %p125, %p126
    %p128 = pneg %p127
    // Predicated region
    $region9: #{_lambda_.8} parent=5 // pred_check
      _
    $region10: #{_lambda_.8} parent=5 // pred_check_branch
      %130 = sbr.rel (%p127) target = $region12
    $region11: #{_lambda_.8} parent=5 // pred_region
      %s131 = ssub.s32 %s9, 1
      // Predicated region
      $region13: #{_lambda_.8} parent=11 // pred_check
        %p132 = pneg %p68
      $region14: #{_lambda_.8} parent=11 // pred_check_branch
        %134 = sbr.rel (%p132) target = $region16
      $region15: #{_lambda_.8} parent=11 // pred_region
        _
      $region16: #{_lambda_.8} parent=11 // pred_fallthru
        _
      // Predicated region
      $region17: #{_lambda_.8} parent=11 // pred_check
        %p135 = pneg %p89
      $region18: #{_lambda_.8} parent=11 // pred_check_branch
        %137 = sbr.rel (%p135) target = $region20
      $region19: #{_lambda_.8} parent=11 // pred_region
        _
      $region20: #{_lambda_.8} parent=11 // pred_fallthru
        _
    $region12: #{_lambda_.8} parent=5 // pred_fallthru
      _
    %p138 = scmp.lt.s32.totalorder %s9, 2
    // Predicated region
    $region21: #{_lambda_.8} parent=5 // pred_check
      %p139 = pneg %p138
    $region22: #{_lambda_.8} parent=5 // pred_check_branch
      %141 = sbr.rel (%p139) target = $region24
    $region23: #{_lambda_.8} parent=5 // pred_region
      // Predicated region
      $region25: #{_lambda_.8} parent=23 // pred_check
        %p142 = pneg %p41
      $region26: #{_lambda_.8} parent=23 // pred_check_branch
        %144 = sbr.rel (%p142) target = $region28
      $region27: #{_lambda_.8} parent=23 // pred_region
        %p145 = scmp.lt.s32.totalorder %s16, 1
        %s146 = scalar_select %p145, %s16, 1
        %s147 = smul.addr %s146, 54
        %s148 = smul.addr %s147, 4
        %s149 = scalar_lea.vmem %s0, %s148
      $region28: #{_lambda_.8} parent=23 // pred_fallthru
        _
    $region24: #{_lambda_.8} parent=5 // pred_fallthru
      _
    %p150 = scmp.le.s32.totalorder 1, %s9
    %p151 = scmp.lt.s32.totalorder %s9, 3
    %p152 = pnand %p150, %p151
    %p153 = pneg %p152
    // Predicated region
    $region29: #{_lambda_.8} parent=5 // pred_check
      _
    $region30: #{_lambda_.8} parent=5 // pred_check_branch
      %155 = sbr.rel (%p152) target = $region32
    $region31: #{_lambda_.8} parent=5 // pred_region
      %s156 = ssub.s32 %s9, 1
      %p157 = scmp.lt.s32.totalorder %s18, 1
      %s158 = scalar_select %p157, %s18, 1
      %s159 = smul.addr %s158, 54
      %s160 = smul.addr %s159, 4
      %s161 = scalar_lea.vmem %s0, %s160
      %p162 = pneg %p47
      %p163 = pneg %p44
      %p164 = pneg %p68
      %p165 = pneg %p65
      %p166 = pneg %p89
      %p167 = pneg %p86
      %p168 = pneg %p117
      %p169 = pneg %p114
      %s170 = smul.u32 16, %s19
      %p171 = scmp.lt.s32.totalorder %s18, 1
      %s172 = scalar_select %p171, %s18, 1
      %p173 = scmp.lt.s32.totalorder %s170, 15
      %s174 = scalar_select %p173, %s170, 15
      %s175 = smul.addr %s174, 2
      %s176 = smul.addr %s172, 32
      %s177 = sadd.s32 %s175, %s176
      %s178 = smul.addr %s177, 4
      %s179 = scalar_lea.vmem %s3, %s178
      %p180 = scmp.lt.s32.totalorder %s18, 1
      %s181 = scalar_select %p180, %s18, 1
      %s182 = smul.addr %s181, 54
      %s183 = smul.addr %s182, 4
      %s184 = scalar_lea.vmem %s0, %s183
      %s185 = smul.u32 16, %s19
      %p186 = scmp.lt.s32.totalorder %s18, 1
      %s187 = scalar_select %p186, %s18, 1
      %p188 = scmp.lt.s32.totalorder %s185, 15
      %s189 = scalar_select %p188, %s185, 15
      %s190 = smul.addr %s189, 2
      %s191 = smul.addr %s187, 32
      %s192 = sadd.s32 %s190, %s191
      %s193 = smul.addr %s192, 4
      %s194 = scalar_lea.vmem %s3, %s193
      %s195 = smul.u32 16, %s19
      %s197 = smul.u32 %s19, 16
      %s198 = smul.u32 %s197, 3
      %s199 = smul.addr %s198, 4
      %s200 = scalar_lea.vmem %s184, %s199
      %v201 = vld [vmem:[%s200] sm:$0xf]
      %v202 = vld [vmem:[%s200 + $0x4] sm:$0xf]
      %v203 = vld [vmem:[%s200 + $0xc] sm:$0xf]
      %v204 = vld [vmem:[%s200 + $0x10] sm:$0xf]
      %v205 = vld [vmem:[%s200 + $0x18] sm:$0xf]
      %v206 = vld [vmem:[%s200 + $0x1c] sm:$0xf]
      %v207 = vld [vmem:[%s200 + $0x24] sm:$0xf]
      %v208 = vld [vmem:[%s200 + $0x28] sm:$0xf]
      %v209 = vld [vmem:[%s200 + $0x30] sm:$0xf]
      %v210 = vld [vmem:[%s200 + $0x34] sm:$0xf]
      %v211 = vld [vmem:[%s200 + $0x3c] sm:$0xf]
      %v212 = vld [vmem:[%s200 + $0x40] sm:$0xf]
      %v213 = vld [vmem:[%s200 + $0x48] sm:$0xf]
      %v214 = vld [vmem:[%s200 + $0x4c] sm:$0xf]
      %v215 = vld [vmem:[%s200 + $0x54] sm:$0xf]
      %v216 = vld [vmem:[%s200 + $0x58] sm:$0xf]
      %v217 = vld [vmem:[%s200 + $0x60] sm:$0xf]
      %v218 = vld [vmem:[%s200 + $0x64] sm:$0xf]
      %v219 = vld [vmem:[%s200 + $0x6c] sm:$0xf]
      %v220 = vld [vmem:[%s200 + $0x70] sm:$0xf]
      %v221 = vld [vmem:[%s200 + $0x78] sm:$0xf]
      %v222 = vld [vmem:[%s200 + $0x7c] sm:$0xf]
      %v223 = vld [vmem:[%s200 + $0x84] sm:$0xf]
      %v224 = vld [vmem:[%s200 + $0x88] sm:$0xf]
      %v225 = vld [vmem:[%s200 + $0x90] sm:$0xf]
      %v226 = vld [vmem:[%s200 + $0x94] sm:$0xf]
      %v227 = vld [vmem:[%s200 + $0x9c] sm:$0xf]
      %v228 = vld [vmem:[%s200 + $0xa0] sm:$0xf]
      %v229 = vld [vmem:[%s200 + $0xa8] sm:$0xf]
      %v230 = vld [vmem:[%s200 + $0xac] sm:$0xf]
      %v231 = vld [vmem:[%s200 + $0xb4] sm:$0xf]
      %v232 = vld [vmem:[%s200 + $0xb8] sm:$0xf]
      %v233 = vld [vmem:[%s1] sm:$0xf]
      %v234 = vld [vmem:[%s1 + $0x4] sm:$0xf]
      %v235 = vld [vmem:[%s1 + $0x8] sm:$0xf]
      %v236 = vld [vmem:[%s1 + $0xc] sm:$0xf]
      %v237 = vld [vmem:[%s1 + $0x10] sm:$0xf]
      %v238 = vld [vmem:[%s1 + $0x14] sm:$0xf]
      %v239 = vld [vmem:[%s1 + $0x18] sm:$0xf]
      %v240 = vld [vmem:[%s1 + $0x1c] sm:$0xf]
      %v241 = vld [vmem:[%s1 + $0x20] sm:$0xf]
      %v242 = vld [vmem:[%s1 + $0x24] sm:$0xf]
      %v243 = vld [vmem:[%s1 + $0x28] sm:$0xf]
      %v244 = vld [vmem:[%s1 + $0x2c] sm:$0xf]
      %v245 = vld [vmem:[%s1 + $0x30] sm:$0xf]
      %v246 = vld [vmem:[%s1 + $0x34] sm:$0xf]
      %v247 = vld [vmem:[%s1 + $0x38] sm:$0xf]
      %v248 = vld [vmem:[%s1 + $0x3c] sm:$0xf]
      %v249 = vld [vmem:[%s200 + $0x8] sm:$0x1]
      %v250 = vld [vmem:[%s200 + $0x14] sm:$0x1]
      %v251 = vld [vmem:[%s200 + $0x20] sm:$0x1]
      %v252 = vld [vmem:[%s200 + $0x2c] sm:$0x1]
      %v253 = vld [vmem:[%s200 + $0x38] sm:$0x1]
      %v254 = vld [vmem:[%s200 + $0x44] sm:$0x1]
      %v255 = vld [vmem:[%s200 + $0x50] sm:$0x1]
      %v256 = vld [vmem:[%s200 + $0x5c] sm:$0x1]
      %v257 = vld [vmem:[%s200 + $0x68] sm:$0x1]
      %v258 = vld [vmem:[%s200 + $0x74] sm:$0x1]
      %v259 = vld [vmem:[%s200 + $0x80] sm:$0x1]
      %v260 = vld [vmem:[%s200 + $0x8c] sm:$0x1]
      %v261 = vld [vmem:[%s200 + $0x98] sm:$0x1]
      %v262 = vld [vmem:[%s200 + $0xa4] sm:$0x1]
      %v263 = vld [vmem:[%s200 + $0xb0] sm:$0x1]
      %v264 = vld [vmem:[%s200 + $0xbc] sm:$0x1]
      %vm265 = vsmask.f32 3328
      %vm266 = vsmask.f32 7440
      %vm267 = vmor %vm265, %vm266
      %v269 = vshrl.u32 %v201, 16
      %v271 = vrot.slane %v269, 4
      %v272 = vshll.u32 %v201, 16
      %v274 = vrot.slane %v272, 5
      %v275 = vor.u32 %v271, %v274
      %v276 = vrot.slane %v275, 4
      %v278 = vshll.u32 %v202, 16
      %v280 = vrot.slane %v278, 5
      %v281 = vsel %vm267, %v276, %v280
      %v282 = vshrl.u32 %v202, 16
      %v284 = vrot.slane %v282, 4
      %v285 = vor.u32 %v284, %v280
      %v286 = vrot.slane %v285, 4
      %v288 = vshll.u32 %v249, 16
      %v290 = vrot.slane %v288, 5
      %v291 = vsel %vm267, %v286, %v290
      %v293 = vshrl.u32 %v203, 16
      %v295 = vrot.slane %v293, 4
      %v296 = vshll.u32 %v203, 16
      %v298 = vrot.slane %v296, 5
      %v299 = vor.u32 %v295, %v298
      %v300 = vrot.slane %v299, 4
      %v302 = vshll.u32 %v204, 16
      %v304 = vrot.slane %v302, 5
      %v305 = vsel %vm267, %v300, %v304
      %v306 = vshrl.u32 %v204, 16
      %v308 = vrot.slane %v306, 4
      %v309 = vor.u32 %v308, %v304
      %v310 = vrot.slane %v309, 4
      %v312 = vshll.u32 %v250, 16
      %v314 = vrot.slane %v312, 5
      %v315 = vsel %vm267, %v310, %v314
      %v317 = vshrl.u32 %v205, 16
      %v319 = vrot.slane %v317, 4
      %v320 = vshll.u32 %v205, 16
      %v322 = vrot.slane %v320, 5
      %v323 = vor.u32 %v319, %v322
      %v324 = vrot.slane %v323, 4
      %v326 = vshll.u32 %v206, 16
      %v328 = vrot.slane %v326, 5
      %v329 = vsel %vm267, %v324, %v328
      %v330 = vshrl.u32 %v206, 16
      %v332 = vrot.slane %v330, 4
      %v333 = vor.u32 %v332, %v328
      %v334 = vrot.slane %v333, 4
      %v336 = vshll.u32 %v251, 16
      %v338 = vrot.slane %v336, 5
      %v339 = vsel %vm267, %v334, %v338
      %v341 = vshrl.u32 %v207, 16
      %v343 = vrot.slane %v341, 4
      %v344 = vshll.u32 %v207, 16
      %v346 = vrot.slane %v344, 5
      %v347 = vor.u32 %v343, %v346
      %v348 = vrot.slane %v347, 4
      %v350 = vshll.u32 %v208, 16
      %v352 = vrot.slane %v350, 5
      %v353 = vsel %vm267, %v348, %v352
      %v354 = vshrl.u32 %v208, 16
      %v356 = vrot.slane %v354, 4
      %v357 = vor.u32 %v356, %v352
      %v358 = vrot.slane %v357, 4
      %v360 = vshll.u32 %v252, 16
      %v362 = vrot.slane %v360, 5
      %v363 = vsel %vm267, %v358, %v362
      %v365 = vshrl.u32 %v209, 16
      %v367 = vrot.slane %v365, 4
      %v368 = vshll.u32 %v209, 16
      %v370 = vrot.slane %v368, 5
      %v371 = vor.u32 %v367, %v370
      %v372 = vrot.slane %v371, 4
      %v374 = vshll.u32 %v210, 16
      %v376 = vrot.slane %v374, 5
      %v377 = vsel %vm267, %v372, %v376
      %v378 = vshrl.u32 %v210, 16
      %v380 = vrot.slane %v378, 4
      %v381 = vor.u32 %v380, %v376
      %v382 = vrot.slane %v381, 4
      %v384 = vshll.u32 %v253, 16
      %v386 = vrot.slane %v384, 5
      %v387 = vsel %vm267, %v382, %v386
      %v389 = vshrl.u32 %v211, 16
      %v391 = vrot.slane %v389, 4
      %v392 = vshll.u32 %v211, 16
      %v394 = vrot.slane %v392, 5
      %v395 = vor.u32 %v391, %v394
      %v396 = vrot.slane %v395, 4
      %v398 = vshll.u32 %v212, 16
      %v400 = vrot.slane %v398, 5
      %v401 = vsel %vm267, %v396, %v400
      %v402 = vshrl.u32 %v212, 16
      %v404 = vrot.slane %v402, 4
      %v405 = vor.u32 %v404, %v400
      %v406 = vrot.slane %v405, 4
      %v408 = vshll.u32 %v254, 16
      %v410 = vrot.slane %v408, 5
      %v411 = vsel %vm267, %v406, %v410
      %v413 = vshrl.u32 %v213, 16
      %v415 = vrot.slane %v413, 4
      %v416 = vshll.u32 %v213, 16
      %v418 = vrot.slane %v416, 5
      %v419 = vor.u32 %v415, %v418
      %v420 = vrot.slane %v419, 4
      %v422 = vshll.u32 %v214, 16
      %v424 = vrot.slane %v422, 5
      %v425 = vsel %vm267, %v420, %v424
      %v426 = vshrl.u32 %v214, 16
      %v428 = vrot.slane %v426, 4
      %v429 = vor.u32 %v428, %v424
      %v430 = vrot.slane %v429, 4
      %v432 = vshll.u32 %v255, 16
      %v434 = vrot.slane %v432, 5
      %v435 = vsel %vm267, %v430, %v434
      %v437 = vshrl.u32 %v215, 16
      %v439 = vrot.slane %v437, 4
      %v440 = vshll.u32 %v215, 16
      %v442 = vrot.slane %v440, 5
      %v443 = vor.u32 %v439, %v442
      %v444 = vrot.slane %v443, 4
      %v446 = vshll.u32 %v216, 16
      %v448 = vrot.slane %v446, 5
      %v449 = vsel %vm267, %v444, %v448
      %v450 = vshrl.u32 %v216, 16
      %v452 = vrot.slane %v450, 4
      %v453 = vor.u32 %v452, %v448
      %v454 = vrot.slane %v453, 4
      %v456 = vshll.u32 %v256, 16
      %v458 = vrot.slane %v456, 5
      %v459 = vsel %vm267, %v454, %v458
      %v461 = vshrl.u32 %v217, 16
      %v463 = vrot.slane %v461, 4
      %v464 = vshll.u32 %v217, 16
      %v466 = vrot.slane %v464, 5
      %v467 = vor.u32 %v463, %v466
      %v468 = vrot.slane %v467, 4
      %v470 = vshll.u32 %v218, 16
      %v472 = vrot.slane %v470, 5
      %v473 = vsel %vm267, %v468, %v472
      %v474 = vshrl.u32 %v218, 16
      %v476 = vrot.slane %v474, 4
      %v477 = vor.u32 %v476, %v472
      %v478 = vrot.slane %v477, 4
      %v480 = vshll.u32 %v257, 16
      %v482 = vrot.slane %v480, 5
      %v483 = vsel %vm267, %v478, %v482
      %v485 = vshrl.u32 %v219, 16
      %v487 = vrot.slane %v485, 4
      %v488 = vshll.u32 %v219, 16
      %v490 = vrot.slane %v488, 5
      %v491 = vor.u32 %v487, %v490
      %v492 = vrot.slane %v491, 4
      %v494 = vshll.u32 %v220, 16
      %v496 = vrot.slane %v494, 5
      %v497 = vsel %vm267, %v492, %v496
      %v498 = vshrl.u32 %v220, 16
      %v500 = vrot.slane %v498, 4
      %v501 = vor.u32 %v500, %v496
      %v502 = vrot.slane %v501, 4
      %v504 = vshll.u32 %v258, 16
      %v506 = vrot.slane %v504, 5
      %v507 = vsel %vm267, %v502, %v506
      %v509 = vshrl.u32 %v221, 16
      %v511 = vrot.slane %v509, 4
      %v512 = vshll.u32 %v221, 16
      %v514 = vrot.slane %v512, 5
      %v515 = vor.u32 %v511, %v514
      %v516 = vrot.slane %v515, 4
      %v518 = vshll.u32 %v222, 16
      %v520 = vrot.slane %v518, 5
      %v521 = vsel %vm267, %v516, %v520
      %v522 = vshrl.u32 %v222, 16
      %v524 = vrot.slane %v522, 4
      %v525 = vor.u32 %v524, %v520
      %v526 = vrot.slane %v525, 4
      %v528 = vshll.u32 %v259, 16
      %v530 = vrot.slane %v528, 5
      %v531 = vsel %vm267, %v526, %v530
      %v533 = vshrl.u32 %v223, 16
      %v535 = vrot.slane %v533, 4
      %v536 = vshll.u32 %v223, 16
      %v538 = vrot.slane %v536, 5
      %v539 = vor.u32 %v535, %v538
      %v540 = vrot.slane %v539, 4
      %v542 = vshll.u32 %v224, 16
      %v544 = vrot.slane %v542, 5
      %v545 = vsel %vm267, %v540, %v544
      %v546 = vshrl.u32 %v224, 16
      %v548 = vrot.slane %v546, 4
      %v549 = vor.u32 %v548, %v544
      %v550 = vrot.slane %v549, 4
      %v552 = vshll.u32 %v260, 16
      %v554 = vrot.slane %v552, 5
      %v555 = vsel %vm267, %v550, %v554
      %v557 = vshrl.u32 %v225, 16
      %v559 = vrot.slane %v557, 4
      %v560 = vshll.u32 %v225, 16
      %v562 = vrot.slane %v560, 5
      %v563 = vor.u32 %v559, %v562
      %v564 = vrot.slane %v563, 4
      %v566 = vshll.u32 %v226, 16
      %v568 = vrot.slane %v566, 5
      %v569 = vsel %vm267, %v564, %v568
      %v570 = vshrl.u32 %v226, 16
      %v572 = vrot.slane %v570, 4
      %v573 = vor.u32 %v572, %v568
      %v574 = vrot.slane %v573, 4
      %v576 = vshll.u32 %v261, 16
      %v578 = vrot.slane %v576, 5
      %v579 = vsel %vm267, %v574, %v578
      %v581 = vshrl.u32 %v227, 16
      %v583 = vrot.slane %v581, 4
      %v584 = vshll.u32 %v227, 16
      %v586 = vrot.slane %v584, 5
      %v587 = vor.u32 %v583, %v586
      %v588 = vrot.slane %v587, 4
      %v590 = vshll.u32 %v228, 16
      %v592 = vrot.slane %v590, 5
      %v593 = vsel %vm267, %v588, %v592
      %v594 = vshrl.u32 %v228, 16
      %v596 = vrot.slane %v594, 4
      %v597 = vor.u32 %v596, %v592
      %v598 = vrot.slane %v597, 4
      %v600 = vshll.u32 %v262, 16
      %v602 = vrot.slane %v600, 5
      %v603 = vsel %vm267, %v598, %v602
      %v605 = vshrl.u32 %v229, 16
      %v607 = vrot.slane %v605, 4
      %v608 = vshll.u32 %v229, 16
      %v610 = vrot.slane %v608, 5
      %v611 = vor.u32 %v607, %v610
      %v612 = vrot.slane %v611, 4
      %v614 = vshll.u32 %v230, 16
      %v616 = vrot.slane %v614, 5
      %v617 = vsel %vm267, %v612, %v616
      %v618 = vshrl.u32 %v230, 16
      %v620 = vrot.slane %v618, 4
      %v621 = vor.u32 %v620, %v616
      %v622 = vrot.slane %v621, 4
      %v624 = vshll.u32 %v263, 16
      %v626 = vrot.slane %v624, 5
      %v627 = vsel %vm267, %v622, %v626
      %v629 = vshrl.u32 %v231, 16
      %v631 = vrot.slane %v629, 4
      %v632 = vshll.u32 %v231, 16
      %v634 = vrot.slane %v632, 5
      %v635 = vor.u32 %v631, %v634
      %v636 = vrot.slane %v635, 4
      %v638 = vshll.u32 %v232, 16
      %v640 = vrot.slane %v638, 5
      %v641 = vsel %vm267, %v636, %v640
      %v642 = vshrl.u32 %v232, 16
      %v644 = vrot.slane %v642, 4
      %v645 = vor.u32 %v644, %v640
      %v646 = vrot.slane %v645, 4
      %v648 = vshll.u32 %v264, 16
      %v650 = vrot.slane %v648, 5
      %v651 = vsel %vm267, %v646, %v650
      %s652 = scalar_lea.vmem %s1, 64
      %v653 = vld [vmem:[%s652] sm:$0xf]
      %v654 = vld [vmem:[%s652 + $0x4] sm:$0xf]
      %v655 = vld [vmem:[%s652 + $0x8] sm:$0xf]
      %v656 = vld [vmem:[%s652 + $0xc] sm:$0xf]
      %v657 = vld [vmem:[%s652 + $0x10] sm:$0xf]
      %v658 = vld [vmem:[%s652 + $0x14] sm:$0xf]
      %v659 = vld [vmem:[%s652 + $0x18] sm:$0xf]
      %v660 = vld [vmem:[%s652 + $0x1c] sm:$0xf]
      %v661 = vld [vmem:[%s652 + $0x20] sm:$0xf]
      %v662 = vld [vmem:[%s652 + $0x24] sm:$0xf]
      %v663 = vld [vmem:[%s652 + $0x28] sm:$0xf]
      %v664 = vld [vmem:[%s652 + $0x2c] sm:$0xf]
      %v665 = vld [vmem:[%s652 + $0x30] sm:$0xf]
      %v666 = vld [vmem:[%s652 + $0x34] sm:$0xf]
      %v667 = vld [vmem:[%s652 + $0x38] sm:$0xf]
      %v668 = vld [vmem:[%s652 + $0x3c] sm:$0xf]
      %v669 = vunpack.c.l.b16 %v281
      %v670 = vunpack.c.l.b16 %v291
      %v671 = vunpack.c.l.b16 %v305
      %v672 = vunpack.c.l.b16 %v315
      %v673 = vunpack.c.l.b16 %v329
      %v674 = vunpack.c.l.b16 %v339
      %v675 = vunpack.c.l.b16 %v353
      %v676 = vunpack.c.l.b16 %v363
      %v677 = vunpack.c.l.b16 %v377
      %v678 = vunpack.c.l.b16 %v387
      %v679 = vunpack.c.l.b16 %v401
      %v680 = vunpack.c.l.b16 %v411
      %v681 = vunpack.c.l.b16 %v425
      %v682 = vunpack.c.l.b16 %v435
      %v683 = vunpack.c.l.b16 %v449
      %v684 = vunpack.c.l.b16 %v459
      %v685 = vunpack.c.l.b16 %v473
      %v686 = vunpack.c.l.b16 %v483
      %v687 = vunpack.c.l.b16 %v497
      %v688 = vunpack.c.l.b16 %v507
      %v689 = vunpack.c.l.b16 %v521
      %v690 = vunpack.c.l.b16 %v531
      %v691 = vunpack.c.l.b16 %v545
      %v692 = vunpack.c.l.b16 %v555
      %v693 = vunpack.c.l.b16 %v569
      %v694 = vunpack.c.l.b16 %v579
      %v695 = vunpack.c.l.b16 %v593
      %v696 = vunpack.c.l.b16 %v603
      %v697 = vunpack.c.l.b16 %v617
      %v698 = vunpack.c.l.b16 %v627
      %v699 = vunpack.c.l.b16 %v641
      %v700 = vunpack.c.l.b16 %v651
      %v701 = vpack.c.b16 %v670, %v669
      %v702 = vpack.c.b16 %v672, %v671
      %v703 = vpack.c.b16 %v674, %v673
      %v704 = vpack.c.b16 %v676, %v675
      %v705 = vpack.c.b16 %v678, %v677
      %v706 = vpack.c.b16 %v680, %v679
      %v707 = vpack.c.b16 %v682, %v681
      %v708 = vpack.c.b16 %v684, %v683
      %v709 = vpack.c.b16 %v686, %v685
      %v710 = vpack.c.b16 %v688, %v687
      %v711 = vpack.c.b16 %v690, %v689
      %v712 = vpack.c.b16 %v692, %v691
      %v713 = vpack.c.b16 %v694, %v693
      %v714 = vpack.c.b16 %v696, %v695
      %v715 = vpack.c.b16 %v698, %v697
      %v716 = vpack.c.b16 %v700, %v699
      %v749 = vunpack.c.l.b16 %v653
      %v750 = vunpack.c.l.b16 %v654
      %v751 = vunpack.c.l.b16 %v655
      %v752 = vunpack.c.l.b16 %v656
      %v753 = vunpack.c.l.b16 %v657
      %v754 = vunpack.c.l.b16 %v658
      %v755 = vunpack.c.l.b16 %v659
      %v756 = vunpack.c.l.b16 %v660
      %v757 = vunpack.c.l.b16 %v661
      %v758 = vunpack.c.l.b16 %v662
      %v759 = vunpack.c.l.b16 %v663
      %v760 = vunpack.c.l.b16 %v664
      %v761 = vunpack.c.l.b16 %v665
      %v762 = vunpack.c.l.b16 %v666
      %v763 = vunpack.c.l.b16 %v667
      %v764 = vunpack.c.l.b16 %v668
      %v765 = vpack.c.b16 %v750, %v749
      %v766 = vpack.c.b16 %v752, %v751
      %v767 = vpack.c.b16 %v754, %v753
      %v768 = vpack.c.b16 %v756, %v755
      %v769 = vpack.c.b16 %v758, %v757
      %v770 = vpack.c.b16 %v760, %v759
      %v771 = vpack.c.b16 %v762, %v761
      %v772 = vpack.c.b16 %v764, %v763
      %781 = vmatprep.subr.bf16.mxu0 0
      %782 = vmatpush1.bf16.msra.mxu0 %v772
      %783 = vmatprep.subr.bf16.mxu0 0
      %784 = vmatpush1.bf16.msra.mxu0 %v771
      %785 = vmatprep.subr.bf16.mxu0 0
      %786 = vmatpush1.bf16.msra.mxu0 %v770
      %787 = vmatprep.subr.bf16.mxu0 0
      %788 = vmatpush1.bf16.msra.mxu0 %v769
      %789 = vmatprep.subr.bf16.mxu0 0
      %790 = vmatpush1.bf16.msra.mxu0 %v768
      %791 = vmatprep.subr.bf16.mxu0 0
      %792 = vmatpush1.bf16.msra.mxu0 %v767
      %793 = vmatprep.subr.bf16.mxu0 0
      %794 = vmatpush1.bf16.msra.mxu0 %v766
      %795 = vmatprep.subr.bf16.mxu0 0
      %796 = vmatpush1.bf16.msra.mxu0 %v765
      %797 = vmatprep.subr.bf16.mxu0 0
      %798 = vmatpush2.bf16.msra.mxu0 0
      %799 = vmatprep.subr.bf16.mxu0 0
      %800 = vmatpush2.bf16.msra.mxu0 0
      %801 = vmatprep.subr.bf16.mxu0 0
      %802 = vmatpush2.bf16.msra.mxu0 0
      %803 = vmatprep.subr.bf16.mxu0 0
      %804 = vmatpush2.bf16.msra.mxu0 0
      %805 = vmatprep.subr.bf16.mxu0 0
      %806 = vmatpush2.bf16.msra.mxu0 0
      %807 = vmatprep.subr.bf16.mxu0 0
      %808 = vmatpush2.bf16.msra.mxu0 0
      %809 = vmatprep.subr.bf16.mxu0 0
      %810 = vmatpush2.bf16.msra.mxu0 0
      %811 = vmatprep.subr.bf16.mxu0 0
      %812 = vmatpush2.bf16.msra.mxu0 0
      %813 = vmatprep.mubr.bf16.mxu0 0
      %814 = vmatmul.mubr.bf16.gmra.mxu0 %v701
      %v815 = vpop.f32.mrf.mxu0
      %v816 = vadd.f32 0.0, %v815
      %v817 = vpop.f32.mrf.mxu0
      %v818 = vpop.f32.mrf.mxu0
      %v819 = vadd.f32 0.0, %v818
      %v820 = vpop.f32.mrf.mxu0
      %821 = vmatprep.mubr.bf16.mxu0 0
      %822 = vmatmul.mubr.bf16.gmra.mxu0 %v702
      %v823 = vpop.f32.mrf.mxu0
      %v824 = vadd.f32 0.0, %v823
      %v825 = vpop.f32.mrf.mxu0
      %v826 = vpop.f32.mrf.mxu0
      %v827 = vadd.f32 0.0, %v826
      %v828 = vpop.f32.mrf.mxu0
      %829 = vmatprep.mubr.bf16.mxu0 0
      %830 = vmatmul.mubr.bf16.gmra.mxu0 %v703
      %v831 = vpop.f32.mrf.mxu0
      %v832 = vadd.f32 0.0, %v831
      %v833 = vpop.f32.mrf.mxu0
      %v834 = vpop.f32.mrf.mxu0
      %v835 = vadd.f32 0.0, %v834
      %v836 = vpop.f32.mrf.mxu0
      %837 = vmatprep.mubr.bf16.mxu0 0
      %838 = vmatmul.mubr.bf16.gmra.mxu0 %v704
      %v839 = vpop.f32.mrf.mxu0
      %v840 = vadd.f32 0.0, %v839
      %v841 = vpop.f32.mrf.mxu0
      %v842 = vpop.f32.mrf.mxu0
      %v843 = vadd.f32 0.0, %v842
      %v844 = vpop.f32.mrf.mxu0
      %845 = vmatprep.mubr.bf16.mxu0 0
      %846 = vmatmul.mubr.bf16.gmra.mxu0 %v705
      %v847 = vpop.f32.mrf.mxu0
      %v848 = vadd.f32 0.0, %v847
      %v849 = vpop.f32.mrf.mxu0
      %v850 = vpop.f32.mrf.mxu0
      %v851 = vadd.f32 0.0, %v850
      %v852 = vpop.f32.mrf.mxu0
      %853 = vmatprep.mubr.bf16.mxu0 0
      %854 = vmatmul.mubr.bf16.gmra.mxu0 %v706
      %v855 = vpop.f32.mrf.mxu0
      %v856 = vadd.f32 0.0, %v855
      %v857 = vpop.f32.mrf.mxu0
      %v858 = vpop.f32.mrf.mxu0
      %v859 = vadd.f32 0.0, %v858
      %v860 = vpop.f32.mrf.mxu0
      %861 = vmatprep.mubr.bf16.mxu0 0
      %862 = vmatmul.mubr.bf16.gmra.mxu0 %v707
      %v863 = vpop.f32.mrf.mxu0
      %v864 = vadd.f32 0.0, %v863
      %v865 = vpop.f32.mrf.mxu0
      %v866 = vpop.f32.mrf.mxu0
      %v867 = vadd.f32 0.0, %v866
      %v868 = vpop.f32.mrf.mxu0
      %869 = vmatprep.mubr.bf16.mxu0 0
      %870 = vmatmul.mubr.bf16.gmra.mxu0 %v708
      %v871 = vpop.f32.mrf.mxu0
      %v872 = vadd.f32 0.0, %v871
      %v873 = vpop.f32.mrf.mxu0
      %v874 = vpop.f32.mrf.mxu0
      %v875 = vadd.f32 0.0, %v874
      %v876 = vpop.f32.mrf.mxu0
      %877 = vmatprep.mubr.bf16.mxu0 0
      %878 = vmatmul.mubr.bf16.gmra.mxu0 %v709
      %v879 = vpop.f32.mrf.mxu0
      %v880 = vadd.f32 0.0, %v879
      %v881 = vpop.f32.mrf.mxu0
      %v882 = vpop.f32.mrf.mxu0
      %v883 = vadd.f32 0.0, %v882
      %v884 = vpop.f32.mrf.mxu0
      %885 = vmatprep.mubr.bf16.mxu0 0
      %886 = vmatmul.mubr.bf16.gmra.mxu0 %v710
      %v887 = vpop.f32.mrf.mxu0
      %v888 = vadd.f32 0.0, %v887
      %v889 = vpop.f32.mrf.mxu0
      %v890 = vpop.f32.mrf.mxu0
      %v891 = vadd.f32 0.0, %v890
      %v892 = vpop.f32.mrf.mxu0
      %893 = vmatprep.mubr.bf16.mxu0 0
      %894 = vmatmul.mubr.bf16.gmra.mxu0 %v711
      %v895 = vpop.f32.mrf.mxu0
      %v896 = vadd.f32 0.0, %v895
      %v897 = vpop.f32.mrf.mxu0
      %v898 = vpop.f32.mrf.mxu0
      %v899 = vadd.f32 0.0, %v898
      %v900 = vpop.f32.mrf.mxu0
      %901 = vmatprep.mubr.bf16.mxu0 0
      %902 = vmatmul.mubr.bf16.gmra.mxu0 %v712
      %v903 = vpop.f32.mrf.mxu0
      %v904 = vadd.f32 0.0, %v903
      %v905 = vpop.f32.mrf.mxu0
      %v906 = vpop.f32.mrf.mxu0
      %v907 = vadd.f32 0.0, %v906
      %v908 = vpop.f32.mrf.mxu0
      %909 = vmatprep.mubr.bf16.mxu0 0
      %910 = vmatmul.mubr.bf16.gmra.mxu0 %v713
      %v911 = vpop.f32.mrf.mxu0
      %v912 = vadd.f32 0.0, %v911
      %v913 = vpop.f32.mrf.mxu0
      %v914 = vpop.f32.mrf.mxu0
      %v915 = vadd.f32 0.0, %v914
      %v916 = vpop.f32.mrf.mxu0
      %917 = vmatprep.mubr.bf16.mxu0 0
      %918 = vmatmul.mubr.bf16.gmra.mxu0 %v714
      %v919 = vpop.f32.mrf.mxu0
      %v920 = vadd.f32 0.0, %v919
      %v921 = vpop.f32.mrf.mxu0
      %v922 = vpop.f32.mrf.mxu0
      %v923 = vadd.f32 0.0, %v922
      %v924 = vpop.f32.mrf.mxu0
      %925 = vmatprep.mubr.bf16.mxu0 0
      %926 = vmatmul.mubr.bf16.gmra.mxu0 %v715
      %v927 = vpop.f32.mrf.mxu0
      %v928 = vadd.f32 0.0, %v927
      %v929 = vpop.f32.mrf.mxu0
      %v930 = vpop.f32.mrf.mxu0
      %v931 = vadd.f32 0.0, %v930
      %v932 = vpop.f32.mrf.mxu0
      %933 = vmatprep.mubr.bf16.mxu0 0
      %934 = vmatmul.mubr.bf16.gmra.mxu0 %v716
      %v935 = vpop.f32.mrf.mxu0
      %v936 = vadd.f32 0.0, %v935
      %v937 = vpop.f32.mrf.mxu0
      %v938 = vpop.f32.mrf.mxu0
      %v939 = vadd.f32 0.0, %v938
      %v940 = vpop.f32.mrf.mxu0
      %941 = vdwg.mxu0
      %v974 = vunpack.c.l.b16 %v201
      %v975 = vunpack.c.l.b16 %v202
      %v976 = vunpack.c.l.b16 %v203
      %v977 = vunpack.c.l.b16 %v204
      %v978 = vunpack.c.l.b16 %v205
      %v979 = vunpack.c.l.b16 %v206
      %v980 = vunpack.c.l.b16 %v207
      %v981 = vunpack.c.l.b16 %v208
      %v982 = vunpack.c.l.b16 %v209
      %v983 = vunpack.c.l.b16 %v210
      %v984 = vunpack.c.l.b16 %v211
      %v985 = vunpack.c.l.b16 %v212
      %v986 = vunpack.c.l.b16 %v213
      %v987 = vunpack.c.l.b16 %v214
      %v988 = vunpack.c.l.b16 %v215
      %v989 = vunpack.c.l.b16 %v216
      %v990 = vunpack.c.l.b16 %v217
      %v991 = vunpack.c.l.b16 %v218
      %v992 = vunpack.c.l.b16 %v219
      %v993 = vunpack.c.l.b16 %v220
      %v994 = vunpack.c.l.b16 %v221
      %v995 = vunpack.c.l.b16 %v222
      %v996 = vunpack.c.l.b16 %v223
      %v997 = vunpack.c.l.b16 %v224
      %v998 = vunpack.c.l.b16 %v225
      %v999 = vunpack.c.l.b16 %v226
      %v1000 = vunpack.c.l.b16 %v227
      %v1001 = vunpack.c.l.b16 %v228
      %v1002 = vunpack.c.l.b16 %v229
      %v1003 = vunpack.c.l.b16 %v230
      %v1004 = vunpack.c.l.b16 %v231
      %v1005 = vunpack.c.l.b16 %v232
      %v1006 = vpack.c.b16 %v975, %v974
      %v1007 = vpack.c.b16 %v977, %v976
      %v1008 = vpack.c.b16 %v979, %v978
      %v1009 = vpack.c.b16 %v981, %v980
      %v1010 = vpack.c.b16 %v983, %v982
      %v1011 = vpack.c.b16 %v985, %v984
      %v1012 = vpack.c.b16 %v987, %v986
      %v1013 = vpack.c.b16 %v989, %v988
      %v1014 = vpack.c.b16 %v991, %v990
      %v1015 = vpack.c.b16 %v993, %v992
      %v1016 = vpack.c.b16 %v995, %v994
      %v1017 = vpack.c.b16 %v997, %v996
      %v1018 = vpack.c.b16 %v999, %v998
      %v1019 = vpack.c.b16 %v1001, %v1000
      %v1020 = vpack.c.b16 %v1003, %v1002
      %v1021 = vpack.c.b16 %v1005, %v1004
      %v1054 = vunpack.c.l.b16 %v233
      %v1055 = vunpack.c.l.b16 %v234
      %v1056 = vunpack.c.l.b16 %v235
      %v1057 = vunpack.c.l.b16 %v236
      %v1058 = vunpack.c.l.b16 %v237
      %v1059 = vunpack.c.l.b16 %v238
      %v1060 = vunpack.c.l.b16 %v239
      %v1061 = vunpack.c.l.b16 %v240
      %v1062 = vunpack.c.l.b16 %v241
      %v1063 = vunpack.c.l.b16 %v242
      %v1064 = vunpack.c.l.b16 %v243
      %v1065 = vunpack.c.l.b16 %v244
      %v1066 = vunpack.c.l.b16 %v245
      %v1067 = vunpack.c.l.b16 %v246
      %v1068 = vunpack.c.l.b16 %v247
      %v1069 = vunpack.c.l.b16 %v248
      %v1070 = vpack.c.b16 %v1055, %v1054
      %v1071 = vpack.c.b16 %v1057, %v1056
      %v1072 = vpack.c.b16 %v1059, %v1058
      %v1073 = vpack.c.b16 %v1061, %v1060
      %v1074 = vpack.c.b16 %v1063, %v1062
      %v1075 = vpack.c.b16 %v1065, %v1064
      %v1076 = vpack.c.b16 %v1067, %v1066
      %v1077 = vpack.c.b16 %v1069, %v1068
      %1086 = vmatprep.subr.bf16.mxu0 0
      %1087 = vmatpush1.bf16.msra.mxu0 %v1077
      %1088 = vmatprep.subr.bf16.mxu0 0
      %1089 = vmatpush1.bf16.msra.mxu0 %v1076
      %1090 = vmatprep.subr.bf16.mxu0 0
      %1091 = vmatpush1.bf16.msra.mxu0 %v1075
      %1092 = vmatprep.subr.bf16.mxu0 0
      %1093 = vmatpush1.bf16.msra.mxu0 %v1074
      %1094 = vmatprep.subr.bf16.mxu0 0
      %1095 = vmatpush1.bf16.msra.mxu0 %v1073
      %1096 = vmatprep.subr.bf16.mxu0 0
      %1097 = vmatpush1.bf16.msra.mxu0 %v1072
      %1098 = vmatprep.subr.bf16.mxu0 0
      %1099 = vmatpush1.bf16.msra.mxu0 %v1071
      %1100 = vmatprep.subr.bf16.mxu0 0
      %1101 = vmatpush1.bf16.msra.mxu0 %v1070
      %1102 = vmatprep.subr.bf16.mxu0 0
      %1103 = vmatpush2.bf16.msra.mxu0 0
      %1104 = vmatprep.subr.bf16.mxu0 0
      %1105 = vmatpush2.bf16.msra.mxu0 0
      %1106 = vmatprep.subr.bf16.mxu0 0
      %1107 = vmatpush2.bf16.msra.mxu0 0
      %1108 = vmatprep.subr.bf16.mxu0 0
      %1109 = vmatpush2.bf16.msra.mxu0 0
      %1110 = vmatprep.subr.bf16.mxu0 0
      %1111 = vmatpush2.bf16.msra.mxu0 0
      %1112 = vmatprep.subr.bf16.mxu0 0
      %1113 = vmatpush2.bf16.msra.mxu0 0
      %1114 = vmatprep.subr.bf16.mxu0 0
      %1115 = vmatpush2.bf16.msra.mxu0 0
      %1116 = vmatprep.subr.bf16.mxu0 0
      %1117 = vmatpush2.bf16.msra.mxu0 0
      %1118 = vmatprep.mubr.bf16.mxu0 0
      %1119 = vmatmul.mubr.bf16.gmra.mxu0 %v1006
      %v1120 = vpop.f32.mrf.mxu0
      %v1121 = vadd.f32 %v816, %v1120
      %v1122 = vpop.f32.mrf.mxu0
      %v1123 = vpop.f32.mrf.mxu0
      %v1124 = vadd.f32 %v819, %v1123
      %v1125 = vpop.f32.mrf.mxu0
      %1126 = vmatprep.mubr.bf16.mxu0 0
      %1127 = vmatmul.mubr.bf16.gmra.mxu0 %v1007
      %v1128 = vpop.f32.mrf.mxu0
      %v1129 = vadd.f32 %v824, %v1128
      %v1130 = vpop.f32.mrf.mxu0
      %v1131 = vpop.f32.mrf.mxu0
      %v1132 = vadd.f32 %v827, %v1131
      %v1133 = vpop.f32.mrf.mxu0
      %1134 = vmatprep.mubr.bf16.mxu0 0
      %1135 = vmatmul.mubr.bf16.gmra.mxu0 %v1008
      %v1136 = vpop.f32.mrf.mxu0
      %v1137 = vadd.f32 %v832, %v1136
      %v1138 = vpop.f32.mrf.mxu0
      %v1139 = vpop.f32.mrf.mxu0
      %v1140 = vadd.f32 %v835, %v1139
      %v1141 = vpop.f32.mrf.mxu0
      %1142 = vmatprep.mubr.bf16.mxu0 0
      %1143 = vmatmul.mubr.bf16.gmra.mxu0 %v1009
      %v1144 = vpop.f32.mrf.mxu0
      %v1145 = vadd.f32 %v840, %v1144
      %v1146 = vpop.f32.mrf.mxu0
      %v1147 = vpop.f32.mrf.mxu0
      %v1148 = vadd.f32 %v843, %v1147
      %v1149 = vpop.f32.mrf.mxu0
      %1150 = vmatprep.mubr.bf16.mxu0 0
      %1151 = vmatmul.mubr.bf16.gmra.mxu0 %v1010
      %v1152 = vpop.f32.mrf.mxu0
      %v1153 = vadd.f32 %v848, %v1152
      %v1154 = vpop.f32.mrf.mxu0
      %v1155 = vpop.f32.mrf.mxu0
      %v1156 = vadd.f32 %v851, %v1155
      %v1157 = vpop.f32.mrf.mxu0
      %1158 = vmatprep.mubr.bf16.mxu0 0
      %1159 = vmatmul.mubr.bf16.gmra.mxu0 %v1011
      %v1160 = vpop.f32.mrf.mxu0
      %v1161 = vadd.f32 %v856, %v1160
      %v1162 = vpop.f32.mrf.mxu0
      %v1163 = vpop.f32.mrf.mxu0
      %v1164 = vadd.f32 %v859, %v1163
      %v1165 = vpop.f32.mrf.mxu0
      %1166 = vmatprep.mubr.bf16.mxu0 0
      %1167 = vmatmul.mubr.bf16.gmra.mxu0 %v1012
      %v1168 = vpop.f32.mrf.mxu0
      %v1169 = vadd.f32 %v864, %v1168
      %v1170 = vpop.f32.mrf.mxu0
      %v1171 = vpop.f32.mrf.mxu0
      %v1172 = vadd.f32 %v867, %v1171
      %v1173 = vpop.f32.mrf.mxu0
      %1174 = vmatprep.mubr.bf16.mxu0 0
      %1175 = vmatmul.mubr.bf16.gmra.mxu0 %v1013
      %v1176 = vpop.f32.mrf.mxu0
      %v1177 = vadd.f32 %v872, %v1176
      %v1178 = vpop.f32.mrf.mxu0
      %v1179 = vpop.f32.mrf.mxu0
      %v1180 = vadd.f32 %v875, %v1179
      %v1181 = vpop.f32.mrf.mxu0
      %1182 = vmatprep.mubr.bf16.mxu0 0
      %1183 = vmatmul.mubr.bf16.gmra.mxu0 %v1014
      %v1184 = vpop.f32.mrf.mxu0
      %v1185 = vadd.f32 %v880, %v1184
      %v1186 = vpop.f32.mrf.mxu0
      %v1187 = vpop.f32.mrf.mxu0
      %v1188 = vadd.f32 %v883, %v1187
      %v1189 = vpop.f32.mrf.mxu0
      %1190 = vmatprep.mubr.bf16.mxu0 0
      %1191 = vmatmul.mubr.bf16.gmra.mxu0 %v1015
      %v1192 = vpop.f32.mrf.mxu0
      %v1193 = vadd.f32 %v888, %v1192
      %v1194 = vpop.f32.mrf.mxu0
      %v1195 = vpop.f32.mrf.mxu0
      %v1196 = vadd.f32 %v891, %v1195
      %v1197 = vpop.f32.mrf.mxu0
      %1198 = vmatprep.mubr.bf16.mxu0 0
      %1199 = vmatmul.mubr.bf16.gmra.mxu0 %v1016
      %v1200 = vpop.f32.mrf.mxu0
      %v1201 = vadd.f32 %v896, %v1200
      %v1202 = vpop.f32.mrf.mxu0
      %v1203 = vpop.f32.mrf.mxu0
      %v1204 = vadd.f32 %v899, %v1203
      %v1205 = vpop.f32.mrf.mxu0
      %1206 = vmatprep.mubr.bf16.mxu0 0
      %1207 = vmatmul.mubr.bf16.gmra.mxu0 %v1017
      %v1208 = vpop.f32.mrf.mxu0
      %v1209 = vadd.f32 %v904, %v1208
      %v1210 = vpop.f32.mrf.mxu0
      %v1211 = vpop.f32.mrf.mxu0
      %v1212 = vadd.f32 %v907, %v1211
      %v1213 = vpop.f32.mrf.mxu0
      %1214 = vmatprep.mubr.bf16.mxu0 0
      %1215 = vmatmul.mubr.bf16.gmra.mxu0 %v1018
      %v1216 = vpop.f32.mrf.mxu0
      %v1217 = vadd.f32 %v912, %v1216
      %v1218 = vpop.f32.mrf.mxu0
      %v1219 = vpop.f32.mrf.mxu0
      %v1220 = vadd.f32 %v915, %v1219
      %v1221 = vpop.f32.mrf.mxu0
      %1222 = vmatprep.mubr.bf16.mxu0 0
      %1223 = vmatmul.mubr.bf16.gmra.mxu0 %v1019
      %v1224 = vpop.f32.mrf.mxu0
      %v1225 = vadd.f32 %v920, %v1224
      %v1226 = vpop.f32.mrf.mxu0
      %v1227 = vpop.f32.mrf.mxu0
      %v1228 = vadd.f32 %v923, %v1227
      %v1229 = vpop.f32.mrf.mxu0
      %1230 = vmatprep.mubr.bf16.mxu0 0
      %1231 = vmatmul.mubr.bf16.gmra.mxu0 %v1020
      %v1232 = vpop.f32.mrf.mxu0
      %v1233 = vadd.f32 %v928, %v1232
      %v1234 = vpop.f32.mrf.mxu0
      %v1235 = vpop.f32.mrf.mxu0
      %v1236 = vadd.f32 %v931, %v1235
      %v1237 = vpop.f32.mrf.mxu0
      %1238 = vmatprep.mubr.bf16.mxu0 0
      %1239 = vmatmul.mubr.bf16.gmra.mxu0 %v1021
      %v1240 = vpop.f32.mrf.mxu0
      %v1241 = vadd.f32 %v936, %v1240
      %v1242 = vpop.f32.mrf.mxu0
      %v1243 = vpop.f32.mrf.mxu0
      %v1244 = vadd.f32 %v939, %v1243
      %v1245 = vpop.f32.mrf.mxu0
      %1246 = vdwg.mxu0
      %v1247 = vld [vmem:[%s200] sm:$0xe]
      %v1248 = vld [vmem:[%s200 + $0xc] sm:$0xe]
      %v1249 = vld [vmem:[%s200 + $0x18] sm:$0xe]
      %v1250 = vld [vmem:[%s200 + $0x24] sm:$0xe]
      %v1251 = vld [vmem:[%s200 + $0x30] sm:$0xe]
      %v1252 = vld [vmem:[%s200 + $0x3c] sm:$0xe]
      %v1253 = vld [vmem:[%s200 + $0x48] sm:$0xe]
      %v1254 = vld [vmem:[%s200 + $0x54] sm:$0xe]
      %v1255 = vld [vmem:[%s200 + $0x60] sm:$0xe]
      %v1256 = vld [vmem:[%s200 + $0x6c] sm:$0xe]
      %v1257 = vld [vmem:[%s200 + $0x78] sm:$0xe]
      %v1258 = vld [vmem:[%s200 + $0x84] sm:$0xe]
      %v1259 = vld [vmem:[%s200 + $0x90] sm:$0xe]
      %v1260 = vld [vmem:[%s200 + $0x9c] sm:$0xe]
      %v1261 = vld [vmem:[%s200 + $0xa8] sm:$0xe]
      %v1262 = vld [vmem:[%s200 + $0xb4] sm:$0xe]
      %vm1295 = vcmask 1042432
      %vm1296 = vcmask 1046532
      %vm1297 = vmor %vm1295, %vm1296
      %v1298 = vrot.slane %v1247, 5
      %v1299 = vrot.slane %v1298, 4
      %v1300 = vrot.slane %v202, 5
      %v1301 = vsel %vm1297, %v1299, %v1300
      %v1302 = vrot.slane %v1300, 4
      %v1303 = vrot.slane %v249, 5
      %v1304 = vsel %vm1297, %v1302, %v1303
      %v1305 = vrot.slane %v1248, 5
      %v1306 = vrot.slane %v1305, 4
      %v1307 = vrot.slane %v204, 5
      %v1308 = vsel %vm1297, %v1306, %v1307
      %v1309 = vrot.slane %v1307, 4
      %v1310 = vrot.slane %v250, 5
      %v1311 = vsel %vm1297, %v1309, %v1310
      %v1312 = vrot.slane %v1249, 5
      %v1313 = vrot.slane %v1312, 4
      %v1314 = vrot.slane %v206, 5
      %v1315 = vsel %vm1297, %v1313, %v1314
      %v1316 = vrot.slane %v1314, 4
      %v1317 = vrot.slane %v251, 5
      %v1318 = vsel %vm1297, %v1316, %v1317
      %v1319 = vrot.slane %v1250, 5
      %v1320 = vrot.slane %v1319, 4
      %v1321 = vrot.slane %v208, 5
      %v1322 = vsel %vm1297, %v1320, %v1321
      %v1323 = vrot.slane %v1321, 4
      %v1324 = vrot.slane %v252, 5
      %v1325 = vsel %vm1297, %v1323, %v1324
      %v1326 = vrot.slane %v1251, 5
      %v1327 = vrot.slane %v1326, 4
      %v1328 = vrot.slane %v210, 5
      %v1329 = vsel %vm1297, %v1327, %v1328
      %v1330 = vrot.slane %v1328, 4
      %v1331 = vrot.slane %v253, 5
      %v1332 = vsel %vm1297, %v1330, %v1331
      %v1333 = vrot.slane %v1252, 5
      %v1334 = vrot.slane %v1333, 4
      %v1335 = vrot.slane %v212, 5
      %v1336 = vsel %vm1297, %v1334, %v1335
      %v1337 = vrot.slane %v1335, 4
      %v1338 = vrot.slane %v254, 5
      %v1339 = vsel %vm1297, %v1337, %v1338
      %v1340 = vrot.slane %v1253, 5
      %v1341 = vrot.slane %v1340, 4
      %v1342 = vrot.slane %v214, 5
      %v1343 = vsel %vm1297, %v1341, %v1342
      %v1344 = vrot.slane %v1342, 4
      %v1345 = vrot.slane %v255, 5
      %v1346 = vsel %vm1297, %v1344, %v1345
      %v1347 = vrot.slane %v1254, 5
      %v1348 = vrot.slane %v1347, 4
      %v1349 = vrot.slane %v216, 5
      %v1350 = vsel %vm1297, %v1348, %v1349
      %v1351 = vrot.slane %v1349, 4
      %v1352 = vrot.slane %v256, 5
      %v1353 = vsel %vm1297, %v1351, %v1352
      %v1354 = vrot.slane %v1255, 5
      %v1355 = vrot.slane %v1354, 4
      %v1356 = vrot.slane %v218, 5
      %v1357 = vsel %vm1297, %v1355, %v1356
      %v1358 = vrot.slane %v1356, 4
      %v1359 = vrot.slane %v257, 5
      %v1360 = vsel %vm1297, %v1358, %v1359
      %v1361 = vrot.slane %v1256, 5
      %v1362 = vrot.slane %v1361, 4
      %v1363 = vrot.slane %v220, 5
      %v1364 = vsel %vm1297, %v1362, %v1363
      %v1365 = vrot.slane %v1363, 4
      %v1366 = vrot.slane %v258, 5
      %v1367 = vsel %vm1297, %v1365, %v1366
      %v1368 = vrot.slane %v1257, 5
      %v1369 = vrot.slane %v1368, 4
      %v1370 = vrot.slane %v222, 5
      %v1371 = vsel %vm1297, %v1369, %v1370
      %v1372 = vrot.slane %v1370, 4
      %v1373 = vrot.slane %v259, 5
      %v1374 = vsel %vm1297, %v1372, %v1373
      %v1375 = vrot.slane %v1258, 5
      %v1376 = vrot.slane %v1375, 4
      %v1377 = vrot.slane %v224, 5
      %v1378 = vsel %vm1297, %v1376, %v1377
      %v1379 = vrot.slane %v1377, 4
      %v1380 = vrot.slane %v260, 5
      %v1381 = vsel %vm1297, %v1379, %v1380
      %v1382 = vrot.slane %v1259, 5
      %v1383 = vrot.slane %v1382, 4
      %v1384 = vrot.slane %v226, 5
      %v1385 = vsel %vm1297, %v1383, %v1384
      %v1386 = vrot.slane %v1384, 4
      %v1387 = vrot.slane %v261, 5
      %v1388 = vsel %vm1297, %v1386, %v1387
      %v1389 = vrot.slane %v1260, 5
      %v1390 = vrot.slane %v1389, 4
      %v1391 = vrot.slane %v228, 5
      %v1392 = vsel %vm1297, %v1390, %v1391
      %v1393 = vrot.slane %v1391, 4
      %v1394 = vrot.slane %v262, 5
      %v1395 = vsel %vm1297, %v1393, %v1394
      %v1396 = vrot.slane %v1261, 5
      %v1397 = vrot.slane %v1396, 4
      %v1398 = vrot.slane %v230, 5
      %v1399 = vsel %vm1297, %v1397, %v1398
      %v1400 = vrot.slane %v1398, 4
      %v1401 = vrot.slane %v263, 5
      %v1402 = vsel %vm1297, %v1400, %v1401
      %v1403 = vrot.slane %v1262, 5
      %v1404 = vrot.slane %v1403, 4
      %v1405 = vrot.slane %v232, 5
      %v1406 = vsel %vm1297, %v1404, %v1405
      %v1407 = vrot.slane %v1405, 4
      %v1408 = vrot.slane %v264, 5
      %v1409 = vsel %vm1297, %v1407, %v1408
      %s1410 = scalar_lea.vmem %s1, 128
      %v1411 = vld [vmem:[%s1410] sm:$0xf]
      %v1412 = vld [vmem:[%s1410 + $0x4] sm:$0xf]
      %v1413 = vld [vmem:[%s1410 + $0x8] sm:$0xf]
      %v1414 = vld [vmem:[%s1410 + $0xc] sm:$0xf]
      %v1415 = vld [vmem:[%s1410 + $0x10] sm:$0xf]
      %v1416 = vld [vmem:[%s1410 + $0x14] sm:$0xf]
      %v1417 = vld [vmem:[%s1410 + $0x18] sm:$0xf]
      %v1418 = vld [vmem:[%s1410 + $0x1c] sm:$0xf]
      %v1419 = vld [vmem:[%s1410 + $0x20] sm:$0xf]
      %v1420 = vld [vmem:[%s1410 + $0x24] sm:$0xf]
      %v1421 = vld [vmem:[%s1410 + $0x28] sm:$0xf]
      %v1422 = vld [vmem:[%s1410 + $0x2c] sm:$0xf]
      %v1423 = vld [vmem:[%s1410 + $0x30] sm:$0xf]
      %v1424 = vld [vmem:[%s1410 + $0x34] sm:$0xf]
      %v1425 = vld [vmem:[%s1410 + $0x38] sm:$0xf]
      %v1426 = vld [vmem:[%s1410 + $0x3c] sm:$0xf]
      %v1427 = vunpack.c.l.b16 %v1301
      %v1428 = vunpack.c.l.b16 %v1304
      %v1429 = vunpack.c.l.b16 %v1308
      %v1430 = vunpack.c.l.b16 %v1311
      %v1431 = vunpack.c.l.b16 %v1315
      %v1432 = vunpack.c.l.b16 %v1318
      %v1433 = vunpack.c.l.b16 %v1322
      %v1434 = vunpack.c.l.b16 %v1325
      %v1435 = vunpack.c.l.b16 %v1329
      %v1436 = vunpack.c.l.b16 %v1332
      %v1437 = vunpack.c.l.b16 %v1336
      %v1438 = vunpack.c.l.b16 %v1339
      %v1439 = vunpack.c.l.b16 %v1343
      %v1440 = vunpack.c.l.b16 %v1346
      %v1441 = vunpack.c.l.b16 %v1350
      %v1442 = vunpack.c.l.b16 %v1353
      %v1443 = vunpack.c.l.b16 %v1357
      %v1444 = vunpack.c.l.b16 %v1360
      %v1445 = vunpack.c.l.b16 %v1364
      %v1446 = vunpack.c.l.b16 %v1367
      %v1447 = vunpack.c.l.b16 %v1371
      %v1448 = vunpack.c.l.b16 %v1374
      %v1449 = vunpack.c.l.b16 %v1378
      %v1450 = vunpack.c.l.b16 %v1381
      %v1451 = vunpack.c.l.b16 %v1385
      %v1452 = vunpack.c.l.b16 %v1388
      %v1453 = vunpack.c.l.b16 %v1392
      %v1454 = vunpack.c.l.b16 %v1395
      %v1455 = vunpack.c.l.b16 %v1399
      %v1456 = vunpack.c.l.b16 %v1402
      %v1457 = vunpack.c.l.b16 %v1406
      %v1458 = vunpack.c.l.b16 %v1409
      %v1459 = vpack.c.b16 %v1428, %v1427
      %v1460 = vpack.c.b16 %v1430, %v1429
      %v1461 = vpack.c.b16 %v1432, %v1431
      %v1462 = vpack.c.b16 %v1434, %v1433
      %v1463 = vpack.c.b16 %v1436, %v1435
      %v1464 = vpack.c.b16 %v1438, %v1437
      %v1465 = vpack.c.b16 %v1440, %v1439
      %v1466 = vpack.c.b16 %v1442, %v1441
      %v1467 = vpack.c.b16 %v1444, %v1443
      %v1468 = vpack.c.b16 %v1446, %v1445
      %v1469 = vpack.c.b16 %v1448, %v1447
      %v1470 = vpack.c.b16 %v1450, %v1449
      %v1471 = vpack.c.b16 %v1452, %v1451
      %v1472 = vpack.c.b16 %v1454, %v1453
      %v1473 = vpack.c.b16 %v1456, %v1455
      %v1474 = vpack.c.b16 %v1458, %v1457
      %v1507 = vunpack.c.l.b16 %v1411
      %v1508 = vunpack.c.l.b16 %v1412
      %v1509 = vunpack.c.l.b16 %v1413
      %v1510 = vunpack.c.l.b16 %v1414
      %v1511 = vunpack.c.l.b16 %v1415
      %v1512 = vunpack.c.l.b16 %v1416
      %v1513 = vunpack.c.l.b16 %v1417
      %v1514 = vunpack.c.l.b16 %v1418
      %v1515 = vunpack.c.l.b16 %v1419
      %v1516 = vunpack.c.l.b16 %v1420
      %v1517 = vunpack.c.l.b16 %v1421
      %v1518 = vunpack.c.l.b16 %v1422
      %v1519 = vunpack.c.l.b16 %v1423
      %v1520 = vunpack.c.l.b16 %v1424
      %v1521 = vunpack.c.l.b16 %v1425
      %v1522 = vunpack.c.l.b16 %v1426
      %v1523 = vpack.c.b16 %v1508, %v1507
      %v1524 = vpack.c.b16 %v1510, %v1509
      %v1525 = vpack.c.b16 %v1512, %v1511
      %v1526 = vpack.c.b16 %v1514, %v1513
      %v1527 = vpack.c.b16 %v1516, %v1515
      %v1528 = vpack.c.b16 %v1518, %v1517
      %v1529 = vpack.c.b16 %v1520, %v1519
      %v1530 = vpack.c.b16 %v1522, %v1521
      %1539 = vmatprep.subr.bf16.mxu0 0
      %1540 = vmatpush1.bf16.msra.mxu0 %v1530
      %1541 = vmatprep.subr.bf16.mxu0 0
      %1542 = vmatpush1.bf16.msra.mxu0 %v1529
      %1543 = vmatprep.subr.bf16.mxu0 0
      %1544 = vmatpush1.bf16.msra.mxu0 %v1528
      %1545 = vmatprep.subr.bf16.mxu0 0
      %1546 = vmatpush1.bf16.msra.mxu0 %v1527
      %1547 = vmatprep.subr.bf16.mxu0 0
      %1548 = vmatpush1.bf16.msra.mxu0 %v1526
      %1549 = vmatprep.subr.bf16.mxu0 0
      %1550 = vmatpush1.bf16.msra.mxu0 %v1525
      %1551 = vmatprep.subr.bf16.mxu0 0
      %1552 = vmatpush1.bf16.msra.mxu0 %v1524
      %1553 = vmatprep.subr.bf16.mxu0 0
      %1554 = vmatpush1.bf16.msra.mxu0 %v1523
      %1555 = vmatprep.subr.bf16.mxu0 0
      %1556 = vmatpush2.bf16.msra.mxu0 0
      %1557 = vmatprep.subr.bf16.mxu0 0
      %1558 = vmatpush2.bf16.msra.mxu0 0
      %1559 = vmatprep.subr.bf16.mxu0 0
      %1560 = vmatpush2.bf16.msra.mxu0 0
      %1561 = vmatprep.subr.bf16.mxu0 0
      %1562 = vmatpush2.bf16.msra.mxu0 0
      %1563 = vmatprep.subr.bf16.mxu0 0
      %1564 = vmatpush2.bf16.msra.mxu0 0
      %1565 = vmatprep.subr.bf16.mxu0 0
      %1566 = vmatpush2.bf16.msra.mxu0 0
      %1567 = vmatprep.subr.bf16.mxu0 0
      %1568 = vmatpush2.bf16.msra.mxu0 0
      %1569 = vmatprep.subr.bf16.mxu0 0
      %1570 = vmatpush2.bf16.msra.mxu0 0
      %1571 = vmatprep.mubr.bf16.mxu0 0
      %1572 = vmatmul.mubr.bf16.gmra.mxu0 %v1459
      %v1573 = vpop.f32.mrf.mxu0
      %v1574 = vadd.f32 0.0, %v1573
      %v1575 = vpop.f32.mrf.mxu0
      %v1576 = vpop.f32.mrf.mxu0
      %v1577 = vadd.f32 0.0, %v1576
      %v1578 = vpop.f32.mrf.mxu0
      %1579 = vmatprep.mubr.bf16.mxu0 0
      %1580 = vmatmul.mubr.bf16.gmra.mxu0 %v1460
      %v1581 = vpop.f32.mrf.mxu0
      %v1582 = vadd.f32 0.0, %v1581
      %v1583 = vpop.f32.mrf.mxu0
      %v1584 = vpop.f32.mrf.mxu0
      %v1585 = vadd.f32 0.0, %v1584
      %v1586 = vpop.f32.mrf.mxu0
      %1587 = vmatprep.mubr.bf16.mxu0 0
      %1588 = vmatmul.mubr.bf16.gmra.mxu0 %v1461
      %v1589 = vpop.f32.mrf.mxu0
      %v1590 = vadd.f32 0.0, %v1589
      %v1591 = vpop.f32.mrf.mxu0
      %v1592 = vpop.f32.mrf.mxu0
      %v1593 = vadd.f32 0.0, %v1592
      %v1594 = vpop.f32.mrf.mxu0
      %1595 = vmatprep.mubr.bf16.mxu0 0
      %1596 = vmatmul.mubr.bf16.gmra.mxu0 %v1462
      %v1597 = vpop.f32.mrf.mxu0
      %v1598 = vadd.f32 0.0, %v1597
      %v1599 = vpop.f32.mrf.mxu0
      %v1600 = vpop.f32.mrf.mxu0
      %v1601 = vadd.f32 0.0, %v1600
      %v1602 = vpop.f32.mrf.mxu0
      %1603 = vmatprep.mubr.bf16.mxu0 0
      %1604 = vmatmul.mubr.bf16.gmra.mxu0 %v1463
      %v1605 = vpop.f32.mrf.mxu0
      %v1606 = vadd.f32 0.0, %v1605
      %v1607 = vpop.f32.mrf.mxu0
      %v1608 = vpop.f32.mrf.mxu0
      %v1609 = vadd.f32 0.0, %v1608
      %v1610 = vpop.f32.mrf.mxu0
      %1611 = vmatprep.mubr.bf16.mxu0 0
      %1612 = vmatmul.mubr.bf16.gmra.mxu0 %v1464
      %v1613 = vpop.f32.mrf.mxu0
      %v1614 = vadd.f32 0.0, %v1613
      %v1615 = vpop.f32.mrf.mxu0
      %v1616 = vpop.f32.mrf.mxu0
      %v1617 = vadd.f32 0.0, %v1616
      %v1618 = vpop.f32.mrf.mxu0
      %1619 = vmatprep.mubr.bf16.mxu0 0
      %1620 = vmatmul.mubr.bf16.gmra.mxu0 %v1465
      %v1621 = vpop.f32.mrf.mxu0
      %v1622 = vadd.f32 0.0, %v1621
      %v1623 = vpop.f32.mrf.mxu0
      %v1624 = vpop.f32.mrf.mxu0
      %v1625 = vadd.f32 0.0, %v1624
      %v1626 = vpop.f32.mrf.mxu0
      %1627 = vmatprep.mubr.bf16.mxu0 0
      %1628 = vmatmul.mubr.bf16.gmra.mxu0 %v1466
      %v1629 = vpop.f32.mrf.mxu0
      %v1630 = vadd.f32 0.0, %v1629
      %v1631 = vpop.f32.mrf.mxu0
      %v1632 = vpop.f32.mrf.mxu0
      %v1633 = vadd.f32 0.0, %v1632
      %v1634 = vpop.f32.mrf.mxu0
      %1635 = vmatprep.mubr.bf16.mxu0 0
      %1636 = vmatmul.mubr.bf16.gmra.mxu0 %v1467
      %v1637 = vpop.f32.mrf.mxu0
      %v1638 = vadd.f32 0.0, %v1637
      %v1639 = vpop.f32.mrf.mxu0
      %v1640 = vpop.f32.mrf.mxu0
      %v1641 = vadd.f32 0.0, %v1640
      %v1642 = vpop.f32.mrf.mxu0
      %1643 = vmatprep.mubr.bf16.mxu0 0
      %1644 = vmatmul.mubr.bf16.gmra.mxu0 %v1468
      %v1645 = vpop.f32.mrf.mxu0
      %v1646 = vadd.f32 0.0, %v1645
      %v1647 = vpop.f32.mrf.mxu0
      %v1648 = vpop.f32.mrf.mxu0
      %v1649 = vadd.f32 0.0, %v1648
      %v1650 = vpop.f32.mrf.mxu0
      %1651 = vmatprep.mubr.bf16.mxu0 0
      %1652 = vmatmul.mubr.bf16.gmra.mxu0 %v1469
      %v1653 = vpop.f32.mrf.mxu0
      %v1654 = vadd.f32 0.0, %v1653
      %v1655 = vpop.f32.mrf.mxu0
      %v1656 = vpop.f32.mrf.mxu0
      %v1657 = vadd.f32 0.0, %v1656
      %v1658 = vpop.f32.mrf.mxu0
      %1659 = vmatprep.mubr.bf16.mxu0 0
      %1660 = vmatmul.mubr.bf16.gmra.mxu0 %v1470
      %v1661 = vpop.f32.mrf.mxu0
      %v1662 = vadd.f32 0.0, %v1661
      %v1663 = vpop.f32.mrf.mxu0
      %v1664 = vpop.f32.mrf.mxu0
      %v1665 = vadd.f32 0.0, %v1664
      %v1666 = vpop.f32.mrf.mxu0
      %1667 = vmatprep.mubr.bf16.mxu0 0
      %1668 = vmatmul.mubr.bf16.gmra.mxu0 %v1471
      %v1669 = vpop.f32.mrf.mxu0
      %v1670 = vadd.f32 0.0, %v1669
      %v1671 = vpop.f32.mrf.mxu0
      %v1672 = vpop.f32.mrf.mxu0
      %v1673 = vadd.f32 0.0, %v1672
      %v1674 = vpop.f32.mrf.mxu0
      %1675 = vmatprep.mubr.bf16.mxu0 0
      %1676 = vmatmul.mubr.bf16.gmra.mxu0 %v1472
      %v1677 = vpop.f32.mrf.mxu0
      %v1678 = vadd.f32 0.0, %v1677
      %v1679 = vpop.f32.mrf.mxu0
      %v1680 = vpop.f32.mrf.mxu0
      %v1681 = vadd.f32 0.0, %v1680
      %v1682 = vpop.f32.mrf.mxu0
      %1683 = vmatprep.mubr.bf16.mxu0 0
      %1684 = vmatmul.mubr.bf16.gmra.mxu0 %v1473
      %v1685 = vpop.f32.mrf.mxu0
      %v1686 = vadd.f32 0.0, %v1685
      %v1687 = vpop.f32.mrf.mxu0
      %v1688 = vpop.f32.mrf.mxu0
      %v1689 = vadd.f32 0.0, %v1688
      %v1690 = vpop.f32.mrf.mxu0
      %1691 = vmatprep.mubr.bf16.mxu0 0
      %1692 = vmatmul.mubr.bf16.gmra.mxu0 %v1474
      %v1693 = vpop.f32.mrf.mxu0
      %v1694 = vadd.f32 0.0, %v1693
      %v1695 = vpop.f32.mrf.mxu0
      %v1696 = vpop.f32.mrf.mxu0
      %v1697 = vadd.f32 0.0, %v1696
      %v1698 = vpop.f32.mrf.mxu0
      %1699 = vdwg.mxu0
      %v1700 = vadd.f32 %v1121, %v1574
      %v1701 = vadd.f32 %v1124, %v1577
      %v1702 = vadd.f32 %v1129, %v1582
      %v1703 = vadd.f32 %v1132, %v1585
      %v1704 = vadd.f32 %v1137, %v1590
      %v1705 = vadd.f32 %v1140, %v1593
      %v1706 = vadd.f32 %v1145, %v1598
      %v1707 = vadd.f32 %v1148, %v1601
      %v1708 = vadd.f32 %v1153, %v1606
      %v1709 = vadd.f32 %v1156, %v1609
      %v1710 = vadd.f32 %v1161, %v1614
      %v1711 = vadd.f32 %v1164, %v1617
      %v1712 = vadd.f32 %v1169, %v1622
      %v1713 = vadd.f32 %v1172, %v1625
      %v1714 = vadd.f32 %v1177, %v1630
      %v1715 = vadd.f32 %v1180, %v1633
      %v1716 = vadd.f32 %v1185, %v1638
      %v1717 = vadd.f32 %v1188, %v1641
      %v1718 = vadd.f32 %v1193, %v1646
      %v1719 = vadd.f32 %v1196, %v1649
      %v1720 = vadd.f32 %v1201, %v1654
      %v1721 = vadd.f32 %v1204, %v1657
      %v1722 = vadd.f32 %v1209, %v1662
      %v1723 = vadd.f32 %v1212, %v1665
      %v1724 = vadd.f32 %v1217, %v1670
      %v1725 = vadd.f32 %v1220, %v1673
      %v1726 = vadd.f32 %v1225, %v1678
      %v1727 = vadd.f32 %v1228, %v1681
      %v1728 = vadd.f32 %v1233, %v1686
      %v1729 = vadd.f32 %v1236, %v1689
      %v1730 = vadd.f32 %v1241, %v1694
      %v1731 = vadd.f32 %v1244, %v1697
      %s1732 = sadd.s32 %s197, 1
      %s1733 = smul.u32 %s1732, 3
      %s1734 = smul.addr %s1733, 4
      %s1735 = scalar_lea.vmem %s184, %s1734
      %v1736 = vld [vmem:[%s1735] sm:$0xf]
      %v1737 = vld [vmem:[%s1735 + $0x4] sm:$0xf]
      %v1738 = vld [vmem:[%s1735 + $0xc] sm:$0xf]
      %v1739 = vld [vmem:[%s1735 + $0x10] sm:$0xf]
      %v1740 = vld [vmem:[%s1735 + $0x18] sm:$0xf]
      %v1741 = vld [vmem:[%s1735 + $0x1c] sm:$0xf]
      %v1742 = vld [vmem:[%s1735 + $0x24] sm:$0xf]
      %v1743 = vld [vmem:[%s1735 + $0x28] sm:$0xf]
      %v1744 = vld [vmem:[%s1735 + $0x30] sm:$0xf]
      %v1745 = vld [vmem:[%s1735 + $0x34] sm:$0xf]
      %v1746 = vld [vmem:[%s1735 + $0x3c] sm:$0xf]
      %v1747 = vld [vmem:[%s1735 + $0x40] sm:$0xf]
      %v1748 = vld [vmem:[%s1735 + $0x48] sm:$0xf]
      %v1749 = vld [vmem:[%s1735 + $0x4c] sm:$0xf]
      %v1750 = vld [vmem:[%s1735 + $0x54] sm:$0xf]
      %v1751 = vld [vmem:[%s1735 + $0x58] sm:$0xf]
      %v1752 = vld [vmem:[%s1735 + $0x60] sm:$0xf]
      %v1753 = vld [vmem:[%s1735 + $0x64] sm:$0xf]
      %v1754 = vld [vmem:[%s1735 + $0x6c] sm:$0xf]
      %v1755 = vld [vmem:[%s1735 + $0x70] sm:$0xf]
      %v1756 = vld [vmem:[%s1735 + $0x78] sm:$0xf]
      %v1757 = vld [vmem:[%s1735 + $0x7c] sm:$0xf]
      %v1758 = vld [vmem:[%s1735 + $0x84] sm:$0xf]
      %v1759 = vld [vmem:[%s1735 + $0x88] sm:$0xf]
      %v1760 = vld [vmem:[%s1735 + $0x90] sm:$0xf]
      %v1761 = vld [vmem:[%s1735 + $0x94] sm:$0xf]
      %v1762 = vld [vmem:[%s1735 + $0x9c] sm:$0xf]
      %v1763 = vld [vmem:[%s1735 + $0xa0] sm:$0xf]
      %v1764 = vld [vmem:[%s1735 + $0xa8] sm:$0xf]
      %v1765 = vld [vmem:[%s1735 + $0xac] sm:$0xf]
      %v1766 = vld [vmem:[%s1735 + $0xb4] sm:$0xf]
      %v1767 = vld [vmem:[%s1735 + $0xb8] sm:$0xf]
      %s1768 = scalar_lea.vmem %s1, 192
      %v1769 = vld [vmem:[%s1768] sm:$0xf]
      %v1770 = vld [vmem:[%s1768 + $0x4] sm:$0xf]
      %v1771 = vld [vmem:[%s1768 + $0x8] sm:$0xf]
      %v1772 = vld [vmem:[%s1768 + $0xc] sm:$0xf]
      %v1773 = vld [vmem:[%s1768 + $0x10] sm:$0xf]
      %v1774 = vld [vmem:[%s1768 + $0x14] sm:$0xf]
      %v1775 = vld [vmem:[%s1768 + $0x18] sm:$0xf]
      %v1776 = vld [vmem:[%s1768 + $0x1c] sm:$0xf]
      %v1777 = vld [vmem:[%s1768 + $0x20] sm:$0xf]
      %v1778 = vld [vmem:[%s1768 + $0x24] sm:$0xf]
      %v1779 = vld [vmem:[%s1768 + $0x28] sm:$0xf]
      %v1780 = vld [vmem:[%s1768 + $0x2c] sm:$0xf]
      %v1781 = vld [vmem:[%s1768 + $0x30] sm:$0xf]
      %v1782 = vld [vmem:[%s1768 + $0x34] sm:$0xf]
      %v1783 = vld [vmem:[%s1768 + $0x38] sm:$0xf]
      %v1784 = vld [vmem:[%s1768 + $0x3c] sm:$0xf]
      %v1817 = vunpack.c.l.b16 %v1736
      %v1818 = vunpack.c.l.b16 %v1737
      %v1819 = vunpack.c.l.b16 %v1738
      %v1820 = vunpack.c.l.b16 %v1739
      %v1821 = vunpack.c.l.b16 %v1740
      %v1822 = vunpack.c.l.b16 %v1741
      %v1823 = vunpack.c.l.b16 %v1742
      %v1824 = vunpack.c.l.b16 %v1743
      %v1825 = vunpack.c.l.b16 %v1744
      %v1826 = vunpack.c.l.b16 %v1745
      %v1827 = vunpack.c.l.b16 %v1746
      %v1828 = vunpack.c.l.b16 %v1747
      %v1829 = vunpack.c.l.b16 %v1748
      %v1830 = vunpack.c.l.b16 %v1749
      %v1831 = vunpack.c.l.b16 %v1750
      %v1832 = vunpack.c.l.b16 %v1751
      %v1833 = vunpack.c.l.b16 %v1752
      %v1834 = vunpack.c.l.b16 %v1753
      %v1835 = vunpack.c.l.b16 %v1754
      %v1836 = vunpack.c.l.b16 %v1755
      %v1837 = vunpack.c.l.b16 %v1756
      %v1838 = vunpack.c.l.b16 %v1757
      %v1839 = vunpack.c.l.b16 %v1758
      %v1840 = vunpack.c.l.b16 %v1759
      %v1841 = vunpack.c.l.b16 %v1760
      %v1842 = vunpack.c.l.b16 %v1761
      %v1843 = vunpack.c.l.b16 %v1762
      %v1844 = vunpack.c.l.b16 %v1763
      %v1845 = vunpack.c.l.b16 %v1764
      %v1846 = vunpack.c.l.b16 %v1765
      %v1847 = vunpack.c.l.b16 %v1766
      %v1848 = vunpack.c.l.b16 %v1767
      %v1849 = vpack.c.b16 %v1818, %v1817
      %v1850 = vpack.c.b16 %v1820, %v1819
      %v1851 = vpack.c.b16 %v1822, %v1821
      %v1852 = vpack.c.b16 %v1824, %v1823
      %v1853 = vpack.c.b16 %v1826, %v1825
      %v1854 = vpack.c.b16 %v1828, %v1827
      %v1855 = vpack.c.b16 %v1830, %v1829
      %v1856 = vpack.c.b16 %v1832, %v1831
      %v1857 = vpack.c.b16 %v1834, %v1833
      %v1858 = vpack.c.b16 %v1836, %v1835
      %v1859 = vpack.c.b16 %v1838, %v1837
      %v1860 = vpack.c.b16 %v1840, %v1839
      %v1861 = vpack.c.b16 %v1842, %v1841
      %v1862 = vpack.c.b16 %v1844, %v1843
      %v1863 = vpack.c.b16 %v1846, %v1845
      %v1864 = vpack.c.b16 %v1848, %v1847
      %v1897 = vunpack.c.l.b16 %v1769
      %v1898 = vunpack.c.l.b16 %v1770
      %v1899 = vunpack.c.l.b16 %v1771
      %v1900 = vunpack.c.l.b16 %v1772
      %v1901 = vunpack.c.l.b16 %v1773
      %v1902 = vunpack.c.l.b16 %v1774
      %v1903 = vunpack.c.l.b16 %v1775
      %v1904 = vunpack.c.l.b16 %v1776
      %v1905 = vunpack.c.l.b16 %v1777
      %v1906 = vunpack.c.l.b16 %v1778
      %v1907 = vunpack.c.l.b16 %v1779
      %v1908 = vunpack.c.l.b16 %v1780
      %v1909 = vunpack.c.l.b16 %v1781
      %v1910 = vunpack.c.l.b16 %v1782
      %v1911 = vunpack.c.l.b16 %v1783
      %v1912 = vunpack.c.l.b16 %v1784
      %v1913 = vpack.c.b16 %v1898, %v1897
      %v1914 = vpack.c.b16 %v1900, %v1899
      %v1915 = vpack.c.b16 %v1902, %v1901
      %v1916 = vpack.c.b16 %v1904, %v1903
      %v1917 = vpack.c.b16 %v1906, %v1905
      %v1918 = vpack.c.b16 %v1908, %v1907
      %v1919 = vpack.c.b16 %v1910, %v1909
      %v1920 = vpack.c.b16 %v1912, %v1911
      %1929 = vmatprep.subr.bf16.mxu0 0
      %1930 = vmatpush1.bf16.msra.mxu0 %v1920
      %1931 = vmatprep.subr.bf16.mxu0 0
      %1932 = vmatpush1.bf16.msra.mxu0 %v1919
      %1933 = vmatprep.subr.bf16.mxu0 0
      %1934 = vmatpush1.bf16.msra.mxu0 %v1918
      %1935 = vmatprep.subr.bf16.mxu0 0
      %1936 = vmatpush1.bf16.msra.mxu0 %v1917
      %1937 = vmatprep.subr.bf16.mxu0 0
      %1938 = vmatpush1.bf16.msra.mxu0 %v1916
      %1939 = vmatprep.subr.bf16.mxu0 0
      %1940 = vmatpush1.bf16.msra.mxu0 %v1915
      %1941 = vmatprep.subr.bf16.mxu0 0
      %1942 = vmatpush1.bf16.msra.mxu0 %v1914
      %1943 = vmatprep.subr.bf16.mxu0 0
      %1944 = vmatpush1.bf16.msra.mxu0 %v1913
      %1945 = vmatprep.subr.bf16.mxu0 0
      %1946 = vmatpush2.bf16.msra.mxu0 0
      %1947 = vmatprep.subr.bf16.mxu0 0
      %1948 = vmatpush2.bf16.msra.mxu0 0
      %1949 = vmatprep.subr.bf16.mxu0 0
      %1950 = vmatpush2.bf16.msra.mxu0 0
      %1951 = vmatprep.subr.bf16.mxu0 0
      %1952 = vmatpush2.bf16.msra.mxu0 0
      %1953 = vmatprep.subr.bf16.mxu0 0
      %1954 = vmatpush2.bf16.msra.mxu0 0
      %1955 = vmatprep.subr.bf16.mxu0 0
      %1956 = vmatpush2.bf16.msra.mxu0 0
      %1957 = vmatprep.subr.bf16.mxu0 0
      %1958 = vmatpush2.bf16.msra.mxu0 0
      %1959 = vmatprep.subr.bf16.mxu0 0
      %1960 = vmatpush2.bf16.msra.mxu0 0
      %1961 = vmatprep.mubr.bf16.mxu0 0
      %1962 = vmatmul.mubr.bf16.gmra.mxu0 %v1849
      %v1963 = vpop.f32.mrf.mxu0
      %v1964 = vadd.f32 0.0, %v1963
      %v1965 = vpop.f32.mrf.mxu0
      %v1966 = vpop.f32.mrf.mxu0
      %v1967 = vadd.f32 0.0, %v1966
      %v1968 = vpop.f32.mrf.mxu0
      %1969 = vmatprep.mubr.bf16.mxu0 0
      %1970 = vmatmul.mubr.bf16.gmra.mxu0 %v1850
      %v1971 = vpop.f32.mrf.mxu0
      %v1972 = vadd.f32 0.0, %v1971
      %v1973 = vpop.f32.mrf.mxu0
      %v1974 = vpop.f32.mrf.mxu0
      %v1975 = vadd.f32 0.0, %v1974
      %v1976 = vpop.f32.mrf.mxu0
      %1977 = vmatprep.mubr.bf16.mxu0 0
      %1978 = vmatmul.mubr.bf16.gmra.mxu0 %v1851
      %v1979 = vpop.f32.mrf.mxu0
      %v1980 = vadd.f32 0.0, %v1979
      %v1981 = vpop.f32.mrf.mxu0
      %v1982 = vpop.f32.mrf.mxu0
      %v1983 = vadd.f32 0.0, %v1982
      %v1984 = vpop.f32.mrf.mxu0
      %1985 = vmatprep.mubr.bf16.mxu0 0
      %1986 = vmatmul.mubr.bf16.gmra.mxu0 %v1852
      %v1987 = vpop.f32.mrf.mxu0
      %v1988 = vadd.f32 0.0, %v1987
      %v1989 = vpop.f32.mrf.mxu0
      %v1990 = vpop.f32.mrf.mxu0
      %v1991 = vadd.f32 0.0, %v1990
      %v1992 = vpop.f32.mrf.mxu0
      %1993 = vmatprep.mubr.bf16.mxu0 0
      %1994 = vmatmul.mubr.bf16.gmra.mxu0 %v1853
      %v1995 = vpop.f32.mrf.mxu0
      %v1996 = vadd.f32 0.0, %v1995
      %v1997 = vpop.f32.mrf.mxu0
      %v1998 = vpop.f32.mrf.mxu0
      %v1999 = vadd.f32 0.0, %v1998
      %v2000 = vpop.f32.mrf.mxu0
      %2001 = vmatprep.mubr.bf16.mxu0 0
      %2002 = vmatmul.mubr.bf16.gmra.mxu0 %v1854
      %v2003 = vpop.f32.mrf.mxu0
      %v2004 = vadd.f32 0.0, %v2003
      %v2005 = vpop.f32.mrf.mxu0
      %v2006 = vpop.f32.mrf.mxu0
      %v2007 = vadd.f32 0.0, %v2006
      %v2008 = vpop.f32.mrf.mxu0
      %2009 = vmatprep.mubr.bf16.mxu0 0
      %2010 = vmatmul.mubr.bf16.gmra.mxu0 %v1855
      %v2011 = vpop.f32.mrf.mxu0
      %v2012 = vadd.f32 0.0, %v2011
      %v2013 = vpop.f32.mrf.mxu0
      %v2014 = vpop.f32.mrf.mxu0
      %v2015 = vadd.f32 0.0, %v2014
      %v2016 = vpop.f32.mrf.mxu0
      %2017 = vmatprep.mubr.bf16.mxu0 0
      %2018 = vmatmul.mubr.bf16.gmra.mxu0 %v1856
      %v2019 = vpop.f32.mrf.mxu0
      %v2020 = vadd.f32 0.0, %v2019
      %v2021 = vpop.f32.mrf.mxu0
      %v2022 = vpop.f32.mrf.mxu0
      %v2023 = vadd.f32 0.0, %v2022
      %v2024 = vpop.f32.mrf.mxu0
      %2025 = vmatprep.mubr.bf16.mxu0 0
      %2026 = vmatmul.mubr.bf16.gmra.mxu0 %v1857
      %v2027 = vpop.f32.mrf.mxu0
      %v2028 = vadd.f32 0.0, %v2027
      %v2029 = vpop.f32.mrf.mxu0
      %v2030 = vpop.f32.mrf.mxu0
      %v2031 = vadd.f32 0.0, %v2030
      %v2032 = vpop.f32.mrf.mxu0
      %2033 = vmatprep.mubr.bf16.mxu0 0
      %2034 = vmatmul.mubr.bf16.gmra.mxu0 %v1858
      %v2035 = vpop.f32.mrf.mxu0
      %v2036 = vadd.f32 0.0, %v2035
      %v2037 = vpop.f32.mrf.mxu0
      %v2038 = vpop.f32.mrf.mxu0
      %v2039 = vadd.f32 0.0, %v2038
      %v2040 = vpop.f32.mrf.mxu0
      %2041 = vmatprep.mubr.bf16.mxu0 0
      %2042 = vmatmul.mubr.bf16.gmra.mxu0 %v1859
      %v2043 = vpop.f32.mrf.mxu0
      %v2044 = vadd.f32 0.0, %v2043
      %v2045 = vpop.f32.mrf.mxu0
      %v2046 = vpop.f32.mrf.mxu0
      %v2047 = vadd.f32 0.0, %v2046
      %v2048 = vpop.f32.mrf.mxu0
      %2049 = vmatprep.mubr.bf16.mxu0 0
      %2050 = vmatmul.mubr.bf16.gmra.mxu0 %v1860
      %v2051 = vpop.f32.mrf.mxu0
      %v2052 = vadd.f32 0.0, %v2051
      %v2053 = vpop.f32.mrf.mxu0
      %v2054 = vpop.f32.mrf.mxu0
      %v2055 = vadd.f32 0.0, %v2054
      %v2056 = vpop.f32.mrf.mxu0
      %2057 = vmatprep.mubr.bf16.mxu0 0
      %2058 = vmatmul.mubr.bf16.gmra.mxu0 %v1861
      %v2059 = vpop.f32.mrf.mxu0
      %v2060 = vadd.f32 0.0, %v2059
      %v2061 = vpop.f32.mrf.mxu0
      %v2062 = vpop.f32.mrf.mxu0
      %v2063 = vadd.f32 0.0, %v2062
      %v2064 = vpop.f32.mrf.mxu0
      %2065 = vmatprep.mubr.bf16.mxu0 0
      %2066 = vmatmul.mubr.bf16.gmra.mxu0 %v1862
      %v2067 = vpop.f32.mrf.mxu0
      %v2068 = vadd.f32 0.0, %v2067
      %v2069 = vpop.f32.mrf.mxu0
      %v2070 = vpop.f32.mrf.mxu0
      %v2071 = vadd.f32 0.0, %v2070
      %v2072 = vpop.f32.mrf.mxu0
      %2073 = vmatprep.mubr.bf16.mxu0 0
      %2074 = vmatmul.mubr.bf16.gmra.mxu0 %v1863
      %v2075 = vpop.f32.mrf.mxu0
      %v2076 = vadd.f32 0.0, %v2075
      %v2077 = vpop.f32.mrf.mxu0
      %v2078 = vpop.f32.mrf.mxu0
      %v2079 = vadd.f32 0.0, %v2078
      %v2080 = vpop.f32.mrf.mxu0
      %2081 = vmatprep.mubr.bf16.mxu0 0
      %2082 = vmatmul.mubr.bf16.gmra.mxu0 %v1864
      %v2083 = vpop.f32.mrf.mxu0
      %v2084 = vadd.f32 0.0, %v2083
      %v2085 = vpop.f32.mrf.mxu0
      %v2086 = vpop.f32.mrf.mxu0
      %v2087 = vadd.f32 0.0, %v2086
      %v2088 = vpop.f32.mrf.mxu0
      %2089 = vdwg.mxu0
      %v2090 = vadd.f32 %v1700, %v1964
      %v2091 = vadd.f32 %v1701, %v1967
      %v2092 = vadd.f32 %v1702, %v1972
      %v2093 = vadd.f32 %v1703, %v1975
      %v2094 = vadd.f32 %v1704, %v1980
      %v2095 = vadd.f32 %v1705, %v1983
      %v2096 = vadd.f32 %v1706, %v1988
      %v2097 = vadd.f32 %v1707, %v1991
      %v2098 = vadd.f32 %v1708, %v1996
      %v2099 = vadd.f32 %v1709, %v1999
      %v2100 = vadd.f32 %v1710, %v2004
      %v2101 = vadd.f32 %v1711, %v2007
      %v2102 = vadd.f32 %v1712, %v2012
      %v2103 = vadd.f32 %v1713, %v2015
      %v2104 = vadd.f32 %v1714, %v2020
      %v2105 = vadd.f32 %v1715, %v2023
      %v2106 = vadd.f32 %v1716, %v2028
      %v2107 = vadd.f32 %v1717, %v2031
      %v2108 = vadd.f32 %v1718, %v2036
      %v2109 = vadd.f32 %v1719, %v2039
      %v2110 = vadd.f32 %v1720, %v2044
      %v2111 = vadd.f32 %v1721, %v2047
      %v2112 = vadd.f32 %v1722, %v2052
      %v2113 = vadd.f32 %v1723, %v2055
      %v2114 = vadd.f32 %v1724, %v2060
      %v2115 = vadd.f32 %v1725, %v2063
      %v2116 = vadd.f32 %v1726, %v2068
      %v2117 = vadd.f32 %v1727, %v2071
      %v2118 = vadd.f32 %v1728, %v2076
      %v2119 = vadd.f32 %v1729, %v2079
      %v2120 = vadd.f32 %v1730, %v2084
      %v2121 = vadd.f32 %v1731, %v2087
      %v2122 = vld [vmem:[%s1735] sm:$0xf]
      %v2123 = vld [vmem:[%s1735 + $0x4] sm:$0xf]
      %v2124 = vld [vmem:[%s1735 + $0x8] sm:$0x1]
      %v2125 = vld [vmem:[%s1735 + $0xc] sm:$0xf]
      %v2126 = vld [vmem:[%s1735 + $0x10] sm:$0xf]
      %v2127 = vld [vmem:[%s1735 + $0x14] sm:$0x1]
      %v2128 = vld [vmem:[%s1735 + $0x18] sm:$0xf]
      %v2129 = vld [vmem:[%s1735 + $0x1c] sm:$0xf]
      %v2130 = vld [vmem:[%s1735 + $0x20] sm:$0x1]
      %v2131 = vld [vmem:[%s1735 + $0x24] sm:$0xf]
      %v2132 = vld [vmem:[%s1735 + $0x28] sm:$0xf]
      %v2133 = vld [vmem:[%s1735 + $0x2c] sm:$0x1]
      %v2134 = vld [vmem:[%s1735 + $0x30] sm:$0xf]
      %v2135 = vld [vmem:[%s1735 + $0x34] sm:$0xf]
      %v2136 = vld [vmem:[%s1735 + $0x38] sm:$0x1]
      %v2137 = vld [vmem:[%s1735 + $0x3c] sm:$0xf]
      %v2138 = vld [vmem:[%s1735 + $0x40] sm:$0xf]
      %v2139 = vld [vmem:[%s1735 + $0x44] sm:$0x1]
      %v2140 = vld [vmem:[%s1735 + $0x48] sm:$0xf]
      %v2141 = vld [vmem:[%s1735 + $0x4c] sm:$0xf]
      %v2142 = vld [vmem:[%s1735 + $0x50] sm:$0x1]
      %v2143 = vld [vmem:[%s1735 + $0x54] sm:$0xf]
      %v2144 = vld [vmem:[%s1735 + $0x58] sm:$0xf]
      %v2145 = vld [vmem:[%s1735 + $0x5c] sm:$0x1]
      %v2146 = vld [vmem:[%s1735 + $0x60] sm:$0xf]
      %v2147 = vld [vmem:[%s1735 + $0x64] sm:$0xf]
      %v2148 = vld [vmem:[%s1735 + $0x68] sm:$0x1]
      %v2149 = vld [vmem:[%s1735 + $0x6c] sm:$0xf]
      %v2150 = vld [vmem:[%s1735 + $0x70] sm:$0xf]
      %v2151 = vld [vmem:[%s1735 + $0x74] sm:$0x1]
      %v2152 = vld [vmem:[%s1735 + $0x78] sm:$0xf]
      %v2153 = vld [vmem:[%s1735 + $0x7c] sm:$0xf]
      %v2154 = vld [vmem:[%s1735 + $0x80] sm:$0x1]
      %v2155 = vld [vmem:[%s1735 + $0x84] sm:$0xf]
      %v2156 = vld [vmem:[%s1735 + $0x88] sm:$0xf]
      %v2157 = vld [vmem:[%s1735 + $0x8c] sm:$0x1]
      %v2158 = vld [vmem:[%s1735 + $0x90] sm:$0xf]
      %v2159 = vld [vmem:[%s1735 + $0x94] sm:$0xf]
      %v2160 = vld [vmem:[%s1735 + $0x98] sm:$0x1]
      %v2161 = vld [vmem:[%s1735 + $0x9c] sm:$0xf]
      %v2162 = vld [vmem:[%s1735 + $0xa0] sm:$0xf]
      %v2163 = vld [vmem:[%s1735 + $0xa4] sm:$0x1]
      %v2164 = vld [vmem:[%s1735 + $0xa8] sm:$0xf]
      %v2165 = vld [vmem:[%s1735 + $0xac] sm:$0xf]
      %v2166 = vld [vmem:[%s1735 + $0xb0] sm:$0x1]
      %v2167 = vld [vmem:[%s1735 + $0xb4] sm:$0xf]
      %v2168 = vld [vmem:[%s1735 + $0xb8] sm:$0xf]
      %v2169 = vld [vmem:[%s1735 + $0xbc] sm:$0x1]
      %v2171 = vshrl.u32 %v2122, 16
      %v2173 = vrot.slane %v2171, 4
      %v2174 = vshll.u32 %v2122, 16
      %v2176 = vrot.slane %v2174, 5
      %v2177 = vor.u32 %v2173, %v2176
      %v2178 = vrot.slane %v2177, 4
      %v2180 = vshll.u32 %v2123, 16
      %v2182 = vrot.slane %v2180, 5
      %v2183 = vsel %vm267, %v2178, %v2182
      %v2184 = vshrl.u32 %v2123, 16
      %v2186 = vrot.slane %v2184, 4
      %v2187 = vor.u32 %v2186, %v2182
      %v2188 = vrot.slane %v2187, 4
      %v2190 = vshll.u32 %v2124, 16
      %v2192 = vrot.slane %v2190, 5
      %v2193 = vsel %vm267, %v2188, %v2192
      %v2195 = vshrl.u32 %v2125, 16
      %v2197 = vrot.slane %v2195, 4
      %v2198 = vshll.u32 %v2125, 16
      %v2200 = vrot.slane %v2198, 5
      %v2201 = vor.u32 %v2197, %v2200
      %v2202 = vrot.slane %v2201, 4
      %v2204 = vshll.u32 %v2126, 16
      %v2206 = vrot.slane %v2204, 5
      %v2207 = vsel %vm267, %v2202, %v2206
      %v2208 = vshrl.u32 %v2126, 16
      %v2210 = vrot.slane %v2208, 4
      %v2211 = vor.u32 %v2210, %v2206
      %v2212 = vrot.slane %v2211, 4
      %v2214 = vshll.u32 %v2127, 16
      %v2216 = vrot.slane %v2214, 5
      %v2217 = vsel %vm267, %v2212, %v2216
      %v2219 = vshrl.u32 %v2128, 16
      %v2221 = vrot.slane %v2219, 4
      %v2222 = vshll.u32 %v2128, 16
      %v2224 = vrot.slane %v2222, 5
      %v2225 = vor.u32 %v2221, %v2224
      %v2226 = vrot.slane %v2225, 4
      %v2228 = vshll.u32 %v2129, 16
      %v2230 = vrot.slane %v2228, 5
      %v2231 = vsel %vm267, %v2226, %v2230
      %v2232 = vshrl.u32 %v2129, 16
      %v2234 = vrot.slane %v2232, 4
      %v2235 = vor.u32 %v2234, %v2230
      %v2236 = vrot.slane %v2235, 4
      %v2238 = vshll.u32 %v2130, 16
      %v2240 = vrot.slane %v2238, 5
      %v2241 = vsel %vm267, %v2236, %v2240
      %v2243 = vshrl.u32 %v2131, 16
      %v2245 = vrot.slane %v2243, 4
      %v2246 = vshll.u32 %v2131, 16
      %v2248 = vrot.slane %v2246, 5
      %v2249 = vor.u32 %v2245, %v2248
      %v2250 = vrot.slane %v2249, 4
      %v2252 = vshll.u32 %v2132, 16
      %v2254 = vrot.slane %v2252, 5
      %v2255 = vsel %vm267, %v2250, %v2254
      %v2256 = vshrl.u32 %v2132, 16
      %v2258 = vrot.slane %v2256, 4
      %v2259 = vor.u32 %v2258, %v2254
      %v2260 = vrot.slane %v2259, 4
      %v2262 = vshll.u32 %v2133, 16
      %v2264 = vrot.slane %v2262, 5
      %v2265 = vsel %vm267, %v2260, %v2264
      %v2267 = vshrl.u32 %v2134, 16
      %v2269 = vrot.slane %v2267, 4
      %v2270 = vshll.u32 %v2134, 16
      %v2272 = vrot.slane %v2270, 5
      %v2273 = vor.u32 %v2269, %v2272
      %v2274 = vrot.slane %v2273, 4
      %v2276 = vshll.u32 %v2135, 16
      %v2278 = vrot.slane %v2276, 5
      %v2279 = vsel %vm267, %v2274, %v2278
      %v2280 = vshrl.u32 %v2135, 16
      %v2282 = vrot.slane %v2280, 4
      %v2283 = vor.u32 %v2282, %v2278
      %v2284 = vrot.slane %v2283, 4
      %v2286 = vshll.u32 %v2136, 16
      %v2288 = vrot.slane %v2286, 5
      %v2289 = vsel %vm267, %v2284, %v2288
      %v2291 = vshrl.u32 %v2137, 16
      %v2293 = vrot.slane %v2291, 4
      %v2294 = vshll.u32 %v2137, 16
      %v2296 = vrot.slane %v2294, 5
      %v2297 = vor.u32 %v2293, %v2296
      %v2298 = vrot.slane %v2297, 4
      %v2300 = vshll.u32 %v2138, 16
      %v2302 = vrot.slane %v2300, 5
      %v2303 = vsel %vm267, %v2298, %v2302
      %v2304 = vshrl.u32 %v2138, 16
      %v2306 = vrot.slane %v2304, 4
      %v2307 = vor.u32 %v2306, %v2302
      %v2308 = vrot.slane %v2307, 4
      %v2310 = vshll.u32 %v2139, 16
      %v2312 = vrot.slane %v2310, 5
      %v2313 = vsel %vm267, %v2308, %v2312
      %v2315 = vshrl.u32 %v2140, 16
      %v2317 = vrot.slane %v2315, 4
      %v2318 = vshll.u32 %v2140, 16
      %v2320 = vrot.slane %v2318, 5
      %v2321 = vor.u32 %v2317, %v2320
      %v2322 = vrot.slane %v2321, 4
      %v2324 = vshll.u32 %v2141, 16
      %v2326 = vrot.slane %v2324, 5
      %v2327 = vsel %vm267, %v2322, %v2326
      %v2328 = vshrl.u32 %v2141, 16
      %v2330 = vrot.slane %v2328, 4
      %v2331 = vor.u32 %v2330, %v2326
      %v2332 = vrot.slane %v2331, 4
      %v2334 = vshll.u32 %v2142, 16
      %v2336 = vrot.slane %v2334, 5
      %v2337 = vsel %vm267, %v2332, %v2336
      %v2339 = vshrl.u32 %v2143, 16
      %v2341 = vrot.slane %v2339, 4
      %v2342 = vshll.u32 %v2143, 16
      %v2344 = vrot.slane %v2342, 5
      %v2345 = vor.u32 %v2341, %v2344
      %v2346 = vrot.slane %v2345, 4
      %v2348 = vshll.u32 %v2144, 16
      %v2350 = vrot.slane %v2348, 5
      %v2351 = vsel %vm267, %v2346, %v2350
      %v2352 = vshrl.u32 %v2144, 16
      %v2354 = vrot.slane %v2352, 4
      %v2355 = vor.u32 %v2354, %v2350
      %v2356 = vrot.slane %v2355, 4
      %v2358 = vshll.u32 %v2145, 16
      %v2360 = vrot.slane %v2358, 5
      %v2361 = vsel %vm267, %v2356, %v2360
      %v2363 = vshrl.u32 %v2146, 16
      %v2365 = vrot.slane %v2363, 4
      %v2366 = vshll.u32 %v2146, 16
      %v2368 = vrot.slane %v2366, 5
      %v2369 = vor.u32 %v2365, %v2368
      %v2370 = vrot.slane %v2369, 4
      %v2372 = vshll.u32 %v2147, 16
      %v2374 = vrot.slane %v2372, 5
      %v2375 = vsel %vm267, %v2370, %v2374
      %v2376 = vshrl.u32 %v2147, 16
      %v2378 = vrot.slane %v2376, 4
      %v2379 = vor.u32 %v2378, %v2374
      %v2380 = vrot.slane %v2379, 4
      %v2382 = vshll.u32 %v2148, 16
      %v2384 = vrot.slane %v2382, 5
      %v2385 = vsel %vm267, %v2380, %v2384
      %v2387 = vshrl.u32 %v2149, 16
      %v2389 = vrot.slane %v2387, 4
      %v2390 = vshll.u32 %v2149, 16
      %v2392 = vrot.slane %v2390, 5
      %v2393 = vor.u32 %v2389, %v2392
      %v2394 = vrot.slane %v2393, 4
      %v2396 = vshll.u32 %v2150, 16
      %v2398 = vrot.slane %v2396, 5
      %v2399 = vsel %vm267, %v2394, %v2398
      %v2400 = vshrl.u32 %v2150, 16
      %v2402 = vrot.slane %v2400, 4
      %v2403 = vor.u32 %v2402, %v2398
      %v2404 = vrot.slane %v2403, 4
      %v2406 = vshll.u32 %v2151, 16
      %v2408 = vrot.slane %v2406, 5
      %v2409 = vsel %vm267, %v2404, %v2408
      %v2411 = vshrl.u32 %v2152, 16
      %v2413 = vrot.slane %v2411, 4
      %v2414 = vshll.u32 %v2152, 16
      %v2416 = vrot.slane %v2414, 5
      %v2417 = vor.u32 %v2413, %v2416
      %v2418 = vrot.slane %v2417, 4
      %v2420 = vshll.u32 %v2153, 16
      %v2422 = vrot.slane %v2420, 5
      %v2423 = vsel %vm267, %v2418, %v2422
      %v2424 = vshrl.u32 %v2153, 16
      %v2426 = vrot.slane %v2424, 4
      %v2427 = vor.u32 %v2426, %v2422
      %v2428 = vrot.slane %v2427, 4
      %v2430 = vshll.u32 %v2154, 16
      %v2432 = vrot.slane %v2430, 5
      %v2433 = vsel %vm267, %v2428, %v2432
      %v2435 = vshrl.u32 %v2155, 16
      %v2437 = vrot.slane %v2435, 4
      %v2438 = vshll.u32 %v2155, 16
      %v2440 = vrot.slane %v2438, 5
      %v2441 = vor.u32 %v2437, %v2440
      %v2442 = vrot.slane %v2441, 4
      %v2444 = vshll.u32 %v2156, 16
      %v2446 = vrot.slane %v2444, 5
      %v2447 = vsel %vm267, %v2442, %v2446
      %v2448 = vshrl.u32 %v2156, 16
      %v2450 = vrot.slane %v2448, 4
      %v2451 = vor.u32 %v2450, %v2446
      %v2452 = vrot.slane %v2451, 4
      %v2454 = vshll.u32 %v2157, 16
      %v2456 = vrot.slane %v2454, 5
      %v2457 = vsel %vm267, %v2452, %v2456
      %v2459 = vshrl.u32 %v2158, 16
      %v2461 = vrot.slane %v2459, 4
      %v2462 = vshll.u32 %v2158, 16
      %v2464 = vrot.slane %v2462, 5
      %v2465 = vor.u32 %v2461, %v2464
      %v2466 = vrot.slane %v2465, 4
      %v2468 = vshll.u32 %v2159, 16
      %v2470 = vrot.slane %v2468, 5
      %v2471 = vsel %vm267, %v2466, %v2470
      %v2472 = vshrl.u32 %v2159, 16
      %v2474 = vrot.slane %v2472, 4
      %v2475 = vor.u32 %v2474, %v2470
      %v2476 = vrot.slane %v2475, 4
      %v2478 = vshll.u32 %v2160, 16
      %v2480 = vrot.slane %v2478, 5
      %v2481 = vsel %vm267, %v2476, %v2480
      %v2483 = vshrl.u32 %v2161, 16
      %v2485 = vrot.slane %v2483, 4
      %v2486 = vshll.u32 %v2161, 16
      %v2488 = vrot.slane %v2486, 5
      %v2489 = vor.u32 %v2485, %v2488
      %v2490 = vrot.slane %v2489, 4
      %v2492 = vshll.u32 %v2162, 16
      %v2494 = vrot.slane %v2492, 5
      %v2495 = vsel %vm267, %v2490, %v2494
      %v2496 = vshrl.u32 %v2162, 16
      %v2498 = vrot.slane %v2496, 4
      %v2499 = vor.u32 %v2498, %v2494
      %v2500 = vrot.slane %v2499, 4
      %v2502 = vshll.u32 %v2163, 16
      %v2504 = vrot.slane %v2502, 5
      %v2505 = vsel %vm267, %v2500, %v2504
      %v2507 = vshrl.u32 %v2164, 16
      %v2509 = vrot.slane %v2507, 4
      %v2510 = vshll.u32 %v2164, 16
      %v2512 = vrot.slane %v2510, 5
      %v2513 = vor.u32 %v2509, %v2512
      %v2514 = vrot.slane %v2513, 4
      %v2516 = vshll.u32 %v2165, 16
      %v2518 = vrot.slane %v2516, 5
      %v2519 = vsel %vm267, %v2514, %v2518
      %v2520 = vshrl.u32 %v2165, 16
      %v2522 = vrot.slane %v2520, 4
      %v2523 = vor.u32 %v2522, %v2518
      %v2524 = vrot.slane %v2523, 4
      %v2526 = vshll.u32 %v2166, 16
      %v2528 = vrot.slane %v2526, 5
      %v2529 = vsel %vm267, %v2524, %v2528
      %v2531 = vshrl.u32 %v2167, 16
      %v2533 = vrot.slane %v2531, 4
      %v2534 = vshll.u32 %v2167, 16
      %v2536 = vrot.slane %v2534, 5
      %v2537 = vor.u32 %v2533, %v2536
      %v2538 = vrot.slane %v2537, 4
      %v2540 = vshll.u32 %v2168, 16
      %v2542 = vrot.slane %v2540, 5
      %v2543 = vsel %vm267, %v2538, %v2542
      %v2544 = vshrl.u32 %v2168, 16
      %v2546 = vrot.slane %v2544, 4
      %v2547 = vor.u32 %v2546, %v2542
      %v2548 = vrot.slane %v2547, 4
      %v2550 = vshll.u32 %v2169, 16
      %v2552 = vrot.slane %v2550, 5
      %v2553 = vsel %vm267, %v2548, %v2552
      %s2554 = scalar_lea.vmem %s1, 256
      %v2555 = vld [vmem:[%s2554] sm:$0xf]
      %v2556 = vld [vmem:[%s2554 + $0x4] sm:$0xf]
      %v2557 = vld [vmem:[%s2554 + $0x8] sm:$0xf]
      %v2558 = vld [vmem:[%s2554 + $0xc] sm:$0xf]
      %v2559 = vld [vmem:[%s2554 + $0x10] sm:$0xf]
      %v2560 = vld [vmem:[%s2554 + $0x14] sm:$0xf]
      %v2561 = vld [vmem:[%s2554 + $0x18] sm:$0xf]
      %v2562 = vld [vmem:[%s2554 + $0x1c] sm:$0xf]
      %v2563 = vld [vmem:[%s2554 + $0x20] sm:$0xf]
      %v2564 = vld [vmem:[%s2554 + $0x24] sm:$0xf]
      %v2565 = vld [vmem:[%s2554 + $0x28] sm:$0xf]
      %v2566 = vld [vmem:[%s2554 + $0x2c] sm:$0xf]
      %v2567 = vld [vmem:[%s2554 + $0x30] sm:$0xf]
      %v2568 = vld [vmem:[%s2554 + $0x34] sm:$0xf]
      %v2569 = vld [vmem:[%s2554 + $0x38] sm:$0xf]
      %v2570 = vld [vmem:[%s2554 + $0x3c] sm:$0xf]
      %v2571 = vunpack.c.l.b16 %v2183
      %v2572 = vunpack.c.l.b16 %v2193
      %v2573 = vunpack.c.l.b16 %v2207
      %v2574 = vunpack.c.l.b16 %v2217
      %v2575 = vunpack.c.l.b16 %v2231
      %v2576 = vunpack.c.l.b16 %v2241
      %v2577 = vunpack.c.l.b16 %v2255
      %v2578 = vunpack.c.l.b16 %v2265
      %v2579 = vunpack.c.l.b16 %v2279
      %v2580 = vunpack.c.l.b16 %v2289
      %v2581 = vunpack.c.l.b16 %v2303
      %v2582 = vunpack.c.l.b16 %v2313
      %v2583 = vunpack.c.l.b16 %v2327
      %v2584 = vunpack.c.l.b16 %v2337
      %v2585 = vunpack.c.l.b16 %v2351
      %v2586 = vunpack.c.l.b16 %v2361
      %v2587 = vunpack.c.l.b16 %v2375
      %v2588 = vunpack.c.l.b16 %v2385
      %v2589 = vunpack.c.l.b16 %v2399
      %v2590 = vunpack.c.l.b16 %v2409
      %v2591 = vunpack.c.l.b16 %v2423
      %v2592 = vunpack.c.l.b16 %v2433
      %v2593 = vunpack.c.l.b16 %v2447
      %v2594 = vunpack.c.l.b16 %v2457
      %v2595 = vunpack.c.l.b16 %v2471
      %v2596 = vunpack.c.l.b16 %v2481
      %v2597 = vunpack.c.l.b16 %v2495
      %v2598 = vunpack.c.l.b16 %v2505
      %v2599 = vunpack.c.l.b16 %v2519
      %v2600 = vunpack.c.l.b16 %v2529
      %v2601 = vunpack.c.l.b16 %v2543
      %v2602 = vunpack.c.l.b16 %v2553
      %v2603 = vpack.c.b16 %v2572, %v2571
      %v2604 = vpack.c.b16 %v2574, %v2573
      %v2605 = vpack.c.b16 %v2576, %v2575
      %v2606 = vpack.c.b16 %v2578, %v2577
      %v2607 = vpack.c.b16 %v2580, %v2579
      %v2608 = vpack.c.b16 %v2582, %v2581
      %v2609 = vpack.c.b16 %v2584, %v2583
      %v2610 = vpack.c.b16 %v2586, %v2585
      %v2611 = vpack.c.b16 %v2588, %v2587
      %v2612 = vpack.c.b16 %v2590, %v2589
      %v2613 = vpack.c.b16 %v2592, %v2591
      %v2614 = vpack.c.b16 %v2594, %v2593
      %v2615 = vpack.c.b16 %v2596, %v2595
      %v2616 = vpack.c.b16 %v2598, %v2597
      %v2617 = vpack.c.b16 %v2600, %v2599
      %v2618 = vpack.c.b16 %v2602, %v2601
      %v2651 = vunpack.c.l.b16 %v2555
      %v2652 = vunpack.c.l.b16 %v2556
      %v2653 = vunpack.c.l.b16 %v2557
      %v2654 = vunpack.c.l.b16 %v2558
      %v2655 = vunpack.c.l.b16 %v2559
      %v2656 = vunpack.c.l.b16 %v2560
      %v2657 = vunpack.c.l.b16 %v2561
      %v2658 = vunpack.c.l.b16 %v2562
      %v2659 = vunpack.c.l.b16 %v2563
      %v2660 = vunpack.c.l.b16 %v2564
      %v2661 = vunpack.c.l.b16 %v2565
      %v2662 = vunpack.c.l.b16 %v2566
      %v2663 = vunpack.c.l.b16 %v2567
      %v2664 = vunpack.c.l.b16 %v2568
      %v2665 = vunpack.c.l.b16 %v2569
      %v2666 = vunpack.c.l.b16 %v2570
      %v2667 = vpack.c.b16 %v2652, %v2651
      %v2668 = vpack.c.b16 %v2654, %v2653
      %v2669 = vpack.c.b16 %v2656, %v2655
      %v2670 = vpack.c.b16 %v2658, %v2657
      %v2671 = vpack.c.b16 %v2660, %v2659
      %v2672 = vpack.c.b16 %v2662, %v2661
      %v2673 = vpack.c.b16 %v2664, %v2663
      %v2674 = vpack.c.b16 %v2666, %v2665
      %2683 = vmatprep.subr.bf16.mxu0 0
      %2684 = vmatpush1.bf16.msra.mxu0 %v2674
      %2685 = vmatprep.subr.bf16.mxu0 0
      %2686 = vmatpush1.bf16.msra.mxu0 %v2673
      %2687 = vmatprep.subr.bf16.mxu0 0
      %2688 = vmatpush1.bf16.msra.mxu0 %v2672
      %2689 = vmatprep.subr.bf16.mxu0 0
      %2690 = vmatpush1.bf16.msra.mxu0 %v2671
      %2691 = vmatprep.subr.bf16.mxu0 0
      %2692 = vmatpush1.bf16.msra.mxu0 %v2670
      %2693 = vmatprep.subr.bf16.mxu0 0
      %2694 = vmatpush1.bf16.msra.mxu0 %v2669
      %2695 = vmatprep.subr.bf16.mxu0 0
      %2696 = vmatpush1.bf16.msra.mxu0 %v2668
      %2697 = vmatprep.subr.bf16.mxu0 0
      %2698 = vmatpush1.bf16.msra.mxu0 %v2667
      %2699 = vmatprep.subr.bf16.mxu0 0
      %2700 = vmatpush2.bf16.msra.mxu0 0
      %2701 = vmatprep.subr.bf16.mxu0 0
      %2702 = vmatpush2.bf16.msra.mxu0 0
      %2703 = vmatprep.subr.bf16.mxu0 0
      %2704 = vmatpush2.bf16.msra.mxu0 0
      %2705 = vmatprep.subr.bf16.mxu0 0
      %2706 = vmatpush2.bf16.msra.mxu0 0
      %2707 = vmatprep.subr.bf16.mxu0 0
      %2708 = vmatpush2.bf16.msra.mxu0 0
      %2709 = vmatprep.subr.bf16.mxu0 0
      %2710 = vmatpush2.bf16.msra.mxu0 0
      %2711 = vmatprep.subr.bf16.mxu0 0
      %2712 = vmatpush2.bf16.msra.mxu0 0
      %2713 = vmatprep.subr.bf16.mxu0 0
      %2714 = vmatpush2.bf16.msra.mxu0 0
      %2715 = vmatprep.mubr.bf16.mxu0 0
      %2716 = vmatmul.mubr.bf16.gmra.mxu0 %v2603
      %v2717 = vpop.f32.mrf.mxu0
      %v2718 = vadd.f32 0.0, %v2717
      %v2719 = vpop.f32.mrf.mxu0
      %v2720 = vpop.f32.mrf.mxu0
      %v2721 = vadd.f32 0.0, %v2720
      %v2722 = vpop.f32.mrf.mxu0
      %2723 = vmatprep.mubr.bf16.mxu0 0
      %2724 = vmatmul.mubr.bf16.gmra.mxu0 %v2604
      %v2725 = vpop.f32.mrf.mxu0
      %v2726 = vadd.f32 0.0, %v2725
      %v2727 = vpop.f32.mrf.mxu0
      %v2728 = vpop.f32.mrf.mxu0
      %v2729 = vadd.f32 0.0, %v2728
      %v2730 = vpop.f32.mrf.mxu0
      %2731 = vmatprep.mubr.bf16.mxu0 0
      %2732 = vmatmul.mubr.bf16.gmra.mxu0 %v2605
      %v2733 = vpop.f32.mrf.mxu0
      %v2734 = vadd.f32 0.0, %v2733
      %v2735 = vpop.f32.mrf.mxu0
      %v2736 = vpop.f32.mrf.mxu0
      %v2737 = vadd.f32 0.0, %v2736
      %v2738 = vpop.f32.mrf.mxu0
      %2739 = vmatprep.mubr.bf16.mxu0 0
      %2740 = vmatmul.mubr.bf16.gmra.mxu0 %v2606
      %v2741 = vpop.f32.mrf.mxu0
      %v2742 = vadd.f32 0.0, %v2741
      %v2743 = vpop.f32.mrf.mxu0
      %v2744 = vpop.f32.mrf.mxu0
      %v2745 = vadd.f32 0.0, %v2744
      %v2746 = vpop.f32.mrf.mxu0
      %2747 = vmatprep.mubr.bf16.mxu0 0
      %2748 = vmatmul.mubr.bf16.gmra.mxu0 %v2607
      %v2749 = vpop.f32.mrf.mxu0
      %v2750 = vadd.f32 0.0, %v2749
      %v2751 = vpop.f32.mrf.mxu0
      %v2752 = vpop.f32.mrf.mxu0
      %v2753 = vadd.f32 0.0, %v2752
      %v2754 = vpop.f32.mrf.mxu0
      %2755 = vmatprep.mubr.bf16.mxu0 0
      %2756 = vmatmul.mubr.bf16.gmra.mxu0 %v2608
      %v2757 = vpop.f32.mrf.mxu0
      %v2758 = vadd.f32 0.0, %v2757
      %v2759 = vpop.f32.mrf.mxu0
      %v2760 = vpop.f32.mrf.mxu0
      %v2761 = vadd.f32 0.0, %v2760
      %v2762 = vpop.f32.mrf.mxu0
      %2763 = vmatprep.mubr.bf16.mxu0 0
      %2764 = vmatmul.mubr.bf16.gmra.mxu0 %v2609
      %v2765 = vpop.f32.mrf.mxu0
      %v2766 = vadd.f32 0.0, %v2765
      %v2767 = vpop.f32.mrf.mxu0
      %v2768 = vpop.f32.mrf.mxu0
      %v2769 = vadd.f32 0.0, %v2768
      %v2770 = vpop.f32.mrf.mxu0
      %2771 = vmatprep.mubr.bf16.mxu0 0
      %2772 = vmatmul.mubr.bf16.gmra.mxu0 %v2610
      %v2773 = vpop.f32.mrf.mxu0
      %v2774 = vadd.f32 0.0, %v2773
      %v2775 = vpop.f32.mrf.mxu0
      %v2776 = vpop.f32.mrf.mxu0
      %v2777 = vadd.f32 0.0, %v2776
      %v2778 = vpop.f32.mrf.mxu0
      %2779 = vmatprep.mubr.bf16.mxu0 0
      %2780 = vmatmul.mubr.bf16.gmra.mxu0 %v2611
      %v2781 = vpop.f32.mrf.mxu0
      %v2782 = vadd.f32 0.0, %v2781
      %v2783 = vpop.f32.mrf.mxu0
      %v2784 = vpop.f32.mrf.mxu0
      %v2785 = vadd.f32 0.0, %v2784
      %v2786 = vpop.f32.mrf.mxu0
      %2787 = vmatprep.mubr.bf16.mxu0 0
      %2788 = vmatmul.mubr.bf16.gmra.mxu0 %v2612
      %v2789 = vpop.f32.mrf.mxu0
      %v2790 = vadd.f32 0.0, %v2789
      %v2791 = vpop.f32.mrf.mxu0
      %v2792 = vpop.f32.mrf.mxu0
      %v2793 = vadd.f32 0.0, %v2792
      %v2794 = vpop.f32.mrf.mxu0
      %2795 = vmatprep.mubr.bf16.mxu0 0
      %2796 = vmatmul.mubr.bf16.gmra.mxu0 %v2613
      %v2797 = vpop.f32.mrf.mxu0
      %v2798 = vadd.f32 0.0, %v2797
      %v2799 = vpop.f32.mrf.mxu0
      %v2800 = vpop.f32.mrf.mxu0
      %v2801 = vadd.f32 0.0, %v2800
      %v2802 = vpop.f32.mrf.mxu0
      %2803 = vmatprep.mubr.bf16.mxu0 0
      %2804 = vmatmul.mubr.bf16.gmra.mxu0 %v2614
      %v2805 = vpop.f32.mrf.mxu0
      %v2806 = vadd.f32 0.0, %v2805
      %v2807 = vpop.f32.mrf.mxu0
      %v2808 = vpop.f32.mrf.mxu0
      %v2809 = vadd.f32 0.0, %v2808
      %v2810 = vpop.f32.mrf.mxu0
      %2811 = vmatprep.mubr.bf16.mxu0 0
      %2812 = vmatmul.mubr.bf16.gmra.mxu0 %v2615
      %v2813 = vpop.f32.mrf.mxu0
      %v2814 = vadd.f32 0.0, %v2813
      %v2815 = vpop.f32.mrf.mxu0
      %v2816 = vpop.f32.mrf.mxu0
      %v2817 = vadd.f32 0.0, %v2816
      %v2818 = vpop.f32.mrf.mxu0
      %2819 = vmatprep.mubr.bf16.mxu0 0
      %2820 = vmatmul.mubr.bf16.gmra.mxu0 %v2616
      %v2821 = vpop.f32.mrf.mxu0
      %v2822 = vadd.f32 0.0, %v2821
      %v2823 = vpop.f32.mrf.mxu0
      %v2824 = vpop.f32.mrf.mxu0
      %v2825 = vadd.f32 0.0, %v2824
      %v2826 = vpop.f32.mrf.mxu0
      %2827 = vmatprep.mubr.bf16.mxu0 0
      %2828 = vmatmul.mubr.bf16.gmra.mxu0 %v2617
      %v2829 = vpop.f32.mrf.mxu0
      %v2830 = vadd.f32 0.0, %v2829
      %v2831 = vpop.f32.mrf.mxu0
      %v2832 = vpop.f32.mrf.mxu0
      %v2833 = vadd.f32 0.0, %v2832
      %v2834 = vpop.f32.mrf.mxu0
      %2835 = vmatprep.mubr.bf16.mxu0 0
      %2836 = vmatmul.mubr.bf16.gmra.mxu0 %v2618
      %v2837 = vpop.f32.mrf.mxu0
      %v2838 = vadd.f32 0.0, %v2837
      %v2839 = vpop.f32.mrf.mxu0
      %v2840 = vpop.f32.mrf.mxu0
      %v2841 = vadd.f32 0.0, %v2840
      %v2842 = vpop.f32.mrf.mxu0
      %2843 = vdwg.mxu0
      %v2844 = vadd.f32 %v2090, %v2718
      %v2845 = vadd.f32 %v2091, %v2721
      %v2846 = vadd.f32 %v2092, %v2726
      %v2847 = vadd.f32 %v2093, %v2729
      %v2848 = vadd.f32 %v2094, %v2734
      %v2849 = vadd.f32 %v2095, %v2737
      %v2850 = vadd.f32 %v2096, %v2742
      %v2851 = vadd.f32 %v2097, %v2745
      %v2852 = vadd.f32 %v2098, %v2750
      %v2853 = vadd.f32 %v2099, %v2753
      %v2854 = vadd.f32 %v2100, %v2758
      %v2855 = vadd.f32 %v2101, %v2761
      %v2856 = vadd.f32 %v2102, %v2766
      %v2857 = vadd.f32 %v2103, %v2769
      %v2858 = vadd.f32 %v2104, %v2774
      %v2859 = vadd.f32 %v2105, %v2777
      %v2860 = vadd.f32 %v2106, %v2782
      %v2861 = vadd.f32 %v2107, %v2785
      %v2862 = vadd.f32 %v2108, %v2790
      %v2863 = vadd.f32 %v2109, %v2793
      %v2864 = vadd.f32 %v2110, %v2798
      %v2865 = vadd.f32 %v2111, %v2801
      %v2866 = vadd.f32 %v2112, %v2806
      %v2867 = vadd.f32 %v2113, %v2809
      %v2868 = vadd.f32 %v2114, %v2814
      %v2869 = vadd.f32 %v2115, %v2817
      %v2870 = vadd.f32 %v2116, %v2822
      %v2871 = vadd.f32 %v2117, %v2825
      %v2872 = vadd.f32 %v2118, %v2830
      %v2873 = vadd.f32 %v2119, %v2833
      %v2874 = vadd.f32 %v2120, %v2838
      %v2875 = vadd.f32 %v2121, %v2841
      %v2876 = vld [vmem:[%s1735] sm:$0xe]
      %v2877 = vld [vmem:[%s1735 + $0xc] sm:$0xe]
      %v2878 = vld [vmem:[%s1735 + $0x18] sm:$0xe]
      %v2879 = vld [vmem:[%s1735 + $0x24] sm:$0xe]
      %v2880 = vld [vmem:[%s1735 + $0x30] sm:$0xe]
      %v2881 = vld [vmem:[%s1735 + $0x3c] sm:$0xe]
      %v2882 = vld [vmem:[%s1735 + $0x48] sm:$0xe]
      %v2883 = vld [vmem:[%s1735 + $0x54] sm:$0xe]
      %v2884 = vld [vmem:[%s1735 + $0x60] sm:$0xe]
      %v2885 = vld [vmem:[%s1735 + $0x6c] sm:$0xe]
      %v2886 = vld [vmem:[%s1735 + $0x78] sm:$0xe]
      %v2887 = vld [vmem:[%s1735 + $0x84] sm:$0xe]
      %v2888 = vld [vmem:[%s1735 + $0x90] sm:$0xe]
      %v2889 = vld [vmem:[%s1735 + $0x9c] sm:$0xe]
      %v2890 = vld [vmem:[%s1735 + $0xa8] sm:$0xe]
      %v2891 = vld [vmem:[%s1735 + $0xb4] sm:$0xe]
      %v2940 = vrot.slane %v2876, 5
      %v2941 = vrot.slane %v2940, 4
      %v2942 = vrot.slane %v2123, 5
      %v2943 = vsel %vm1297, %v2941, %v2942
      %v2944 = vrot.slane %v2942, 4
      %v2945 = vrot.slane %v2124, 5
      %v2946 = vsel %vm1297, %v2944, %v2945
      %v2947 = vrot.slane %v2877, 5
      %v2948 = vrot.slane %v2947, 4
      %v2949 = vrot.slane %v2126, 5
      %v2950 = vsel %vm1297, %v2948, %v2949
      %v2951 = vrot.slane %v2949, 4
      %v2952 = vrot.slane %v2127, 5
      %v2953 = vsel %vm1297, %v2951, %v2952
      %v2954 = vrot.slane %v2878, 5
      %v2955 = vrot.slane %v2954, 4
      %v2956 = vrot.slane %v2129, 5
      %v2957 = vsel %vm1297, %v2955, %v2956
      %v2958 = vrot.slane %v2956, 4
      %v2959 = vrot.slane %v2130, 5
      %v2960 = vsel %vm1297, %v2958, %v2959
      %v2961 = vrot.slane %v2879, 5
      %v2962 = vrot.slane %v2961, 4
      %v2963 = vrot.slane %v2132, 5
      %v2964 = vsel %vm1297, %v2962, %v2963
      %v2965 = vrot.slane %v2963, 4
      %v2966 = vrot.slane %v2133, 5
      %v2967 = vsel %vm1297, %v2965, %v2966
      %v2968 = vrot.slane %v2880, 5
      %v2969 = vrot.slane %v2968, 4
      %v2970 = vrot.slane %v2135, 5
      %v2971 = vsel %vm1297, %v2969, %v2970
      %v2972 = vrot.slane %v2970, 4
      %v2973 = vrot.slane %v2136, 5
      %v2974 = vsel %vm1297, %v2972, %v2973
      %v2975 = vrot.slane %v2881, 5
      %v2976 = vrot.slane %v2975, 4
      %v2977 = vrot.slane %v2138, 5
      %v2978 = vsel %vm1297, %v2976, %v2977
      %v2979 = vrot.slane %v2977, 4
      %v2980 = vrot.slane %v2139, 5
      %v2981 = vsel %vm1297, %v2979, %v2980
      %v2982 = vrot.slane %v2882, 5
      %v2983 = vrot.slane %v2982, 4
      %v2984 = vrot.slane %v2141, 5
      %v2985 = vsel %vm1297, %v2983, %v2984
      %v2986 = vrot.slane %v2984, 4
      %v2987 = vrot.slane %v2142, 5
      %v2988 = vsel %vm1297, %v2986, %v2987
      %v2989 = vrot.slane %v2883, 5
      %v2990 = vrot.slane %v2989, 4
      %v2991 = vrot.slane %v2144, 5
      %v2992 = vsel %vm1297, %v2990, %v2991
      %v2993 = vrot.slane %v2991, 4
      %v2994 = vrot.slane %v2145, 5
      %v2995 = vsel %vm1297, %v2993, %v2994
      %v2996 = vrot.slane %v2884, 5
      %v2997 = vrot.slane %v2996, 4
      %v2998 = vrot.slane %v2147, 5
      %v2999 = vsel %vm1297, %v2997, %v2998
      %v3000 = vrot.slane %v2998, 4
      %v3001 = vrot.slane %v2148, 5
      %v3002 = vsel %vm1297, %v3000, %v3001
      %v3003 = vrot.slane %v2885, 5
      %v3004 = vrot.slane %v3003, 4
      %v3005 = vrot.slane %v2150, 5
      %v3006 = vsel %vm1297, %v3004, %v3005
      %v3007 = vrot.slane %v3005, 4
      %v3008 = vrot.slane %v2151, 5
      %v3009 = vsel %vm1297, %v3007, %v3008
      %v3010 = vrot.slane %v2886, 5
      %v3011 = vrot.slane %v3010, 4
      %v3012 = vrot.slane %v2153, 5
      %v3013 = vsel %vm1297, %v3011, %v3012
      %v3014 = vrot.slane %v3012, 4
      %v3015 = vrot.slane %v2154, 5
      %v3016 = vsel %vm1297, %v3014, %v3015
      %v3017 = vrot.slane %v2887, 5
      %v3018 = vrot.slane %v3017, 4
      %v3019 = vrot.slane %v2156, 5
      %v3020 = vsel %vm1297, %v3018, %v3019
      %v3021 = vrot.slane %v3019, 4
      %v3022 = vrot.slane %v2157, 5
      %v3023 = vsel %vm1297, %v3021, %v3022
      %v3024 = vrot.slane %v2888, 5
      %v3025 = vrot.slane %v3024, 4
      %v3026 = vrot.slane %v2159, 5
      %v3027 = vsel %vm1297, %v3025, %v3026
      %v3028 = vrot.slane %v3026, 4
      %v3029 = vrot.slane %v2160, 5
      %v3030 = vsel %vm1297, %v3028, %v3029
      %v3031 = vrot.slane %v2889, 5
      %v3032 = vrot.slane %v3031, 4
      %v3033 = vrot.slane %v2162, 5
      %v3034 = vsel %vm1297, %v3032, %v3033
      %v3035 = vrot.slane %v3033, 4
      %v3036 = vrot.slane %v2163, 5
      %v3037 = vsel %vm1297, %v3035, %v3036
      %v3038 = vrot.slane %v2890, 5
      %v3039 = vrot.slane %v3038, 4
      %v3040 = vrot.slane %v2165, 5
      %v3041 = vsel %vm1297, %v3039, %v3040
      %v3042 = vrot.slane %v3040, 4
      %v3043 = vrot.slane %v2166, 5
      %v3044 = vsel %vm1297, %v3042, %v3043
      %v3045 = vrot.slane %v2891, 5
      %v3046 = vrot.slane %v3045, 4
      %v3047 = vrot.slane %v2168, 5
      %v3048 = vsel %vm1297, %v3046, %v3047
      %v3049 = vrot.slane %v3047, 4
      %v3050 = vrot.slane %v2169, 5
      %v3051 = vsel %vm1297, %v3049, %v3050
      %s3052 = scalar_lea.vmem %s1, 320
      %v3053 = vld [vmem:[%s3052] sm:$0xf]
      %v3054 = vld [vmem:[%s3052 + $0x4] sm:$0xf]
      %v3055 = vld [vmem:[%s3052 + $0x8] sm:$0xf]
      %v3056 = vld [vmem:[%s3052 + $0xc] sm:$0xf]
      %v3057 = vld [vmem:[%s3052 + $0x10] sm:$0xf]
      %v3058 = vld [vmem:[%s3052 + $0x14] sm:$0xf]
      %v3059 = vld [vmem:[%s3052 + $0x18] sm:$0xf]
      %v3060 = vld [vmem:[%s3052 + $0x1c] sm:$0xf]
      %v3061 = vld [vmem:[%s3052 + $0x20] sm:$0xf]
      %v3062 = vld [vmem:[%s3052 + $0x24] sm:$0xf]
      %v3063 = vld [vmem:[%s3052 + $0x28] sm:$0xf]
      %v3064 = vld [vmem:[%s3052 + $0x2c] sm:$0xf]
      %v3065 = vld [vmem:[%s3052 + $0x30] sm:$0xf]
      %v3066 = vld [vmem:[%s3052 + $0x34] sm:$0xf]
      %v3067 = vld [vmem:[%s3052 + $0x38] sm:$0xf]
      %v3068 = vld [vmem:[%s3052 + $0x3c] sm:$0xf]
      %v3069 = vunpack.c.l.b16 %v2943
      %v3070 = vunpack.c.l.b16 %v2946
      %v3071 = vunpack.c.l.b16 %v2950
      %v3072 = vunpack.c.l.b16 %v2953
      %v3073 = vunpack.c.l.b16 %v2957
      %v3074 = vunpack.c.l.b16 %v2960
      %v3075 = vunpack.c.l.b16 %v2964
      %v3076 = vunpack.c.l.b16 %v2967
      %v3077 = vunpack.c.l.b16 %v2971
      %v3078 = vunpack.c.l.b16 %v2974
      %v3079 = vunpack.c.l.b16 %v2978
      %v3080 = vunpack.c.l.b16 %v2981
      %v3081 = vunpack.c.l.b16 %v2985
      %v3082 = vunpack.c.l.b16 %v2988
      %v3083 = vunpack.c.l.b16 %v2992
      %v3084 = vunpack.c.l.b16 %v2995
      %v3085 = vunpack.c.l.b16 %v2999
      %v3086 = vunpack.c.l.b16 %v3002
      %v3087 = vunpack.c.l.b16 %v3006
      %v3088 = vunpack.c.l.b16 %v3009
      %v3089 = vunpack.c.l.b16 %v3013
      %v3090 = vunpack.c.l.b16 %v3016
      %v3091 = vunpack.c.l.b16 %v3020
      %v3092 = vunpack.c.l.b16 %v3023
      %v3093 = vunpack.c.l.b16 %v3027
      %v3094 = vunpack.c.l.b16 %v3030
      %v3095 = vunpack.c.l.b16 %v3034
      %v3096 = vunpack.c.l.b16 %v3037
      %v3097 = vunpack.c.l.b16 %v3041
      %v3098 = vunpack.c.l.b16 %v3044
      %v3099 = vunpack.c.l.b16 %v3048
      %v3100 = vunpack.c.l.b16 %v3051
      %v3101 = vpack.c.b16 %v3070, %v3069
      %v3102 = vpack.c.b16 %v3072, %v3071
      %v3103 = vpack.c.b16 %v3074, %v3073
      %v3104 = vpack.c.b16 %v3076, %v3075
      %v3105 = vpack.c.b16 %v3078, %v3077
      %v3106 = vpack.c.b16 %v3080, %v3079
      %v3107 = vpack.c.b16 %v3082, %v3081
      %v3108 = vpack.c.b16 %v3084, %v3083
      %v3109 = vpack.c.b16 %v3086, %v3085
      %v3110 = vpack.c.b16 %v3088, %v3087
      %v3111 = vpack.c.b16 %v3090, %v3089
      %v3112 = vpack.c.b16 %v3092, %v3091
      %v3113 = vpack.c.b16 %v3094, %v3093
      %v3114 = vpack.c.b16 %v3096, %v3095
      %v3115 = vpack.c.b16 %v3098, %v3097
      %v3116 = vpack.c.b16 %v3100, %v3099
      %v3149 = vunpack.c.l.b16 %v3053
      %v3150 = vunpack.c.l.b16 %v3054
      %v3151 = vunpack.c.l.b16 %v3055
      %v3152 = vunpack.c.l.b16 %v3056
      %v3153 = vunpack.c.l.b16 %v3057
      %v3154 = vunpack.c.l.b16 %v3058
      %v3155 = vunpack.c.l.b16 %v3059
      %v3156 = vunpack.c.l.b16 %v3060
      %v3157 = vunpack.c.l.b16 %v3061
      %v3158 = vunpack.c.l.b16 %v3062
      %v3159 = vunpack.c.l.b16 %v3063
      %v3160 = vunpack.c.l.b16 %v3064
      %v3161 = vunpack.c.l.b16 %v3065
      %v3162 = vunpack.c.l.b16 %v3066
      %v3163 = vunpack.c.l.b16 %v3067
      %v3164 = vunpack.c.l.b16 %v3068
      %v3165 = vpack.c.b16 %v3150, %v3149
      %v3166 = vpack.c.b16 %v3152, %v3151
      %v3167 = vpack.c.b16 %v3154, %v3153
      %v3168 = vpack.c.b16 %v3156, %v3155
      %v3169 = vpack.c.b16 %v3158, %v3157
      %v3170 = vpack.c.b16 %v3160, %v3159
      %v3171 = vpack.c.b16 %v3162, %v3161
      %v3172 = vpack.c.b16 %v3164, %v3163
      %3181 = vmatprep.subr.bf16.mxu0 0
      %3182 = vmatpush1.bf16.msra.mxu0 %v3172
      %3183 = vmatprep.subr.bf16.mxu0 0
      %3184 = vmatpush1.bf16.msra.mxu0 %v3171
      %3185 = vmatprep.subr.bf16.mxu0 0
      %3186 = vmatpush1.bf16.msra.mxu0 %v3170
      %3187 = vmatprep.subr.bf16.mxu0 0
      %3188 = vmatpush1.bf16.msra.mxu0 %v3169
      %3189 = vmatprep.subr.bf16.mxu0 0
      %3190 = vmatpush1.bf16.msra.mxu0 %v3168
      %3191 = vmatprep.subr.bf16.mxu0 0
      %3192 = vmatpush1.bf16.msra.mxu0 %v3167
      %3193 = vmatprep.subr.bf16.mxu0 0
      %3194 = vmatpush1.bf16.msra.mxu0 %v3166
      %3195 = vmatprep.subr.bf16.mxu0 0
      %3196 = vmatpush1.bf16.msra.mxu0 %v3165
      %3197 = vmatprep.subr.bf16.mxu0 0
      %3198 = vmatpush2.bf16.msra.mxu0 0
      %3199 = vmatprep.subr.bf16.mxu0 0
      %3200 = vmatpush2.bf16.msra.mxu0 0
      %3201 = vmatprep.subr.bf16.mxu0 0
      %3202 = vmatpush2.bf16.msra.mxu0 0
      %3203 = vmatprep.subr.bf16.mxu0 0
      %3204 = vmatpush2.bf16.msra.mxu0 0
      %3205 = vmatprep.subr.bf16.mxu0 0
      %3206 = vmatpush2.bf16.msra.mxu0 0
      %3207 = vmatprep.subr.bf16.mxu0 0
      %3208 = vmatpush2.bf16.msra.mxu0 0
      %3209 = vmatprep.subr.bf16.mxu0 0
      %3210 = vmatpush2.bf16.msra.mxu0 0
      %3211 = vmatprep.subr.bf16.mxu0 0
      %3212 = vmatpush2.bf16.msra.mxu0 0
      %3213 = vmatprep.mubr.bf16.mxu0 0
      %3214 = vmatmul.mubr.bf16.gmra.mxu0 %v3101
      %v3215 = vpop.f32.mrf.mxu0
      %v3216 = vadd.f32 0.0, %v3215
      %v3217 = vpop.f32.mrf.mxu0
      %v3218 = vpop.f32.mrf.mxu0
      %v3219 = vadd.f32 0.0, %v3218
      %v3220 = vpop.f32.mrf.mxu0
      %3221 = vmatprep.mubr.bf16.mxu0 0
      %3222 = vmatmul.mubr.bf16.gmra.mxu0 %v3102
      %v3223 = vpop.f32.mrf.mxu0
      %v3224 = vadd.f32 0.0, %v3223
      %v3225 = vpop.f32.mrf.mxu0
      %v3226 = vpop.f32.mrf.mxu0
      %v3227 = vadd.f32 0.0, %v3226
      %v3228 = vpop.f32.mrf.mxu0
      %3229 = vmatprep.mubr.bf16.mxu0 0
      %3230 = vmatmul.mubr.bf16.gmra.mxu0 %v3103
      %v3231 = vpop.f32.mrf.mxu0
      %v3232 = vadd.f32 0.0, %v3231
      %v3233 = vpop.f32.mrf.mxu0
      %v3234 = vpop.f32.mrf.mxu0
      %v3235 = vadd.f32 0.0, %v3234
      %v3236 = vpop.f32.mrf.mxu0
      %3237 = vmatprep.mubr.bf16.mxu0 0
      %3238 = vmatmul.mubr.bf16.gmra.mxu0 %v3104
      %v3239 = vpop.f32.mrf.mxu0
      %v3240 = vadd.f32 0.0, %v3239
      %v3241 = vpop.f32.mrf.mxu0
      %v3242 = vpop.f32.mrf.mxu0
      %v3243 = vadd.f32 0.0, %v3242
      %v3244 = vpop.f32.mrf.mxu0
      %3245 = vmatprep.mubr.bf16.mxu0 0
      %3246 = vmatmul.mubr.bf16.gmra.mxu0 %v3105
      %v3247 = vpop.f32.mrf.mxu0
      %v3248 = vadd.f32 0.0, %v3247
      %v3249 = vpop.f32.mrf.mxu0
      %v3250 = vpop.f32.mrf.mxu0
      %v3251 = vadd.f32 0.0, %v3250
      %v3252 = vpop.f32.mrf.mxu0
      %3253 = vmatprep.mubr.bf16.mxu0 0
      %3254 = vmatmul.mubr.bf16.gmra.mxu0 %v3106
      %v3255 = vpop.f32.mrf.mxu0
      %v3256 = vadd.f32 0.0, %v3255
      %v3257 = vpop.f32.mrf.mxu0
      %v3258 = vpop.f32.mrf.mxu0
      %v3259 = vadd.f32 0.0, %v3258
      %v3260 = vpop.f32.mrf.mxu0
      %3261 = vmatprep.mubr.bf16.mxu0 0
      %3262 = vmatmul.mubr.bf16.gmra.mxu0 %v3107
      %v3263 = vpop.f32.mrf.mxu0
      %v3264 = vadd.f32 0.0, %v3263
      %v3265 = vpop.f32.mrf.mxu0
      %v3266 = vpop.f32.mrf.mxu0
      %v3267 = vadd.f32 0.0, %v3266
      %v3268 = vpop.f32.mrf.mxu0
      %3269 = vmatprep.mubr.bf16.mxu0 0
      %3270 = vmatmul.mubr.bf16.gmra.mxu0 %v3108
      %v3271 = vpop.f32.mrf.mxu0
      %v3272 = vadd.f32 0.0, %v3271
      %v3273 = vpop.f32.mrf.mxu0
      %v3274 = vpop.f32.mrf.mxu0
      %v3275 = vadd.f32 0.0, %v3274
      %v3276 = vpop.f32.mrf.mxu0
      %3277 = vmatprep.mubr.bf16.mxu0 0
      %3278 = vmatmul.mubr.bf16.gmra.mxu0 %v3109
      %v3279 = vpop.f32.mrf.mxu0
      %v3280 = vadd.f32 0.0, %v3279
      %v3281 = vpop.f32.mrf.mxu0
      %v3282 = vpop.f32.mrf.mxu0
      %v3283 = vadd.f32 0.0, %v3282
      %v3284 = vpop.f32.mrf.mxu0
      %3285 = vmatprep.mubr.bf16.mxu0 0
      %3286 = vmatmul.mubr.bf16.gmra.mxu0 %v3110
      %v3287 = vpop.f32.mrf.mxu0
      %v3288 = vadd.f32 0.0, %v3287
      %v3289 = vpop.f32.mrf.mxu0
      %v3290 = vpop.f32.mrf.mxu0
      %v3291 = vadd.f32 0.0, %v3290
      %v3292 = vpop.f32.mrf.mxu0
      %3293 = vmatprep.mubr.bf16.mxu0 0
      %3294 = vmatmul.mubr.bf16.gmra.mxu0 %v3111
      %v3295 = vpop.f32.mrf.mxu0
      %v3296 = vadd.f32 0.0, %v3295
      %v3297 = vpop.f32.mrf.mxu0
      %v3298 = vpop.f32.mrf.mxu0
      %v3299 = vadd.f32 0.0, %v3298
      %v3300 = vpop.f32.mrf.mxu0
      %3301 = vmatprep.mubr.bf16.mxu0 0
      %3302 = vmatmul.mubr.bf16.gmra.mxu0 %v3112
      %v3303 = vpop.f32.mrf.mxu0
      %v3304 = vadd.f32 0.0, %v3303
      %v3305 = vpop.f32.mrf.mxu0
      %v3306 = vpop.f32.mrf.mxu0
      %v3307 = vadd.f32 0.0, %v3306
      %v3308 = vpop.f32.mrf.mxu0
      %3309 = vmatprep.mubr.bf16.mxu0 0
      %3310 = vmatmul.mubr.bf16.gmra.mxu0 %v3113
      %v3311 = vpop.f32.mrf.mxu0
      %v3312 = vadd.f32 0.0, %v3311
      %v3313 = vpop.f32.mrf.mxu0
      %v3314 = vpop.f32.mrf.mxu0
      %v3315 = vadd.f32 0.0, %v3314
      %v3316 = vpop.f32.mrf.mxu0
      %3317 = vmatprep.mubr.bf16.mxu0 0
      %3318 = vmatmul.mubr.bf16.gmra.mxu0 %v3114
      %v3319 = vpop.f32.mrf.mxu0
      %v3320 = vadd.f32 0.0, %v3319
      %v3321 = vpop.f32.mrf.mxu0
      %v3322 = vpop.f32.mrf.mxu0
      %v3323 = vadd.f32 0.0, %v3322
      %v3324 = vpop.f32.mrf.mxu0
      %3325 = vmatprep.mubr.bf16.mxu0 0
      %3326 = vmatmul.mubr.bf16.gmra.mxu0 %v3115
      %v3327 = vpop.f32.mrf.mxu0
      %v3328 = vadd.f32 0.0, %v3327
      %v3329 = vpop.f32.mrf.mxu0
      %v3330 = vpop.f32.mrf.mxu0
      %v3331 = vadd.f32 0.0, %v3330
      %v3332 = vpop.f32.mrf.mxu0
      %3333 = vmatprep.mubr.bf16.mxu0 0
      %3334 = vmatmul.mubr.bf16.gmra.mxu0 %v3116
      %v3335 = vpop.f32.mrf.mxu0
      %v3336 = vadd.f32 0.0, %v3335
      %v3337 = vpop.f32.mrf.mxu0
      %v3338 = vpop.f32.mrf.mxu0
      %v3339 = vadd.f32 0.0, %v3338
      %v3340 = vpop.f32.mrf.mxu0
      %3341 = vdwg.mxu0
      %v3342 = vadd.f32 %v2844, %v3216
      %v3343 = vadd.f32 %v2845, %v3219
      %v3344 = vadd.f32 %v2846, %v3224
      %v3345 = vadd.f32 %v2847, %v3227
      %v3346 = vadd.f32 %v2848, %v3232
      %v3347 = vadd.f32 %v2849, %v3235
      %v3348 = vadd.f32 %v2850, %v3240
      %v3349 = vadd.f32 %v2851, %v3243
      %v3350 = vadd.f32 %v2852, %v3248
      %v3351 = vadd.f32 %v2853, %v3251
      %v3352 = vadd.f32 %v2854, %v3256
      %v3353 = vadd.f32 %v2855, %v3259
      %v3354 = vadd.f32 %v2856, %v3264
      %v3355 = vadd.f32 %v2857, %v3267
      %v3356 = vadd.f32 %v2858, %v3272
      %v3357 = vadd.f32 %v2859, %v3275
      %v3358 = vadd.f32 %v2860, %v3280
      %v3359 = vadd.f32 %v2861, %v3283
      %v3360 = vadd.f32 %v2862, %v3288
      %v3361 = vadd.f32 %v2863, %v3291
      %v3362 = vadd.f32 %v2864, %v3296
      %v3363 = vadd.f32 %v2865, %v3299
      %v3364 = vadd.f32 %v2866, %v3304
      %v3365 = vadd.f32 %v2867, %v3307
      %v3366 = vadd.f32 %v2868, %v3312
      %v3367 = vadd.f32 %v2869, %v3315
      %v3368 = vadd.f32 %v2870, %v3320
      %v3369 = vadd.f32 %v2871, %v3323
      %v3370 = vadd.f32 %v2872, %v3328
      %v3371 = vadd.f32 %v2873, %v3331
      %v3372 = vadd.f32 %v2874, %v3336
      %v3373 = vadd.f32 %v2875, %v3339
      %s3374 = sadd.s32 %s197, 2
      %s3375 = smul.u32 %s3374, 3
      %s3376 = smul.addr %s3375, 4
      %s3377 = scalar_lea.vmem %s184, %s3376
      %v3378 = vld [vmem:[%s3377] sm:$0xf]
      %v3379 = vld [vmem:[%s3377 + $0x4] sm:$0xf]
      %v3380 = vld [vmem:[%s3377 + $0xc] sm:$0xf]
      %v3381 = vld [vmem:[%s3377 + $0x10] sm:$0xf]
      %v3382 = vld [vmem:[%s3377 + $0x18] sm:$0xf]
      %v3383 = vld [vmem:[%s3377 + $0x1c] sm:$0xf]
      %v3384 = vld [vmem:[%s3377 + $0x24] sm:$0xf]
      %v3385 = vld [vmem:[%s3377 + $0x28] sm:$0xf]
      %v3386 = vld [vmem:[%s3377 + $0x30] sm:$0xf]
      %v3387 = vld [vmem:[%s3377 + $0x34] sm:$0xf]
      %v3388 = vld [vmem:[%s3377 + $0x3c] sm:$0xf]
      %v3389 = vld [vmem:[%s3377 + $0x40] sm:$0xf]
      %v3390 = vld [vmem:[%s3377 + $0x48] sm:$0xf]
      %v3391 = vld [vmem:[%s3377 + $0x4c] sm:$0xf]
      %v3392 = vld [vmem:[%s3377 + $0x54] sm:$0xf]
      %v3393 = vld [vmem:[%s3377 + $0x58] sm:$0xf]
      %v3394 = vld [vmem:[%s3377 + $0x60] sm:$0xf]
      %v3395 = vld [vmem:[%s3377 + $0x64] sm:$0xf]
      %v3396 = vld [vmem:[%s3377 + $0x6c] sm:$0xf]
      %v3397 = vld [vmem:[%s3377 + $0x70] sm:$0xf]
      %v3398 = vld [vmem:[%s3377 + $0x78] sm:$0xf]
      %v3399 = vld [vmem:[%s3377 + $0x7c] sm:$0xf]
      %v3400 = vld [vmem:[%s3377 + $0x84] sm:$0xf]
      %v3401 = vld [vmem:[%s3377 + $0x88] sm:$0xf]
      %v3402 = vld [vmem:[%s3377 + $0x90] sm:$0xf]
      %v3403 = vld [vmem:[%s3377 + $0x94] sm:$0xf]
      %v3404 = vld [vmem:[%s3377 + $0x9c] sm:$0xf]
      %v3405 = vld [vmem:[%s3377 + $0xa0] sm:$0xf]
      %v3406 = vld [vmem:[%s3377 + $0xa8] sm:$0xf]
      %v3407 = vld [vmem:[%s3377 + $0xac] sm:$0xf]
      %v3408 = vld [vmem:[%s3377 + $0xb4] sm:$0xf]
      %v3409 = vld [vmem:[%s3377 + $0xb8] sm:$0xf]
      %s3410 = scalar_lea.vmem %s1, 384
      %v3411 = vld [vmem:[%s3410] sm:$0xf]
      %v3412 = vld [vmem:[%s3410 + $0x4] sm:$0xf]
      %v3413 = vld [vmem:[%s3410 + $0x8] sm:$0xf]
      %v3414 = vld [vmem:[%s3410 + $0xc] sm:$0xf]
      %v3415 = vld [vmem:[%s3410 + $0x10] sm:$0xf]
      %v3416 = vld [vmem:[%s3410 + $0x14] sm:$0xf]
      %v3417 = vld [vmem:[%s3410 + $0x18] sm:$0xf]
      %v3418 = vld [vmem:[%s3410 + $0x1c] sm:$0xf]
      %v3419 = vld [vmem:[%s3410 + $0x20] sm:$0xf]
      %v3420 = vld [vmem:[%s3410 + $0x24] sm:$0xf]
      %v3421 = vld [vmem:[%s3410 + $0x28] sm:$0xf]
      %v3422 = vld [vmem:[%s3410 + $0x2c] sm:$0xf]
      %v3423 = vld [vmem:[%s3410 + $0x30] sm:$0xf]
      %v3424 = vld [vmem:[%s3410 + $0x34] sm:$0xf]
      %v3425 = vld [vmem:[%s3410 + $0x38] sm:$0xf]
      %v3426 = vld [vmem:[%s3410 + $0x3c] sm:$0xf]
      %v3459 = vunpack.c.l.b16 %v3378
      %v3460 = vunpack.c.l.b16 %v3379
      %v3461 = vunpack.c.l.b16 %v3380
      %v3462 = vunpack.c.l.b16 %v3381
      %v3463 = vunpack.c.l.b16 %v3382
      %v3464 = vunpack.c.l.b16 %v3383
      %v3465 = vunpack.c.l.b16 %v3384
      %v3466 = vunpack.c.l.b16 %v3385
      %v3467 = vunpack.c.l.b16 %v3386
      %v3468 = vunpack.c.l.b16 %v3387
      %v3469 = vunpack.c.l.b16 %v3388
      %v3470 = vunpack.c.l.b16 %v3389
      %v3471 = vunpack.c.l.b16 %v3390
      %v3472 = vunpack.c.l.b16 %v3391
      %v3473 = vunpack.c.l.b16 %v3392
      %v3474 = vunpack.c.l.b16 %v3393
      %v3475 = vunpack.c.l.b16 %v3394
      %v3476 = vunpack.c.l.b16 %v3395
      %v3477 = vunpack.c.l.b16 %v3396
      %v3478 = vunpack.c.l.b16 %v3397
      %v3479 = vunpack.c.l.b16 %v3398
      %v3480 = vunpack.c.l.b16 %v3399
      %v3481 = vunpack.c.l.b16 %v3400
      %v3482 = vunpack.c.l.b16 %v3401
      %v3483 = vunpack.c.l.b16 %v3402
      %v3484 = vunpack.c.l.b16 %v3403
      %v3485 = vunpack.c.l.b16 %v3404
      %v3486 = vunpack.c.l.b16 %v3405
      %v3487 = vunpack.c.l.b16 %v3406
      %v3488 = vunpack.c.l.b16 %v3407
      %v3489 = vunpack.c.l.b16 %v3408
      %v3490 = vunpack.c.l.b16 %v3409
      %v3491 = vpack.c.b16 %v3460, %v3459
      %v3492 = vpack.c.b16 %v3462, %v3461
      %v3493 = vpack.c.b16 %v3464, %v3463
      %v3494 = vpack.c.b16 %v3466, %v3465
      %v3495 = vpack.c.b16 %v3468, %v3467
      %v3496 = vpack.c.b16 %v3470, %v3469
      %v3497 = vpack.c.b16 %v3472, %v3471
      %v3498 = vpack.c.b16 %v3474, %v3473
      %v3499 = vpack.c.b16 %v3476, %v3475
      %v3500 = vpack.c.b16 %v3478, %v3477
      %v3501 = vpack.c.b16 %v3480, %v3479
      %v3502 = vpack.c.b16 %v3482, %v3481
      %v3503 = vpack.c.b16 %v3484, %v3483
      %v3504 = vpack.c.b16 %v3486, %v3485
      %v3505 = vpack.c.b16 %v3488, %v3487
      %v3506 = vpack.c.b16 %v3490, %v3489
      %v3539 = vunpack.c.l.b16 %v3411
      %v3540 = vunpack.c.l.b16 %v3412
      %v3541 = vunpack.c.l.b16 %v3413
      %v3542 = vunpack.c.l.b16 %v3414
      %v3543 = vunpack.c.l.b16 %v3415
      %v3544 = vunpack.c.l.b16 %v3416
      %v3545 = vunpack.c.l.b16 %v3417
      %v3546 = vunpack.c.l.b16 %v3418
      %v3547 = vunpack.c.l.b16 %v3419
      %v3548 = vunpack.c.l.b16 %v3420
      %v3549 = vunpack.c.l.b16 %v3421
      %v3550 = vunpack.c.l.b16 %v3422
      %v3551 = vunpack.c.l.b16 %v3423
      %v3552 = vunpack.c.l.b16 %v3424
      %v3553 = vunpack.c.l.b16 %v3425
      %v3554 = vunpack.c.l.b16 %v3426
      %v3555 = vpack.c.b16 %v3540, %v3539
      %v3556 = vpack.c.b16 %v3542, %v3541
      %v3557 = vpack.c.b16 %v3544, %v3543
      %v3558 = vpack.c.b16 %v3546, %v3545
      %v3559 = vpack.c.b16 %v3548, %v3547
      %v3560 = vpack.c.b16 %v3550, %v3549
      %v3561 = vpack.c.b16 %v3552, %v3551
      %v3562 = vpack.c.b16 %v3554, %v3553
      %3571 = vmatprep.subr.bf16.mxu0 0
      %3572 = vmatpush1.bf16.msra.mxu0 %v3562
      %3573 = vmatprep.subr.bf16.mxu0 0
      %3574 = vmatpush1.bf16.msra.mxu0 %v3561
      %3575 = vmatprep.subr.bf16.mxu0 0
      %3576 = vmatpush1.bf16.msra.mxu0 %v3560
      %3577 = vmatprep.subr.bf16.mxu0 0
      %3578 = vmatpush1.bf16.msra.mxu0 %v3559
      %3579 = vmatprep.subr.bf16.mxu0 0
      %3580 = vmatpush1.bf16.msra.mxu0 %v3558
      %3581 = vmatprep.subr.bf16.mxu0 0
      %3582 = vmatpush1.bf16.msra.mxu0 %v3557
      %3583 = vmatprep.subr.bf16.mxu0 0
      %3584 = vmatpush1.bf16.msra.mxu0 %v3556
      %3585 = vmatprep.subr.bf16.mxu0 0
      %3586 = vmatpush1.bf16.msra.mxu0 %v3555
      %3587 = vmatprep.subr.bf16.mxu0 0
      %3588 = vmatpush2.bf16.msra.mxu0 0
      %3589 = vmatprep.subr.bf16.mxu0 0
      %3590 = vmatpush2.bf16.msra.mxu0 0
      %3591 = vmatprep.subr.bf16.mxu0 0
      %3592 = vmatpush2.bf16.msra.mxu0 0
      %3593 = vmatprep.subr.bf16.mxu0 0
      %3594 = vmatpush2.bf16.msra.mxu0 0
      %3595 = vmatprep.subr.bf16.mxu0 0
      %3596 = vmatpush2.bf16.msra.mxu0 0
      %3597 = vmatprep.subr.bf16.mxu0 0
      %3598 = vmatpush2.bf16.msra.mxu0 0
      %3599 = vmatprep.subr.bf16.mxu0 0
      %3600 = vmatpush2.bf16.msra.mxu0 0
      %3601 = vmatprep.subr.bf16.mxu0 0
      %3602 = vmatpush2.bf16.msra.mxu0 0
      %3603 = vmatprep.mubr.bf16.mxu0 0
      %3604 = vmatmul.mubr.bf16.gmra.mxu0 %v3491
      %v3605 = vpop.f32.mrf.mxu0
      %v3606 = vadd.f32 0.0, %v3605
      %v3607 = vpop.f32.mrf.mxu0
      %v3608 = vpop.f32.mrf.mxu0
      %v3609 = vadd.f32 0.0, %v3608
      %v3610 = vpop.f32.mrf.mxu0
      %3611 = vmatprep.mubr.bf16.mxu0 0
      %3612 = vmatmul.mubr.bf16.gmra.mxu0 %v3492
      %v3613 = vpop.f32.mrf.mxu0
      %v3614 = vadd.f32 0.0, %v3613
      %v3615 = vpop.f32.mrf.mxu0
      %v3616 = vpop.f32.mrf.mxu0
      %v3617 = vadd.f32 0.0, %v3616
      %v3618 = vpop.f32.mrf.mxu0
      %3619 = vmatprep.mubr.bf16.mxu0 0
      %3620 = vmatmul.mubr.bf16.gmra.mxu0 %v3493
      %v3621 = vpop.f32.mrf.mxu0
      %v3622 = vadd.f32 0.0, %v3621
      %v3623 = vpop.f32.mrf.mxu0
      %v3624 = vpop.f32.mrf.mxu0
      %v3625 = vadd.f32 0.0, %v3624
      %v3626 = vpop.f32.mrf.mxu0
      %3627 = vmatprep.mubr.bf16.mxu0 0
      %3628 = vmatmul.mubr.bf16.gmra.mxu0 %v3494
      %v3629 = vpop.f32.mrf.mxu0
      %v3630 = vadd.f32 0.0, %v3629
      %v3631 = vpop.f32.mrf.mxu0
      %v3632 = vpop.f32.mrf.mxu0
      %v3633 = vadd.f32 0.0, %v3632
      %v3634 = vpop.f32.mrf.mxu0
      %3635 = vmatprep.mubr.bf16.mxu0 0
      %3636 = vmatmul.mubr.bf16.gmra.mxu0 %v3495
      %v3637 = vpop.f32.mrf.mxu0
      %v3638 = vadd.f32 0.0, %v3637
      %v3639 = vpop.f32.mrf.mxu0
      %v3640 = vpop.f32.mrf.mxu0
      %v3641 = vadd.f32 0.0, %v3640
      %v3642 = vpop.f32.mrf.mxu0
      %3643 = vmatprep.mubr.bf16.mxu0 0
      %3644 = vmatmul.mubr.bf16.gmra.mxu0 %v3496
      %v3645 = vpop.f32.mrf.mxu0
      %v3646 = vadd.f32 0.0, %v3645
      %v3647 = vpop.f32.mrf.mxu0
      %v3648 = vpop.f32.mrf.mxu0
      %v3649 = vadd.f32 0.0, %v3648
      %v3650 = vpop.f32.mrf.mxu0
      %3651 = vmatprep.mubr.bf16.mxu0 0
      %3652 = vmatmul.mubr.bf16.gmra.mxu0 %v3497
      %v3653 = vpop.f32.mrf.mxu0
      %v3654 = vadd.f32 0.0, %v3653
      %v3655 = vpop.f32.mrf.mxu0
      %v3656 = vpop.f32.mrf.mxu0
      %v3657 = vadd.f32 0.0, %v3656
      %v3658 = vpop.f32.mrf.mxu0
      %3659 = vmatprep.mubr.bf16.mxu0 0
      %3660 = vmatmul.mubr.bf16.gmra.mxu0 %v3498
      %v3661 = vpop.f32.mrf.mxu0
      %v3662 = vadd.f32 0.0, %v3661
      %v3663 = vpop.f32.mrf.mxu0
      %v3664 = vpop.f32.mrf.mxu0
      %v3665 = vadd.f32 0.0, %v3664
      %v3666 = vpop.f32.mrf.mxu0
      %3667 = vmatprep.mubr.bf16.mxu0 0
      %3668 = vmatmul.mubr.bf16.gmra.mxu0 %v3499
      %v3669 = vpop.f32.mrf.mxu0
      %v3670 = vadd.f32 0.0, %v3669
      %v3671 = vpop.f32.mrf.mxu0
      %v3672 = vpop.f32.mrf.mxu0
      %v3673 = vadd.f32 0.0, %v3672
      %v3674 = vpop.f32.mrf.mxu0
      %3675 = vmatprep.mubr.bf16.mxu0 0
      %3676 = vmatmul.mubr.bf16.gmra.mxu0 %v3500
      %v3677 = vpop.f32.mrf.mxu0
      %v3678 = vadd.f32 0.0, %v3677
      %v3679 = vpop.f32.mrf.mxu0
      %v3680 = vpop.f32.mrf.mxu0
      %v3681 = vadd.f32 0.0, %v3680
      %v3682 = vpop.f32.mrf.mxu0
      %3683 = vmatprep.mubr.bf16.mxu0 0
      %3684 = vmatmul.mubr.bf16.gmra.mxu0 %v3501
      %v3685 = vpop.f32.mrf.mxu0
      %v3686 = vadd.f32 0.0, %v3685
      %v3687 = vpop.f32.mrf.mxu0
      %v3688 = vpop.f32.mrf.mxu0
      %v3689 = vadd.f32 0.0, %v3688
      %v3690 = vpop.f32.mrf.mxu0
      %3691 = vmatprep.mubr.bf16.mxu0 0
      %3692 = vmatmul.mubr.bf16.gmra.mxu0 %v3502
      %v3693 = vpop.f32.mrf.mxu0
      %v3694 = vadd.f32 0.0, %v3693
      %v3695 = vpop.f32.mrf.mxu0
      %v3696 = vpop.f32.mrf.mxu0
      %v3697 = vadd.f32 0.0, %v3696
      %v3698 = vpop.f32.mrf.mxu0
      %3699 = vmatprep.mubr.bf16.mxu0 0
      %3700 = vmatmul.mubr.bf16.gmra.mxu0 %v3503
      %v3701 = vpop.f32.mrf.mxu0
      %v3702 = vadd.f32 0.0, %v3701
      %v3703 = vpop.f32.mrf.mxu0
      %v3704 = vpop.f32.mrf.mxu0
      %v3705 = vadd.f32 0.0, %v3704
      %v3706 = vpop.f32.mrf.mxu0
      %3707 = vmatprep.mubr.bf16.mxu0 0
      %3708 = vmatmul.mubr.bf16.gmra.mxu0 %v3504
      %v3709 = vpop.f32.mrf.mxu0
      %v3710 = vadd.f32 0.0, %v3709
      %v3711 = vpop.f32.mrf.mxu0
      %v3712 = vpop.f32.mrf.mxu0
      %v3713 = vadd.f32 0.0, %v3712
      %v3714 = vpop.f32.mrf.mxu0
      %3715 = vmatprep.mubr.bf16.mxu0 0
      %3716 = vmatmul.mubr.bf16.gmra.mxu0 %v3505
      %v3717 = vpop.f32.mrf.mxu0
      %v3718 = vadd.f32 0.0, %v3717
      %v3719 = vpop.f32.mrf.mxu0
      %v3720 = vpop.f32.mrf.mxu0
      %v3721 = vadd.f32 0.0, %v3720
      %v3722 = vpop.f32.mrf.mxu0
      %3723 = vmatprep.mubr.bf16.mxu0 0
      %3724 = vmatmul.mubr.bf16.gmra.mxu0 %v3506
      %v3725 = vpop.f32.mrf.mxu0
      %v3726 = vadd.f32 0.0, %v3725
      %v3727 = vpop.f32.mrf.mxu0
      %v3728 = vpop.f32.mrf.mxu0
      %v3729 = vadd.f32 0.0, %v3728
      %v3730 = vpop.f32.mrf.mxu0
      %3731 = vdwg.mxu0
      %v3732 = vadd.f32 %v3342, %v3606
      %v3733 = vadd.f32 %v3343, %v3609
      %v3734 = vadd.f32 %v3344, %v3614
      %v3735 = vadd.f32 %v3345, %v3617
      %v3736 = vadd.f32 %v3346, %v3622
      %v3737 = vadd.f32 %v3347, %v3625
      %v3738 = vadd.f32 %v3348, %v3630
      %v3739 = vadd.f32 %v3349, %v3633
      %v3740 = vadd.f32 %v3350, %v3638
      %v3741 = vadd.f32 %v3351, %v3641
      %v3742 = vadd.f32 %v3352, %v3646
      %v3743 = vadd.f32 %v3353, %v3649
      %v3744 = vadd.f32 %v3354, %v3654
      %v3745 = vadd.f32 %v3355, %v3657
      %v3746 = vadd.f32 %v3356, %v3662
      %v3747 = vadd.f32 %v3357, %v3665
      %v3748 = vadd.f32 %v3358, %v3670
      %v3749 = vadd.f32 %v3359, %v3673
      %v3750 = vadd.f32 %v3360, %v3678
      %v3751 = vadd.f32 %v3361, %v3681
      %v3752 = vadd.f32 %v3362, %v3686
      %v3753 = vadd.f32 %v3363, %v3689
      %v3754 = vadd.f32 %v3364, %v3694
      %v3755 = vadd.f32 %v3365, %v3697
      %v3756 = vadd.f32 %v3366, %v3702
      %v3757 = vadd.f32 %v3367, %v3705
      %v3758 = vadd.f32 %v3368, %v3710
      %v3759 = vadd.f32 %v3369, %v3713
      %v3760 = vadd.f32 %v3370, %v3718
      %v3761 = vadd.f32 %v3371, %v3721
      %v3762 = vadd.f32 %v3372, %v3726
      %v3763 = vadd.f32 %v3373, %v3729
      %v3764 = vld [vmem:[%s3377] sm:$0xf]
      %v3765 = vld [vmem:[%s3377 + $0x4] sm:$0xf]
      %v3766 = vld [vmem:[%s3377 + $0x8] sm:$0x1]
      %v3767 = vld [vmem:[%s3377 + $0xc] sm:$0xf]
      %v3768 = vld [vmem:[%s3377 + $0x10] sm:$0xf]
      %v3769 = vld [vmem:[%s3377 + $0x14] sm:$0x1]
      %v3770 = vld [vmem:[%s3377 + $0x18] sm:$0xf]
      %v3771 = vld [vmem:[%s3377 + $0x1c] sm:$0xf]
      %v3772 = vld [vmem:[%s3377 + $0x20] sm:$0x1]
      %v3773 = vld [vmem:[%s3377 + $0x24] sm:$0xf]
      %v3774 = vld [vmem:[%s3377 + $0x28] sm:$0xf]
      %v3775 = vld [vmem:[%s3377 + $0x2c] sm:$0x1]
      %v3776 = vld [vmem:[%s3377 + $0x30] sm:$0xf]
      %v3777 = vld [vmem:[%s3377 + $0x34] sm:$0xf]
      %v3778 = vld [vmem:[%s3377 + $0x38] sm:$0x1]
      %v3779 = vld [vmem:[%s3377 + $0x3c] sm:$0xf]
      %v3780 = vld [vmem:[%s3377 + $0x40] sm:$0xf]
      %v3781 = vld [vmem:[%s3377 + $0x44] sm:$0x1]
      %v3782 = vld [vmem:[%s3377 + $0x48] sm:$0xf]
      %v3783 = vld [vmem:[%s3377 + $0x4c] sm:$0xf]
      %v3784 = vld [vmem:[%s3377 + $0x50] sm:$0x1]
      %v3785 = vld [vmem:[%s3377 + $0x54] sm:$0xf]
      %v3786 = vld [vmem:[%s3377 + $0x58] sm:$0xf]
      %v3787 = vld [vmem:[%s3377 + $0x5c] sm:$0x1]
      %v3788 = vld [vmem:[%s3377 + $0x60] sm:$0xf]
      %v3789 = vld [vmem:[%s3377 + $0x64] sm:$0xf]
      %v3790 = vld [vmem:[%s3377 + $0x68] sm:$0x1]
      %v3791 = vld [vmem:[%s3377 + $0x6c] sm:$0xf]
      %v3792 = vld [vmem:[%s3377 + $0x70] sm:$0xf]
      %v3793 = vld [vmem:[%s3377 + $0x74] sm:$0x1]
      %v3794 = vld [vmem:[%s3377 + $0x78] sm:$0xf]
      %v3795 = vld [vmem:[%s3377 + $0x7c] sm:$0xf]
      %v3796 = vld [vmem:[%s3377 + $0x80] sm:$0x1]
      %v3797 = vld [vmem:[%s3377 + $0x84] sm:$0xf]
      %v3798 = vld [vmem:[%s3377 + $0x88] sm:$0xf]
      %v3799 = vld [vmem:[%s3377 + $0x8c] sm:$0x1]
      %v3800 = vld [vmem:[%s3377 + $0x90] sm:$0xf]
      %v3801 = vld [vmem:[%s3377 + $0x94] sm:$0xf]
      %v3802 = vld [vmem:[%s3377 + $0x98] sm:$0x1]
      %v3803 = vld [vmem:[%s3377 + $0x9c] sm:$0xf]
      %v3804 = vld [vmem:[%s3377 + $0xa0] sm:$0xf]
      %v3805 = vld [vmem:[%s3377 + $0xa4] sm:$0x1]
      %v3806 = vld [vmem:[%s3377 + $0xa8] sm:$0xf]
      %v3807 = vld [vmem:[%s3377 + $0xac] sm:$0xf]
      %v3808 = vld [vmem:[%s3377 + $0xb0] sm:$0x1]
      %v3809 = vld [vmem:[%s3377 + $0xb4] sm:$0xf]
      %v3810 = vld [vmem:[%s3377 + $0xb8] sm:$0xf]
      %v3811 = vld [vmem:[%s3377 + $0xbc] sm:$0x1]
      %v3813 = vshrl.u32 %v3764, 16
      %v3815 = vrot.slane %v3813, 4
      %v3816 = vshll.u32 %v3764, 16
      %v3818 = vrot.slane %v3816, 5
      %v3819 = vor.u32 %v3815, %v3818
      %v3820 = vrot.slane %v3819, 4
      %v3822 = vshll.u32 %v3765, 16
      %v3824 = vrot.slane %v3822, 5
      %v3825 = vsel %vm267, %v3820, %v3824
      %v3826 = vshrl.u32 %v3765, 16
      %v3828 = vrot.slane %v3826, 4
      %v3829 = vor.u32 %v3828, %v3824
      %v3830 = vrot.slane %v3829, 4
      %v3832 = vshll.u32 %v3766, 16
      %v3834 = vrot.slane %v3832, 5
      %v3835 = vsel %vm267, %v3830, %v3834
      %v3837 = vshrl.u32 %v3767, 16
      %v3839 = vrot.slane %v3837, 4
      %v3840 = vshll.u32 %v3767, 16
      %v3842 = vrot.slane %v3840, 5
      %v3843 = vor.u32 %v3839, %v3842
      %v3844 = vrot.slane %v3843, 4
      %v3846 = vshll.u32 %v3768, 16
      %v3848 = vrot.slane %v3846, 5
      %v3849 = vsel %vm267, %v3844, %v3848
      %v3850 = vshrl.u32 %v3768, 16
      %v3852 = vrot.slane %v3850, 4
      %v3853 = vor.u32 %v3852, %v3848
      %v3854 = vrot.slane %v3853, 4
      %v3856 = vshll.u32 %v3769, 16
      %v3858 = vrot.slane %v3856, 5
      %v3859 = vsel %vm267, %v3854, %v3858
      %v3861 = vshrl.u32 %v3770, 16
      %v3863 = vrot.slane %v3861, 4
      %v3864 = vshll.u32 %v3770, 16
      %v3866 = vrot.slane %v3864, 5
      %v3867 = vor.u32 %v3863, %v3866
      %v3868 = vrot.slane %v3867, 4
      %v3870 = vshll.u32 %v3771, 16
      %v3872 = vrot.slane %v3870, 5
      %v3873 = vsel %vm267, %v3868, %v3872
      %v3874 = vshrl.u32 %v3771, 16
      %v3876 = vrot.slane %v3874, 4
      %v3877 = vor.u32 %v3876, %v3872
      %v3878 = vrot.slane %v3877, 4
      %v3880 = vshll.u32 %v3772, 16
      %v3882 = vrot.slane %v3880, 5
      %v3883 = vsel %vm267, %v3878, %v3882
      %v3885 = vshrl.u32 %v3773, 16
      %v3887 = vrot.slane %v3885, 4
      %v3888 = vshll.u32 %v3773, 16
      %v3890 = vrot.slane %v3888, 5
      %v3891 = vor.u32 %v3887, %v3890
      %v3892 = vrot.slane %v3891, 4
      %v3894 = vshll.u32 %v3774, 16
      %v3896 = vrot.slane %v3894, 5
      %v3897 = vsel %vm267, %v3892, %v3896
      %v3898 = vshrl.u32 %v3774, 16
      %v3900 = vrot.slane %v3898, 4
      %v3901 = vor.u32 %v3900, %v3896
      %v3902 = vrot.slane %v3901, 4
      %v3904 = vshll.u32 %v3775, 16
      %v3906 = vrot.slane %v3904, 5
      %v3907 = vsel %vm267, %v3902, %v3906
      %v3909 = vshrl.u32 %v3776, 16
      %v3911 = vrot.slane %v3909, 4
      %v3912 = vshll.u32 %v3776, 16
      %v3914 = vrot.slane %v3912, 5
      %v3915 = vor.u32 %v3911, %v3914
      %v3916 = vrot.slane %v3915, 4
      %v3918 = vshll.u32 %v3777, 16
      %v3920 = vrot.slane %v3918, 5
      %v3921 = vsel %vm267, %v3916, %v3920
      %v3922 = vshrl.u32 %v3777, 16
      %v3924 = vrot.slane %v3922, 4
      %v3925 = vor.u32 %v3924, %v3920
      %v3926 = vrot.slane %v3925, 4
      %v3928 = vshll.u32 %v3778, 16
      %v3930 = vrot.slane %v3928, 5
      %v3931 = vsel %vm267, %v3926, %v3930
      %v3933 = vshrl.u32 %v3779, 16
      %v3935 = vrot.slane %v3933, 4
      %v3936 = vshll.u32 %v3779, 16
      %v3938 = vrot.slane %v3936, 5
      %v3939 = vor.u32 %v3935, %v3938
      %v3940 = vrot.slane %v3939, 4
      %v3942 = vshll.u32 %v3780, 16
      %v3944 = vrot.slane %v3942, 5
      %v3945 = vsel %vm267, %v3940, %v3944
      %v3946 = vshrl.u32 %v3780, 16
      %v3948 = vrot.slane %v3946, 4
      %v3949 = vor.u32 %v3948, %v3944
      %v3950 = vrot.slane %v3949, 4
      %v3952 = vshll.u32 %v3781, 16
      %v3954 = vrot.slane %v3952, 5
      %v3955 = vsel %vm267, %v3950, %v3954
      %v3957 = vshrl.u32 %v3782, 16
      %v3959 = vrot.slane %v3957, 4
      %v3960 = vshll.u32 %v3782, 16
      %v3962 = vrot.slane %v3960, 5
      %v3963 = vor.u32 %v3959, %v3962
      %v3964 = vrot.slane %v3963, 4
      %v3966 = vshll.u32 %v3783, 16
      %v3968 = vrot.slane %v3966, 5
      %v3969 = vsel %vm267, %v3964, %v3968
      %v3970 = vshrl.u32 %v3783, 16
      %v3972 = vrot.slane %v3970, 4
      %v3973 = vor.u32 %v3972, %v3968
      %v3974 = vrot.slane %v3973, 4
      %v3976 = vshll.u32 %v3784, 16
      %v3978 = vrot.slane %v3976, 5
      %v3979 = vsel %vm267, %v3974, %v3978
      %v3981 = vshrl.u32 %v3785, 16
      %v3983 = vrot.slane %v3981, 4
      %v3984 = vshll.u32 %v3785, 16
      %v3986 = vrot.slane %v3984, 5
      %v3987 = vor.u32 %v3983, %v3986
      %v3988 = vrot.slane %v3987, 4
      %v3990 = vshll.u32 %v3786, 16
      %v3992 = vrot.slane %v3990, 5
      %v3993 = vsel %vm267, %v3988, %v3992
      %v3994 = vshrl.u32 %v3786, 16
      %v3996 = vrot.slane %v3994, 4
      %v3997 = vor.u32 %v3996, %v3992
      %v3998 = vrot.slane %v3997, 4
      %v4000 = vshll.u32 %v3787, 16
      %v4002 = vrot.slane %v4000, 5
      %v4003 = vsel %vm267, %v3998, %v4002
      %v4005 = vshrl.u32 %v3788, 16
      %v4007 = vrot.slane %v4005, 4
      %v4008 = vshll.u32 %v3788, 16
      %v4010 = vrot.slane %v4008, 5
      %v4011 = vor.u32 %v4007, %v4010
      %v4012 = vrot.slane %v4011, 4
      %v4014 = vshll.u32 %v3789, 16
      %v4016 = vrot.slane %v4014, 5
      %v4017 = vsel %vm267, %v4012, %v4016
      %v4018 = vshrl.u32 %v3789, 16
      %v4020 = vrot.slane %v4018, 4
      %v4021 = vor.u32 %v4020, %v4016
      %v4022 = vrot.slane %v4021, 4
      %v4024 = vshll.u32 %v3790, 16
      %v4026 = vrot.slane %v4024, 5
      %v4027 = vsel %vm267, %v4022, %v4026
      %v4029 = vshrl.u32 %v3791, 16
      %v4031 = vrot.slane %v4029, 4
      %v4032 = vshll.u32 %v3791, 16
      %v4034 = vrot.slane %v4032, 5
      %v4035 = vor.u32 %v4031, %v4034
      %v4036 = vrot.slane %v4035, 4
      %v4038 = vshll.u32 %v3792, 16
      %v4040 = vrot.slane %v4038, 5
      %v4041 = vsel %vm267, %v4036, %v4040
      %v4042 = vshrl.u32 %v3792, 16
      %v4044 = vrot.slane %v4042, 4
      %v4045 = vor.u32 %v4044, %v4040
      %v4046 = vrot.slane %v4045, 4
      %v4048 = vshll.u32 %v3793, 16
      %v4050 = vrot.slane %v4048, 5
      %v4051 = vsel %vm267, %v4046, %v4050
      %v4053 = vshrl.u32 %v3794, 16
      %v4055 = vrot.slane %v4053, 4
      %v4056 = vshll.u32 %v3794, 16
      %v4058 = vrot.slane %v4056, 5
      %v4059 = vor.u32 %v4055, %v4058
      %v4060 = vrot.slane %v4059, 4
      %v4062 = vshll.u32 %v3795, 16
      %v4064 = vrot.slane %v4062, 5
      %v4065 = vsel %vm267, %v4060, %v4064
      %v4066 = vshrl.u32 %v3795, 16
      %v4068 = vrot.slane %v4066, 4
      %v4069 = vor.u32 %v4068, %v4064
      %v4070 = vrot.slane %v4069, 4
      %v4072 = vshll.u32 %v3796, 16
      %v4074 = vrot.slane %v4072, 5
      %v4075 = vsel %vm267, %v4070, %v4074
      %v4077 = vshrl.u32 %v3797, 16
      %v4079 = vrot.slane %v4077, 4
      %v4080 = vshll.u32 %v3797, 16
      %v4082 = vrot.slane %v4080, 5
      %v4083 = vor.u32 %v4079, %v4082
      %v4084 = vrot.slane %v4083, 4
      %v4086 = vshll.u32 %v3798, 16
      %v4088 = vrot.slane %v4086, 5
      %v4089 = vsel %vm267, %v4084, %v4088
      %v4090 = vshrl.u32 %v3798, 16
      %v4092 = vrot.slane %v4090, 4
      %v4093 = vor.u32 %v4092, %v4088
      %v4094 = vrot.slane %v4093, 4
      %v4096 = vshll.u32 %v3799, 16
      %v4098 = vrot.slane %v4096, 5
      %v4099 = vsel %vm267, %v4094, %v4098
      %v4101 = vshrl.u32 %v3800, 16
      %v4103 = vrot.slane %v4101, 4
      %v4104 = vshll.u32 %v3800, 16
      %v4106 = vrot.slane %v4104, 5
      %v4107 = vor.u32 %v4103, %v4106
      %v4108 = vrot.slane %v4107, 4
      %v4110 = vshll.u32 %v3801, 16
      %v4112 = vrot.slane %v4110, 5
      %v4113 = vsel %vm267, %v4108, %v4112
      %v4114 = vshrl.u32 %v3801, 16
      %v4116 = vrot.slane %v4114, 4
      %v4117 = vor.u32 %v4116, %v4112
      %v4118 = vrot.slane %v4117, 4
      %v4120 = vshll.u32 %v3802, 16
      %v4122 = vrot.slane %v4120, 5
      %v4123 = vsel %vm267, %v4118, %v4122
      %v4125 = vshrl.u32 %v3803, 16
      %v4127 = vrot.slane %v4125, 4
      %v4128 = vshll.u32 %v3803, 16
      %v4130 = vrot.slane %v4128, 5
      %v4131 = vor.u32 %v4127, %v4130
      %v4132 = vrot.slane %v4131, 4
      %v4134 = vshll.u32 %v3804, 16
      %v4136 = vrot.slane %v4134, 5
      %v4137 = vsel %vm267, %v4132, %v4136
      %v4138 = vshrl.u32 %v3804, 16
      %v4140 = vrot.slane %v4138, 4
      %v4141 = vor.u32 %v4140, %v4136
      %v4142 = vrot.slane %v4141, 4
      %v4144 = vshll.u32 %v3805, 16
      %v4146 = vrot.slane %v4144, 5
      %v4147 = vsel %vm267, %v4142, %v4146
      %v4149 = vshrl.u32 %v3806, 16
      %v4151 = vrot.slane %v4149, 4
      %v4152 = vshll.u32 %v3806, 16
      %v4154 = vrot.slane %v4152, 5
      %v4155 = vor.u32 %v4151, %v4154
      %v4156 = vrot.slane %v4155, 4
      %v4158 = vshll.u32 %v3807, 16
      %v4160 = vrot.slane %v4158, 5
      %v4161 = vsel %vm267, %v4156, %v4160
      %v4162 = vshrl.u32 %v3807, 16
      %v4164 = vrot.slane %v4162, 4
      %v4165 = vor.u32 %v4164, %v4160
      %v4166 = vrot.slane %v4165, 4
      %v4168 = vshll.u32 %v3808, 16
      %v4170 = vrot.slane %v4168, 5
      %v4171 = vsel %vm267, %v4166, %v4170
      %v4173 = vshrl.u32 %v3809, 16
      %v4175 = vrot.slane %v4173, 4
      %v4176 = vshll.u32 %v3809, 16
      %v4178 = vrot.slane %v4176, 5
      %v4179 = vor.u32 %v4175, %v4178
      %v4180 = vrot.slane %v4179, 4
      %v4182 = vshll.u32 %v3810, 16
      %v4184 = vrot.slane %v4182, 5
      %v4185 = vsel %vm267, %v4180, %v4184
      %v4186 = vshrl.u32 %v3810, 16
      %v4188 = vrot.slane %v4186, 4
      %v4189 = vor.u32 %v4188, %v4184
      %v4190 = vrot.slane %v4189, 4
      %v4192 = vshll.u32 %v3811, 16
      %v4194 = vrot.slane %v4192, 5
      %v4195 = vsel %vm267, %v4190, %v4194
      %s4196 = scalar_lea.vmem %s1, 448
      %v4197 = vld [vmem:[%s4196] sm:$0xf]
      %v4198 = vld [vmem:[%s4196 + $0x4] sm:$0xf]
      %v4199 = vld [vmem:[%s4196 + $0x8] sm:$0xf]
      %v4200 = vld [vmem:[%s4196 + $0xc] sm:$0xf]
      %v4201 = vld [vmem:[%s4196 + $0x10] sm:$0xf]
      %v4202 = vld [vmem:[%s4196 + $0x14] sm:$0xf]
      %v4203 = vld [vmem:[%s4196 + $0x18] sm:$0xf]
      %v4204 = vld [vmem:[%s4196 + $0x1c] sm:$0xf]
      %v4205 = vld [vmem:[%s4196 + $0x20] sm:$0xf]
      %v4206 = vld [vmem:[%s4196 + $0x24] sm:$0xf]
      %v4207 = vld [vmem:[%s4196 + $0x28] sm:$0xf]
      %v4208 = vld [vmem:[%s4196 + $0x2c] sm:$0xf]
      %v4209 = vld [vmem:[%s4196 + $0x30] sm:$0xf]
      %v4210 = vld [vmem:[%s4196 + $0x34] sm:$0xf]
      %v4211 = vld [vmem:[%s4196 + $0x38] sm:$0xf]
      %v4212 = vld [vmem:[%s4196 + $0x3c] sm:$0xf]
      %v4213 = vunpack.c.l.b16 %v3825
      %v4214 = vunpack.c.l.b16 %v3835
      %v4215 = vunpack.c.l.b16 %v3849
      %v4216 = vunpack.c.l.b16 %v3859
      %v4217 = vunpack.c.l.b16 %v3873
      %v4218 = vunpack.c.l.b16 %v3883
      %v4219 = vunpack.c.l.b16 %v3897
      %v4220 = vunpack.c.l.b16 %v3907
      %v4221 = vunpack.c.l.b16 %v3921
      %v4222 = vunpack.c.l.b16 %v3931
      %v4223 = vunpack.c.l.b16 %v3945
      %v4224 = vunpack.c.l.b16 %v3955
      %v4225 = vunpack.c.l.b16 %v3969
      %v4226 = vunpack.c.l.b16 %v3979
      %v4227 = vunpack.c.l.b16 %v3993
      %v4228 = vunpack.c.l.b16 %v4003
      %v4229 = vunpack.c.l.b16 %v4017
      %v4230 = vunpack.c.l.b16 %v4027
      %v4231 = vunpack.c.l.b16 %v4041
      %v4232 = vunpack.c.l.b16 %v4051
      %v4233 = vunpack.c.l.b16 %v4065
      %v4234 = vunpack.c.l.b16 %v4075
      %v4235 = vunpack.c.l.b16 %v4089
      %v4236 = vunpack.c.l.b16 %v4099
      %v4237 = vunpack.c.l.b16 %v4113
      %v4238 = vunpack.c.l.b16 %v4123
      %v4239 = vunpack.c.l.b16 %v4137
      %v4240 = vunpack.c.l.b16 %v4147
      %v4241 = vunpack.c.l.b16 %v4161
      %v4242 = vunpack.c.l.b16 %v4171
      %v4243 = vunpack.c.l.b16 %v4185
      %v4244 = vunpack.c.l.b16 %v4195
      %v4245 = vpack.c.b16 %v4214, %v4213
      %v4246 = vpack.c.b16 %v4216, %v4215
      %v4247 = vpack.c.b16 %v4218, %v4217
      %v4248 = vpack.c.b16 %v4220, %v4219
      %v4249 = vpack.c.b16 %v4222, %v4221
      %v4250 = vpack.c.b16 %v4224, %v4223
      %v4251 = vpack.c.b16 %v4226, %v4225
      %v4252 = vpack.c.b16 %v4228, %v4227
      %v4253 = vpack.c.b16 %v4230, %v4229
      %v4254 = vpack.c.b16 %v4232, %v4231
      %v4255 = vpack.c.b16 %v4234, %v4233
      %v4256 = vpack.c.b16 %v4236, %v4235
      %v4257 = vpack.c.b16 %v4238, %v4237
      %v4258 = vpack.c.b16 %v4240, %v4239
      %v4259 = vpack.c.b16 %v4242, %v4241
      %v4260 = vpack.c.b16 %v4244, %v4243
      %v4293 = vunpack.c.l.b16 %v4197
      %v4294 = vunpack.c.l.b16 %v4198
      %v4295 = vunpack.c.l.b16 %v4199
      %v4296 = vunpack.c.l.b16 %v4200
      %v4297 = vunpack.c.l.b16 %v4201
      %v4298 = vunpack.c.l.b16 %v4202
      %v4299 = vunpack.c.l.b16 %v4203
      %v4300 = vunpack.c.l.b16 %v4204
      %v4301 = vunpack.c.l.b16 %v4205
      %v4302 = vunpack.c.l.b16 %v4206
      %v4303 = vunpack.c.l.b16 %v4207
      %v4304 = vunpack.c.l.b16 %v4208
      %v4305 = vunpack.c.l.b16 %v4209
      %v4306 = vunpack.c.l.b16 %v4210
      %v4307 = vunpack.c.l.b16 %v4211
      %v4308 = vunpack.c.l.b16 %v4212
      %v4309 = vpack.c.b16 %v4294, %v4293
      %v4310 = vpack.c.b16 %v4296, %v4295
      %v4311 = vpack.c.b16 %v4298, %v4297
      %v4312 = vpack.c.b16 %v4300, %v4299
      %v4313 = vpack.c.b16 %v4302, %v4301
      %v4314 = vpack.c.b16 %v4304, %v4303
      %v4315 = vpack.c.b16 %v4306, %v4305
      %v4316 = vpack.c.b16 %v4308, %v4307
      %4325 = vmatprep.subr.bf16.mxu0 0
      %4326 = vmatpush1.bf16.msra.mxu0 %v4316
      %4327 = vmatprep.subr.bf16.mxu0 0
      %4328 = vmatpush1.bf16.msra.mxu0 %v4315
      %4329 = vmatprep.subr.bf16.mxu0 0
      %4330 = vmatpush1.bf16.msra.mxu0 %v4314
      %4331 = vmatprep.subr.bf16.mxu0 0
      %4332 = vmatpush1.bf16.msra.mxu0 %v4313
      %4333 = vmatprep.subr.bf16.mxu0 0
      %4334 = vmatpush1.bf16.msra.mxu0 %v4312
      %4335 = vmatprep.subr.bf16.mxu0 0
      %4336 = vmatpush1.bf16.msra.mxu0 %v4311
      %4337 = vmatprep.subr.bf16.mxu0 0
      %4338 = vmatpush1.bf16.msra.mxu0 %v4310
      %4339 = vmatprep.subr.bf16.mxu0 0
      %4340 = vmatpush1.bf16.msra.mxu0 %v4309
      %4341 = vmatprep.subr.bf16.mxu0 0
      %4342 = vmatpush2.bf16.msra.mxu0 0
      %4343 = vmatprep.subr.bf16.mxu0 0
      %4344 = vmatpush2.bf16.msra.mxu0 0
      %4345 = vmatprep.subr.bf16.mxu0 0
      %4346 = vmatpush2.bf16.msra.mxu0 0
      %4347 = vmatprep.subr.bf16.mxu0 0
      %4348 = vmatpush2.bf16.msra.mxu0 0
      %4349 = vmatprep.subr.bf16.mxu0 0
      %4350 = vmatpush2.bf16.msra.mxu0 0
      %4351 = vmatprep.subr.bf16.mxu0 0
      %4352 = vmatpush2.bf16.msra.mxu0 0
      %4353 = vmatprep.subr.bf16.mxu0 0
      %4354 = vmatpush2.bf16.msra.mxu0 0
      %4355 = vmatprep.subr.bf16.mxu0 0
      %4356 = vmatpush2.bf16.msra.mxu0 0
      %4357 = vmatprep.mubr.bf16.mxu0 0
      %4358 = vmatmul.mubr.bf16.gmra.mxu0 %v4245
      %v4359 = vpop.f32.mrf.mxu0
      %v4360 = vadd.f32 0.0, %v4359
      %v4361 = vpop.f32.mrf.mxu0
      %v4362 = vpop.f32.mrf.mxu0
      %v4363 = vadd.f32 0.0, %v4362
      %v4364 = vpop.f32.mrf.mxu0
      %4365 = vmatprep.mubr.bf16.mxu0 0
      %4366 = vmatmul.mubr.bf16.gmra.mxu0 %v4246
      %v4367 = vpop.f32.mrf.mxu0
      %v4368 = vadd.f32 0.0, %v4367
      %v4369 = vpop.f32.mrf.mxu0
      %v4370 = vpop.f32.mrf.mxu0
      %v4371 = vadd.f32 0.0, %v4370
      %v4372 = vpop.f32.mrf.mxu0
      %4373 = vmatprep.mubr.bf16.mxu0 0
      %4374 = vmatmul.mubr.bf16.gmra.mxu0 %v4247
      %v4375 = vpop.f32.mrf.mxu0
      %v4376 = vadd.f32 0.0, %v4375
      %v4377 = vpop.f32.mrf.mxu0
      %v4378 = vpop.f32.mrf.mxu0
      %v4379 = vadd.f32 0.0, %v4378
      %v4380 = vpop.f32.mrf.mxu0
      %4381 = vmatprep.mubr.bf16.mxu0 0
      %4382 = vmatmul.mubr.bf16.gmra.mxu0 %v4248
      %v4383 = vpop.f32.mrf.mxu0
      %v4384 = vadd.f32 0.0, %v4383
      %v4385 = vpop.f32.mrf.mxu0
      %v4386 = vpop.f32.mrf.mxu0
      %v4387 = vadd.f32 0.0, %v4386
      %v4388 = vpop.f32.mrf.mxu0
      %4389 = vmatprep.mubr.bf16.mxu0 0
      %4390 = vmatmul.mubr.bf16.gmra.mxu0 %v4249
      %v4391 = vpop.f32.mrf.mxu0
      %v4392 = vadd.f32 0.0, %v4391
      %v4393 = vpop.f32.mrf.mxu0
      %v4394 = vpop.f32.mrf.mxu0
      %v4395 = vadd.f32 0.0, %v4394
      %v4396 = vpop.f32.mrf.mxu0
      %4397 = vmatprep.mubr.bf16.mxu0 0
      %4398 = vmatmul.mubr.bf16.gmra.mxu0 %v4250
      %v4399 = vpop.f32.mrf.mxu0
      %v4400 = vadd.f32 0.0, %v4399
      %v4401 = vpop.f32.mrf.mxu0
      %v4402 = vpop.f32.mrf.mxu0
      %v4403 = vadd.f32 0.0, %v4402
      %v4404 = vpop.f32.mrf.mxu0
      %4405 = vmatprep.mubr.bf16.mxu0 0
      %4406 = vmatmul.mubr.bf16.gmra.mxu0 %v4251
      %v4407 = vpop.f32.mrf.mxu0
      %v4408 = vadd.f32 0.0, %v4407
      %v4409 = vpop.f32.mrf.mxu0
      %v4410 = vpop.f32.mrf.mxu0
      %v4411 = vadd.f32 0.0, %v4410
      %v4412 = vpop.f32.mrf.mxu0
      %4413 = vmatprep.mubr.bf16.mxu0 0
      %4414 = vmatmul.mubr.bf16.gmra.mxu0 %v4252
      %v4415 = vpop.f32.mrf.mxu0
      %v4416 = vadd.f32 0.0, %v4415
      %v4417 = vpop.f32.mrf.mxu0
      %v4418 = vpop.f32.mrf.mxu0
      %v4419 = vadd.f32 0.0, %v4418
      %v4420 = vpop.f32.mrf.mxu0
      %4421 = vmatprep.mubr.bf16.mxu0 0
      %4422 = vmatmul.mubr.bf16.gmra.mxu0 %v4253
      %v4423 = vpop.f32.mrf.mxu0
      %v4424 = vadd.f32 0.0, %v4423
      %v4425 = vpop.f32.mrf.mxu0
      %v4426 = vpop.f32.mrf.mxu0
      %v4427 = vadd.f32 0.0, %v4426
      %v4428 = vpop.f32.mrf.mxu0
      %4429 = vmatprep.mubr.bf16.mxu0 0
      %4430 = vmatmul.mubr.bf16.gmra.mxu0 %v4254
      %v4431 = vpop.f32.mrf.mxu0
      %v4432 = vadd.f32 0.0, %v4431
      %v4433 = vpop.f32.mrf.mxu0
      %v4434 = vpop.f32.mrf.mxu0
      %v4435 = vadd.f32 0.0, %v4434
      %v4436 = vpop.f32.mrf.mxu0
      %4437 = vmatprep.mubr.bf16.mxu0 0
      %4438 = vmatmul.mubr.bf16.gmra.mxu0 %v4255
      %v4439 = vpop.f32.mrf.mxu0
      %v4440 = vadd.f32 0.0, %v4439
      %v4441 = vpop.f32.mrf.mxu0
      %v4442 = vpop.f32.mrf.mxu0
      %v4443 = vadd.f32 0.0, %v4442
      %v4444 = vpop.f32.mrf.mxu0
      %4445 = vmatprep.mubr.bf16.mxu0 0
      %4446 = vmatmul.mubr.bf16.gmra.mxu0 %v4256
      %v4447 = vpop.f32.mrf.mxu0
      %v4448 = vadd.f32 0.0, %v4447
      %v4449 = vpop.f32.mrf.mxu0
      %v4450 = vpop.f32.mrf.mxu0
      %v4451 = vadd.f32 0.0, %v4450
      %v4452 = vpop.f32.mrf.mxu0
      %4453 = vmatprep.mubr.bf16.mxu0 0
      %4454 = vmatmul.mubr.bf16.gmra.mxu0 %v4257
      %v4455 = vpop.f32.mrf.mxu0
      %v4456 = vadd.f32 0.0, %v4455
      %v4457 = vpop.f32.mrf.mxu0
      %v4458 = vpop.f32.mrf.mxu0
      %v4459 = vadd.f32 0.0, %v4458
      %v4460 = vpop.f32.mrf.mxu0
      %4461 = vmatprep.mubr.bf16.mxu0 0
      %4462 = vmatmul.mubr.bf16.gmra.mxu0 %v4258
      %v4463 = vpop.f32.mrf.mxu0
      %v4464 = vadd.f32 0.0, %v4463
      %v4465 = vpop.f32.mrf.mxu0
      %v4466 = vpop.f32.mrf.mxu0
      %v4467 = vadd.f32 0.0, %v4466
      %v4468 = vpop.f32.mrf.mxu0
      %4469 = vmatprep.mubr.bf16.mxu0 0
      %4470 = vmatmul.mubr.bf16.gmra.mxu0 %v4259
      %v4471 = vpop.f32.mrf.mxu0
      %v4472 = vadd.f32 0.0, %v4471
      %v4473 = vpop.f32.mrf.mxu0
      %v4474 = vpop.f32.mrf.mxu0
      %v4475 = vadd.f32 0.0, %v4474
      %v4476 = vpop.f32.mrf.mxu0
      %4477 = vmatprep.mubr.bf16.mxu0 0
      %4478 = vmatmul.mubr.bf16.gmra.mxu0 %v4260
      %v4479 = vpop.f32.mrf.mxu0
      %v4480 = vadd.f32 0.0, %v4479
      %v4481 = vpop.f32.mrf.mxu0
      %v4482 = vpop.f32.mrf.mxu0
      %v4483 = vadd.f32 0.0, %v4482
      %v4484 = vpop.f32.mrf.mxu0
      %4485 = vdwg.mxu0
      %v4486 = vadd.f32 %v3732, %v4360
      %v4487 = vadd.f32 %v3733, %v4363
      %v4488 = vadd.f32 %v3734, %v4368
      %v4489 = vadd.f32 %v3735, %v4371
      %v4490 = vadd.f32 %v3736, %v4376
      %v4491 = vadd.f32 %v3737, %v4379
      %v4492 = vadd.f32 %v3738, %v4384
      %v4493 = vadd.f32 %v3739, %v4387
      %v4494 = vadd.f32 %v3740, %v4392
      %v4495 = vadd.f32 %v3741, %v4395
      %v4496 = vadd.f32 %v3742, %v4400
      %v4497 = vadd.f32 %v3743, %v4403
      %v4498 = vadd.f32 %v3744, %v4408
      %v4499 = vadd.f32 %v3745, %v4411
      %v4500 = vadd.f32 %v3746, %v4416
      %v4501 = vadd.f32 %v3747, %v4419
      %v4502 = vadd.f32 %v3748, %v4424
      %v4503 = vadd.f32 %v3749, %v4427
      %v4504 = vadd.f32 %v3750, %v4432
      %v4505 = vadd.f32 %v3751, %v4435
      %v4506 = vadd.f32 %v3752, %v4440
      %v4507 = vadd.f32 %v3753, %v4443
      %v4508 = vadd.f32 %v3754, %v4448
      %v4509 = vadd.f32 %v3755, %v4451
      %v4510 = vadd.f32 %v3756, %v4456
      %v4511 = vadd.f32 %v3757, %v4459
      %v4512 = vadd.f32 %v3758, %v4464
      %v4513 = vadd.f32 %v3759, %v4467
      %v4514 = vadd.f32 %v3760, %v4472
      %v4515 = vadd.f32 %v3761, %v4475
      %v4516 = vadd.f32 %v3762, %v4480
      %v4517 = vadd.f32 %v3763, %v4483
      %v4518 = vld [vmem:[%s3377] sm:$0xe]
      %v4519 = vld [vmem:[%s3377 + $0xc] sm:$0xe]
      %v4520 = vld [vmem:[%s3377 + $0x18] sm:$0xe]
      %v4521 = vld [vmem:[%s3377 + $0x24] sm:$0xe]
      %v4522 = vld [vmem:[%s3377 + $0x30] sm:$0xe]
      %v4523 = vld [vmem:[%s3377 + $0x3c] sm:$0xe]
      %v4524 = vld [vmem:[%s3377 + $0x48] sm:$0xe]
      %v4525 = vld [vmem:[%s3377 + $0x54] sm:$0xe]
      %v4526 = vld [vmem:[%s3377 + $0x60] sm:$0xe]
      %v4527 = vld [vmem:[%s3377 + $0x6c] sm:$0xe]
      %v4528 = vld [vmem:[%s3377 + $0x78] sm:$0xe]
      %v4529 = vld [vmem:[%s3377 + $0x84] sm:$0xe]
      %v4530 = vld [vmem:[%s3377 + $0x90] sm:$0xe]
      %v4531 = vld [vmem:[%s3377 + $0x9c] sm:$0xe]
      %v4532 = vld [vmem:[%s3377 + $0xa8] sm:$0xe]
      %v4533 = vld [vmem:[%s3377 + $0xb4] sm:$0xe]
      %v4582 = vrot.slane %v4518, 5
      %v4583 = vrot.slane %v4582, 4
      %v4584 = vrot.slane %v3765, 5
      %v4585 = vsel %vm1297, %v4583, %v4584
      %v4586 = vrot.slane %v4584, 4
      %v4587 = vrot.slane %v3766, 5
      %v4588 = vsel %vm1297, %v4586, %v4587
      %v4589 = vrot.slane %v4519, 5
      %v4590 = vrot.slane %v4589, 4
      %v4591 = vrot.slane %v3768, 5
      %v4592 = vsel %vm1297, %v4590, %v4591
      %v4593 = vrot.slane %v4591, 4
      %v4594 = vrot.slane %v3769, 5
      %v4595 = vsel %vm1297, %v4593, %v4594
      %v4596 = vrot.slane %v4520, 5
      %v4597 = vrot.slane %v4596, 4
      %v4598 = vrot.slane %v3771, 5
      %v4599 = vsel %vm1297, %v4597, %v4598
      %v4600 = vrot.slane %v4598, 4
      %v4601 = vrot.slane %v3772, 5
      %v4602 = vsel %vm1297, %v4600, %v4601
      %v4603 = vrot.slane %v4521, 5
      %v4604 = vrot.slane %v4603, 4
      %v4605 = vrot.slane %v3774, 5
      %v4606 = vsel %vm1297, %v4604, %v4605
      %v4607 = vrot.slane %v4605, 4
      %v4608 = vrot.slane %v3775, 5
      %v4609 = vsel %vm1297, %v4607, %v4608
      %v4610 = vrot.slane %v4522, 5
      %v4611 = vrot.slane %v4610, 4
      %v4612 = vrot.slane %v3777, 5
      %v4613 = vsel %vm1297, %v4611, %v4612
      %v4614 = vrot.slane %v4612, 4
      %v4615 = vrot.slane %v3778, 5
      %v4616 = vsel %vm1297, %v4614, %v4615
      %v4617 = vrot.slane %v4523, 5
      %v4618 = vrot.slane %v4617, 4
      %v4619 = vrot.slane %v3780, 5
      %v4620 = vsel %vm1297, %v4618, %v4619
      %v4621 = vrot.slane %v4619, 4
      %v4622 = vrot.slane %v3781, 5
      %v4623 = vsel %vm1297, %v4621, %v4622
      %v4624 = vrot.slane %v4524, 5
      %v4625 = vrot.slane %v4624, 4
      %v4626 = vrot.slane %v3783, 5
      %v4627 = vsel %vm1297, %v4625, %v4626
      %v4628 = vrot.slane %v4626, 4
      %v4629 = vrot.slane %v3784, 5
      %v4630 = vsel %vm1297, %v4628, %v4629
      %v4631 = vrot.slane %v4525, 5
      %v4632 = vrot.slane %v4631, 4
      %v4633 = vrot.slane %v3786, 5
      %v4634 = vsel %vm1297, %v4632, %v4633
      %v4635 = vrot.slane %v4633, 4
      %v4636 = vrot.slane %v3787, 5
      %v4637 = vsel %vm1297, %v4635, %v4636
      %v4638 = vrot.slane %v4526, 5
      %v4639 = vrot.slane %v4638, 4
      %v4640 = vrot.slane %v3789, 5
      %v4641 = vsel %vm1297, %v4639, %v4640
      %v4642 = vrot.slane %v4640, 4
      %v4643 = vrot.slane %v3790, 5
      %v4644 = vsel %vm1297, %v4642, %v4643
      %v4645 = vrot.slane %v4527, 5
      %v4646 = vrot.slane %v4645, 4
      %v4647 = vrot.slane %v3792, 5
      %v4648 = vsel %vm1297, %v4646, %v4647
      %v4649 = vrot.slane %v4647, 4
      %v4650 = vrot.slane %v3793, 5
      %v4651 = vsel %vm1297, %v4649, %v4650
      %v4652 = vrot.slane %v4528, 5
      %v4653 = vrot.slane %v4652, 4
      %v4654 = vrot.slane %v3795, 5
      %v4655 = vsel %vm1297, %v4653, %v4654
      %v4656 = vrot.slane %v4654, 4
      %v4657 = vrot.slane %v3796, 5
      %v4658 = vsel %vm1297, %v4656, %v4657
      %v4659 = vrot.slane %v4529, 5
      %v4660 = vrot.slane %v4659, 4
      %v4661 = vrot.slane %v3798, 5
      %v4662 = vsel %vm1297, %v4660, %v4661
      %v4663 = vrot.slane %v4661, 4
      %v4664 = vrot.slane %v3799, 5
      %v4665 = vsel %vm1297, %v4663, %v4664
      %v4666 = vrot.slane %v4530, 5
      %v4667 = vrot.slane %v4666, 4
      %v4668 = vrot.slane %v3801, 5
      %v4669 = vsel %vm1297, %v4667, %v4668
      %v4670 = vrot.slane %v4668, 4
      %v4671 = vrot.slane %v3802, 5
      %v4672 = vsel %vm1297, %v4670, %v4671
      %v4673 = vrot.slane %v4531, 5
      %v4674 = vrot.slane %v4673, 4
      %v4675 = vrot.slane %v3804, 5
      %v4676 = vsel %vm1297, %v4674, %v4675
      %v4677 = vrot.slane %v4675, 4
      %v4678 = vrot.slane %v3805, 5
      %v4679 = vsel %vm1297, %v4677, %v4678
      %v4680 = vrot.slane %v4532, 5
      %v4681 = vrot.slane %v4680, 4
      %v4682 = vrot.slane %v3807, 5
      %v4683 = vsel %vm1297, %v4681, %v4682
      %v4684 = vrot.slane %v4682, 4
      %v4685 = vrot.slane %v3808, 5
      %v4686 = vsel %vm1297, %v4684, %v4685
      %v4687 = vrot.slane %v4533, 5
      %v4688 = vrot.slane %v4687, 4
      %v4689 = vrot.slane %v3810, 5
      %v4690 = vsel %vm1297, %v4688, %v4689
      %v4691 = vrot.slane %v4689, 4
      %v4692 = vrot.slane %v3811, 5
      %v4693 = vsel %vm1297, %v4691, %v4692
      %s4694 = scalar_lea.vmem %s1, 512
      %v4695 = vld [vmem:[%s4694] sm:$0xf]
      %v4696 = vld [vmem:[%s4694 + $0x4] sm:$0xf]
      %v4697 = vld [vmem:[%s4694 + $0x8] sm:$0xf]
      %v4698 = vld [vmem:[%s4694 + $0xc] sm:$0xf]
      %v4699 = vld [vmem:[%s4694 + $0x10] sm:$0xf]
      %v4700 = vld [vmem:[%s4694 + $0x14] sm:$0xf]
      %v4701 = vld [vmem:[%s4694 + $0x18] sm:$0xf]
      %v4702 = vld [vmem:[%s4694 + $0x1c] sm:$0xf]
      %v4703 = vld [vmem:[%s4694 + $0x20] sm:$0xf]
      %v4704 = vld [vmem:[%s4694 + $0x24] sm:$0xf]
      %v4705 = vld [vmem:[%s4694 + $0x28] sm:$0xf]
      %v4706 = vld [vmem:[%s4694 + $0x2c] sm:$0xf]
      %v4707 = vld [vmem:[%s4694 + $0x30] sm:$0xf]
      %v4708 = vld [vmem:[%s4694 + $0x34] sm:$0xf]
      %v4709 = vld [vmem:[%s4694 + $0x38] sm:$0xf]
      %v4710 = vld [vmem:[%s4694 + $0x3c] sm:$0xf]
      %v4711 = vunpack.c.l.b16 %v4585
      %v4712 = vunpack.c.l.b16 %v4588
      %v4713 = vunpack.c.l.b16 %v4592
      %v4714 = vunpack.c.l.b16 %v4595
      %v4715 = vunpack.c.l.b16 %v4599
      %v4716 = vunpack.c.l.b16 %v4602
      %v4717 = vunpack.c.l.b16 %v4606
      %v4718 = vunpack.c.l.b16 %v4609
      %v4719 = vunpack.c.l.b16 %v4613
      %v4720 = vunpack.c.l.b16 %v4616
      %v4721 = vunpack.c.l.b16 %v4620
      %v4722 = vunpack.c.l.b16 %v4623
      %v4723 = vunpack.c.l.b16 %v4627
      %v4724 = vunpack.c.l.b16 %v4630
      %v4725 = vunpack.c.l.b16 %v4634
      %v4726 = vunpack.c.l.b16 %v4637
      %v4727 = vunpack.c.l.b16 %v4641
      %v4728 = vunpack.c.l.b16 %v4644
      %v4729 = vunpack.c.l.b16 %v4648
      %v4730 = vunpack.c.l.b16 %v4651
      %v4731 = vunpack.c.l.b16 %v4655
      %v4732 = vunpack.c.l.b16 %v4658
      %v4733 = vunpack.c.l.b16 %v4662
      %v4734 = vunpack.c.l.b16 %v4665
      %v4735 = vunpack.c.l.b16 %v4669
      %v4736 = vunpack.c.l.b16 %v4672
      %v4737 = vunpack.c.l.b16 %v4676
      %v4738 = vunpack.c.l.b16 %v4679
      %v4739 = vunpack.c.l.b16 %v4683
      %v4740 = vunpack.c.l.b16 %v4686
      %v4741 = vunpack.c.l.b16 %v4690
      %v4742 = vunpack.c.l.b16 %v4693
      %v4743 = vpack.c.b16 %v4712, %v4711
      %v4744 = vpack.c.b16 %v4714, %v4713
      %v4745 = vpack.c.b16 %v4716, %v4715
      %v4746 = vpack.c.b16 %v4718, %v4717
      %v4747 = vpack.c.b16 %v4720, %v4719
      %v4748 = vpack.c.b16 %v4722, %v4721
      %v4749 = vpack.c.b16 %v4724, %v4723
      %v4750 = vpack.c.b16 %v4726, %v4725
      %v4751 = vpack.c.b16 %v4728, %v4727
      %v4752 = vpack.c.b16 %v4730, %v4729
      %v4753 = vpack.c.b16 %v4732, %v4731
      %v4754 = vpack.c.b16 %v4734, %v4733
      %v4755 = vpack.c.b16 %v4736, %v4735
      %v4756 = vpack.c.b16 %v4738, %v4737
      %v4757 = vpack.c.b16 %v4740, %v4739
      %v4758 = vpack.c.b16 %v4742, %v4741
      %v4791 = vunpack.c.l.b16 %v4695
      %v4792 = vunpack.c.l.b16 %v4696
      %v4793 = vunpack.c.l.b16 %v4697
      %v4794 = vunpack.c.l.b16 %v4698
      %v4795 = vunpack.c.l.b16 %v4699
      %v4796 = vunpack.c.l.b16 %v4700
      %v4797 = vunpack.c.l.b16 %v4701
      %v4798 = vunpack.c.l.b16 %v4702
      %v4799 = vunpack.c.l.b16 %v4703
      %v4800 = vunpack.c.l.b16 %v4704
      %v4801 = vunpack.c.l.b16 %v4705
      %v4802 = vunpack.c.l.b16 %v4706
      %v4803 = vunpack.c.l.b16 %v4707
      %v4804 = vunpack.c.l.b16 %v4708
      %v4805 = vunpack.c.l.b16 %v4709
      %v4806 = vunpack.c.l.b16 %v4710
      %v4807 = vpack.c.b16 %v4792, %v4791
      %v4808 = vpack.c.b16 %v4794, %v4793
      %v4809 = vpack.c.b16 %v4796, %v4795
      %v4810 = vpack.c.b16 %v4798, %v4797
      %v4811 = vpack.c.b16 %v4800, %v4799
      %v4812 = vpack.c.b16 %v4802, %v4801
      %v4813 = vpack.c.b16 %v4804, %v4803
      %v4814 = vpack.c.b16 %v4806, %v4805
      %4823 = vmatprep.subr.bf16.mxu0 0
      %4824 = vmatpush1.bf16.msra.mxu0 %v4814
      %4825 = vmatprep.subr.bf16.mxu0 0
      %4826 = vmatpush1.bf16.msra.mxu0 %v4813
      %4827 = vmatprep.subr.bf16.mxu0 0
      %4828 = vmatpush1.bf16.msra.mxu0 %v4812
      %4829 = vmatprep.subr.bf16.mxu0 0
      %4830 = vmatpush1.bf16.msra.mxu0 %v4811
      %4831 = vmatprep.subr.bf16.mxu0 0
      %4832 = vmatpush1.bf16.msra.mxu0 %v4810
      %4833 = vmatprep.subr.bf16.mxu0 0
      %4834 = vmatpush1.bf16.msra.mxu0 %v4809
      %4835 = vmatprep.subr.bf16.mxu0 0
      %4836 = vmatpush1.bf16.msra.mxu0 %v4808
      %4837 = vmatprep.subr.bf16.mxu0 0
      %4838 = vmatpush1.bf16.msra.mxu0 %v4807
      %4839 = vmatprep.subr.bf16.mxu0 0
      %4840 = vmatpush2.bf16.msra.mxu0 0
      %4841 = vmatprep.subr.bf16.mxu0 0
      %4842 = vmatpush2.bf16.msra.mxu0 0
      %4843 = vmatprep.subr.bf16.mxu0 0
      %4844 = vmatpush2.bf16.msra.mxu0 0
      %4845 = vmatprep.subr.bf16.mxu0 0
      %4846 = vmatpush2.bf16.msra.mxu0 0
      %4847 = vmatprep.subr.bf16.mxu0 0
      %4848 = vmatpush2.bf16.msra.mxu0 0
      %4849 = vmatprep.subr.bf16.mxu0 0
      %4850 = vmatpush2.bf16.msra.mxu0 0
      %4851 = vmatprep.subr.bf16.mxu0 0
      %4852 = vmatpush2.bf16.msra.mxu0 0
      %4853 = vmatprep.subr.bf16.mxu0 0
      %4854 = vmatpush2.bf16.msra.mxu0 0
      %4855 = vmatprep.mubr.bf16.mxu0 0
      %4856 = vmatmul.mubr.bf16.gmra.mxu0 %v4743
      %v4857 = vpop.f32.mrf.mxu0
      %v4858 = vadd.f32 0.0, %v4857
      %v4859 = vpop.f32.mrf.mxu0
      %v4860 = vpop.f32.mrf.mxu0
      %v4861 = vadd.f32 0.0, %v4860
      %v4862 = vpop.f32.mrf.mxu0
      %4863 = vmatprep.mubr.bf16.mxu0 0
      %4864 = vmatmul.mubr.bf16.gmra.mxu0 %v4744
      %v4865 = vpop.f32.mrf.mxu0
      %v4866 = vadd.f32 0.0, %v4865
      %v4867 = vpop.f32.mrf.mxu0
      %v4868 = vpop.f32.mrf.mxu0
      %v4869 = vadd.f32 0.0, %v4868
      %v4870 = vpop.f32.mrf.mxu0
      %4871 = vmatprep.mubr.bf16.mxu0 0
      %4872 = vmatmul.mubr.bf16.gmra.mxu0 %v4745
      %v4873 = vpop.f32.mrf.mxu0
      %v4874 = vadd.f32 0.0, %v4873
      %v4875 = vpop.f32.mrf.mxu0
      %v4876 = vpop.f32.mrf.mxu0
      %v4877 = vadd.f32 0.0, %v4876
      %v4878 = vpop.f32.mrf.mxu0
      %4879 = vmatprep.mubr.bf16.mxu0 0
      %4880 = vmatmul.mubr.bf16.gmra.mxu0 %v4746
      %v4881 = vpop.f32.mrf.mxu0
      %v4882 = vadd.f32 0.0, %v4881
      %v4883 = vpop.f32.mrf.mxu0
      %v4884 = vpop.f32.mrf.mxu0
      %v4885 = vadd.f32 0.0, %v4884
      %v4886 = vpop.f32.mrf.mxu0
      %4887 = vmatprep.mubr.bf16.mxu0 0
      %4888 = vmatmul.mubr.bf16.gmra.mxu0 %v4747
      %v4889 = vpop.f32.mrf.mxu0
      %v4890 = vadd.f32 0.0, %v4889
      %v4891 = vpop.f32.mrf.mxu0
      %v4892 = vpop.f32.mrf.mxu0
      %v4893 = vadd.f32 0.0, %v4892
      %v4894 = vpop.f32.mrf.mxu0
      %4895 = vmatprep.mubr.bf16.mxu0 0
      %4896 = vmatmul.mubr.bf16.gmra.mxu0 %v4748
      %v4897 = vpop.f32.mrf.mxu0
      %v4898 = vadd.f32 0.0, %v4897
      %v4899 = vpop.f32.mrf.mxu0
      %v4900 = vpop.f32.mrf.mxu0
      %v4901 = vadd.f32 0.0, %v4900
      %v4902 = vpop.f32.mrf.mxu0
      %4903 = vmatprep.mubr.bf16.mxu0 0
      %4904 = vmatmul.mubr.bf16.gmra.mxu0 %v4749
      %v4905 = vpop.f32.mrf.mxu0
      %v4906 = vadd.f32 0.0, %v4905
      %v4907 = vpop.f32.mrf.mxu0
      %v4908 = vpop.f32.mrf.mxu0
      %v4909 = vadd.f32 0.0, %v4908
      %v4910 = vpop.f32.mrf.mxu0
      %4911 = vmatprep.mubr.bf16.mxu0 0
      %4912 = vmatmul.mubr.bf16.gmra.mxu0 %v4750
      %v4913 = vpop.f32.mrf.mxu0
      %v4914 = vadd.f32 0.0, %v4913
      %v4915 = vpop.f32.mrf.mxu0
      %v4916 = vpop.f32.mrf.mxu0
      %v4917 = vadd.f32 0.0, %v4916
      %v4918 = vpop.f32.mrf.mxu0
      %4919 = vmatprep.mubr.bf16.mxu0 0
      %4920 = vmatmul.mubr.bf16.gmra.mxu0 %v4751
      %v4921 = vpop.f32.mrf.mxu0
      %v4922 = vadd.f32 0.0, %v4921
      %v4923 = vpop.f32.mrf.mxu0
      %v4924 = vpop.f32.mrf.mxu0
      %v4925 = vadd.f32 0.0, %v4924
      %v4926 = vpop.f32.mrf.mxu0
      %4927 = vmatprep.mubr.bf16.mxu0 0
      %4928 = vmatmul.mubr.bf16.gmra.mxu0 %v4752
      %v4929 = vpop.f32.mrf.mxu0
      %v4930 = vadd.f32 0.0, %v4929
      %v4931 = vpop.f32.mrf.mxu0
      %v4932 = vpop.f32.mrf.mxu0
      %v4933 = vadd.f32 0.0, %v4932
      %v4934 = vpop.f32.mrf.mxu0
      %4935 = vmatprep.mubr.bf16.mxu0 0
      %4936 = vmatmul.mubr.bf16.gmra.mxu0 %v4753
      %v4937 = vpop.f32.mrf.mxu0
      %v4938 = vadd.f32 0.0, %v4937
      %v4939 = vpop.f32.mrf.mxu0
      %v4940 = vpop.f32.mrf.mxu0
      %v4941 = vadd.f32 0.0, %v4940
      %v4942 = vpop.f32.mrf.mxu0
      %4943 = vmatprep.mubr.bf16.mxu0 0
      %4944 = vmatmul.mubr.bf16.gmra.mxu0 %v4754
      %v4945 = vpop.f32.mrf.mxu0
      %v4946 = vadd.f32 0.0, %v4945
      %v4947 = vpop.f32.mrf.mxu0
      %v4948 = vpop.f32.mrf.mxu0
      %v4949 = vadd.f32 0.0, %v4948
      %v4950 = vpop.f32.mrf.mxu0
      %4951 = vmatprep.mubr.bf16.mxu0 0
      %4952 = vmatmul.mubr.bf16.gmra.mxu0 %v4755
      %v4953 = vpop.f32.mrf.mxu0
      %v4954 = vadd.f32 0.0, %v4953
      %v4955 = vpop.f32.mrf.mxu0
      %v4956 = vpop.f32.mrf.mxu0
      %v4957 = vadd.f32 0.0, %v4956
      %v4958 = vpop.f32.mrf.mxu0
      %4959 = vmatprep.mubr.bf16.mxu0 0
      %4960 = vmatmul.mubr.bf16.gmra.mxu0 %v4756
      %v4961 = vpop.f32.mrf.mxu0
      %v4962 = vadd.f32 0.0, %v4961
      %v4963 = vpop.f32.mrf.mxu0
      %v4964 = vpop.f32.mrf.mxu0
      %v4965 = vadd.f32 0.0, %v4964
      %v4966 = vpop.f32.mrf.mxu0
      %4967 = vmatprep.mubr.bf16.mxu0 0
      %4968 = vmatmul.mubr.bf16.gmra.mxu0 %v4757
      %v4969 = vpop.f32.mrf.mxu0
      %v4970 = vadd.f32 0.0, %v4969
      %v4971 = vpop.f32.mrf.mxu0
      %v4972 = vpop.f32.mrf.mxu0
      %v4973 = vadd.f32 0.0, %v4972
      %v4974 = vpop.f32.mrf.mxu0
      %4975 = vmatprep.mubr.bf16.mxu0 0
      %4976 = vmatmul.mubr.bf16.gmra.mxu0 %v4758
      %v4977 = vpop.f32.mrf.mxu0
      %v4978 = vadd.f32 0.0, %v4977
      %v4979 = vpop.f32.mrf.mxu0
      %v4980 = vpop.f32.mrf.mxu0
      %v4981 = vadd.f32 0.0, %v4980
      %v4982 = vpop.f32.mrf.mxu0
      %4983 = vdwg.mxu0
      %v4984 = vadd.f32 %v4486, %v4858
      %v4985 = vadd.f32 %v4487, %v4861
      %v4986 = vadd.f32 %v4488, %v4866
      %v4987 = vadd.f32 %v4489, %v4869
      %v4988 = vadd.f32 %v4490, %v4874
      %v4989 = vadd.f32 %v4491, %v4877
      %v4990 = vadd.f32 %v4492, %v4882
      %v4991 = vadd.f32 %v4493, %v4885
      %v4992 = vadd.f32 %v4494, %v4890
      %v4993 = vadd.f32 %v4495, %v4893
      %v4994 = vadd.f32 %v4496, %v4898
      %v4995 = vadd.f32 %v4497, %v4901
      %v4996 = vadd.f32 %v4498, %v4906
      %v4997 = vadd.f32 %v4499, %v4909
      %v4998 = vadd.f32 %v4500, %v4914
      %v4999 = vadd.f32 %v4501, %v4917
      %v5000 = vadd.f32 %v4502, %v4922
      %v5001 = vadd.f32 %v4503, %v4925
      %v5002 = vadd.f32 %v4504, %v4930
      %v5003 = vadd.f32 %v4505, %v4933
      %v5004 = vadd.f32 %v4506, %v4938
      %v5005 = vadd.f32 %v4507, %v4941
      %v5006 = vadd.f32 %v4508, %v4946
      %v5007 = vadd.f32 %v4509, %v4949
      %v5008 = vadd.f32 %v4510, %v4954
      %v5009 = vadd.f32 %v4511, %v4957
      %v5010 = vadd.f32 %v4512, %v4962
      %v5011 = vadd.f32 %v4513, %v4965
      %v5012 = vadd.f32 %v4514, %v4970
      %v5013 = vadd.f32 %v4515, %v4973
      %v5014 = vadd.f32 %v4516, %v4978
      %v5015 = vadd.f32 %v4517, %v4981
      %v5016 = vld [vmem:[%s2] sm:$0x1]
      %v5018 = vlaneseq
      %v5019 = vshrl.u32 %v5018, 7
      %v5020 = vsub.s32 0, %v5019
      %v5021 = vrot.slane %v5016, %v5020
      %v5023 = vadd.f32 %v4984, %v5021
      %v5024 = vadd.f32 %v4985, %v5021
      %v5025 = vadd.f32 %v4986, %v5021
      %v5026 = vadd.f32 %v4987, %v5021
      %v5027 = vadd.f32 %v4988, %v5021
      %v5028 = vadd.f32 %v4989, %v5021
      %v5029 = vadd.f32 %v4990, %v5021
      %v5030 = vadd.f32 %v4991, %v5021
      %v5031 = vadd.f32 %v4992, %v5021
      %v5032 = vadd.f32 %v4993, %v5021
      %v5033 = vadd.f32 %v4994, %v5021
      %v5034 = vadd.f32 %v4995, %v5021
      %v5035 = vadd.f32 %v4996, %v5021
      %v5036 = vadd.f32 %v4997, %v5021
      %v5037 = vadd.f32 %v4998, %v5021
      %v5038 = vadd.f32 %v4999, %v5021
      %v5039 = vadd.f32 %v5000, %v5021
      %v5040 = vadd.f32 %v5001, %v5021
      %v5041 = vadd.f32 %v5002, %v5021
      %v5042 = vadd.f32 %v5003, %v5021
      %v5043 = vadd.f32 %v5004, %v5021
      %v5044 = vadd.f32 %v5005, %v5021
      %v5045 = vadd.f32 %v5006, %v5021
      %v5046 = vadd.f32 %v5007, %v5021
      %v5047 = vadd.f32 %v5008, %v5021
      %v5048 = vadd.f32 %v5009, %v5021
      %v5049 = vadd.f32 %v5010, %v5021
      %v5050 = vadd.f32 %v5011, %v5021
      %v5051 = vadd.f32 %v5012, %v5021
      %v5052 = vadd.f32 %v5013, %v5021
      %v5053 = vadd.f32 %v5014, %v5021
      %v5054 = vadd.f32 %v5015, %v5021
      %v5055 = vmax.f32 %v5023, 0.0
      %v5056 = vmax.f32 %v5024, 0.0
      %v5057 = vmax.f32 %v5025, 0.0
      %v5058 = vmax.f32 %v5026, 0.0
      %v5059 = vmax.f32 %v5027, 0.0
      %v5060 = vmax.f32 %v5028, 0.0
      %v5061 = vmax.f32 %v5029, 0.0
      %v5062 = vmax.f32 %v5030, 0.0
      %v5063 = vmax.f32 %v5031, 0.0
      %v5064 = vmax.f32 %v5032, 0.0
      %v5065 = vmax.f32 %v5033, 0.0
      %v5066 = vmax.f32 %v5034, 0.0
      %v5067 = vmax.f32 %v5035, 0.0
      %v5068 = vmax.f32 %v5036, 0.0
      %v5069 = vmax.f32 %v5037, 0.0
      %v5070 = vmax.f32 %v5038, 0.0
      %v5071 = vmax.f32 %v5039, 0.0
      %v5072 = vmax.f32 %v5040, 0.0
      %v5073 = vmax.f32 %v5041, 0.0
      %v5074 = vmax.f32 %v5042, 0.0
      %v5075 = vmax.f32 %v5043, 0.0
      %v5076 = vmax.f32 %v5044, 0.0
      %v5077 = vmax.f32 %v5045, 0.0
      %v5078 = vmax.f32 %v5046, 0.0
      %v5079 = vmax.f32 %v5047, 0.0
      %v5080 = vmax.f32 %v5048, 0.0
      %v5081 = vmax.f32 %v5049, 0.0
      %v5082 = vmax.f32 %v5050, 0.0
      %v5083 = vmax.f32 %v5051, 0.0
      %v5084 = vmax.f32 %v5052, 0.0
      %v5085 = vmax.f32 %v5053, 0.0
      %v5086 = vmax.f32 %v5054, 0.0
      %v5087 = vpack.c.bf16 %v5056, %v5055
      %v5088 = vpack.c.bf16 %v5058, %v5057
      %v5089 = vpack.c.bf16 %v5060, %v5059
      %v5090 = vpack.c.bf16 %v5062, %v5061
      %v5091 = vpack.c.bf16 %v5064, %v5063
      %v5092 = vpack.c.bf16 %v5066, %v5065
      %v5093 = vpack.c.bf16 %v5068, %v5067
      %v5094 = vpack.c.bf16 %v5070, %v5069
      %v5095 = vpack.c.bf16 %v5072, %v5071
      %v5096 = vpack.c.bf16 %v5074, %v5073
      %v5097 = vpack.c.bf16 %v5076, %v5075
      %v5098 = vpack.c.bf16 %v5078, %v5077
      %v5099 = vpack.c.bf16 %v5080, %v5079
      %v5100 = vpack.c.bf16 %v5082, %v5081
      %v5101 = vpack.c.bf16 %v5084, %v5083
      %v5102 = vpack.c.bf16 %v5086, %v5085
      %v5119 = vunpack.c.l.b16 %v5087
      %v5120 = vunpack.c.h.b16 %v5087
      %v5121 = vunpack.c.l.b16 %v5088
      %v5122 = vunpack.c.h.b16 %v5088
      %v5123 = vunpack.c.l.b16 %v5089
      %v5124 = vunpack.c.h.b16 %v5089
      %v5125 = vunpack.c.l.b16 %v5090
      %v5126 = vunpack.c.h.b16 %v5090
      %v5127 = vunpack.c.l.b16 %v5091
      %v5128 = vunpack.c.h.b16 %v5091
      %v5129 = vunpack.c.l.b16 %v5092
      %v5130 = vunpack.c.h.b16 %v5092
      %v5131 = vunpack.c.l.b16 %v5093
      %v5132 = vunpack.c.h.b16 %v5093
      %v5133 = vunpack.c.l.b16 %v5094
      %v5134 = vunpack.c.h.b16 %v5094
      %v5135 = vunpack.c.l.b16 %v5095
      %v5136 = vunpack.c.h.b16 %v5095
      %v5137 = vunpack.c.l.b16 %v5096
      %v5138 = vunpack.c.h.b16 %v5096
      %v5139 = vunpack.c.l.b16 %v5097
      %v5140 = vunpack.c.h.b16 %v5097
      %v5141 = vunpack.c.l.b16 %v5098
      %v5142 = vunpack.c.h.b16 %v5098
      %v5143 = vunpack.c.l.b16 %v5099
      %v5144 = vunpack.c.h.b16 %v5099
      %v5145 = vunpack.c.l.b16 %v5100
      %v5146 = vunpack.c.h.b16 %v5100
      %v5147 = vunpack.c.l.b16 %v5101
      %v5148 = vunpack.c.h.b16 %v5101
      %v5149 = vunpack.c.l.b16 %v5102
      %v5150 = vunpack.c.h.b16 %v5102
      %v5151 = vpack.c.b16 %v5119, %v5119
      %v5152 = vpack.c.b16 %v5120, %v5120
      %v5153 = vpack.c.b16 %v5121, %v5121
      %v5154 = vpack.c.b16 %v5122, %v5122
      %v5155 = vpack.c.b16 %v5123, %v5123
      %v5156 = vpack.c.b16 %v5124, %v5124
      %v5157 = vpack.c.b16 %v5125, %v5125
      %v5158 = vpack.c.b16 %v5126, %v5126
      %v5159 = vpack.c.b16 %v5127, %v5127
      %v5160 = vpack.c.b16 %v5128, %v5128
      %v5161 = vpack.c.b16 %v5129, %v5129
      %v5162 = vpack.c.b16 %v5130, %v5130
      %v5163 = vpack.c.b16 %v5131, %v5131
      %v5164 = vpack.c.b16 %v5132, %v5132
      %v5165 = vpack.c.b16 %v5133, %v5133
      %v5166 = vpack.c.b16 %v5134, %v5134
      %v5167 = vpack.c.b16 %v5135, %v5135
      %v5168 = vpack.c.b16 %v5136, %v5136
      %v5169 = vpack.c.b16 %v5137, %v5137
      %v5170 = vpack.c.b16 %v5138, %v5138
      %v5171 = vpack.c.b16 %v5139, %v5139
      %v5172 = vpack.c.b16 %v5140, %v5140
      %v5173 = vpack.c.b16 %v5141, %v5141
      %v5174 = vpack.c.b16 %v5142, %v5142
      %v5175 = vpack.c.b16 %v5143, %v5143
      %v5176 = vpack.c.b16 %v5144, %v5144
      %v5177 = vpack.c.b16 %v5145, %v5145
      %v5178 = vpack.c.b16 %v5146, %v5146
      %v5179 = vpack.c.b16 %v5147, %v5147
      %v5180 = vpack.c.b16 %v5148, %v5148
      %v5181 = vpack.c.b16 %v5149, %v5149
      %v5182 = vpack.c.b16 %v5150, %v5150
      %5215 = vst [vmem:[%s194] sm:$0xf] %v5151
      %5216 = vst [vmem:[%s194 + $0x4] sm:$0xf] %v5152
      %5217 = vst [vmem:[%s194 + $0x8] sm:$0xf] %v5153
      %5218 = vst [vmem:[%s194 + $0xc] sm:$0xf] %v5154
      %5219 = vst [vmem:[%s194 + $0x10] sm:$0xf] %v5155
      %5220 = vst [vmem:[%s194 + $0x14] sm:$0xf] %v5156
      %5221 = vst [vmem:[%s194 + $0x18] sm:$0xf] %v5157
      %5222 = vst [vmem:[%s194 + $0x1c] sm:$0xf] %v5158
      %5223 = vst [vmem:[%s194 + $0x20] sm:$0xf] %v5159
      %5224 = vst [vmem:[%s194 + $0x24] sm:$0xf] %v5160
      %5225 = vst [vmem:[%s194 + $0x28] sm:$0xf] %v5161
      %5226 = vst [vmem:[%s194 + $0x2c] sm:$0xf] %v5162
      %5227 = vst [vmem:[%s194 + $0x30] sm:$0xf] %v5163
      %5228 = vst [vmem:[%s194 + $0x34] sm:$0xf] %v5164
      %5229 = vst [vmem:[%s194 + $0x38] sm:$0xf] %v5165
      %5230 = vst [vmem:[%s194 + $0x3c] sm:$0xf] %v5166
      %5231 = vst [vmem:[%s194 + $0x40] sm:$0xf] %v5167
      %5232 = vst [vmem:[%s194 + $0x44] sm:$0xf] %v5168
      %5233 = vst [vmem:[%s194 + $0x48] sm:$0xf] %v5169
      %5234 = vst [vmem:[%s194 + $0x4c] sm:$0xf] %v5170
      %5235 = vst [vmem:[%s194 + $0x50] sm:$0xf] %v5171
      %5236 = vst [vmem:[%s194 + $0x54] sm:$0xf] %v5172
      %5237 = vst [vmem:[%s194 + $0x58] sm:$0xf] %v5173
      %5238 = vst [vmem:[%s194 + $0x5c] sm:$0xf] %v5174
      %5239 = vst [vmem:[%s194 + $0x60] sm:$0xf] %v5175
      %5240 = vst [vmem:[%s194 + $0x64] sm:$0xf] %v5176
      %5241 = vst [vmem:[%s194 + $0x68] sm:$0xf] %v5177
      %5242 = vst [vmem:[%s194 + $0x6c] sm:$0xf] %v5178
      %5243 = vst [vmem:[%s194 + $0x70] sm:$0xf] %v5179
      %5244 = vst [vmem:[%s194 + $0x74] sm:$0xf] %v5180
      %5245 = vst [vmem:[%s194 + $0x78] sm:$0xf] %v5181
      %5246 = vst [vmem:[%s194 + $0x7c] sm:$0xf] %v5182
      %s5247 = smul.u32 16, %s19
      %p5248 = scmp.lt.s32.totalorder %s18, 1
      %s5249 = scalar_select %p5248, %s18, 1
      %p5250 = scmp.lt.s32.totalorder %s5247, 15
      %s5251 = scalar_select %p5250, %s5247, 15
      %s5252 = smul.addr %s5251, 2
      %s5253 = smul.addr %s5249, 32
      %s5254 = sadd.s32 %s5252, %s5253
      %s5255 = smul.addr %s5254, 4
      %s5256 = scalar_lea.vmem %s3, %s5255
      // Predicated region
      $region33: #{_lambda_.8} parent=31 // pred_check
        %p5257 = pneg %p114
      $region34: #{_lambda_.8} parent=31 // pred_check_branch
        %5259 = sbr.rel (%p5257) target = $region36
      $region35: #{_lambda_.8} parent=31 // pred_region
        %s5260 = smul.u32 16, %s19
      $region36: #{_lambda_.8} parent=31 // pred_fallthru
        _
    $region32: #{_lambda_.8} parent=5 // pred_fallthru
      _
    %p5261 = scmp.le.s32.totalorder 2, %s9
    // Predicated region
    $region37: #{_lambda_.8} parent=5 // pred_check
      %p5262 = pneg %p5261
    $region38: #{_lambda_.8} parent=5 // pred_check_branch
      %5264 = sbr.rel (%p5262) target = $region40
    $region39: #{_lambda_.8} parent=5 // pred_region
      %s5265 = ssub.s32 %s9, 2
      // Predicated region
      $region41: #{_lambda_.8} parent=39 // pred_check
        %p5266 = pneg %p120
      $region42: #{_lambda_.8} parent=39 // pred_check_branch
        %5268 = sbr.rel (%p5266) target = $region44
      $region43: #{_lambda_.8} parent=39 // pred_region
        %s5269 = smul.u32 16, %s21
        %p5270 = scmp.lt.s32.totalorder %s20, 1
        %s5271 = scalar_select %p5270, %s20, 1
        %p5272 = scmp.lt.s32.totalorder %s5269, 15
        %s5273 = scalar_select %p5272, %s5269, 15
        %s5274 = smul.addr %s5273, 2
        %s5275 = smul.addr %s5271, 32
        %s5276 = sadd.s32 %s5274, %s5275
        %s5277 = smul.addr %s5276, 4
        %s5278 = scalar_lea.vmem %s3, %s5277
      $region44: #{_lambda_.8} parent=39 // pred_fallthru
        _
    $region40: #{_lambda_.8} parent=5 // pred_fallthru
      _
  $region6: #{_lambda_.8} parent=0 // loop_footer
    %s13 = sadd.s32 1, %s9
  $region7: #{_lambda_.8} parent=0 // loop_footer_branch
    %8 = sbr.rel target = $region3
  $region8: #{_lambda_.8} parent=0 // loop_exit
    _

// kernel: _lambda_.13
$region0: #{_lambda_.13}
  #allocation0 [shape = 'u32[]', space=smem, size = 0x4, offset = 0x4, fixed_abs, tag = 'smem constant byte address 0x4 - core index']
  #allocation1 [shape = 'u32[144,128]{1,0:T(1,128)}', space=vmem, size = 0x12000, scoped, tag = 'internal scratch']
  %s0 = inlined_call_operand.vmem [shape: bf16[32,1152], index: 0, kind: input, shape index: {}]
  %s1 = inlined_call_operand.vmem [shape: bf16[1152,128], index: 1, kind: input, shape index: {}]
  %s2 = inlined_call_operand.vmem [shape: f32[1,128], index: 2, kind: input, shape index: {}]
  %s3 = inlined_call_operand.vmem [shape: bf16[32,128], index: 3, kind: output, shape index: {}]
  %s4 = sld [smem:[#allocation0]]
  $region22: #{_lambda_.13} parent=0
    _
  %s6 = ssub.s32 1, %s4
  %s7 = scalar_select 0, %s6, %s4
  // Predicated region
  $region2: #{_lambda_.13} parent=0 // pred_check
    _
  $region3: #{_lambda_.13} parent=0 // pred_check_branch
    %9 = sbr.rel (0) target = $region5
  $region4: #{_lambda_.13} parent=0 // pred_region
    _
  $region5: #{_lambda_.13} parent=0 // pred_fallthru
    _
  // Predicated region
  $region6: #{_lambda_.13} parent=0 // pred_check
    _
  $region7: #{_lambda_.13} parent=0 // pred_check_branch
    %11 = sbr.rel (0) target = $region9
  $region8: #{_lambda_.13} parent=0 // pred_region
    _
  $region9: #{_lambda_.13} parent=0 // pred_fallthru
    _
  // Predicated region
  $region10: #{_lambda_.13} parent=0 // pred_check
    _
  $region11: #{_lambda_.13} parent=0 // pred_check_branch
    %13 = sbr.rel (0) target = $region13
  $region12: #{_lambda_.13} parent=0 // pred_region
    _
  $region13: #{_lambda_.13} parent=0 // pred_fallthru
    _
  %v15 = vld [vmem:[%s0] sm:$0xff]
  %v16 = vld [vmem:[%s0 + $0x8] sm:$0xff]
  %v17 = vld [vmem:[%s0 + $0x10] sm:$0xff]
  %v18 = vld [vmem:[%s0 + $0x18] sm:$0xff]
  %v19 = vld [vmem:[%s0 + $0x20] sm:$0xf]
  %v20 = vld [vmem:[%s0 + $0x24] sm:$0xff]
  %v21 = vld [vmem:[%s0 + $0x2c] sm:$0xff]
  %v22 = vld [vmem:[%s0 + $0x34] sm:$0xff]
  %v23 = vld [vmem:[%s0 + $0x3c] sm:$0xff]
  %v24 = vld [vmem:[%s0 + $0x44] sm:$0xf]
  %v25 = vld [vmem:[%s0 + $0x48] sm:$0xff]
  %v26 = vld [vmem:[%s0 + $0x50] sm:$0xff]
  %v27 = vld [vmem:[%s0 + $0x58] sm:$0xff]
  %v28 = vld [vmem:[%s0 + $0x60] sm:$0xff]
  %v29 = vld [vmem:[%s0 + $0x68] sm:$0xf]
  %v30 = vld [vmem:[%s0 + $0x6c] sm:$0xff]
  %v31 = vld [vmem:[%s0 + $0x74] sm:$0xff]
  %v32 = vld [vmem:[%s0 + $0x7c] sm:$0xff]
  %v33 = vld [vmem:[%s0 + $0x84] sm:$0xff]
  %v34 = vld [vmem:[%s0 + $0x8c] sm:$0xf]
  %v35 = vld [vmem:[%s1] sm:$0xf]
  %v36 = vld [vmem:[%s1 + $0x4] sm:$0xf]
  %v37 = vld [vmem:[%s1 + $0x8] sm:$0xf]
  %v38 = vld [vmem:[%s1 + $0xc] sm:$0xf]
  %v39 = vld [vmem:[%s1 + $0x10] sm:$0xf]
  %v40 = vld [vmem:[%s1 + $0x14] sm:$0xf]
  %v41 = vld [vmem:[%s1 + $0x18] sm:$0xf]
  %v42 = vld [vmem:[%s1 + $0x1c] sm:$0xf]
  %v43 = vld [vmem:[%s1 + $0x20] sm:$0xf]
  %v44 = vld [vmem:[%s1 + $0x24] sm:$0xf]
  %v45 = vld [vmem:[%s1 + $0x28] sm:$0xf]
  %v46 = vld [vmem:[%s1 + $0x2c] sm:$0xf]
  %v47 = vld [vmem:[%s1 + $0x30] sm:$0xf]
  %v48 = vld [vmem:[%s1 + $0x34] sm:$0xf]
  %v49 = vld [vmem:[%s1 + $0x38] sm:$0xf]
  %v50 = vld [vmem:[%s1 + $0x3c] sm:$0xf]
  %v51 = vld [vmem:[%s1 + $0x40] sm:$0xf]
  %v52 = vld [vmem:[%s1 + $0x44] sm:$0xf]
  %v53 = vld [vmem:[%s1 + $0x48] sm:$0xf]
  %v54 = vld [vmem:[%s1 + $0x4c] sm:$0xf]
  %v55 = vld [vmem:[%s1 + $0x50] sm:$0xf]
  %v56 = vld [vmem:[%s1 + $0x54] sm:$0xf]
  %v57 = vld [vmem:[%s1 + $0x58] sm:$0xf]
  %v58 = vld [vmem:[%s1 + $0x5c] sm:$0xf]
  %v59 = vld [vmem:[%s1 + $0x60] sm:$0xf]
  %v60 = vld [vmem:[%s1 + $0x64] sm:$0xf]
  %v61 = vld [vmem:[%s1 + $0x68] sm:$0xf]
  %v62 = vld [vmem:[%s1 + $0x6c] sm:$0xf]
  %v63 = vld [vmem:[%s1 + $0x70] sm:$0xf]
  %v64 = vld [vmem:[%s1 + $0x74] sm:$0xf]
  %v65 = vld [vmem:[%s1 + $0x78] sm:$0xf]
  %v66 = vld [vmem:[%s1 + $0x7c] sm:$0xf]
  %v67 = vld [vmem:[%s1 + $0x80] sm:$0xf]
  %v68 = vld [vmem:[%s1 + $0x84] sm:$0xf]
  %v69 = vld [vmem:[%s1 + $0x88] sm:$0xf]
  %v70 = vld [vmem:[%s1 + $0x8c] sm:$0xf]
  %v71 = vld [vmem:[%s1 + $0x90] sm:$0xf]
  %v72 = vld [vmem:[%s1 + $0x94] sm:$0xf]
  %v73 = vld [vmem:[%s1 + $0x98] sm:$0xf]
  %v74 = vld [vmem:[%s1 + $0x9c] sm:$0xf]
  %v75 = vld [vmem:[%s1 + $0xa0] sm:$0xf]
  %v76 = vld [vmem:[%s1 + $0xa4] sm:$0xf]
  %v77 = vld [vmem:[%s1 + $0xa8] sm:$0xf]
  %v78 = vld [vmem:[%s1 + $0xac] sm:$0xf]
  %v79 = vld [vmem:[%s1 + $0xb0] sm:$0xf]
  %v80 = vld [vmem:[%s1 + $0xb4] sm:$0xf]
  %v81 = vld [vmem:[%s1 + $0xb8] sm:$0xf]
  %v82 = vld [vmem:[%s1 + $0xbc] sm:$0xf]
  %v83 = vld [vmem:[%s1 + $0xc0] sm:$0xf]
  %v84 = vld [vmem:[%s1 + $0xc4] sm:$0xf]
  %v85 = vld [vmem:[%s1 + $0xc8] sm:$0xf]
  %v86 = vld [vmem:[%s1 + $0xcc] sm:$0xf]
  %v87 = vld [vmem:[%s1 + $0xd0] sm:$0xf]
  %v88 = vld [vmem:[%s1 + $0xd4] sm:$0xf]
  %v89 = vld [vmem:[%s1 + $0xd8] sm:$0xf]
  %v90 = vld [vmem:[%s1 + $0xdc] sm:$0xf]
  %v91 = vld [vmem:[%s1 + $0xe0] sm:$0xf]
  %v92 = vld [vmem:[%s1 + $0xe4] sm:$0xf]
  %v93 = vld [vmem:[%s1 + $0xe8] sm:$0xf]
  %v94 = vld [vmem:[%s1 + $0xec] sm:$0xf]
  %v95 = vld [vmem:[%s1 + $0xf0] sm:$0xf]
  %v96 = vld [vmem:[%s1 + $0xf4] sm:$0xf]
  %v97 = vld [vmem:[%s1 + $0xf8] sm:$0xf]
  %v98 = vld [vmem:[%s1 + $0xfc] sm:$0xf]
  %v99 = vld [vmem:[%s1 + $0x100] sm:$0xf]
  %v100 = vld [vmem:[%s1 + $0x104] sm:$0xf]
  %v101 = vld [vmem:[%s1 + $0x108] sm:$0xf]
  %v102 = vld [vmem:[%s1 + $0x10c] sm:$0xf]
  %v103 = vld [vmem:[%s1 + $0x110] sm:$0xf]
  %v104 = vld [vmem:[%s1 + $0x114] sm:$0xf]
  %v105 = vld [vmem:[%s1 + $0x118] sm:$0xf]
  %v106 = vld [vmem:[%s1 + $0x11c] sm:$0xf]
  %v107 = vld [vmem:[%s1 + $0x120] sm:$0xf]
  %v108 = vld [vmem:[%s1 + $0x124] sm:$0xf]
  %v109 = vld [vmem:[%s1 + $0x128] sm:$0xf]
  %v110 = vld [vmem:[%s1 + $0x12c] sm:$0xf]
  %v111 = vld [vmem:[%s1 + $0x130] sm:$0xf]
  %v112 = vld [vmem:[%s1 + $0x134] sm:$0xf]
  %v113 = vld [vmem:[%s1 + $0x138] sm:$0xf]
  %v114 = vld [vmem:[%s1 + $0x13c] sm:$0xf]
  %v115 = vld [vmem:[%s1 + $0x140] sm:$0xf]
  %v116 = vld [vmem:[%s1 + $0x144] sm:$0xf]
  %v117 = vld [vmem:[%s1 + $0x148] sm:$0xf]
  %v118 = vld [vmem:[%s1 + $0x14c] sm:$0xf]
  %v119 = vld [vmem:[%s1 + $0x150] sm:$0xf]
  %v120 = vld [vmem:[%s1 + $0x154] sm:$0xf]
  %v121 = vld [vmem:[%s1 + $0x158] sm:$0xf]
  %v122 = vld [vmem:[%s1 + $0x15c] sm:$0xf]
  %v123 = vld [vmem:[%s1 + $0x160] sm:$0xf]
  %v124 = vld [vmem:[%s1 + $0x164] sm:$0xf]
  %v125 = vld [vmem:[%s1 + $0x168] sm:$0xf]
  %v126 = vld [vmem:[%s1 + $0x16c] sm:$0xf]
  %v127 = vld [vmem:[%s1 + $0x170] sm:$0xf]
  %v128 = vld [vmem:[%s1 + $0x174] sm:$0xf]
  %v129 = vld [vmem:[%s1 + $0x178] sm:$0xf]
  %v130 = vld [vmem:[%s1 + $0x17c] sm:$0xf]
  %v131 = vld [vmem:[%s1 + $0x180] sm:$0xf]
  %v132 = vld [vmem:[%s1 + $0x184] sm:$0xf]
  %v133 = vld [vmem:[%s1 + $0x188] sm:$0xf]
  %v134 = vld [vmem:[%s1 + $0x18c] sm:$0xf]
  %v135 = vld [vmem:[%s1 + $0x190] sm:$0xf]
  %v136 = vld [vmem:[%s1 + $0x194] sm:$0xf]
  %v137 = vld [vmem:[%s1 + $0x198] sm:$0xf]
  %v138 = vld [vmem:[%s1 + $0x19c] sm:$0xf]
  %v139 = vld [vmem:[%s1 + $0x1a0] sm:$0xf]
  %v140 = vld [vmem:[%s1 + $0x1a4] sm:$0xf]
  %v141 = vld [vmem:[%s1 + $0x1a8] sm:$0xf]
  %v142 = vld [vmem:[%s1 + $0x1ac] sm:$0xf]
  %v143 = vld [vmem:[%s1 + $0x1b0] sm:$0xf]
  %v144 = vld [vmem:[%s1 + $0x1b4] sm:$0xf]
  %v145 = vld [vmem:[%s1 + $0x1b8] sm:$0xf]
  %v146 = vld [vmem:[%s1 + $0x1bc] sm:$0xf]
  %v147 = vld [vmem:[%s1 + $0x1c0] sm:$0xf]
  %v148 = vld [vmem:[%s1 + $0x1c4] sm:$0xf]
  %v149 = vld [vmem:[%s1 + $0x1c8] sm:$0xf]
  %v150 = vld [vmem:[%s1 + $0x1cc] sm:$0xf]
  %v151 = vld [vmem:[%s1 + $0x1d0] sm:$0xf]
  %v152 = vld [vmem:[%s1 + $0x1d4] sm:$0xf]
  %v153 = vld [vmem:[%s1 + $0x1d8] sm:$0xf]
  %v154 = vld [vmem:[%s1 + $0x1dc] sm:$0xf]
  %v155 = vld [vmem:[%s1 + $0x1e0] sm:$0xf]
  %v156 = vld [vmem:[%s1 + $0x1e4] sm:$0xf]
  %v157 = vld [vmem:[%s1 + $0x1e8] sm:$0xf]
  %v158 = vld [vmem:[%s1 + $0x1ec] sm:$0xf]
  %v159 = vld [vmem:[%s1 + $0x1f0] sm:$0xf]
  %v160 = vld [vmem:[%s1 + $0x1f4] sm:$0xf]
  %v161 = vld [vmem:[%s1 + $0x1f8] sm:$0xf]
  %v162 = vld [vmem:[%s1 + $0x1fc] sm:$0xf]
  %v163 = vld [vmem:[%s1 + $0x200] sm:$0xf]
  %v164 = vld [vmem:[%s1 + $0x204] sm:$0xf]
  %v165 = vld [vmem:[%s1 + $0x208] sm:$0xf]
  %v166 = vld [vmem:[%s1 + $0x20c] sm:$0xf]
  %v167 = vld [vmem:[%s1 + $0x210] sm:$0xf]
  %v168 = vld [vmem:[%s1 + $0x214] sm:$0xf]
  %v169 = vld [vmem:[%s1 + $0x218] sm:$0xf]
  %v170 = vld [vmem:[%s1 + $0x21c] sm:$0xf]
  %v171 = vld [vmem:[%s1 + $0x220] sm:$0xf]
  %v172 = vld [vmem:[%s1 + $0x224] sm:$0xf]
  %v173 = vld [vmem:[%s1 + $0x228] sm:$0xf]
  %v174 = vld [vmem:[%s1 + $0x22c] sm:$0xf]
  %v175 = vld [vmem:[%s1 + $0x230] sm:$0xf]
  %v176 = vld [vmem:[%s1 + $0x234] sm:$0xf]
  %v177 = vld [vmem:[%s1 + $0x238] sm:$0xf]
  %v178 = vld [vmem:[%s1 + $0x23c] sm:$0xf]
  %v179 = vld [vmem:[%s2] sm:$0x1]
  %v181 = vlaneseq
  %v182 = vshrl.u32 %v181, 7
  %v183 = vsub.s32 0, %v182
  %v184 = vrot.slane %v179, %v183
  %v206 = vunpack.c.l.b16 %v15
  %v207 = vunpack.c.h.b16 %v15
  %v208 = vunpack.c.l.b16 %v16
  %v209 = vunpack.c.h.b16 %v16
  %v210 = vunpack.c.l.b16 %v17
  %v211 = vunpack.c.h.b16 %v17
  %v212 = vunpack.c.l.b16 %v18
  %v213 = vunpack.c.h.b16 %v18
  %v214 = vunpack.c.l.b16 %v19
  %v215 = vunpack.c.l.b16 %v20
  %v216 = vunpack.c.h.b16 %v20
  %v217 = vunpack.c.l.b16 %v21
  %v218 = vunpack.c.h.b16 %v21
  %v219 = vunpack.c.l.b16 %v22
  %v220 = vunpack.c.h.b16 %v22
  %v221 = vunpack.c.l.b16 %v23
  %v222 = vunpack.c.h.b16 %v23
  %v223 = vunpack.c.l.b16 %v24
  %v224 = vunpack.c.l.b16 %v25
  %v225 = vunpack.c.h.b16 %v25
  %v226 = vunpack.c.l.b16 %v26
  %v227 = vunpack.c.h.b16 %v26
  %v228 = vunpack.c.l.b16 %v27
  %v229 = vunpack.c.h.b16 %v27
  %v230 = vunpack.c.l.b16 %v28
  %v231 = vunpack.c.h.b16 %v28
  %v232 = vunpack.c.l.b16 %v29
  %v233 = vunpack.c.l.b16 %v30
  %v234 = vunpack.c.h.b16 %v30
  %v235 = vunpack.c.l.b16 %v31
  %v236 = vunpack.c.h.b16 %v31
  %v237 = vunpack.c.l.b16 %v32
  %v238 = vunpack.c.h.b16 %v32
  %v239 = vunpack.c.l.b16 %v33
  %v240 = vunpack.c.h.b16 %v33
  %v241 = vunpack.c.l.b16 %v34
  %v242 = vpack.c.b16 %v215, %v206
  %v243 = vpack.c.b16 %v216, %v207
  %v244 = vpack.c.b16 %v217, %v208
  %v245 = vpack.c.b16 %v218, %v209
  %v246 = vpack.c.b16 %v219, %v210
  %v247 = vpack.c.b16 %v220, %v211
  %v248 = vpack.c.b16 %v221, %v212
  %v249 = vpack.c.b16 %v222, %v213
  %v250 = vpack.c.b16 %v223, %v214
  %v251 = vpack.c.b16 %v233, %v224
  %v252 = vpack.c.b16 %v234, %v225
  %v253 = vpack.c.b16 %v235, %v226
  %v254 = vpack.c.b16 %v236, %v227
  %v255 = vpack.c.b16 %v237, %v228
  %v256 = vpack.c.b16 %v238, %v229
  %v257 = vpack.c.b16 %v239, %v230
  %v258 = vpack.c.b16 %v240, %v231
  %v259 = vpack.c.b16 %v241, %v232
  %v422 = vunpack.c.l.b16 %v35
  %v423 = vunpack.c.l.b16 %v36
  %v424 = vunpack.c.l.b16 %v37
  %v425 = vunpack.c.l.b16 %v38
  %v426 = vunpack.c.l.b16 %v39
  %v427 = vunpack.c.l.b16 %v40
  %v428 = vunpack.c.l.b16 %v41
  %v429 = vunpack.c.l.b16 %v42
  %v430 = vunpack.c.l.b16 %v43
  %v431 = vunpack.c.l.b16 %v44
  %v432 = vunpack.c.l.b16 %v45
  %v433 = vunpack.c.l.b16 %v46
  %v434 = vunpack.c.l.b16 %v47
  %v435 = vunpack.c.l.b16 %v48
  %v436 = vunpack.c.l.b16 %v49
  %v437 = vunpack.c.l.b16 %v50
  %v438 = vunpack.c.l.b16 %v51
  %v439 = vunpack.c.l.b16 %v52
  %v440 = vunpack.c.l.b16 %v53
  %v441 = vunpack.c.l.b16 %v54
  %v442 = vunpack.c.l.b16 %v55
  %v443 = vunpack.c.l.b16 %v56
  %v444 = vunpack.c.l.b16 %v57
  %v445 = vunpack.c.l.b16 %v58
  %v446 = vunpack.c.l.b16 %v59
  %v447 = vunpack.c.l.b16 %v60
  %v448 = vunpack.c.l.b16 %v61
  %v449 = vunpack.c.l.b16 %v62
  %v450 = vunpack.c.l.b16 %v63
  %v451 = vunpack.c.l.b16 %v64
  %v452 = vunpack.c.l.b16 %v65
  %v453 = vunpack.c.l.b16 %v66
  %v454 = vunpack.c.l.b16 %v67
  %v455 = vunpack.c.l.b16 %v68
  %v456 = vunpack.c.l.b16 %v69
  %v457 = vunpack.c.l.b16 %v70
  %v458 = vunpack.c.l.b16 %v71
  %v459 = vunpack.c.l.b16 %v72
  %v460 = vunpack.c.l.b16 %v73
  %v461 = vunpack.c.l.b16 %v74
  %v462 = vunpack.c.l.b16 %v75
  %v463 = vunpack.c.l.b16 %v76
  %v464 = vunpack.c.l.b16 %v77
  %v465 = vunpack.c.l.b16 %v78
  %v466 = vunpack.c.l.b16 %v79
  %v467 = vunpack.c.l.b16 %v80
  %v468 = vunpack.c.l.b16 %v81
  %v469 = vunpack.c.l.b16 %v82
  %v470 = vunpack.c.l.b16 %v83
  %v471 = vunpack.c.l.b16 %v84
  %v472 = vunpack.c.l.b16 %v85
  %v473 = vunpack.c.l.b16 %v86
  %v474 = vunpack.c.l.b16 %v87
  %v475 = vunpack.c.l.b16 %v88
  %v476 = vunpack.c.l.b16 %v89
  %v477 = vunpack.c.l.b16 %v90
  %v478 = vunpack.c.l.b16 %v91
  %v479 = vunpack.c.l.b16 %v92
  %v480 = vunpack.c.l.b16 %v93
  %v481 = vunpack.c.l.b16 %v94
  %v482 = vunpack.c.l.b16 %v95
  %v483 = vunpack.c.l.b16 %v96
  %v484 = vunpack.c.l.b16 %v97
  %v485 = vunpack.c.l.b16 %v98
  %v486 = vunpack.c.l.b16 %v99
  %v487 = vunpack.c.l.b16 %v100
  %v488 = vunpack.c.l.b16 %v101
  %v489 = vunpack.c.l.b16 %v102
  %v490 = vunpack.c.l.b16 %v103
  %v491 = vunpack.c.l.b16 %v104
  %v492 = vunpack.c.l.b16 %v105
  %v493 = vunpack.c.l.b16 %v106
  %v494 = vunpack.c.l.b16 %v107
  %v495 = vunpack.c.l.b16 %v108
  %v496 = vunpack.c.l.b16 %v109
  %v497 = vunpack.c.l.b16 %v110
  %v498 = vunpack.c.l.b16 %v111
  %v499 = vunpack.c.l.b16 %v112
  %v500 = vunpack.c.l.b16 %v113
  %v501 = vunpack.c.l.b16 %v114
  %v502 = vunpack.c.l.b16 %v115
  %v503 = vunpack.c.l.b16 %v116
  %v504 = vunpack.c.l.b16 %v117
  %v505 = vunpack.c.l.b16 %v118
  %v506 = vunpack.c.l.b16 %v119
  %v507 = vunpack.c.l.b16 %v120
  %v508 = vunpack.c.l.b16 %v121
  %v509 = vunpack.c.l.b16 %v122
  %v510 = vunpack.c.l.b16 %v123
  %v511 = vunpack.c.l.b16 %v124
  %v512 = vunpack.c.l.b16 %v125
  %v513 = vunpack.c.l.b16 %v126
  %v514 = vunpack.c.l.b16 %v127
  %v515 = vunpack.c.l.b16 %v128
  %v516 = vunpack.c.l.b16 %v129
  %v517 = vunpack.c.l.b16 %v130
  %v518 = vunpack.c.l.b16 %v131
  %v519 = vunpack.c.l.b16 %v132
  %v520 = vunpack.c.l.b16 %v133
  %v521 = vunpack.c.l.b16 %v134
  %v522 = vunpack.c.l.b16 %v135
  %v523 = vunpack.c.l.b16 %v136
  %v524 = vunpack.c.l.b16 %v137
  %v525 = vunpack.c.l.b16 %v138
  %v526 = vunpack.c.l.b16 %v139
  %v527 = vunpack.c.l.b16 %v140
  %v528 = vunpack.c.l.b16 %v141
  %v529 = vunpack.c.l.b16 %v142
  %v530 = vunpack.c.l.b16 %v143
  %v531 = vunpack.c.l.b16 %v144
  %v532 = vunpack.c.l.b16 %v145
  %v533 = vunpack.c.l.b16 %v146
  %v534 = vunpack.c.l.b16 %v147
  %v535 = vunpack.c.l.b16 %v148
  %v536 = vunpack.c.l.b16 %v149
  %v537 = vunpack.c.l.b16 %v150
  %v538 = vunpack.c.l.b16 %v151
  %v539 = vunpack.c.l.b16 %v152
  %v540 = vunpack.c.l.b16 %v153
  %v541 = vunpack.c.l.b16 %v154
  %v542 = vunpack.c.l.b16 %v155
  %v543 = vunpack.c.l.b16 %v156
  %v544 = vunpack.c.l.b16 %v157
  %v545 = vunpack.c.l.b16 %v158
  %v546 = vunpack.c.l.b16 %v159
  %v547 = vunpack.c.l.b16 %v160
  %v548 = vunpack.c.l.b16 %v161
  %v549 = vunpack.c.l.b16 %v162
  %v550 = vunpack.c.l.b16 %v163
  %v551 = vunpack.c.l.b16 %v164
  %v552 = vunpack.c.l.b16 %v165
  %v553 = vunpack.c.l.b16 %v166
  %v554 = vunpack.c.l.b16 %v167
  %v555 = vunpack.c.l.b16 %v168
  %v556 = vunpack.c.l.b16 %v169
  %v557 = vunpack.c.l.b16 %v170
  %v558 = vunpack.c.l.b16 %v171
  %v559 = vunpack.c.l.b16 %v172
  %v560 = vunpack.c.l.b16 %v173
  %v561 = vunpack.c.l.b16 %v174
  %v562 = vunpack.c.l.b16 %v175
  %v563 = vunpack.c.l.b16 %v176
  %v564 = vunpack.c.l.b16 %v177
  %v565 = vunpack.c.l.b16 %v178
  %v566 = vpack.c.b16 %v423, %v422
  %v567 = vpack.c.b16 %v425, %v424
  %v568 = vpack.c.b16 %v427, %v426
  %v569 = vpack.c.b16 %v429, %v428
  %v570 = vpack.c.b16 %v431, %v430
  %v571 = vpack.c.b16 %v433, %v432
  %v572 = vpack.c.b16 %v435, %v434
  %v573 = vpack.c.b16 %v437, %v436
  %v574 = vpack.c.b16 %v439, %v438
  %v575 = vpack.c.b16 %v441, %v440
  %v576 = vpack.c.b16 %v443, %v442
  %v577 = vpack.c.b16 %v445, %v444
  %v578 = vpack.c.b16 %v447, %v446
  %v579 = vpack.c.b16 %v449, %v448
  %v580 = vpack.c.b16 %v451, %v450
  %v581 = vpack.c.b16 %v453, %v452
  %v582 = vpack.c.b16 %v455, %v454
  %v583 = vpack.c.b16 %v457, %v456
  %v584 = vpack.c.b16 %v459, %v458
  %v585 = vpack.c.b16 %v461, %v460
  %v586 = vpack.c.b16 %v463, %v462
  %v587 = vpack.c.b16 %v465, %v464
  %v588 = vpack.c.b16 %v467, %v466
  %v589 = vpack.c.b16 %v469, %v468
  %v590 = vpack.c.b16 %v471, %v470
  %v591 = vpack.c.b16 %v473, %v472
  %v592 = vpack.c.b16 %v475, %v474
  %v593 = vpack.c.b16 %v477, %v476
  %v594 = vpack.c.b16 %v479, %v478
  %v595 = vpack.c.b16 %v481, %v480
  %v596 = vpack.c.b16 %v483, %v482
  %v597 = vpack.c.b16 %v485, %v484
  %v598 = vpack.c.b16 %v487, %v486
  %v599 = vpack.c.b16 %v489, %v488
  %v600 = vpack.c.b16 %v491, %v490
  %v601 = vpack.c.b16 %v493, %v492
  %v602 = vpack.c.b16 %v495, %v494
  %v603 = vpack.c.b16 %v497, %v496
  %v604 = vpack.c.b16 %v499, %v498
  %v605 = vpack.c.b16 %v501, %v500
  %v606 = vpack.c.b16 %v503, %v502
  %v607 = vpack.c.b16 %v505, %v504
  %v608 = vpack.c.b16 %v507, %v506
  %v609 = vpack.c.b16 %v509, %v508
  %v610 = vpack.c.b16 %v511, %v510
  %v611 = vpack.c.b16 %v513, %v512
  %v612 = vpack.c.b16 %v515, %v514
  %v613 = vpack.c.b16 %v517, %v516
  %v614 = vpack.c.b16 %v519, %v518
  %v615 = vpack.c.b16 %v521, %v520
  %v616 = vpack.c.b16 %v523, %v522
  %v617 = vpack.c.b16 %v525, %v524
  %v618 = vpack.c.b16 %v527, %v526
  %v619 = vpack.c.b16 %v529, %v528
  %v620 = vpack.c.b16 %v531, %v530
  %v621 = vpack.c.b16 %v533, %v532
  %v622 = vpack.c.b16 %v535, %v534
  %v623 = vpack.c.b16 %v537, %v536
  %v624 = vpack.c.b16 %v539, %v538
  %v625 = vpack.c.b16 %v541, %v540
  %v626 = vpack.c.b16 %v543, %v542
  %v627 = vpack.c.b16 %v545, %v544
  %v628 = vpack.c.b16 %v547, %v546
  %v629 = vpack.c.b16 %v549, %v548
  %v630 = vpack.c.b16 %v551, %v550
  %v631 = vpack.c.b16 %v553, %v552
  %v632 = vpack.c.b16 %v555, %v554
  %v633 = vpack.c.b16 %v557, %v556
  %v634 = vpack.c.b16 %v559, %v558
  %v635 = vpack.c.b16 %v561, %v560
  %v636 = vpack.c.b16 %v563, %v562
  %v637 = vpack.c.b16 %v565, %v564
  %710 = vmatprep.subr.bf16.mxu0 0
  %711 = vmatpush1.bf16.msra.mxu0 %v573
  %712 = vmatprep.subr.bf16.mxu0 0
  %713 = vmatpush1.bf16.msra.mxu0 %v572
  %714 = vmatprep.subr.bf16.mxu0 0
  %715 = vmatpush1.bf16.msra.mxu0 %v571
  %716 = vmatprep.subr.bf16.mxu0 0
  %717 = vmatpush1.bf16.msra.mxu0 %v570
  %718 = vmatprep.subr.bf16.mxu0 0
  %719 = vmatpush1.bf16.msra.mxu0 %v569
  %720 = vmatprep.subr.bf16.mxu0 0
  %721 = vmatpush1.bf16.msra.mxu0 %v568
  %722 = vmatprep.subr.bf16.mxu0 0
  %723 = vmatpush1.bf16.msra.mxu0 %v567
  %724 = vmatprep.subr.bf16.mxu0 0
  %725 = vmatpush1.bf16.msra.mxu0 %v566
  %726 = vmatprep.subr.bf16.mxu0 0
  %727 = vmatpush2.bf16.msra.mxu0 %v581
  %728 = vmatprep.subr.bf16.mxu0 0
  %729 = vmatpush2.bf16.msra.mxu0 %v580
  %730 = vmatprep.subr.bf16.mxu0 0
  %731 = vmatpush2.bf16.msra.mxu0 %v579
  %732 = vmatprep.subr.bf16.mxu0 0
  %733 = vmatpush2.bf16.msra.mxu0 %v578
  %734 = vmatprep.subr.bf16.mxu0 0
  %735 = vmatpush2.bf16.msra.mxu0 %v577
  %736 = vmatprep.subr.bf16.mxu0 0
  %737 = vmatpush2.bf16.msra.mxu0 %v576
  %738 = vmatprep.subr.bf16.mxu0 0
  %739 = vmatpush2.bf16.msra.mxu0 %v575
  %740 = vmatprep.subr.bf16.mxu0 0
  %741 = vmatpush2.bf16.msra.mxu0 %v574
  %742 = vmatprep.mubr.bf16.mxu0 %v243
  %743 = vmatmul.mubr.bf16.gmra.mxu0 %v242
  %v744 = vpop.f32.mrf.mxu0
  %v745 = vadd.f32 %v184, %v744
  %v746 = vpop.f32.mrf.mxu0
  %v747 = vpop.f32.mrf.mxu0
  %v748 = vadd.f32 %v184, %v747
  %v749 = vpop.f32.mrf.mxu0
  %750 = vmatprep.mubr.bf16.mxu0 %v252
  %751 = vmatmul.mubr.bf16.gmra.mxu0 %v251
  %v752 = vpop.f32.mrf.mxu0
  %v753 = vadd.f32 %v184, %v752
  %v754 = vpop.f32.mrf.mxu0
  %v755 = vpop.f32.mrf.mxu0
  %v756 = vadd.f32 %v184, %v755
  %v757 = vpop.f32.mrf.mxu0
  %758 = vdwg.mxu0
  %759 = vmatprep.subr.bf16.mxu0 0
  %760 = vmatpush1.bf16.msra.mxu0 %v589
  %761 = vmatprep.subr.bf16.mxu0 0
  %762 = vmatpush1.bf16.msra.mxu0 %v588
  %763 = vmatprep.subr.bf16.mxu0 0
  %764 = vmatpush1.bf16.msra.mxu0 %v587
  %765 = vmatprep.subr.bf16.mxu0 0
  %766 = vmatpush1.bf16.msra.mxu0 %v586
  %767 = vmatprep.subr.bf16.mxu0 0
  %768 = vmatpush1.bf16.msra.mxu0 %v585
  %769 = vmatprep.subr.bf16.mxu0 0
  %770 = vmatpush1.bf16.msra.mxu0 %v584
  %771 = vmatprep.subr.bf16.mxu0 0
  %772 = vmatpush1.bf16.msra.mxu0 %v583
  %773 = vmatprep.subr.bf16.mxu0 0
  %774 = vmatpush1.bf16.msra.mxu0 %v582
  %775 = vmatprep.subr.bf16.mxu0 0
  %776 = vmatpush2.bf16.msra.mxu0 %v597
  %777 = vmatprep.subr.bf16.mxu0 0
  %778 = vmatpush2.bf16.msra.mxu0 %v596
  %779 = vmatprep.subr.bf16.mxu0 0
  %780 = vmatpush2.bf16.msra.mxu0 %v595
  %781 = vmatprep.subr.bf16.mxu0 0
  %782 = vmatpush2.bf16.msra.mxu0 %v594
  %783 = vmatprep.subr.bf16.mxu0 0
  %784 = vmatpush2.bf16.msra.mxu0 %v593
  %785 = vmatprep.subr.bf16.mxu0 0
  %786 = vmatpush2.bf16.msra.mxu0 %v592
  %787 = vmatprep.subr.bf16.mxu0 0
  %788 = vmatpush2.bf16.msra.mxu0 %v591
  %789 = vmatprep.subr.bf16.mxu0 0
  %790 = vmatpush2.bf16.msra.mxu0 %v590
  %791 = vmatprep.mubr.bf16.mxu0 %v245
  %792 = vmatmul.mubr.bf16.gmra.mxu0 %v244
  %v793 = vpop.f32.mrf.mxu0
  %v794 = vadd.f32 %v745, %v793
  %v795 = vpop.f32.mrf.mxu0
  %v796 = vpop.f32.mrf.mxu0
  %v797 = vadd.f32 %v748, %v796
  %v798 = vpop.f32.mrf.mxu0
  %799 = vmatprep.mubr.bf16.mxu0 %v254
  %800 = vmatmul.mubr.bf16.gmra.mxu0 %v253
  %v801 = vpop.f32.mrf.mxu0
  %v802 = vadd.f32 %v753, %v801
  %v803 = vpop.f32.mrf.mxu0
  %v804 = vpop.f32.mrf.mxu0
  %v805 = vadd.f32 %v756, %v804
  %v806 = vpop.f32.mrf.mxu0
  %807 = vdwg.mxu0
  %808 = vmatprep.subr.bf16.mxu0 0
  %809 = vmatpush1.bf16.msra.mxu0 %v605
  %810 = vmatprep.subr.bf16.mxu0 0
  %811 = vmatpush1.bf16.msra.mxu0 %v604
  %812 = vmatprep.subr.bf16.mxu0 0
  %813 = vmatpush1.bf16.msra.mxu0 %v603
  %814 = vmatprep.subr.bf16.mxu0 0
  %815 = vmatpush1.bf16.msra.mxu0 %v602
  %816 = vmatprep.subr.bf16.mxu0 0
  %817 = vmatpush1.bf16.msra.mxu0 %v601
  %818 = vmatprep.subr.bf16.mxu0 0
  %819 = vmatpush1.bf16.msra.mxu0 %v600
  %820 = vmatprep.subr.bf16.mxu0 0
  %821 = vmatpush1.bf16.msra.mxu0 %v599
  %822 = vmatprep.subr.bf16.mxu0 0
  %823 = vmatpush1.bf16.msra.mxu0 %v598
  %824 = vmatprep.subr.bf16.mxu0 0
  %825 = vmatpush2.bf16.msra.mxu0 %v613
  %826 = vmatprep.subr.bf16.mxu0 0
  %827 = vmatpush2.bf16.msra.mxu0 %v612
  %828 = vmatprep.subr.bf16.mxu0 0
  %829 = vmatpush2.bf16.msra.mxu0 %v611
  %830 = vmatprep.subr.bf16.mxu0 0
  %831 = vmatpush2.bf16.msra.mxu0 %v610
  %832 = vmatprep.subr.bf16.mxu0 0
  %833 = vmatpush2.bf16.msra.mxu0 %v609
  %834 = vmatprep.subr.bf16.mxu0 0
  %835 = vmatpush2.bf16.msra.mxu0 %v608
  %836 = vmatprep.subr.bf16.mxu0 0
  %837 = vmatpush2.bf16.msra.mxu0 %v607
  %838 = vmatprep.subr.bf16.mxu0 0
  %839 = vmatpush2.bf16.msra.mxu0 %v606
  %840 = vmatprep.mubr.bf16.mxu0 %v247
  %841 = vmatmul.mubr.bf16.gmra.mxu0 %v246
  %v842 = vpop.f32.mrf.mxu0
  %v843 = vadd.f32 %v794, %v842
  %v844 = vpop.f32.mrf.mxu0
  %v845 = vpop.f32.mrf.mxu0
  %v846 = vadd.f32 %v797, %v845
  %v847 = vpop.f32.mrf.mxu0
  %848 = vmatprep.mubr.bf16.mxu0 %v256
  %849 = vmatmul.mubr.bf16.gmra.mxu0 %v255
  %v850 = vpop.f32.mrf.mxu0
  %v851 = vadd.f32 %v802, %v850
  %v852 = vpop.f32.mrf.mxu0
  %v853 = vpop.f32.mrf.mxu0
  %v854 = vadd.f32 %v805, %v853
  %v855 = vpop.f32.mrf.mxu0
  %856 = vdwg.mxu0
  %857 = vmatprep.subr.bf16.mxu0 0
  %858 = vmatpush1.bf16.msra.mxu0 %v621
  %859 = vmatprep.subr.bf16.mxu0 0
  %860 = vmatpush1.bf16.msra.mxu0 %v620
  %861 = vmatprep.subr.bf16.mxu0 0
  %862 = vmatpush1.bf16.msra.mxu0 %v619
  %863 = vmatprep.subr.bf16.mxu0 0
  %864 = vmatpush1.bf16.msra.mxu0 %v618
  %865 = vmatprep.subr.bf16.mxu0 0
  %866 = vmatpush1.bf16.msra.mxu0 %v617
  %867 = vmatprep.subr.bf16.mxu0 0
  %868 = vmatpush1.bf16.msra.mxu0 %v616
  %869 = vmatprep.subr.bf16.mxu0 0
  %870 = vmatpush1.bf16.msra.mxu0 %v615
  %871 = vmatprep.subr.bf16.mxu0 0
  %872 = vmatpush1.bf16.msra.mxu0 %v614
  %873 = vmatprep.subr.bf16.mxu0 0
  %874 = vmatpush2.bf16.msra.mxu0 %v629
  %875 = vmatprep.subr.bf16.mxu0 0
  %876 = vmatpush2.bf16.msra.mxu0 %v628
  %877 = vmatprep.subr.bf16.mxu0 0
  %878 = vmatpush2.bf16.msra.mxu0 %v627
  %879 = vmatprep.subr.bf16.mxu0 0
  %880 = vmatpush2.bf16.msra.mxu0 %v626
  %881 = vmatprep.subr.bf16.mxu0 0
  %882 = vmatpush2.bf16.msra.mxu0 %v625
  %883 = vmatprep.subr.bf16.mxu0 0
  %884 = vmatpush2.bf16.msra.mxu0 %v624
  %885 = vmatprep.subr.bf16.mxu0 0
  %886 = vmatpush2.bf16.msra.mxu0 %v623
  %887 = vmatprep.subr.bf16.mxu0 0
  %888 = vmatpush2.bf16.msra.mxu0 %v622
  %889 = vmatprep.mubr.bf16.mxu0 %v249
  %890 = vmatmul.mubr.bf16.gmra.mxu0 %v248
  %v891 = vpop.f32.mrf.mxu0
  %v892 = vadd.f32 %v843, %v891
  %v893 = vpop.f32.mrf.mxu0
  %v894 = vpop.f32.mrf.mxu0
  %v895 = vadd.f32 %v846, %v894
  %v896 = vpop.f32.mrf.mxu0
  %897 = vmatprep.mubr.bf16.mxu0 %v258
  %898 = vmatmul.mubr.bf16.gmra.mxu0 %v257
  %v899 = vpop.f32.mrf.mxu0
  %v900 = vadd.f32 %v851, %v899
  %v901 = vpop.f32.mrf.mxu0
  %v902 = vpop.f32.mrf.mxu0
  %v903 = vadd.f32 %v854, %v902
  %v904 = vpop.f32.mrf.mxu0
  %905 = vdwg.mxu0
  %906 = vmatprep.subr.bf16.mxu0 0
  %907 = vmatpush1.bf16.msra.mxu0 %v637
  %908 = vmatprep.subr.bf16.mxu0 0
  %909 = vmatpush1.bf16.msra.mxu0 %v636
  %910 = vmatprep.subr.bf16.mxu0 0
  %911 = vmatpush1.bf16.msra.mxu0 %v635
  %912 = vmatprep.subr.bf16.mxu0 0
  %913 = vmatpush1.bf16.msra.mxu0 %v634
  %914 = vmatprep.subr.bf16.mxu0 0
  %915 = vmatpush1.bf16.msra.mxu0 %v633
  %916 = vmatprep.subr.bf16.mxu0 0
  %917 = vmatpush1.bf16.msra.mxu0 %v632
  %918 = vmatprep.subr.bf16.mxu0 0
  %919 = vmatpush1.bf16.msra.mxu0 %v631
  %920 = vmatprep.subr.bf16.mxu0 0
  %921 = vmatpush1.bf16.msra.mxu0 %v630
  %922 = vmatprep.subr.bf16.mxu0 0
  %923 = vmatpush2.bf16.msra.mxu0 0
  %924 = vmatprep.subr.bf16.mxu0 0
  %925 = vmatpush2.bf16.msra.mxu0 0
  %926 = vmatprep.subr.bf16.mxu0 0
  %927 = vmatpush2.bf16.msra.mxu0 0
  %928 = vmatprep.subr.bf16.mxu0 0
  %929 = vmatpush2.bf16.msra.mxu0 0
  %930 = vmatprep.subr.bf16.mxu0 0
  %931 = vmatpush2.bf16.msra.mxu0 0
  %932 = vmatprep.subr.bf16.mxu0 0
  %933 = vmatpush2.bf16.msra.mxu0 0
  %934 = vmatprep.subr.bf16.mxu0 0
  %935 = vmatpush2.bf16.msra.mxu0 0
  %936 = vmatprep.subr.bf16.mxu0 0
  %937 = vmatpush2.bf16.msra.mxu0 0
  %938 = vmatprep.mubr.bf16.mxu0 0
  %939 = vmatmul.mubr.bf16.gmra.mxu0 %v250
  %v940 = vpop.f32.mrf.mxu0
  %v941 = vadd.f32 %v892, %v940
  %v942 = vpop.f32.mrf.mxu0
  %v943 = vpop.f32.mrf.mxu0
  %v944 = vadd.f32 %v895, %v943
  %v945 = vpop.f32.mrf.mxu0
  %946 = vmatprep.mubr.bf16.mxu0 0
  %947 = vmatmul.mubr.bf16.gmra.mxu0 %v259
  %v948 = vpop.f32.mrf.mxu0
  %v949 = vadd.f32 %v900, %v948
  %v950 = vpop.f32.mrf.mxu0
  %v951 = vpop.f32.mrf.mxu0
  %v952 = vadd.f32 %v903, %v951
  %v953 = vpop.f32.mrf.mxu0
  %954 = vdwg.mxu0
  %v955 = vmax.f32 %v941, 0.0
  %v956 = vmax.f32 %v944, 0.0
  %v957 = vmax.f32 %v949, 0.0
  %v958 = vmax.f32 %v952, 0.0
  %v959 = vpack.c.bf16 %v956, %v955
  %v960 = vpack.c.bf16 %v958, %v957
  %v963 = vunpack.c.l.b16 %v959
  %v964 = vunpack.c.h.b16 %v959
  %v965 = vunpack.c.l.b16 %v960
  %v966 = vunpack.c.h.b16 %v960
  %v967 = vpack.c.b16 %v963, %v963
  %v968 = vpack.c.b16 %v964, %v964
  %v969 = vpack.c.b16 %v965, %v965
  %v970 = vpack.c.b16 %v966, %v966
  %975 = vst [vmem:[%s3] sm:$0xf] %v967
  %976 = vst [vmem:[%s3 + $0x4] sm:$0xf] %v968
  %977 = vst [vmem:[%s3 + $0x8] sm:$0xf] %v969
  %978 = vst [vmem:[%s3 + $0xc] sm:$0xf] %v970
  // Predicated region
  $region14: #{_lambda_.13} parent=0 // pred_check
    _
  $region15: #{_lambda_.13} parent=0 // pred_check_branch
    %980 = sbr.rel (0) target = $region17
  $region16: #{_lambda_.13} parent=0 // pred_region
    _
  $region17: #{_lambda_.13} parent=0 // pred_fallthru
    _
  // Predicated region
  $region18: #{_lambda_.13} parent=0 // pred_check
    _
  $region19: #{_lambda_.13} parent=0 // pred_check_branch
    %982 = sbr.rel (0) target = $region21
  $region20: #{_lambda_.13} parent=0 // pred_region
    _
  $region21: #{_lambda_.13} parent=0 // pred_fallthru
    _

// kernel: _lambda_.15
$region0: #{_lambda_.15}
  #allocation0 [shape = 'u32[]', space=smem, size = 0x4, offset = 0x4, fixed_abs, tag = 'smem constant byte address 0x4 - core index']
  #allocation1 [shape = 'u32[144,128]{1,0:T(1,128)}', space=vmem, size = 0x12000, scoped, tag = 'internal scratch']
  %s0 = inlined_call_operand.vmem [shape: bf16[32,128], index: 0, kind: input, shape index: {}]
  %s1 = inlined_call_operand.vmem [shape: bf16[128,512], index: 1, kind: input, shape index: {}]
  %s2 = inlined_call_operand.vmem [shape: f32[1,128], index: 2, kind: input, shape index: {}]
  %s3 = inlined_call_operand.vmem [shape: bf16[128,128], index: 3, kind: input, shape index: {}]
  %s4 = inlined_call_operand.vmem [shape: f32[1,128], index: 4, kind: input, shape index: {}]
  %s5 = inlined_call_operand.vmem [shape: f32[32,128], index: 5, kind: output, shape index: {}]
  %s6 = sld [smem:[#allocation0]]
  $region30: #{_lambda_.15} parent=0
    _
  %s8 = ssub.s32 1, %s6
  %s9 = scalar_select 0, %s8, %s6
  // Predicated region
  $region2: #{_lambda_.15} parent=0 // pred_check
    _
  $region3: #{_lambda_.15} parent=0 // pred_check_branch
    %11 = sbr.rel (0) target = $region5
  $region4: #{_lambda_.15} parent=0 // pred_region
    _
  $region5: #{_lambda_.15} parent=0 // pred_fallthru
    _
  // Predicated region
  $region6: #{_lambda_.15} parent=0 // pred_check
    _
  $region7: #{_lambda_.15} parent=0 // pred_check_branch
    %13 = sbr.rel (0) target = $region9
  $region8: #{_lambda_.15} parent=0 // pred_region
    _
  $region9: #{_lambda_.15} parent=0 // pred_fallthru
    _
  // Predicated region
  $region10: #{_lambda_.15} parent=0 // pred_check
    _
  $region11: #{_lambda_.15} parent=0 // pred_check_branch
    %15 = sbr.rel (0) target = $region13
  $region12: #{_lambda_.15} parent=0 // pred_region
    _
  $region13: #{_lambda_.15} parent=0 // pred_fallthru
    _
  // Predicated region
  $region14: #{_lambda_.15} parent=0 // pred_check
    _
  $region15: #{_lambda_.15} parent=0 // pred_check_branch
    %17 = sbr.rel (0) target = $region17
  $region16: #{_lambda_.15} parent=0 // pred_region
    _
  $region17: #{_lambda_.15} parent=0 // pred_fallthru
    _
  // Predicated region
  $region18: #{_lambda_.15} parent=0 // pred_check
    _
  $region19: #{_lambda_.15} parent=0 // pred_check_branch
    %19 = sbr.rel (0) target = $region21
  $region20: #{_lambda_.15} parent=0 // pred_region
    _
  $region21: #{_lambda_.15} parent=0 // pred_fallthru
    _
  %v21 = vld [vmem:[%s0] sm:$0xf]
  %v22 = vld [vmem:[%s0 + $0x4] sm:$0xf]
  %v23 = vld [vmem:[%s0 + $0x8] sm:$0xf]
  %v24 = vld [vmem:[%s0 + $0xc] sm:$0xf]
  %v25 = vld [vmem:[%s1] sm:$0xff]
  %v26 = vld [vmem:[%s1 + $0x8] sm:$0xff]
  %v27 = vld [vmem:[%s1 + $0x10] sm:$0xff]
  %v28 = vld [vmem:[%s1 + $0x18] sm:$0xff]
  %v29 = vld [vmem:[%s1 + $0x20] sm:$0xff]
  %v30 = vld [vmem:[%s1 + $0x28] sm:$0xff]
  %v31 = vld [vmem:[%s1 + $0x30] sm:$0xff]
  %v32 = vld [vmem:[%s1 + $0x38] sm:$0xff]
  %v33 = vld [vmem:[%s1 + $0x40] sm:$0xff]
  %v34 = vld [vmem:[%s1 + $0x48] sm:$0xff]
  %v35 = vld [vmem:[%s1 + $0x50] sm:$0xff]
  %v36 = vld [vmem:[%s1 + $0x58] sm:$0xff]
  %v37 = vld [vmem:[%s1 + $0x60] sm:$0xff]
  %v38 = vld [vmem:[%s1 + $0x68] sm:$0xff]
  %v39 = vld [vmem:[%s1 + $0x70] sm:$0xff]
  %v40 = vld [vmem:[%s1 + $0x78] sm:$0xff]
  %v41 = vld [vmem:[%s1 + $0x80] sm:$0xff]
  %v42 = vld [vmem:[%s1 + $0x88] sm:$0xff]
  %v43 = vld [vmem:[%s1 + $0x90] sm:$0xff]
  %v44 = vld [vmem:[%s1 + $0x98] sm:$0xff]
  %v45 = vld [vmem:[%s1 + $0xa0] sm:$0xff]
  %v46 = vld [vmem:[%s1 + $0xa8] sm:$0xff]
  %v47 = vld [vmem:[%s1 + $0xb0] sm:$0xff]
  %v48 = vld [vmem:[%s1 + $0xb8] sm:$0xff]
  %v49 = vld [vmem:[%s1 + $0xc0] sm:$0xff]
  %v50 = vld [vmem:[%s1 + $0xc8] sm:$0xff]
  %v51 = vld [vmem:[%s1 + $0xd0] sm:$0xff]
  %v52 = vld [vmem:[%s1 + $0xd8] sm:$0xff]
  %v53 = vld [vmem:[%s1 + $0xe0] sm:$0xff]
  %v54 = vld [vmem:[%s1 + $0xe8] sm:$0xff]
  %v55 = vld [vmem:[%s1 + $0xf0] sm:$0xff]
  %v56 = vld [vmem:[%s1 + $0xf8] sm:$0xff]
  %v61 = vunpack.c.l.b16 %v21
  %v62 = vunpack.c.l.b16 %v22
  %v63 = vunpack.c.l.b16 %v23
  %v64 = vunpack.c.l.b16 %v24
  %v65 = vpack.c.b16 %v62, %v61
  %v66 = vpack.c.b16 %v64, %v63
  %v101 = vunpack.c.l.b16 %v25
  %v102 = vunpack.c.h.b16 %v25
  %v103 = vunpack.c.l.b16 %v26
  %v104 = vunpack.c.h.b16 %v26
  %v105 = vunpack.c.l.b16 %v27
  %v106 = vunpack.c.h.b16 %v27
  %v107 = vunpack.c.l.b16 %v28
  %v108 = vunpack.c.h.b16 %v28
  %v109 = vunpack.c.l.b16 %v29
  %v110 = vunpack.c.h.b16 %v29
  %v111 = vunpack.c.l.b16 %v30
  %v112 = vunpack.c.h.b16 %v30
  %v113 = vunpack.c.l.b16 %v31
  %v114 = vunpack.c.h.b16 %v31
  %v115 = vunpack.c.l.b16 %v32
  %v116 = vunpack.c.h.b16 %v32
  %v117 = vunpack.c.l.b16 %v33
  %v118 = vunpack.c.h.b16 %v33
  %v119 = vunpack.c.l.b16 %v34
  %v120 = vunpack.c.h.b16 %v34
  %v121 = vunpack.c.l.b16 %v35
  %v122 = vunpack.c.h.b16 %v35
  %v123 = vunpack.c.l.b16 %v36
  %v124 = vunpack.c.h.b16 %v36
  %v125 = vunpack.c.l.b16 %v37
  %v126 = vunpack.c.h.b16 %v37
  %v127 = vunpack.c.l.b16 %v38
  %v128 = vunpack.c.h.b16 %v38
  %v129 = vunpack.c.l.b16 %v39
  %v130 = vunpack.c.h.b16 %v39
  %v131 = vunpack.c.l.b16 %v40
  %v132 = vunpack.c.h.b16 %v40
  %v133 = vunpack.c.l.b16 %v41
  %v134 = vunpack.c.h.b16 %v41
  %v135 = vunpack.c.l.b16 %v42
  %v136 = vunpack.c.h.b16 %v42
  %v137 = vunpack.c.l.b16 %v43
  %v138 = vunpack.c.h.b16 %v43
  %v139 = vunpack.c.l.b16 %v44
  %v140 = vunpack.c.h.b16 %v44
  %v141 = vunpack.c.l.b16 %v45
  %v142 = vunpack.c.h.b16 %v45
  %v143 = vunpack.c.l.b16 %v46
  %v144 = vunpack.c.h.b16 %v46
  %v145 = vunpack.c.l.b16 %v47
  %v146 = vunpack.c.h.b16 %v47
  %v147 = vunpack.c.l.b16 %v48
  %v148 = vunpack.c.h.b16 %v48
  %v149 = vunpack.c.l.b16 %v49
  %v150 = vunpack.c.h.b16 %v49
  %v151 = vunpack.c.l.b16 %v50
  %v152 = vunpack.c.h.b16 %v50
  %v153 = vunpack.c.l.b16 %v51
  %v154 = vunpack.c.h.b16 %v51
  %v155 = vunpack.c.l.b16 %v52
  %v156 = vunpack.c.h.b16 %v52
  %v157 = vunpack.c.l.b16 %v53
  %v158 = vunpack.c.h.b16 %v53
  %v159 = vunpack.c.l.b16 %v54
  %v160 = vunpack.c.h.b16 %v54
  %v161 = vunpack.c.l.b16 %v55
  %v162 = vunpack.c.h.b16 %v55
  %v163 = vunpack.c.l.b16 %v56
  %v164 = vunpack.c.h.b16 %v56
  %v165 = vpack.c.b16 %v105, %v101
  %v166 = vpack.c.b16 %v106, %v102
  %v167 = vpack.c.b16 %v107, %v103
  %v168 = vpack.c.b16 %v108, %v104
  %v169 = vpack.c.b16 %v113, %v109
  %v170 = vpack.c.b16 %v114, %v110
  %v171 = vpack.c.b16 %v115, %v111
  %v172 = vpack.c.b16 %v116, %v112
  %v173 = vpack.c.b16 %v121, %v117
  %v174 = vpack.c.b16 %v122, %v118
  %v175 = vpack.c.b16 %v123, %v119
  %v176 = vpack.c.b16 %v124, %v120
  %v177 = vpack.c.b16 %v129, %v125
  %v178 = vpack.c.b16 %v130, %v126
  %v179 = vpack.c.b16 %v131, %v127
  %v180 = vpack.c.b16 %v132, %v128
  %v181 = vpack.c.b16 %v137, %v133
  %v182 = vpack.c.b16 %v138, %v134
  %v183 = vpack.c.b16 %v139, %v135
  %v184 = vpack.c.b16 %v140, %v136
  %v185 = vpack.c.b16 %v145, %v141
  %v186 = vpack.c.b16 %v146, %v142
  %v187 = vpack.c.b16 %v147, %v143
  %v188 = vpack.c.b16 %v148, %v144
  %v189 = vpack.c.b16 %v153, %v149
  %v190 = vpack.c.b16 %v154, %v150
  %v191 = vpack.c.b16 %v155, %v151
  %v192 = vpack.c.b16 %v156, %v152
  %v193 = vpack.c.b16 %v161, %v157
  %v194 = vpack.c.b16 %v162, %v158
  %v195 = vpack.c.b16 %v163, %v159
  %v196 = vpack.c.b16 %v164, %v160
  %229 = vmatprep.subr.bf16.mxu0 %v194
  %230 = vmatpush1.bf16.msra.mxu0 %v193
  %231 = vmatprep.subr.bf16.mxu0 %v190
  %232 = vmatpush1.bf16.msra.mxu0 %v189
  %233 = vmatprep.subr.bf16.mxu0 %v186
  %234 = vmatpush1.bf16.msra.mxu0 %v185
  %235 = vmatprep.subr.bf16.mxu0 %v182
  %236 = vmatpush1.bf16.msra.mxu0 %v181
  %237 = vmatprep.subr.bf16.mxu0 %v178
  %238 = vmatpush1.bf16.msra.mxu0 %v177
  %239 = vmatprep.subr.bf16.mxu0 %v174
  %240 = vmatpush1.bf16.msra.mxu0 %v173
  %241 = vmatprep.subr.bf16.mxu0 %v170
  %242 = vmatpush1.bf16.msra.mxu0 %v169
  %243 = vmatprep.subr.bf16.mxu0 %v166
  %244 = vmatpush1.bf16.msra.mxu0 %v165
  %245 = vmatprep.subr.bf16.mxu0 0
  %246 = vmatpush2.bf16.msra.mxu0 0
  %247 = vmatprep.subr.bf16.mxu0 0
  %248 = vmatpush2.bf16.msra.mxu0 0
  %249 = vmatprep.subr.bf16.mxu0 0
  %250 = vmatpush2.bf16.msra.mxu0 0
  %251 = vmatprep.subr.bf16.mxu0 0
  %252 = vmatpush2.bf16.msra.mxu0 0
  %253 = vmatprep.subr.bf16.mxu0 0
  %254 = vmatpush2.bf16.msra.mxu0 0
  %255 = vmatprep.subr.bf16.mxu0 0
  %256 = vmatpush2.bf16.msra.mxu0 0
  %257 = vmatprep.subr.bf16.mxu0 0
  %258 = vmatpush2.bf16.msra.mxu0 0
  %259 = vmatprep.subr.bf16.mxu0 0
  %260 = vmatpush2.bf16.msra.mxu0 0
  %261 = vmatprep.mubr.bf16.mxu0 0
  %262 = vmatmul.mubr.bf16.gmra.mxu0 %v65
  %v263 = vpop.f32.mrf.mxu0
  %v264 = vadd.f32 0.0, %v263
  %v265 = vpop.f32.mrf.mxu0
  %v266 = vadd.f32 0.0, %v265
  %v267 = vpop.f32.mrf.mxu0
  %v268 = vadd.f32 0.0, %v267
  %v269 = vpop.f32.mrf.mxu0
  %v270 = vadd.f32 0.0, %v269
  %271 = vmatprep.mubr.bf16.mxu0 0
  %272 = vmatmul.mubr.bf16.gmra.mxu0 %v66
  %v273 = vpop.f32.mrf.mxu0
  %v274 = vadd.f32 0.0, %v273
  %v275 = vpop.f32.mrf.mxu0
  %v276 = vadd.f32 0.0, %v275
  %v277 = vpop.f32.mrf.mxu0
  %v278 = vadd.f32 0.0, %v277
  %v279 = vpop.f32.mrf.mxu0
  %v280 = vadd.f32 0.0, %v279
  %281 = vdwg.mxu0
  %282 = vmatprep.subr.bf16.mxu0 %v196
  %283 = vmatpush1.bf16.msra.mxu0 %v195
  %284 = vmatprep.subr.bf16.mxu0 %v192
  %285 = vmatpush1.bf16.msra.mxu0 %v191
  %286 = vmatprep.subr.bf16.mxu0 %v188
  %287 = vmatpush1.bf16.msra.mxu0 %v187
  %288 = vmatprep.subr.bf16.mxu0 %v184
  %289 = vmatpush1.bf16.msra.mxu0 %v183
  %290 = vmatprep.subr.bf16.mxu0 %v180
  %291 = vmatpush1.bf16.msra.mxu0 %v179
  %292 = vmatprep.subr.bf16.mxu0 %v176
  %293 = vmatpush1.bf16.msra.mxu0 %v175
  %294 = vmatprep.subr.bf16.mxu0 %v172
  %295 = vmatpush1.bf16.msra.mxu0 %v171
  %296 = vmatprep.subr.bf16.mxu0 %v168
  %297 = vmatpush1.bf16.msra.mxu0 %v167
  %298 = vmatprep.subr.bf16.mxu0 0
  %299 = vmatpush2.bf16.msra.mxu0 0
  %300 = vmatprep.subr.bf16.mxu0 0
  %301 = vmatpush2.bf16.msra.mxu0 0
  %302 = vmatprep.subr.bf16.mxu0 0
  %303 = vmatpush2.bf16.msra.mxu0 0
  %304 = vmatprep.subr.bf16.mxu0 0
  %305 = vmatpush2.bf16.msra.mxu0 0
  %306 = vmatprep.subr.bf16.mxu0 0
  %307 = vmatpush2.bf16.msra.mxu0 0
  %308 = vmatprep.subr.bf16.mxu0 0
  %309 = vmatpush2.bf16.msra.mxu0 0
  %310 = vmatprep.subr.bf16.mxu0 0
  %311 = vmatpush2.bf16.msra.mxu0 0
  %312 = vmatprep.subr.bf16.mxu0 0
  %313 = vmatpush2.bf16.msra.mxu0 0
  %314 = vmatprep.mubr.bf16.mxu0 0
  %315 = vmatmul.mubr.bf16.gmra.mxu0 %v65
  %v316 = vpop.f32.mrf.mxu0
  %v317 = vadd.f32 0.0, %v316
  %v318 = vpop.f32.mrf.mxu0
  %v319 = vadd.f32 0.0, %v318
  %v320 = vpop.f32.mrf.mxu0
  %v321 = vadd.f32 0.0, %v320
  %v322 = vpop.f32.mrf.mxu0
  %v323 = vadd.f32 0.0, %v322
  %324 = vmatprep.mubr.bf16.mxu0 0
  %325 = vmatmul.mubr.bf16.gmra.mxu0 %v66
  %v326 = vpop.f32.mrf.mxu0
  %v327 = vadd.f32 0.0, %v326
  %v328 = vpop.f32.mrf.mxu0
  %v329 = vadd.f32 0.0, %v328
  %v330 = vpop.f32.mrf.mxu0
  %v331 = vadd.f32 0.0, %v330
  %v332 = vpop.f32.mrf.mxu0
  %v333 = vadd.f32 0.0, %v332
  %334 = vdwg.mxu0
  %v335 = vmax.f32 %v264, %v266
  %v336 = vmax.f32 %v268, %v270
  %v337 = vmax.f32 %v274, %v276
  %v338 = vmax.f32 %v278, %v280
  %v339 = vmax.f32 %v317, %v319
  %v340 = vmax.f32 %v321, %v323
  %v341 = vmax.f32 %v327, %v329
  %v342 = vmax.f32 %v331, %v333
  %v343 = vmax.f32 %v335, %v339
  %v344 = vmax.f32 %v336, %v340
  %v345 = vmax.f32 %v337, %v341
  %v346 = vmax.f32 %v338, %v342
  %v347 = vld [vmem:[%s2] sm:$0x1]
  %v349 = vlaneseq
  %v350 = vshrl.u32 %v349, 7
  %v351 = vsub.s32 0, %v350
  %v352 = vrot.slane %v347, %v351
  %v354 = vadd.f32 %v343, %v352
  %v355 = vadd.f32 %v344, %v352
  %v356 = vadd.f32 %v345, %v352
  %v357 = vadd.f32 %v346, %v352
  %v358 = vmax.f32 %v354, 0.0
  %v359 = vmax.f32 %v355, 0.0
  %v360 = vmax.f32 %v356, 0.0
  %v361 = vmax.f32 %v357, 0.0
  %v362 = vpack.c.bf16 %v359, %v358
  %v363 = vpack.c.bf16 %v361, %v360
  %v364 = vld [vmem:[%s3] sm:$0xf]
  %v365 = vld [vmem:[%s3 + $0x4] sm:$0xf]
  %v366 = vld [vmem:[%s3 + $0x8] sm:$0xf]
  %v367 = vld [vmem:[%s3 + $0xc] sm:$0xf]
  %v368 = vld [vmem:[%s3 + $0x10] sm:$0xf]
  %v369 = vld [vmem:[%s3 + $0x14] sm:$0xf]
  %v370 = vld [vmem:[%s3 + $0x18] sm:$0xf]
  %v371 = vld [vmem:[%s3 + $0x1c] sm:$0xf]
  %v372 = vld [vmem:[%s3 + $0x20] sm:$0xf]
  %v373 = vld [vmem:[%s3 + $0x24] sm:$0xf]
  %v374 = vld [vmem:[%s3 + $0x28] sm:$0xf]
  %v375 = vld [vmem:[%s3 + $0x2c] sm:$0xf]
  %v376 = vld [vmem:[%s3 + $0x30] sm:$0xf]
  %v377 = vld [vmem:[%s3 + $0x34] sm:$0xf]
  %v378 = vld [vmem:[%s3 + $0x38] sm:$0xf]
  %v379 = vld [vmem:[%s3 + $0x3c] sm:$0xf]
  %v380 = vld [vmem:[%s4] sm:$0x1]
  %v382 = vlaneseq
  %v383 = vshrl.u32 %v382, 7
  %v384 = vsub.s32 0, %v383
  %v385 = vrot.slane %v380, %v384
  %v403 = vunpack.c.l.b16 %v364
  %v404 = vunpack.c.l.b16 %v365
  %v405 = vunpack.c.l.b16 %v366
  %v406 = vunpack.c.l.b16 %v367
  %v407 = vunpack.c.l.b16 %v368
  %v408 = vunpack.c.l.b16 %v369
  %v409 = vunpack.c.l.b16 %v370
  %v410 = vunpack.c.l.b16 %v371
  %v411 = vunpack.c.l.b16 %v372
  %v412 = vunpack.c.l.b16 %v373
  %v413 = vunpack.c.l.b16 %v374
  %v414 = vunpack.c.l.b16 %v375
  %v415 = vunpack.c.l.b16 %v376
  %v416 = vunpack.c.l.b16 %v377
  %v417 = vunpack.c.l.b16 %v378
  %v418 = vunpack.c.l.b16 %v379
  %v419 = vpack.c.b16 %v404, %v403
  %v420 = vpack.c.b16 %v406, %v405
  %v421 = vpack.c.b16 %v408, %v407
  %v422 = vpack.c.b16 %v410, %v409
  %v423 = vpack.c.b16 %v412, %v411
  %v424 = vpack.c.b16 %v414, %v413
  %v425 = vpack.c.b16 %v416, %v415
  %v426 = vpack.c.b16 %v418, %v417
  %435 = vmatprep.subr.bf16.mxu0 0
  %436 = vmatpush1.bf16.msra.mxu0 %v426
  %437 = vmatprep.subr.bf16.mxu0 0
  %438 = vmatpush1.bf16.msra.mxu0 %v425
  %439 = vmatprep.subr.bf16.mxu0 0
  %440 = vmatpush1.bf16.msra.mxu0 %v424
  %441 = vmatprep.subr.bf16.mxu0 0
  %442 = vmatpush1.bf16.msra.mxu0 %v423
  %443 = vmatprep.subr.bf16.mxu0 0
  %444 = vmatpush1.bf16.msra.mxu0 %v422
  %445 = vmatprep.subr.bf16.mxu0 0
  %446 = vmatpush1.bf16.msra.mxu0 %v421
  %447 = vmatprep.subr.bf16.mxu0 0
  %448 = vmatpush1.bf16.msra.mxu0 %v420
  %449 = vmatprep.subr.bf16.mxu0 0
  %450 = vmatpush1.bf16.msra.mxu0 %v419
  %451 = vmatprep.subr.bf16.mxu0 0
  %452 = vmatpush2.bf16.msra.mxu0 0
  %453 = vmatprep.subr.bf16.mxu0 0
  %454 = vmatpush2.bf16.msra.mxu0 0
  %455 = vmatprep.subr.bf16.mxu0 0
  %456 = vmatpush2.bf16.msra.mxu0 0
  %457 = vmatprep.subr.bf16.mxu0 0
  %458 = vmatpush2.bf16.msra.mxu0 0
  %459 = vmatprep.subr.bf16.mxu0 0
  %460 = vmatpush2.bf16.msra.mxu0 0
  %461 = vmatprep.subr.bf16.mxu0 0
  %462 = vmatpush2.bf16.msra.mxu0 0
  %463 = vmatprep.subr.bf16.mxu0 0
  %464 = vmatpush2.bf16.msra.mxu0 0
  %465 = vmatprep.subr.bf16.mxu0 0
  %466 = vmatpush2.bf16.msra.mxu0 0
  %467 = vmatprep.mubr.bf16.mxu0 0
  %468 = vmatmul.mubr.bf16.gmra.mxu0 %v362
  %v469 = vpop.f32.mrf.mxu0
  %v470 = vadd.f32 %v385, %v469
  %v471 = vpop.f32.mrf.mxu0
  %v472 = vpop.f32.mrf.mxu0
  %v473 = vadd.f32 %v385, %v472
  %v474 = vpop.f32.mrf.mxu0
  %475 = vmatprep.mubr.bf16.mxu0 0
  %476 = vmatmul.mubr.bf16.gmra.mxu0 %v363
  %v477 = vpop.f32.mrf.mxu0
  %v478 = vadd.f32 %v385, %v477
  %v479 = vpop.f32.mrf.mxu0
  %v480 = vpop.f32.mrf.mxu0
  %v481 = vadd.f32 %v385, %v480
  %v482 = vpop.f32.mrf.mxu0
  %483 = vdwg.mxu0
  %v484 = vmax.f32 %v470, 0.0
  %v485 = vmax.f32 %v473, 0.0
  %v486 = vmax.f32 %v478, 0.0
  %v487 = vmax.f32 %v481, 0.0
  %488 = vst [vmem:[%s5] sm:$0xff] %v484
  %489 = vst [vmem:[%s5 + $0x8] sm:$0xff] %v485
  %490 = vst [vmem:[%s5 + $0x10] sm:$0xff] %v486
  %491 = vst [vmem:[%s5 + $0x18] sm:$0xff] %v487
  // Predicated region
  $region22: #{_lambda_.15} parent=0 // pred_check
    _
  $region23: #{_lambda_.15} parent=0 // pred_check_branch
    %493 = sbr.rel (0) target = $region25
  $region24: #{_lambda_.15} parent=0 // pred_region
    _
  $region25: #{_lambda_.15} parent=0 // pred_fallthru
    _
  // Predicated region
  $region26: #{_lambda_.15} parent=0 // pred_check
    _
  $region27: #{_lambda_.15} parent=0 // pred_check_branch
    %495 = sbr.rel (0) target = $region29
  $region28: #{_lambda_.15} parent=0 // pred_region
    _
  $region29: #{_lambda_.15} parent=0 // pred_fallthru
    _

// kernel: _lambda_.14
$region0: #{_lambda_.14}
  #allocation0 [shape = 'u32[]', space=smem, size = 0x4, offset = 0x4, fixed_abs, tag = 'smem constant byte address 0x4 - core index']
  #allocation1 [shape = 'u32[144,128]{1,0:T(1,128)}', space=vmem, size = 0x12000, scoped, tag = 'internal scratch']
  %s0 = inlined_call_operand.vmem [shape: bf16[2,6,6,128], index: 0, kind: input, shape index: {}]
  %s1 = inlined_call_operand.vmem [shape: bf16[9,128,128], index: 1, kind: input, shape index: {}]
  %s2 = inlined_call_operand.vmem [shape: f32[1,128], index: 2, kind: input, shape index: {}]
  %s3 = inlined_call_operand.vmem [shape: bf16[2,4,4,128], index: 3, kind: output, shape index: {}]
  %s4 = sld [smem:[#allocation0]]
  $region45: #{_lambda_.14} parent=0
    _
  %s6 = ssub.s32 1, %s4
  %s7 = scalar_select 0, %s6, %s4
  loop: start=0, step=1, limit=4
  $region2: #{_lambda_.14} parent=0 // loop_pre_header
    _
  $region3: #{_lambda_.14} parent=0 // loop_header
    %s9 = sphi 0, %s13
    %p10 = scmp.ge.s32.totalorder %s9, 4
    %s16 = sphi 0, %s28
    %s17 = sphi 0, %s24
    %s18 = sphi 0, %s16
    %s19 = sphi 0, %s17
    %s20 = sphi 0, %s18
    %s21 = sphi 0, %s19
    %s31 = sphi 0, %s33
    %s34 = sphi 0, %s31
    %s35 = sphi 0, %s34
    %s51 = sphi 0, %s35
    %s55 = sphi 0, %s55
    %s57 = sphi 0, %s55
    %s58 = sphi 0, %s57
    %s72 = sphi 0, %s58
    %s76 = sphi 0, %s76
    %s78 = sphi 0, %s76
    %s79 = sphi 0, %s78
    %s93 = sphi 0, %s79
    %s101 = sphi 0, %s103
    %s104 = sphi 0, %s101
    %s105 = sphi 0, %s104
    %s121 = sphi 0, %s105
  $region4: #{_lambda_.14} parent=0 // loop_header_branch
    %12 = sbr.rel (%p10) target = $region8
  $region5: #{_lambda_.14} parent=0 // loop_body
    %s14 = ssub.s32 %s9, 1
    %s15 = ssub.s32 %s9, 2
    %s22 = sadd.s32 1, %s17
    %p23 = scmp.ge.s32.totalorder %s22, 1
    %s24 = scalar_select %p23, 0, %s22
    %s25 = sadd.s32 1, %s16
    %s26 = scalar_select %p23, %s25, %s16
    %p27 = scmp.ge.s32.totalorder %s26, 2
    %s28 = scalar_select %p27, 0, %s26
    %s29 = ssub.s32 %s16, %s28
    %p30 = scmp.eq.s32.totalorder %s29, 0
    %s32 = sadd.s32 %s31, 1
    %s33 = scalar_select %p30, %s31, %s32
    %p36 = pneg %p30
    %p37 = scmp.eq.s32.totalorder %s9, 1
    %p38 = por %p36, %p37
    %p39 = scmp.ne.s32.totalorder %s31, %s34
    %p40 = scmp.eq.s32.totalorder %s9, 0
    %p41 = por %p39, %p40
    %p42 = scmp.ne.s32.totalorder %s31, %s34
    %p43 = scmp.eq.s32.totalorder %s14, 1
    %p44 = por %p42, %p43
    %p45 = scmp.ne.s32.totalorder %s34, %s35
    %p46 = scmp.eq.s32.totalorder %s14, 0
    %p47 = por %p45, %p46
    %p48 = scmp.ne.s32.totalorder %s34, %s35
    %p49 = scmp.eq.s32.totalorder %s15, 1
    %p50 = por %p48, %p49
    %p52 = scmp.ne.s32.totalorder %s35, %s51
    %p53 = scmp.eq.s32.totalorder %s15, 0
    %p54 = por %p52, %p53
    %s56 = sadd.s32 %s55, 1
    %p59 = scmp.eq.s32.totalorder %s9, 1
    %p60 = scmp.ne.s32.totalorder %s55, %s57
    %p61 = scmp.eq.s32.totalorder %s9, 0
    %p62 = por %p60, %p61
    %p63 = scmp.ne.s32.totalorder %s55, %s57
    %p64 = scmp.eq.s32.totalorder %s14, 1
    %p65 = por %p63, %p64
    %p66 = scmp.ne.s32.totalorder %s57, %s58
    %p67 = scmp.eq.s32.totalorder %s14, 0
    %p68 = por %p66, %p67
    %p69 = scmp.ne.s32.totalorder %s57, %s58
    %p70 = scmp.eq.s32.totalorder %s15, 1
    %p71 = por %p69, %p70
    %p73 = scmp.ne.s32.totalorder %s58, %s72
    %p74 = scmp.eq.s32.totalorder %s15, 0
    %p75 = por %p73, %p74
    %s77 = sadd.s32 %s76, 1
    %p80 = scmp.eq.s32.totalorder %s9, 1
    %p81 = scmp.ne.s32.totalorder %s76, %s78
    %p82 = scmp.eq.s32.totalorder %s9, 0
    %p83 = por %p81, %p82
    %p84 = scmp.ne.s32.totalorder %s76, %s78
    %p85 = scmp.eq.s32.totalorder %s14, 1
    %p86 = por %p84, %p85
    %p87 = scmp.ne.s32.totalorder %s78, %s79
    %p88 = scmp.eq.s32.totalorder %s14, 0
    %p89 = por %p87, %p88
    %p90 = scmp.ne.s32.totalorder %s78, %s79
    %p91 = scmp.eq.s32.totalorder %s15, 1
    %p92 = por %p90, %p91
    %p94 = scmp.ne.s32.totalorder %s79, %s93
    %p95 = scmp.eq.s32.totalorder %s15, 0
    %p96 = por %p94, %p95
    %s97 = ssub.s32 %s16, %s28
    %s98 = ssub.s32 %s17, %s24
    %s99 = sor.u32 %s97, %s98
    %p100 = scmp.eq.s32.totalorder %s99, 0
    %s102 = sadd.s32 %s101, 1
    %s103 = scalar_select %p100, %s101, %s102
    %p106 = pneg %p100
    %p107 = scmp.eq.s32.totalorder %s9, 1
    %p108 = por %p106, %p107
    %p109 = scmp.ne.s32.totalorder %s101, %s104
    %p110 = scmp.eq.s32.totalorder %s9, 0
    %p111 = por %p109, %p110
    %p112 = scmp.ne.s32.totalorder %s101, %s104
    %p113 = scmp.eq.s32.totalorder %s14, 1
    %p114 = por %p112, %p113
    %p115 = scmp.ne.s32.totalorder %s104, %s105
    %p116 = scmp.eq.s32.totalorder %s14, 0
    %p117 = por %p115, %p116
    %p118 = scmp.ne.s32.totalorder %s104, %s105
    %p119 = scmp.eq.s32.totalorder %s15, 1
    %p120 = por %p118, %p119
    %p122 = scmp.ne.s32.totalorder %s105, %s121
    %p123 = scmp.eq.s32.totalorder %s15, 0
    %p124 = por %p122, %p123
    %p125 = scmp.le.s32.totalorder 1, %s9
    %p126 = scmp.lt.s32.totalorder %s9, 3
    %p127 = pnand %p125, %p126
    %p128 = pneg %p127
    // Predicated region
    $region9: #{_lambda_.14} parent=5 // pred_check
      _
    $region10: #{_lambda_.14} parent=5 // pred_check_branch
      %130 = sbr.rel (%p127) target = $region12
    $region11: #{_lambda_.14} parent=5 // pred_region
      %s131 = ssub.s32 %s9, 1
      // Predicated region
      $region13: #{_lambda_.14} parent=11 // pred_check
        %p132 = pneg %p68
      $region14: #{_lambda_.14} parent=11 // pred_check_branch
        %134 = sbr.rel (%p132) target = $region16
      $region15: #{_lambda_.14} parent=11 // pred_region
        _
      $region16: #{_lambda_.14} parent=11 // pred_fallthru
        _
      // Predicated region
      $region17: #{_lambda_.14} parent=11 // pred_check
        %p135 = pneg %p89
      $region18: #{_lambda_.14} parent=11 // pred_check_branch
        %137 = sbr.rel (%p135) target = $region20
      $region19: #{_lambda_.14} parent=11 // pred_region
        _
      $region20: #{_lambda_.14} parent=11 // pred_fallthru
        _
    $region12: #{_lambda_.14} parent=5 // pred_fallthru
      _
    %p138 = scmp.lt.s32.totalorder %s9, 2
    // Predicated region
    $region21: #{_lambda_.14} parent=5 // pred_check
      %p139 = pneg %p138
    $region22: #{_lambda_.14} parent=5 // pred_check_branch
      %141 = sbr.rel (%p139) target = $region24
    $region23: #{_lambda_.14} parent=5 // pred_region
      // Predicated region
      $region25: #{_lambda_.14} parent=23 // pred_check
        %p142 = pneg %p41
      $region26: #{_lambda_.14} parent=23 // pred_check_branch
        %144 = sbr.rel (%p142) target = $region28
      $region27: #{_lambda_.14} parent=23 // pred_region
        %p145 = scmp.lt.s32.totalorder %s16, 1
        %s146 = scalar_select %p145, %s16, 1
        %s147 = smul.addr %s146, 6
        %s148 = smul.addr %s147, 4
        %s149 = scalar_lea.vmem %s0, %s148
      $region28: #{_lambda_.14} parent=23 // pred_fallthru
        _
    $region24: #{_lambda_.14} parent=5 // pred_fallthru
      _
    %p150 = scmp.le.s32.totalorder 1, %s9
    %p151 = scmp.lt.s32.totalorder %s9, 3
    %p152 = pnand %p150, %p151
    %p153 = pneg %p152
    // Predicated region
    $region29: #{_lambda_.14} parent=5 // pred_check
      _
    $region30: #{_lambda_.14} parent=5 // pred_check_branch
      %155 = sbr.rel (%p152) target = $region32
    $region31: #{_lambda_.14} parent=5 // pred_region
      %s156 = ssub.s32 %s9, 1
      %p157 = scmp.lt.s32.totalorder %s18, 1
      %s158 = scalar_select %p157, %s18, 1
      %s159 = smul.addr %s158, 6
      %s160 = smul.addr %s159, 4
      %s161 = scalar_lea.vmem %s0, %s160
      %p162 = pneg %p47
      %p163 = pneg %p44
      %p164 = pneg %p68
      %p165 = pneg %p65
      %p166 = pneg %p89
      %p167 = pneg %p86
      %p168 = pneg %p117
      %p169 = pneg %p114
      %s170 = smul.u32 4, %s19
      %p171 = scmp.lt.s32.totalorder %s18, 1
      %s172 = scalar_select %p171, %s18, 1
      %p173 = scmp.lt.s32.totalorder %s170, 3
      %s174 = scalar_select %p173, %s170, 3
      %s175 = smul.addr %s172, 4
      %s176 = sadd.s32 %s174, %s175
      %s177 = smul.addr %s176, 2
      %s178 = scalar_lea.vmem %s3, %s177
      %p179 = scmp.lt.s32.totalorder %s18, 1
      %s180 = scalar_select %p179, %s18, 1
      %s181 = smul.addr %s180, 6
      %s182 = smul.addr %s181, 4
      %s183 = scalar_lea.vmem %s0, %s182
      %s184 = smul.u32 4, %s19
      %p185 = scmp.lt.s32.totalorder %s18, 1
      %s186 = scalar_select %p185, %s18, 1
      %p187 = scmp.lt.s32.totalorder %s184, 3
      %s188 = scalar_select %p187, %s184, 3
      %s189 = smul.addr %s186, 4
      %s190 = sadd.s32 %s188, %s189
      %s191 = smul.addr %s190, 2
      %s192 = scalar_lea.vmem %s3, %s191
      %s193 = smul.u32 4, %s19
      %s195 = smul.u32 %s19, 4
      %s196 = smul.addr %s195, 4
      %s197 = scalar_lea.vmem %s183, %s196
      %v198 = vld [vmem:[%s197] sm:$0x3]
      %v199 = vld [vmem:[%s197 + $0x4] sm:$0x3]
      %v200 = vld [vmem:[%s197 + $0x8] sm:$0x3]
      %v201 = vld [vmem:[%s197 + $0xc] sm:$0x3]
      %v202 = vld [vmem:[%s1] sm:$0xf]
      %v203 = vld [vmem:[%s1 + $0x4] sm:$0xf]
      %v204 = vld [vmem:[%s1 + $0x8] sm:$0xf]
      %v205 = vld [vmem:[%s1 + $0xc] sm:$0xf]
      %v206 = vld [vmem:[%s1 + $0x10] sm:$0xf]
      %v207 = vld [vmem:[%s1 + $0x14] sm:$0xf]
      %v208 = vld [vmem:[%s1 + $0x18] sm:$0xf]
      %v209 = vld [vmem:[%s1 + $0x1c] sm:$0xf]
      %v210 = vld [vmem:[%s1 + $0x20] sm:$0xf]
      %v211 = vld [vmem:[%s1 + $0x24] sm:$0xf]
      %v212 = vld [vmem:[%s1 + $0x28] sm:$0xf]
      %v213 = vld [vmem:[%s1 + $0x2c] sm:$0xf]
      %v214 = vld [vmem:[%s1 + $0x30] sm:$0xf]
      %v215 = vld [vmem:[%s1 + $0x34] sm:$0xf]
      %v216 = vld [vmem:[%s1 + $0x38] sm:$0xf]
      %v217 = vld [vmem:[%s1 + $0x3c] sm:$0xf]
      %v218 = vld [vmem:[%s197] sm:$0x7]
      %v219 = vld [vmem:[%s197 + $0x4] sm:$0x7]
      %v220 = vld [vmem:[%s197 + $0x8] sm:$0x7]
      %v221 = vld [vmem:[%s197 + $0xc] sm:$0x7]
      %v227 = vunpack.c.l.s4 1983009808
      %v228 = vunpack.c.0.s8 %v227
      %v229 = vlaneseq
      %v230 = vshrl.u32 %v229, 7
      %v231 = vsub.s32 %v228, %v230
      %v232 = vrot.slane %v218, %v231
      %v233 = vcombine.high %v232, %v232
      %v235 = vunpack.c.l.s4 1983009808
      %v236 = vunpack.c.0.s8 %v235
      %v237 = vlaneseq
      %v238 = vshrl.u32 %v237, 7
      %v239 = vsub.s32 %v236, %v238
      %v240 = vrot.slane %v219, %v239
      %v241 = vcombine.high %v240, %v240
      %v243 = vunpack.c.l.s4 1983009808
      %v244 = vunpack.c.0.s8 %v243
      %v245 = vlaneseq
      %v246 = vshrl.u32 %v245, 7
      %v247 = vsub.s32 %v244, %v246
      %v248 = vrot.slane %v220, %v247
      %v249 = vcombine.high %v248, %v248
      %v251 = vunpack.c.l.s4 1983009808
      %v252 = vunpack.c.0.s8 %v251
      %v253 = vlaneseq
      %v254 = vshrl.u32 %v253, 7
      %v255 = vsub.s32 %v252, %v254
      %v256 = vrot.slane %v221, %v255
      %v257 = vcombine.high %v256, %v256
      %vm258 = vsmask.f32 1280
      %vm259 = vsmask.f32 3336
      %vm260 = vmor %vm258, %vm259
      %vm261 = vsmask.f32 5392
      %vm262 = vmor %vm260, %vm261
      %vm263 = vsmask.f32 7448
      %vm264 = vmor %vm262, %vm263
      %v266 = vshrl.u32 %v232, 16
      %v268 = vrot.slane %v266, 6
      %v269 = vshll.u32 %v232, 16
      %v271 = vrot.slane %v269, 7
      %v272 = vor.u32 %v268, %v271
      %v273 = vrot.slane %v272, 2
      %v275 = vshll.u32 %v233, 16
      %v277 = vrot.slane %v275, 7
      %v278 = vsel %vm264, %v273, %v277
      %v280 = vshrl.u32 %v240, 16
      %v282 = vrot.slane %v280, 6
      %v283 = vshll.u32 %v240, 16
      %v285 = vrot.slane %v283, 7
      %v286 = vor.u32 %v282, %v285
      %v287 = vrot.slane %v286, 2
      %v289 = vshll.u32 %v241, 16
      %v291 = vrot.slane %v289, 7
      %v292 = vsel %vm264, %v287, %v291
      %v294 = vshrl.u32 %v248, 16
      %v296 = vrot.slane %v294, 6
      %v297 = vshll.u32 %v248, 16
      %v299 = vrot.slane %v297, 7
      %v300 = vor.u32 %v296, %v299
      %v301 = vrot.slane %v300, 2
      %v303 = vshll.u32 %v249, 16
      %v305 = vrot.slane %v303, 7
      %v306 = vsel %vm264, %v301, %v305
      %v308 = vshrl.u32 %v256, 16
      %v310 = vrot.slane %v308, 6
      %v311 = vshll.u32 %v256, 16
      %v313 = vrot.slane %v311, 7
      %v314 = vor.u32 %v310, %v313
      %v315 = vrot.slane %v314, 2
      %v317 = vshll.u32 %v257, 16
      %v319 = vrot.slane %v317, 7
      %v320 = vsel %vm264, %v315, %v319
      %s321 = scalar_lea.vmem %s1, 64
      %v322 = vld [vmem:[%s321] sm:$0xf]
      %v323 = vld [vmem:[%s321 + $0x4] sm:$0xf]
      %v324 = vld [vmem:[%s321 + $0x8] sm:$0xf]
      %v325 = vld [vmem:[%s321 + $0xc] sm:$0xf]
      %v326 = vld [vmem:[%s321 + $0x10] sm:$0xf]
      %v327 = vld [vmem:[%s321 + $0x14] sm:$0xf]
      %v328 = vld [vmem:[%s321 + $0x18] sm:$0xf]
      %v329 = vld [vmem:[%s321 + $0x1c] sm:$0xf]
      %v330 = vld [vmem:[%s321 + $0x20] sm:$0xf]
      %v331 = vld [vmem:[%s321 + $0x24] sm:$0xf]
      %v332 = vld [vmem:[%s321 + $0x28] sm:$0xf]
      %v333 = vld [vmem:[%s321 + $0x2c] sm:$0xf]
      %v334 = vld [vmem:[%s321 + $0x30] sm:$0xf]
      %v335 = vld [vmem:[%s321 + $0x34] sm:$0xf]
      %v336 = vld [vmem:[%s321 + $0x38] sm:$0xf]
      %v337 = vld [vmem:[%s321 + $0x3c] sm:$0xf]
      %v338 = vcombine.low %v278, %v292
      %v339 = vcombine.low %v306, %v320
      %v341 = vunpack.c.l.s4 1983009808
      %v342 = vunpack.c.0.s8 %v341
      %v343 = vlaneseq
      %v344 = vshrl.u32 %v343, 7
      %v345 = vsub.s32 %v342, %v344
      %v346 = vrot.slane %v338, %v345
      %v348 = vunpack.c.l.s4 1983009808
      %v349 = vunpack.c.0.s8 %v348
      %v350 = vlaneseq
      %v351 = vshrl.u32 %v350, 7
      %v352 = vsub.s32 %v349, %v351
      %v353 = vrot.slane %v339, %v352
      %v354 = vcombine.low %v346, %v353
      %v372 = vunpack.c.l.b16 %v322
      %v373 = vunpack.c.l.b16 %v323
      %v374 = vunpack.c.l.b16 %v324
      %v375 = vunpack.c.l.b16 %v325
      %v376 = vunpack.c.l.b16 %v326
      %v377 = vunpack.c.l.b16 %v327
      %v378 = vunpack.c.l.b16 %v328
      %v379 = vunpack.c.l.b16 %v329
      %v380 = vunpack.c.l.b16 %v330
      %v381 = vunpack.c.l.b16 %v331
      %v382 = vunpack.c.l.b16 %v332
      %v383 = vunpack.c.l.b16 %v333
      %v384 = vunpack.c.l.b16 %v334
      %v385 = vunpack.c.l.b16 %v335
      %v386 = vunpack.c.l.b16 %v336
      %v387 = vunpack.c.l.b16 %v337
      %v388 = vpack.c.b16 %v373, %v372
      %v389 = vpack.c.b16 %v375, %v374
      %v390 = vpack.c.b16 %v377, %v376
      %v391 = vpack.c.b16 %v379, %v378
      %v392 = vpack.c.b16 %v381, %v380
      %v393 = vpack.c.b16 %v383, %v382
      %v394 = vpack.c.b16 %v385, %v384
      %v395 = vpack.c.b16 %v387, %v386
      %404 = vmatprep.subr.bf16.mxu0 0
      %405 = vmatpush1.bf16.msra.mxu0 %v395
      %406 = vmatprep.subr.bf16.mxu0 0
      %407 = vmatpush1.bf16.msra.mxu0 %v394
      %408 = vmatprep.subr.bf16.mxu0 0
      %409 = vmatpush1.bf16.msra.mxu0 %v393
      %410 = vmatprep.subr.bf16.mxu0 0
      %411 = vmatpush1.bf16.msra.mxu0 %v392
      %412 = vmatprep.subr.bf16.mxu0 0
      %413 = vmatpush1.bf16.msra.mxu0 %v391
      %414 = vmatprep.subr.bf16.mxu0 0
      %415 = vmatpush1.bf16.msra.mxu0 %v390
      %416 = vmatprep.subr.bf16.mxu0 0
      %417 = vmatpush1.bf16.msra.mxu0 %v389
      %418 = vmatprep.subr.bf16.mxu0 0
      %419 = vmatpush1.bf16.msra.mxu0 %v388
      %420 = vmatprep.subr.bf16.mxu0 0
      %421 = vmatpush2.bf16.msra.mxu0 0
      %422 = vmatprep.subr.bf16.mxu0 0
      %423 = vmatpush2.bf16.msra.mxu0 0
      %424 = vmatprep.subr.bf16.mxu0 0
      %425 = vmatpush2.bf16.msra.mxu0 0
      %426 = vmatprep.subr.bf16.mxu0 0
      %427 = vmatpush2.bf16.msra.mxu0 0
      %428 = vmatprep.subr.bf16.mxu0 0
      %429 = vmatpush2.bf16.msra.mxu0 0
      %430 = vmatprep.subr.bf16.mxu0 0
      %431 = vmatpush2.bf16.msra.mxu0 0
      %432 = vmatprep.subr.bf16.mxu0 0
      %433 = vmatpush2.bf16.msra.mxu0 0
      %434 = vmatprep.subr.bf16.mxu0 0
      %435 = vmatpush2.bf16.msra.mxu0 0
      %436 = vmatprep.mubr.bf16.mxu0 0
      %437 = vmatmul.mubr.bf16.gmra.mxu0 %v354
      %v438 = vpop.f32.mrf.mxu0
      %v439 = vadd.f32 0.0, %v438
      %v440 = vpop.f32.mrf.mxu0
      %v441 = vpop.f32.mrf.mxu0
      %v442 = vadd.f32 0.0, %v441
      %v443 = vpop.f32.mrf.mxu0
      %444 = vdwg.mxu0
      %v449 = vcombine.low %v198, %v199
      %v450 = vcombine.low %v200, %v201
      %v452 = vunpack.c.l.s4 1983009808
      %v453 = vunpack.c.0.s8 %v452
      %v454 = vlaneseq
      %v455 = vshrl.u32 %v454, 7
      %v456 = vsub.s32 %v453, %v455
      %v457 = vrot.slane %v449, %v456
      %v459 = vunpack.c.l.s4 1983009808
      %v460 = vunpack.c.0.s8 %v459
      %v461 = vlaneseq
      %v462 = vshrl.u32 %v461, 7
      %v463 = vsub.s32 %v460, %v462
      %v464 = vrot.slane %v450, %v463
      %v465 = vcombine.low %v457, %v464
      %v483 = vunpack.c.l.b16 %v202
      %v484 = vunpack.c.l.b16 %v203
      %v485 = vunpack.c.l.b16 %v204
      %v486 = vunpack.c.l.b16 %v205
      %v487 = vunpack.c.l.b16 %v206
      %v488 = vunpack.c.l.b16 %v207
      %v489 = vunpack.c.l.b16 %v208
      %v490 = vunpack.c.l.b16 %v209
      %v491 = vunpack.c.l.b16 %v210
      %v492 = vunpack.c.l.b16 %v211
      %v493 = vunpack.c.l.b16 %v212
      %v494 = vunpack.c.l.b16 %v213
      %v495 = vunpack.c.l.b16 %v214
      %v496 = vunpack.c.l.b16 %v215
      %v497 = vunpack.c.l.b16 %v216
      %v498 = vunpack.c.l.b16 %v217
      %v499 = vpack.c.b16 %v484, %v483
      %v500 = vpack.c.b16 %v486, %v485
      %v501 = vpack.c.b16 %v488, %v487
      %v502 = vpack.c.b16 %v490, %v489
      %v503 = vpack.c.b16 %v492, %v491
      %v504 = vpack.c.b16 %v494, %v493
      %v505 = vpack.c.b16 %v496, %v495
      %v506 = vpack.c.b16 %v498, %v497
      %515 = vmatprep.subr.bf16.mxu0 0
      %516 = vmatpush1.bf16.msra.mxu0 %v506
      %517 = vmatprep.subr.bf16.mxu0 0
      %518 = vmatpush1.bf16.msra.mxu0 %v505
      %519 = vmatprep.subr.bf16.mxu0 0
      %520 = vmatpush1.bf16.msra.mxu0 %v504
      %521 = vmatprep.subr.bf16.mxu0 0
      %522 = vmatpush1.bf16.msra.mxu0 %v503
      %523 = vmatprep.subr.bf16.mxu0 0
      %524 = vmatpush1.bf16.msra.mxu0 %v502
      %525 = vmatprep.subr.bf16.mxu0 0
      %526 = vmatpush1.bf16.msra.mxu0 %v501
      %527 = vmatprep.subr.bf16.mxu0 0
      %528 = vmatpush1.bf16.msra.mxu0 %v500
      %529 = vmatprep.subr.bf16.mxu0 0
      %530 = vmatpush1.bf16.msra.mxu0 %v499
      %531 = vmatprep.subr.bf16.mxu0 0
      %532 = vmatpush2.bf16.msra.mxu0 0
      %533 = vmatprep.subr.bf16.mxu0 0
      %534 = vmatpush2.bf16.msra.mxu0 0
      %535 = vmatprep.subr.bf16.mxu0 0
      %536 = vmatpush2.bf16.msra.mxu0 0
      %537 = vmatprep.subr.bf16.mxu0 0
      %538 = vmatpush2.bf16.msra.mxu0 0
      %539 = vmatprep.subr.bf16.mxu0 0
      %540 = vmatpush2.bf16.msra.mxu0 0
      %541 = vmatprep.subr.bf16.mxu0 0
      %542 = vmatpush2.bf16.msra.mxu0 0
      %543 = vmatprep.subr.bf16.mxu0 0
      %544 = vmatpush2.bf16.msra.mxu0 0
      %545 = vmatprep.subr.bf16.mxu0 0
      %546 = vmatpush2.bf16.msra.mxu0 0
      %547 = vmatprep.mubr.bf16.mxu0 0
      %548 = vmatmul.mubr.bf16.gmra.mxu0 %v465
      %v549 = vpop.f32.mrf.mxu0
      %v550 = vadd.f32 %v439, %v549
      %v551 = vpop.f32.mrf.mxu0
      %v552 = vpop.f32.mrf.mxu0
      %v553 = vadd.f32 %v442, %v552
      %v554 = vpop.f32.mrf.mxu0
      %555 = vdwg.mxu0
      %v556 = vld [vmem:[%s197] sm:$0x6]
      %v557 = vld [vmem:[%s197 + $0x4] sm:$0x6]
      %v558 = vld [vmem:[%s197 + $0x8] sm:$0x6]
      %v559 = vld [vmem:[%s197 + $0xc] sm:$0x6]
      %v565 = vunpack.c.l.s4 1983009808
      %v566 = vunpack.c.0.s8 %v565
      %v567 = vlaneseq
      %v568 = vshrl.u32 %v567, 7
      %v569 = vsub.s32 %v566, %v568
      %v570 = vrot.slane %v556, %v569
      %v571 = vcombine.high %v570, %v570
      %v573 = vunpack.c.l.s4 1983009808
      %v574 = vunpack.c.0.s8 %v573
      %v575 = vlaneseq
      %v576 = vshrl.u32 %v575, 7
      %v577 = vsub.s32 %v574, %v576
      %v578 = vrot.slane %v557, %v577
      %v579 = vcombine.high %v578, %v578
      %v581 = vunpack.c.l.s4 1983009808
      %v582 = vunpack.c.0.s8 %v581
      %v583 = vlaneseq
      %v584 = vshrl.u32 %v583, 7
      %v585 = vsub.s32 %v582, %v584
      %v586 = vrot.slane %v558, %v585
      %v587 = vcombine.high %v586, %v586
      %v589 = vunpack.c.l.s4 1983009808
      %v590 = vunpack.c.0.s8 %v589
      %v591 = vlaneseq
      %v592 = vshrl.u32 %v591, 7
      %v593 = vsub.s32 %v590, %v592
      %v594 = vrot.slane %v559, %v593
      %v595 = vcombine.high %v594, %v594
      %vm596 = vcmask 1040384
      %vm597 = vcmask 1042434
      %vm598 = vmor %vm596, %vm597
      %vm599 = vcmask 1044484
      %vm600 = vmor %vm598, %vm599
      %vm601 = vcmask 1046534
      %vm602 = vmor %vm600, %vm601
      %v603 = vrot.slane %v570, 7
      %v604 = vrot.slane %v603, 2
      %v605 = vrot.slane %v571, 7
      %v606 = vsel %vm602, %v604, %v605
      %v607 = vrot.slane %v578, 7
      %v608 = vrot.slane %v607, 2
      %v609 = vrot.slane %v579, 7
      %v610 = vsel %vm602, %v608, %v609
      %v611 = vrot.slane %v586, 7
      %v612 = vrot.slane %v611, 2
      %v613 = vrot.slane %v587, 7
      %v614 = vsel %vm602, %v612, %v613
      %v615 = vrot.slane %v594, 7
      %v616 = vrot.slane %v615, 2
      %v617 = vrot.slane %v595, 7
      %v618 = vsel %vm602, %v616, %v617
      %s619 = scalar_lea.vmem %s1, 128
      %v620 = vld [vmem:[%s619] sm:$0xf]
      %v621 = vld [vmem:[%s619 + $0x4] sm:$0xf]
      %v622 = vld [vmem:[%s619 + $0x8] sm:$0xf]
      %v623 = vld [vmem:[%s619 + $0xc] sm:$0xf]
      %v624 = vld [vmem:[%s619 + $0x10] sm:$0xf]
      %v625 = vld [vmem:[%s619 + $0x14] sm:$0xf]
      %v626 = vld [vmem:[%s619 + $0x18] sm:$0xf]
      %v627 = vld [vmem:[%s619 + $0x1c] sm:$0xf]
      %v628 = vld [vmem:[%s619 + $0x20] sm:$0xf]
      %v629 = vld [vmem:[%s619 + $0x24] sm:$0xf]
      %v630 = vld [vmem:[%s619 + $0x28] sm:$0xf]
      %v631 = vld [vmem:[%s619 + $0x2c] sm:$0xf]
      %v632 = vld [vmem:[%s619 + $0x30] sm:$0xf]
      %v633 = vld [vmem:[%s619 + $0x34] sm:$0xf]
      %v634 = vld [vmem:[%s619 + $0x38] sm:$0xf]
      %v635 = vld [vmem:[%s619 + $0x3c] sm:$0xf]
      %v636 = vcombine.low %v606, %v610
      %v637 = vcombine.low %v614, %v618
      %v639 = vunpack.c.l.s4 1983009808
      %v640 = vunpack.c.0.s8 %v639
      %v641 = vlaneseq
      %v642 = vshrl.u32 %v641, 7
      %v643 = vsub.s32 %v640, %v642
      %v644 = vrot.slane %v636, %v643
      %v646 = vunpack.c.l.s4 1983009808
      %v647 = vunpack.c.0.s8 %v646
      %v648 = vlaneseq
      %v649 = vshrl.u32 %v648, 7
      %v650 = vsub.s32 %v647, %v649
      %v651 = vrot.slane %v637, %v650
      %v652 = vcombine.low %v644, %v651
      %v670 = vunpack.c.l.b16 %v620
      %v671 = vunpack.c.l.b16 %v621
      %v672 = vunpack.c.l.b16 %v622
      %v673 = vunpack.c.l.b16 %v623
      %v674 = vunpack.c.l.b16 %v624
      %v675 = vunpack.c.l.b16 %v625
      %v676 = vunpack.c.l.b16 %v626
      %v677 = vunpack.c.l.b16 %v627
      %v678 = vunpack.c.l.b16 %v628
      %v679 = vunpack.c.l.b16 %v629
      %v680 = vunpack.c.l.b16 %v630
      %v681 = vunpack.c.l.b16 %v631
      %v682 = vunpack.c.l.b16 %v632
      %v683 = vunpack.c.l.b16 %v633
      %v684 = vunpack.c.l.b16 %v634
      %v685 = vunpack.c.l.b16 %v635
      %v686 = vpack.c.b16 %v671, %v670
      %v687 = vpack.c.b16 %v673, %v672
      %v688 = vpack.c.b16 %v675, %v674
      %v689 = vpack.c.b16 %v677, %v676
      %v690 = vpack.c.b16 %v679, %v678
      %v691 = vpack.c.b16 %v681, %v680
      %v692 = vpack.c.b16 %v683, %v682
      %v693 = vpack.c.b16 %v685, %v684
      %702 = vmatprep.subr.bf16.mxu0 0
      %703 = vmatpush1.bf16.msra.mxu0 %v693
      %704 = vmatprep.subr.bf16.mxu0 0
      %705 = vmatpush1.bf16.msra.mxu0 %v692
      %706 = vmatprep.subr.bf16.mxu0 0
      %707 = vmatpush1.bf16.msra.mxu0 %v691
      %708 = vmatprep.subr.bf16.mxu0 0
      %709 = vmatpush1.bf16.msra.mxu0 %v690
      %710 = vmatprep.subr.bf16.mxu0 0
      %711 = vmatpush1.bf16.msra.mxu0 %v689
      %712 = vmatprep.subr.bf16.mxu0 0
      %713 = vmatpush1.bf16.msra.mxu0 %v688
      %714 = vmatprep.subr.bf16.mxu0 0
      %715 = vmatpush1.bf16.msra.mxu0 %v687
      %716 = vmatprep.subr.bf16.mxu0 0
      %717 = vmatpush1.bf16.msra.mxu0 %v686
      %718 = vmatprep.subr.bf16.mxu0 0
      %719 = vmatpush2.bf16.msra.mxu0 0
      %720 = vmatprep.subr.bf16.mxu0 0
      %721 = vmatpush2.bf16.msra.mxu0 0
      %722 = vmatprep.subr.bf16.mxu0 0
      %723 = vmatpush2.bf16.msra.mxu0 0
      %724 = vmatprep.subr.bf16.mxu0 0
      %725 = vmatpush2.bf16.msra.mxu0 0
      %726 = vmatprep.subr.bf16.mxu0 0
      %727 = vmatpush2.bf16.msra.mxu0 0
      %728 = vmatprep.subr.bf16.mxu0 0
      %729 = vmatpush2.bf16.msra.mxu0 0
      %730 = vmatprep.subr.bf16.mxu0 0
      %731 = vmatpush2.bf16.msra.mxu0 0
      %732 = vmatprep.subr.bf16.mxu0 0
      %733 = vmatpush2.bf16.msra.mxu0 0
      %734 = vmatprep.mubr.bf16.mxu0 0
      %735 = vmatmul.mubr.bf16.gmra.mxu0 %v652
      %v736 = vpop.f32.mrf.mxu0
      %v737 = vadd.f32 0.0, %v736
      %v738 = vpop.f32.mrf.mxu0
      %v739 = vpop.f32.mrf.mxu0
      %v740 = vadd.f32 0.0, %v739
      %v741 = vpop.f32.mrf.mxu0
      %742 = vdwg.mxu0
      %v743 = vadd.f32 %v550, %v737
      %v744 = vadd.f32 %v553, %v740
      %s745 = sadd.s32 %s195, 1
      %s746 = smul.addr %s745, 4
      %s747 = scalar_lea.vmem %s183, %s746
      %v748 = vld [vmem:[%s747] sm:$0x3]
      %v749 = vld [vmem:[%s747 + $0x4] sm:$0x3]
      %v750 = vld [vmem:[%s747 + $0x8] sm:$0x3]
      %v751 = vld [vmem:[%s747 + $0xc] sm:$0x3]
      %s752 = scalar_lea.vmem %s1, 192
      %v753 = vld [vmem:[%s752] sm:$0xf]
      %v754 = vld [vmem:[%s752 + $0x4] sm:$0xf]
      %v755 = vld [vmem:[%s752 + $0x8] sm:$0xf]
      %v756 = vld [vmem:[%s752 + $0xc] sm:$0xf]
      %v757 = vld [vmem:[%s752 + $0x10] sm:$0xf]
      %v758 = vld [vmem:[%s752 + $0x14] sm:$0xf]
      %v759 = vld [vmem:[%s752 + $0x18] sm:$0xf]
      %v760 = vld [vmem:[%s752 + $0x1c] sm:$0xf]
      %v761 = vld [vmem:[%s752 + $0x20] sm:$0xf]
      %v762 = vld [vmem:[%s752 + $0x24] sm:$0xf]
      %v763 = vld [vmem:[%s752 + $0x28] sm:$0xf]
      %v764 = vld [vmem:[%s752 + $0x2c] sm:$0xf]
      %v765 = vld [vmem:[%s752 + $0x30] sm:$0xf]
      %v766 = vld [vmem:[%s752 + $0x34] sm:$0xf]
      %v767 = vld [vmem:[%s752 + $0x38] sm:$0xf]
      %v768 = vld [vmem:[%s752 + $0x3c] sm:$0xf]
      %v773 = vcombine.low %v748, %v749
      %v774 = vcombine.low %v750, %v751
      %v776 = vunpack.c.l.s4 1983009808
      %v777 = vunpack.c.0.s8 %v776
      %v778 = vlaneseq
      %v779 = vshrl.u32 %v778, 7
      %v780 = vsub.s32 %v777, %v779
      %v781 = vrot.slane %v773, %v780
      %v783 = vunpack.c.l.s4 1983009808
      %v784 = vunpack.c.0.s8 %v783
      %v785 = vlaneseq
      %v786 = vshrl.u32 %v785, 7
      %v787 = vsub.s32 %v784, %v786
      %v788 = vrot.slane %v774, %v787
      %v789 = vcombine.low %v781, %v788
      %v807 = vunpack.c.l.b16 %v753
      %v808 = vunpack.c.l.b16 %v754
      %v809 = vunpack.c.l.b16 %v755
      %v810 = vunpack.c.l.b16 %v756
      %v811 = vunpack.c.l.b16 %v757
      %v812 = vunpack.c.l.b16 %v758
      %v813 = vunpack.c.l.b16 %v759
      %v814 = vunpack.c.l.b16 %v760
      %v815 = vunpack.c.l.b16 %v761
      %v816 = vunpack.c.l.b16 %v762
      %v817 = vunpack.c.l.b16 %v763
      %v818 = vunpack.c.l.b16 %v764
      %v819 = vunpack.c.l.b16 %v765
      %v820 = vunpack.c.l.b16 %v766
      %v821 = vunpack.c.l.b16 %v767
      %v822 = vunpack.c.l.b16 %v768
      %v823 = vpack.c.b16 %v808, %v807
      %v824 = vpack.c.b16 %v810, %v809
      %v825 = vpack.c.b16 %v812, %v811
      %v826 = vpack.c.b16 %v814, %v813
      %v827 = vpack.c.b16 %v816, %v815
      %v828 = vpack.c.b16 %v818, %v817
      %v829 = vpack.c.b16 %v820, %v819
      %v830 = vpack.c.b16 %v822, %v821
      %839 = vmatprep.subr.bf16.mxu0 0
      %840 = vmatpush1.bf16.msra.mxu0 %v830
      %841 = vmatprep.subr.bf16.mxu0 0
      %842 = vmatpush1.bf16.msra.mxu0 %v829
      %843 = vmatprep.subr.bf16.mxu0 0
      %844 = vmatpush1.bf16.msra.mxu0 %v828
      %845 = vmatprep.subr.bf16.mxu0 0
      %846 = vmatpush1.bf16.msra.mxu0 %v827
      %847 = vmatprep.subr.bf16.mxu0 0
      %848 = vmatpush1.bf16.msra.mxu0 %v826
      %849 = vmatprep.subr.bf16.mxu0 0
      %850 = vmatpush1.bf16.msra.mxu0 %v825
      %851 = vmatprep.subr.bf16.mxu0 0
      %852 = vmatpush1.bf16.msra.mxu0 %v824
      %853 = vmatprep.subr.bf16.mxu0 0
      %854 = vmatpush1.bf16.msra.mxu0 %v823
      %855 = vmatprep.subr.bf16.mxu0 0
      %856 = vmatpush2.bf16.msra.mxu0 0
      %857 = vmatprep.subr.bf16.mxu0 0
      %858 = vmatpush2.bf16.msra.mxu0 0
      %859 = vmatprep.subr.bf16.mxu0 0
      %860 = vmatpush2.bf16.msra.mxu0 0
      %861 = vmatprep.subr.bf16.mxu0 0
      %862 = vmatpush2.bf16.msra.mxu0 0
      %863 = vmatprep.subr.bf16.mxu0 0
      %864 = vmatpush2.bf16.msra.mxu0 0
      %865 = vmatprep.subr.bf16.mxu0 0
      %866 = vmatpush2.bf16.msra.mxu0 0
      %867 = vmatprep.subr.bf16.mxu0 0
      %868 = vmatpush2.bf16.msra.mxu0 0
      %869 = vmatprep.subr.bf16.mxu0 0
      %870 = vmatpush2.bf16.msra.mxu0 0
      %871 = vmatprep.mubr.bf16.mxu0 0
      %872 = vmatmul.mubr.bf16.gmra.mxu0 %v789
      %v873 = vpop.f32.mrf.mxu0
      %v874 = vadd.f32 0.0, %v873
      %v875 = vpop.f32.mrf.mxu0
      %v876 = vpop.f32.mrf.mxu0
      %v877 = vadd.f32 0.0, %v876
      %v878 = vpop.f32.mrf.mxu0
      %879 = vdwg.mxu0
      %v880 = vadd.f32 %v743, %v874
      %v881 = vadd.f32 %v744, %v877
      %v882 = vld [vmem:[%s747] sm:$0x7]
      %v883 = vld [vmem:[%s747 + $0x4] sm:$0x7]
      %v884 = vld [vmem:[%s747 + $0x8] sm:$0x7]
      %v885 = vld [vmem:[%s747 + $0xc] sm:$0x7]
      %v891 = vunpack.c.l.s4 1983009808
      %v892 = vunpack.c.0.s8 %v891
      %v893 = vlaneseq
      %v894 = vshrl.u32 %v893, 7
      %v895 = vsub.s32 %v892, %v894
      %v896 = vrot.slane %v882, %v895
      %v897 = vcombine.high %v896, %v896
      %v899 = vunpack.c.l.s4 1983009808
      %v900 = vunpack.c.0.s8 %v899
      %v901 = vlaneseq
      %v902 = vshrl.u32 %v901, 7
      %v903 = vsub.s32 %v900, %v902
      %v904 = vrot.slane %v883, %v903
      %v905 = vcombine.high %v904, %v904
      %v907 = vunpack.c.l.s4 1983009808
      %v908 = vunpack.c.0.s8 %v907
      %v909 = vlaneseq
      %v910 = vshrl.u32 %v909, 7
      %v911 = vsub.s32 %v908, %v910
      %v912 = vrot.slane %v884, %v911
      %v913 = vcombine.high %v912, %v912
      %v915 = vunpack.c.l.s4 1983009808
      %v916 = vunpack.c.0.s8 %v915
      %v917 = vlaneseq
      %v918 = vshrl.u32 %v917, 7
      %v919 = vsub.s32 %v916, %v918
      %v920 = vrot.slane %v885, %v919
      %v921 = vcombine.high %v920, %v920
      %v923 = vshrl.u32 %v896, 16
      %v925 = vrot.slane %v923, 6
      %v926 = vshll.u32 %v896, 16
      %v928 = vrot.slane %v926, 7
      %v929 = vor.u32 %v925, %v928
      %v930 = vrot.slane %v929, 2
      %v932 = vshll.u32 %v897, 16
      %v934 = vrot.slane %v932, 7
      %v935 = vsel %vm264, %v930, %v934
      %v937 = vshrl.u32 %v904, 16
      %v939 = vrot.slane %v937, 6
      %v940 = vshll.u32 %v904, 16
      %v942 = vrot.slane %v940, 7
      %v943 = vor.u32 %v939, %v942
      %v944 = vrot.slane %v943, 2
      %v946 = vshll.u32 %v905, 16
      %v948 = vrot.slane %v946, 7
      %v949 = vsel %vm264, %v944, %v948
      %v951 = vshrl.u32 %v912, 16
      %v953 = vrot.slane %v951, 6
      %v954 = vshll.u32 %v912, 16
      %v956 = vrot.slane %v954, 7
      %v957 = vor.u32 %v953, %v956
      %v958 = vrot.slane %v957, 2
      %v960 = vshll.u32 %v913, 16
      %v962 = vrot.slane %v960, 7
      %v963 = vsel %vm264, %v958, %v962
      %v965 = vshrl.u32 %v920, 16
      %v967 = vrot.slane %v965, 6
      %v968 = vshll.u32 %v920, 16
      %v970 = vrot.slane %v968, 7
      %v971 = vor.u32 %v967, %v970
      %v972 = vrot.slane %v971, 2
      %v974 = vshll.u32 %v921, 16
      %v976 = vrot.slane %v974, 7
      %v977 = vsel %vm264, %v972, %v976
      %s978 = scalar_lea.vmem %s1, 256
      %v979 = vld [vmem:[%s978] sm:$0xf]
      %v980 = vld [vmem:[%s978 + $0x4] sm:$0xf]
      %v981 = vld [vmem:[%s978 + $0x8] sm:$0xf]
      %v982 = vld [vmem:[%s978 + $0xc] sm:$0xf]
      %v983 = vld [vmem:[%s978 + $0x10] sm:$0xf]
      %v984 = vld [vmem:[%s978 + $0x14] sm:$0xf]
      %v985 = vld [vmem:[%s978 + $0x18] sm:$0xf]
      %v986 = vld [vmem:[%s978 + $0x1c] sm:$0xf]
      %v987 = vld [vmem:[%s978 + $0x20] sm:$0xf]
      %v988 = vld [vmem:[%s978 + $0x24] sm:$0xf]
      %v989 = vld [vmem:[%s978 + $0x28] sm:$0xf]
      %v990 = vld [vmem:[%s978 + $0x2c] sm:$0xf]
      %v991 = vld [vmem:[%s978 + $0x30] sm:$0xf]
      %v992 = vld [vmem:[%s978 + $0x34] sm:$0xf]
      %v993 = vld [vmem:[%s978 + $0x38] sm:$0xf]
      %v994 = vld [vmem:[%s978 + $0x3c] sm:$0xf]
      %v995 = vcombine.low %v935, %v949
      %v996 = vcombine.low %v963, %v977
      %v998 = vunpack.c.l.s4 1983009808
      %v999 = vunpack.c.0.s8 %v998
      %v1000 = vlaneseq
      %v1001 = vshrl.u32 %v1000, 7
      %v1002 = vsub.s32 %v999, %v1001
      %v1003 = vrot.slane %v995, %v1002
      %v1005 = vunpack.c.l.s4 1983009808
      %v1006 = vunpack.c.0.s8 %v1005
      %v1007 = vlaneseq
      %v1008 = vshrl.u32 %v1007, 7
      %v1009 = vsub.s32 %v1006, %v1008
      %v1010 = vrot.slane %v996, %v1009
      %v1011 = vcombine.low %v1003, %v1010
      %v1029 = vunpack.c.l.b16 %v979
      %v1030 = vunpack.c.l.b16 %v980
      %v1031 = vunpack.c.l.b16 %v981
      %v1032 = vunpack.c.l.b16 %v982
      %v1033 = vunpack.c.l.b16 %v983
      %v1034 = vunpack.c.l.b16 %v984
      %v1035 = vunpack.c.l.b16 %v985
      %v1036 = vunpack.c.l.b16 %v986
      %v1037 = vunpack.c.l.b16 %v987
      %v1038 = vunpack.c.l.b16 %v988
      %v1039 = vunpack.c.l.b16 %v989
      %v1040 = vunpack.c.l.b16 %v990
      %v1041 = vunpack.c.l.b16 %v991
      %v1042 = vunpack.c.l.b16 %v992
      %v1043 = vunpack.c.l.b16 %v993
      %v1044 = vunpack.c.l.b16 %v994
      %v1045 = vpack.c.b16 %v1030, %v1029
      %v1046 = vpack.c.b16 %v1032, %v1031
      %v1047 = vpack.c.b16 %v1034, %v1033
      %v1048 = vpack.c.b16 %v1036, %v1035
      %v1049 = vpack.c.b16 %v1038, %v1037
      %v1050 = vpack.c.b16 %v1040, %v1039
      %v1051 = vpack.c.b16 %v1042, %v1041
      %v1052 = vpack.c.b16 %v1044, %v1043
      %1061 = vmatprep.subr.bf16.mxu0 0
      %1062 = vmatpush1.bf16.msra.mxu0 %v1052
      %1063 = vmatprep.subr.bf16.mxu0 0
      %1064 = vmatpush1.bf16.msra.mxu0 %v1051
      %1065 = vmatprep.subr.bf16.mxu0 0
      %1066 = vmatpush1.bf16.msra.mxu0 %v1050
      %1067 = vmatprep.subr.bf16.mxu0 0
      %1068 = vmatpush1.bf16.msra.mxu0 %v1049
      %1069 = vmatprep.subr.bf16.mxu0 0
      %1070 = vmatpush1.bf16.msra.mxu0 %v1048
      %1071 = vmatprep.subr.bf16.mxu0 0
      %1072 = vmatpush1.bf16.msra.mxu0 %v1047
      %1073 = vmatprep.subr.bf16.mxu0 0
      %1074 = vmatpush1.bf16.msra.mxu0 %v1046
      %1075 = vmatprep.subr.bf16.mxu0 0
      %1076 = vmatpush1.bf16.msra.mxu0 %v1045
      %1077 = vmatprep.subr.bf16.mxu0 0
      %1078 = vmatpush2.bf16.msra.mxu0 0
      %1079 = vmatprep.subr.bf16.mxu0 0
      %1080 = vmatpush2.bf16.msra.mxu0 0
      %1081 = vmatprep.subr.bf16.mxu0 0
      %1082 = vmatpush2.bf16.msra.mxu0 0
      %1083 = vmatprep.subr.bf16.mxu0 0
      %1084 = vmatpush2.bf16.msra.mxu0 0
      %1085 = vmatprep.subr.bf16.mxu0 0
      %1086 = vmatpush2.bf16.msra.mxu0 0
      %1087 = vmatprep.subr.bf16.mxu0 0
      %1088 = vmatpush2.bf16.msra.mxu0 0
      %1089 = vmatprep.subr.bf16.mxu0 0
      %1090 = vmatpush2.bf16.msra.mxu0 0
      %1091 = vmatprep.subr.bf16.mxu0 0
      %1092 = vmatpush2.bf16.msra.mxu0 0
      %1093 = vmatprep.mubr.bf16.mxu0 0
      %1094 = vmatmul.mubr.bf16.gmra.mxu0 %v1011
      %v1095 = vpop.f32.mrf.mxu0
      %v1096 = vadd.f32 0.0, %v1095
      %v1097 = vpop.f32.mrf.mxu0
      %v1098 = vpop.f32.mrf.mxu0
      %v1099 = vadd.f32 0.0, %v1098
      %v1100 = vpop.f32.mrf.mxu0
      %1101 = vdwg.mxu0
      %v1102 = vadd.f32 %v880, %v1096
      %v1103 = vadd.f32 %v881, %v1099
      %v1104 = vld [vmem:[%s747] sm:$0x6]
      %v1105 = vld [vmem:[%s747 + $0x4] sm:$0x6]
      %v1106 = vld [vmem:[%s747 + $0x8] sm:$0x6]
      %v1107 = vld [vmem:[%s747 + $0xc] sm:$0x6]
      %v1113 = vunpack.c.l.s4 1983009808
      %v1114 = vunpack.c.0.s8 %v1113
      %v1115 = vlaneseq
      %v1116 = vshrl.u32 %v1115, 7
      %v1117 = vsub.s32 %v1114, %v1116
      %v1118 = vrot.slane %v1104, %v1117
      %v1119 = vcombine.high %v1118, %v1118
      %v1121 = vunpack.c.l.s4 1983009808
      %v1122 = vunpack.c.0.s8 %v1121
      %v1123 = vlaneseq
      %v1124 = vshrl.u32 %v1123, 7
      %v1125 = vsub.s32 %v1122, %v1124
      %v1126 = vrot.slane %v1105, %v1125
      %v1127 = vcombine.high %v1126, %v1126
      %v1129 = vunpack.c.l.s4 1983009808
      %v1130 = vunpack.c.0.s8 %v1129
      %v1131 = vlaneseq
      %v1132 = vshrl.u32 %v1131, 7
      %v1133 = vsub.s32 %v1130, %v1132
      %v1134 = vrot.slane %v1106, %v1133
      %v1135 = vcombine.high %v1134, %v1134
      %v1137 = vunpack.c.l.s4 1983009808
      %v1138 = vunpack.c.0.s8 %v1137
      %v1139 = vlaneseq
      %v1140 = vshrl.u32 %v1139, 7
      %v1141 = vsub.s32 %v1138, %v1140
      %v1142 = vrot.slane %v1107, %v1141
      %v1143 = vcombine.high %v1142, %v1142
      %v1144 = vrot.slane %v1118, 7
      %v1145 = vrot.slane %v1144, 2
      %v1146 = vrot.slane %v1119, 7
      %v1147 = vsel %vm602, %v1145, %v1146
      %v1148 = vrot.slane %v1126, 7
      %v1149 = vrot.slane %v1148, 2
      %v1150 = vrot.slane %v1127, 7
      %v1151 = vsel %vm602, %v1149, %v1150
      %v1152 = vrot.slane %v1134, 7
      %v1153 = vrot.slane %v1152, 2
      %v1154 = vrot.slane %v1135, 7
      %v1155 = vsel %vm602, %v1153, %v1154
      %v1156 = vrot.slane %v1142, 7
      %v1157 = vrot.slane %v1156, 2
      %v1158 = vrot.slane %v1143, 7
      %v1159 = vsel %vm602, %v1157, %v1158
      %s1160 = scalar_lea.vmem %s1, 320
      %v1161 = vld [vmem:[%s1160] sm:$0xf]
      %v1162 = vld [vmem:[%s1160 + $0x4] sm:$0xf]
      %v1163 = vld [vmem:[%s1160 + $0x8] sm:$0xf]
      %v1164 = vld [vmem:[%s1160 + $0xc] sm:$0xf]
      %v1165 = vld [vmem:[%s1160 + $0x10] sm:$0xf]
      %v1166 = vld [vmem:[%s1160 + $0x14] sm:$0xf]
      %v1167 = vld [vmem:[%s1160 + $0x18] sm:$0xf]
      %v1168 = vld [vmem:[%s1160 + $0x1c] sm:$0xf]
      %v1169 = vld [vmem:[%s1160 + $0x20] sm:$0xf]
      %v1170 = vld [vmem:[%s1160 + $0x24] sm:$0xf]
      %v1171 = vld [vmem:[%s1160 + $0x28] sm:$0xf]
      %v1172 = vld [vmem:[%s1160 + $0x2c] sm:$0xf]
      %v1173 = vld [vmem:[%s1160 + $0x30] sm:$0xf]
      %v1174 = vld [vmem:[%s1160 + $0x34] sm:$0xf]
      %v1175 = vld [vmem:[%s1160 + $0x38] sm:$0xf]
      %v1176 = vld [vmem:[%s1160 + $0x3c] sm:$0xf]
      %v1177 = vcombine.low %v1147, %v1151
      %v1178 = vcombine.low %v1155, %v1159
      %v1180 = vunpack.c.l.s4 1983009808
      %v1181 = vunpack.c.0.s8 %v1180
      %v1182 = vlaneseq
      %v1183 = vshrl.u32 %v1182, 7
      %v1184 = vsub.s32 %v1181, %v1183
      %v1185 = vrot.slane %v1177, %v1184
      %v1187 = vunpack.c.l.s4 1983009808
      %v1188 = vunpack.c.0.s8 %v1187
      %v1189 = vlaneseq
      %v1190 = vshrl.u32 %v1189, 7
      %v1191 = vsub.s32 %v1188, %v1190
      %v1192 = vrot.slane %v1178, %v1191
      %v1193 = vcombine.low %v1185, %v1192
      %v1211 = vunpack.c.l.b16 %v1161
      %v1212 = vunpack.c.l.b16 %v1162
      %v1213 = vunpack.c.l.b16 %v1163
      %v1214 = vunpack.c.l.b16 %v1164
      %v1215 = vunpack.c.l.b16 %v1165
      %v1216 = vunpack.c.l.b16 %v1166
      %v1217 = vunpack.c.l.b16 %v1167
      %v1218 = vunpack.c.l.b16 %v1168
      %v1219 = vunpack.c.l.b16 %v1169
      %v1220 = vunpack.c.l.b16 %v1170
      %v1221 = vunpack.c.l.b16 %v1171
      %v1222 = vunpack.c.l.b16 %v1172
      %v1223 = vunpack.c.l.b16 %v1173
      %v1224 = vunpack.c.l.b16 %v1174
      %v1225 = vunpack.c.l.b16 %v1175
      %v1226 = vunpack.c.l.b16 %v1176
      %v1227 = vpack.c.b16 %v1212, %v1211
      %v1228 = vpack.c.b16 %v1214, %v1213
      %v1229 = vpack.c.b16 %v1216, %v1215
      %v1230 = vpack.c.b16 %v1218, %v1217
      %v1231 = vpack.c.b16 %v1220, %v1219
      %v1232 = vpack.c.b16 %v1222, %v1221
      %v1233 = vpack.c.b16 %v1224, %v1223
      %v1234 = vpack.c.b16 %v1226, %v1225
      %1243 = vmatprep.subr.bf16.mxu0 0
      %1244 = vmatpush1.bf16.msra.mxu0 %v1234
      %1245 = vmatprep.subr.bf16.mxu0 0
      %1246 = vmatpush1.bf16.msra.mxu0 %v1233
      %1247 = vmatprep.subr.bf16.mxu0 0
      %1248 = vmatpush1.bf16.msra.mxu0 %v1232
      %1249 = vmatprep.subr.bf16.mxu0 0
      %1250 = vmatpush1.bf16.msra.mxu0 %v1231
      %1251 = vmatprep.subr.bf16.mxu0 0
      %1252 = vmatpush1.bf16.msra.mxu0 %v1230
      %1253 = vmatprep.subr.bf16.mxu0 0
      %1254 = vmatpush1.bf16.msra.mxu0 %v1229
      %1255 = vmatprep.subr.bf16.mxu0 0
      %1256 = vmatpush1.bf16.msra.mxu0 %v1228
      %1257 = vmatprep.subr.bf16.mxu0 0
      %1258 = vmatpush1.bf16.msra.mxu0 %v1227
      %1259 = vmatprep.subr.bf16.mxu0 0
      %1260 = vmatpush2.bf16.msra.mxu0 0
      %1261 = vmatprep.subr.bf16.mxu0 0
      %1262 = vmatpush2.bf16.msra.mxu0 0
      %1263 = vmatprep.subr.bf16.mxu0 0
      %1264 = vmatpush2.bf16.msra.mxu0 0
      %1265 = vmatprep.subr.bf16.mxu0 0
      %1266 = vmatpush2.bf16.msra.mxu0 0
      %1267 = vmatprep.subr.bf16.mxu0 0
      %1268 = vmatpush2.bf16.msra.mxu0 0
      %1269 = vmatprep.subr.bf16.mxu0 0
      %1270 = vmatpush2.bf16.msra.mxu0 0
      %1271 = vmatprep.subr.bf16.mxu0 0
      %1272 = vmatpush2.bf16.msra.mxu0 0
      %1273 = vmatprep.subr.bf16.mxu0 0
      %1274 = vmatpush2.bf16.msra.mxu0 0
      %1275 = vmatprep.mubr.bf16.mxu0 0
      %1276 = vmatmul.mubr.bf16.gmra.mxu0 %v1193
      %v1277 = vpop.f32.mrf.mxu0
      %v1278 = vadd.f32 0.0, %v1277
      %v1279 = vpop.f32.mrf.mxu0
      %v1280 = vpop.f32.mrf.mxu0
      %v1281 = vadd.f32 0.0, %v1280
      %v1282 = vpop.f32.mrf.mxu0
      %1283 = vdwg.mxu0
      %v1284 = vadd.f32 %v1102, %v1278
      %v1285 = vadd.f32 %v1103, %v1281
      %s1286 = sadd.s32 %s195, 2
      %s1287 = smul.addr %s1286, 4
      %s1288 = scalar_lea.vmem %s183, %s1287
      %v1289 = vld [vmem:[%s1288] sm:$0x3]
      %v1290 = vld [vmem:[%s1288 + $0x4] sm:$0x3]
      %v1291 = vld [vmem:[%s1288 + $0x8] sm:$0x3]
      %v1292 = vld [vmem:[%s1288 + $0xc] sm:$0x3]
      %s1293 = scalar_lea.vmem %s1, 384
      %v1294 = vld [vmem:[%s1293] sm:$0xf]
      %v1295 = vld [vmem:[%s1293 + $0x4] sm:$0xf]
      %v1296 = vld [vmem:[%s1293 + $0x8] sm:$0xf]
      %v1297 = vld [vmem:[%s1293 + $0xc] sm:$0xf]
      %v1298 = vld [vmem:[%s1293 + $0x10] sm:$0xf]
      %v1299 = vld [vmem:[%s1293 + $0x14] sm:$0xf]
      %v1300 = vld [vmem:[%s1293 + $0x18] sm:$0xf]
      %v1301 = vld [vmem:[%s1293 + $0x1c] sm:$0xf]
      %v1302 = vld [vmem:[%s1293 + $0x20] sm:$0xf]
      %v1303 = vld [vmem:[%s1293 + $0x24] sm:$0xf]
      %v1304 = vld [vmem:[%s1293 + $0x28] sm:$0xf]
      %v1305 = vld [vmem:[%s1293 + $0x2c] sm:$0xf]
      %v1306 = vld [vmem:[%s1293 + $0x30] sm:$0xf]
      %v1307 = vld [vmem:[%s1293 + $0x34] sm:$0xf]
      %v1308 = vld [vmem:[%s1293 + $0x38] sm:$0xf]
      %v1309 = vld [vmem:[%s1293 + $0x3c] sm:$0xf]
      %v1314 = vcombine.low %v1289, %v1290
      %v1315 = vcombine.low %v1291, %v1292
      %v1317 = vunpack.c.l.s4 1983009808
      %v1318 = vunpack.c.0.s8 %v1317
      %v1319 = vlaneseq
      %v1320 = vshrl.u32 %v1319, 7
      %v1321 = vsub.s32 %v1318, %v1320
      %v1322 = vrot.slane %v1314, %v1321
      %v1324 = vunpack.c.l.s4 1983009808
      %v1325 = vunpack.c.0.s8 %v1324
      %v1326 = vlaneseq
      %v1327 = vshrl.u32 %v1326, 7
      %v1328 = vsub.s32 %v1325, %v1327
      %v1329 = vrot.slane %v1315, %v1328
      %v1330 = vcombine.low %v1322, %v1329
      %v1348 = vunpack.c.l.b16 %v1294
      %v1349 = vunpack.c.l.b16 %v1295
      %v1350 = vunpack.c.l.b16 %v1296
      %v1351 = vunpack.c.l.b16 %v1297
      %v1352 = vunpack.c.l.b16 %v1298
      %v1353 = vunpack.c.l.b16 %v1299
      %v1354 = vunpack.c.l.b16 %v1300
      %v1355 = vunpack.c.l.b16 %v1301
      %v1356 = vunpack.c.l.b16 %v1302
      %v1357 = vunpack.c.l.b16 %v1303
      %v1358 = vunpack.c.l.b16 %v1304
      %v1359 = vunpack.c.l.b16 %v1305
      %v1360 = vunpack.c.l.b16 %v1306
      %v1361 = vunpack.c.l.b16 %v1307
      %v1362 = vunpack.c.l.b16 %v1308
      %v1363 = vunpack.c.l.b16 %v1309
      %v1364 = vpack.c.b16 %v1349, %v1348
      %v1365 = vpack.c.b16 %v1351, %v1350
      %v1366 = vpack.c.b16 %v1353, %v1352
      %v1367 = vpack.c.b16 %v1355, %v1354
      %v1368 = vpack.c.b16 %v1357, %v1356
      %v1369 = vpack.c.b16 %v1359, %v1358
      %v1370 = vpack.c.b16 %v1361, %v1360
      %v1371 = vpack.c.b16 %v1363, %v1362
      %1380 = vmatprep.subr.bf16.mxu0 0
      %1381 = vmatpush1.bf16.msra.mxu0 %v1371
      %1382 = vmatprep.subr.bf16.mxu0 0
      %1383 = vmatpush1.bf16.msra.mxu0 %v1370
      %1384 = vmatprep.subr.bf16.mxu0 0
      %1385 = vmatpush1.bf16.msra.mxu0 %v1369
      %1386 = vmatprep.subr.bf16.mxu0 0
      %1387 = vmatpush1.bf16.msra.mxu0 %v1368
      %1388 = vmatprep.subr.bf16.mxu0 0
      %1389 = vmatpush1.bf16.msra.mxu0 %v1367
      %1390 = vmatprep.subr.bf16.mxu0 0
      %1391 = vmatpush1.bf16.msra.mxu0 %v1366
      %1392 = vmatprep.subr.bf16.mxu0 0
      %1393 = vmatpush1.bf16.msra.mxu0 %v1365
      %1394 = vmatprep.subr.bf16.mxu0 0
      %1395 = vmatpush1.bf16.msra.mxu0 %v1364
      %1396 = vmatprep.subr.bf16.mxu0 0
      %1397 = vmatpush2.bf16.msra.mxu0 0
      %1398 = vmatprep.subr.bf16.mxu0 0
      %1399 = vmatpush2.bf16.msra.mxu0 0
      %1400 = vmatprep.subr.bf16.mxu0 0
      %1401 = vmatpush2.bf16.msra.mxu0 0
      %1402 = vmatprep.subr.bf16.mxu0 0
      %1403 = vmatpush2.bf16.msra.mxu0 0
      %1404 = vmatprep.subr.bf16.mxu0 0
      %1405 = vmatpush2.bf16.msra.mxu0 0
      %1406 = vmatprep.subr.bf16.mxu0 0
      %1407 = vmatpush2.bf16.msra.mxu0 0
      %1408 = vmatprep.subr.bf16.mxu0 0
      %1409 = vmatpush2.bf16.msra.mxu0 0
      %1410 = vmatprep.subr.bf16.mxu0 0
      %1411 = vmatpush2.bf16.msra.mxu0 0
      %1412 = vmatprep.mubr.bf16.mxu0 0
      %1413 = vmatmul.mubr.bf16.gmra.mxu0 %v1330
      %v1414 = vpop.f32.mrf.mxu0
      %v1415 = vadd.f32 0.0, %v1414
      %v1416 = vpop.f32.mrf.mxu0
      %v1417 = vpop.f32.mrf.mxu0
      %v1418 = vadd.f32 0.0, %v1417
      %v1419 = vpop.f32.mrf.mxu0
      %1420 = vdwg.mxu0
      %v1421 = vadd.f32 %v1284, %v1415
      %v1422 = vadd.f32 %v1285, %v1418
      %v1423 = vld [vmem:[%s1288] sm:$0x7]
      %v1424 = vld [vmem:[%s1288 + $0x4] sm:$0x7]
      %v1425 = vld [vmem:[%s1288 + $0x8] sm:$0x7]
      %v1426 = vld [vmem:[%s1288 + $0xc] sm:$0x7]
      %v1432 = vunpack.c.l.s4 1983009808
      %v1433 = vunpack.c.0.s8 %v1432
      %v1434 = vlaneseq
      %v1435 = vshrl.u32 %v1434, 7
      %v1436 = vsub.s32 %v1433, %v1435
      %v1437 = vrot.slane %v1423, %v1436
      %v1438 = vcombine.high %v1437, %v1437
      %v1440 = vunpack.c.l.s4 1983009808
      %v1441 = vunpack.c.0.s8 %v1440
      %v1442 = vlaneseq
      %v1443 = vshrl.u32 %v1442, 7
      %v1444 = vsub.s32 %v1441, %v1443
      %v1445 = vrot.slane %v1424, %v1444
      %v1446 = vcombine.high %v1445, %v1445
      %v1448 = vunpack.c.l.s4 1983009808
      %v1449 = vunpack.c.0.s8 %v1448
      %v1450 = vlaneseq
      %v1451 = vshrl.u32 %v1450, 7
      %v1452 = vsub.s32 %v1449, %v1451
      %v1453 = vrot.slane %v1425, %v1452
      %v1454 = vcombine.high %v1453, %v1453
      %v1456 = vunpack.c.l.s4 1983009808
      %v1457 = vunpack.c.0.s8 %v1456
      %v1458 = vlaneseq
      %v1459 = vshrl.u32 %v1458, 7
      %v1460 = vsub.s32 %v1457, %v1459
      %v1461 = vrot.slane %v1426, %v1460
      %v1462 = vcombine.high %v1461, %v1461
      %v1464 = vshrl.u32 %v1437, 16
      %v1466 = vrot.slane %v1464, 6
      %v1467 = vshll.u32 %v1437, 16
      %v1469 = vrot.slane %v1467, 7
      %v1470 = vor.u32 %v1466, %v1469
      %v1471 = vrot.slane %v1470, 2
      %v1473 = vshll.u32 %v1438, 16
      %v1475 = vrot.slane %v1473, 7
      %v1476 = vsel %vm264, %v1471, %v1475
      %v1478 = vshrl.u32 %v1445, 16
      %v1480 = vrot.slane %v1478, 6
      %v1481 = vshll.u32 %v1445, 16
      %v1483 = vrot.slane %v1481, 7
      %v1484 = vor.u32 %v1480, %v1483
      %v1485 = vrot.slane %v1484, 2
      %v1487 = vshll.u32 %v1446, 16
      %v1489 = vrot.slane %v1487, 7
      %v1490 = vsel %vm264, %v1485, %v1489
      %v1492 = vshrl.u32 %v1453, 16
      %v1494 = vrot.slane %v1492, 6
      %v1495 = vshll.u32 %v1453, 16
      %v1497 = vrot.slane %v1495, 7
      %v1498 = vor.u32 %v1494, %v1497
      %v1499 = vrot.slane %v1498, 2
      %v1501 = vshll.u32 %v1454, 16
      %v1503 = vrot.slane %v1501, 7
      %v1504 = vsel %vm264, %v1499, %v1503
      %v1506 = vshrl.u32 %v1461, 16
      %v1508 = vrot.slane %v1506, 6
      %v1509 = vshll.u32 %v1461, 16
      %v1511 = vrot.slane %v1509, 7
      %v1512 = vor.u32 %v1508, %v1511
      %v1513 = vrot.slane %v1512, 2
      %v1515 = vshll.u32 %v1462, 16
      %v1517 = vrot.slane %v1515, 7
      %v1518 = vsel %vm264, %v1513, %v1517
      %s1519 = scalar_lea.vmem %s1, 448
      %v1520 = vld [vmem:[%s1519] sm:$0xf]
      %v1521 = vld [vmem:[%s1519 + $0x4] sm:$0xf]
      %v1522 = vld [vmem:[%s1519 + $0x8] sm:$0xf]
      %v1523 = vld [vmem:[%s1519 + $0xc] sm:$0xf]
      %v1524 = vld [vmem:[%s1519 + $0x10] sm:$0xf]
      %v1525 = vld [vmem:[%s1519 + $0x14] sm:$0xf]
      %v1526 = vld [vmem:[%s1519 + $0x18] sm:$0xf]
      %v1527 = vld [vmem:[%s1519 + $0x1c] sm:$0xf]
      %v1528 = vld [vmem:[%s1519 + $0x20] sm:$0xf]
      %v1529 = vld [vmem:[%s1519 + $0x24] sm:$0xf]
      %v1530 = vld [vmem:[%s1519 + $0x28] sm:$0xf]
      %v1531 = vld [vmem:[%s1519 + $0x2c] sm:$0xf]
      %v1532 = vld [vmem:[%s1519 + $0x30] sm:$0xf]
      %v1533 = vld [vmem:[%s1519 + $0x34] sm:$0xf]
      %v1534 = vld [vmem:[%s1519 + $0x38] sm:$0xf]
      %v1535 = vld [vmem:[%s1519 + $0x3c] sm:$0xf]
      %v1536 = vcombine.low %v1476, %v1490
      %v1537 = vcombine.low %v1504, %v1518
      %v1539 = vunpack.c.l.s4 1983009808
      %v1540 = vunpack.c.0.s8 %v1539
      %v1541 = vlaneseq
      %v1542 = vshrl.u32 %v1541, 7
      %v1543 = vsub.s32 %v1540, %v1542
      %v1544 = vrot.slane %v1536, %v1543
      %v1546 = vunpack.c.l.s4 1983009808
      %v1547 = vunpack.c.0.s8 %v1546
      %v1548 = vlaneseq
      %v1549 = vshrl.u32 %v1548, 7
      %v1550 = vsub.s32 %v1547, %v1549
      %v1551 = vrot.slane %v1537, %v1550
      %v1552 = vcombine.low %v1544, %v1551
      %v1570 = vunpack.c.l.b16 %v1520
      %v1571 = vunpack.c.l.b16 %v1521
      %v1572 = vunpack.c.l.b16 %v1522
      %v1573 = vunpack.c.l.b16 %v1523
      %v1574 = vunpack.c.l.b16 %v1524
      %v1575 = vunpack.c.l.b16 %v1525
      %v1576 = vunpack.c.l.b16 %v1526
      %v1577 = vunpack.c.l.b16 %v1527
      %v1578 = vunpack.c.l.b16 %v1528
      %v1579 = vunpack.c.l.b16 %v1529
      %v1580 = vunpack.c.l.b16 %v1530
      %v1581 = vunpack.c.l.b16 %v1531
      %v1582 = vunpack.c.l.b16 %v1532
      %v1583 = vunpack.c.l.b16 %v1533
      %v1584 = vunpack.c.l.b16 %v1534
      %v1585 = vunpack.c.l.b16 %v1535
      %v1586 = vpack.c.b16 %v1571, %v1570
      %v1587 = vpack.c.b16 %v1573, %v1572
      %v1588 = vpack.c.b16 %v1575, %v1574
      %v1589 = vpack.c.b16 %v1577, %v1576
      %v1590 = vpack.c.b16 %v1579, %v1578
      %v1591 = vpack.c.b16 %v1581, %v1580
      %v1592 = vpack.c.b16 %v1583, %v1582
      %v1593 = vpack.c.b16 %v1585, %v1584
      %1602 = vmatprep.subr.bf16.mxu0 0
      %1603 = vmatpush1.bf16.msra.mxu0 %v1593
      %1604 = vmatprep.subr.bf16.mxu0 0
      %1605 = vmatpush1.bf16.msra.mxu0 %v1592
      %1606 = vmatprep.subr.bf16.mxu0 0
      %1607 = vmatpush1.bf16.msra.mxu0 %v1591
      %1608 = vmatprep.subr.bf16.mxu0 0
      %1609 = vmatpush1.bf16.msra.mxu0 %v1590
      %1610 = vmatprep.subr.bf16.mxu0 0
      %1611 = vmatpush1.bf16.msra.mxu0 %v1589
      %1612 = vmatprep.subr.bf16.mxu0 0
      %1613 = vmatpush1.bf16.msra.mxu0 %v1588
      %1614 = vmatprep.subr.bf16.mxu0 0
      %1615 = vmatpush1.bf16.msra.mxu0 %v1587
      %1616 = vmatprep.subr.bf16.mxu0 0
      %1617 = vmatpush1.bf16.msra.mxu0 %v1586
      %1618 = vmatprep.subr.bf16.mxu0 0
      %1619 = vmatpush2.bf16.msra.mxu0 0
      %1620 = vmatprep.subr.bf16.mxu0 0
      %1621 = vmatpush2.bf16.msra.mxu0 0
      %1622 = vmatprep.subr.bf16.mxu0 0
      %1623 = vmatpush2.bf16.msra.mxu0 0
      %1624 = vmatprep.subr.bf16.mxu0 0
      %1625 = vmatpush2.bf16.msra.mxu0 0
      %1626 = vmatprep.subr.bf16.mxu0 0
      %1627 = vmatpush2.bf16.msra.mxu0 0
      %1628 = vmatprep.subr.bf16.mxu0 0
      %1629 = vmatpush2.bf16.msra.mxu0 0
      %1630 = vmatprep.subr.bf16.mxu0 0
      %1631 = vmatpush2.bf16.msra.mxu0 0
      %1632 = vmatprep.subr.bf16.mxu0 0
      %1633 = vmatpush2.bf16.msra.mxu0 0
      %1634 = vmatprep.mubr.bf16.mxu0 0
      %1635 = vmatmul.mubr.bf16.gmra.mxu0 %v1552
      %v1636 = vpop.f32.mrf.mxu0
      %v1637 = vadd.f32 0.0, %v1636
      %v1638 = vpop.f32.mrf.mxu0
      %v1639 = vpop.f32.mrf.mxu0
      %v1640 = vadd.f32 0.0, %v1639
      %v1641 = vpop.f32.mrf.mxu0
      %1642 = vdwg.mxu0
      %v1643 = vadd.f32 %v1421, %v1637
      %v1644 = vadd.f32 %v1422, %v1640
      %v1645 = vld [vmem:[%s1288] sm:$0x6]
      %v1646 = vld [vmem:[%s1288 + $0x4] sm:$0x6]
      %v1647 = vld [vmem:[%s1288 + $0x8] sm:$0x6]
      %v1648 = vld [vmem:[%s1288 + $0xc] sm:$0x6]
      %v1654 = vunpack.c.l.s4 1983009808
      %v1655 = vunpack.c.0.s8 %v1654
      %v1656 = vlaneseq
      %v1657 = vshrl.u32 %v1656, 7
      %v1658 = vsub.s32 %v1655, %v1657
      %v1659 = vrot.slane %v1645, %v1658
      %v1660 = vcombine.high %v1659, %v1659
      %v1662 = vunpack.c.l.s4 1983009808
      %v1663 = vunpack.c.0.s8 %v1662
      %v1664 = vlaneseq
      %v1665 = vshrl.u32 %v1664, 7
      %v1666 = vsub.s32 %v1663, %v1665
      %v1667 = vrot.slane %v1646, %v1666
      %v1668 = vcombine.high %v1667, %v1667
      %v1670 = vunpack.c.l.s4 1983009808
      %v1671 = vunpack.c.0.s8 %v1670
      %v1672 = vlaneseq
      %v1673 = vshrl.u32 %v1672, 7
      %v1674 = vsub.s32 %v1671, %v1673
      %v1675 = vrot.slane %v1647, %v1674
      %v1676 = vcombine.high %v1675, %v1675
      %v1678 = vunpack.c.l.s4 1983009808
      %v1679 = vunpack.c.0.s8 %v1678
      %v1680 = vlaneseq
      %v1681 = vshrl.u32 %v1680, 7
      %v1682 = vsub.s32 %v1679, %v1681
      %v1683 = vrot.slane %v1648, %v1682
      %v1684 = vcombine.high %v1683, %v1683
      %v1685 = vrot.slane %v1659, 7
      %v1686 = vrot.slane %v1685, 2
      %v1687 = vrot.slane %v1660, 7
      %v1688 = vsel %vm602, %v1686, %v1687
      %v1689 = vrot.slane %v1667, 7
      %v1690 = vrot.slane %v1689, 2
      %v1691 = vrot.slane %v1668, 7
      %v1692 = vsel %vm602, %v1690, %v1691
      %v1693 = vrot.slane %v1675, 7
      %v1694 = vrot.slane %v1693, 2
      %v1695 = vrot.slane %v1676, 7
      %v1696 = vsel %vm602, %v1694, %v1695
      %v1697 = vrot.slane %v1683, 7
      %v1698 = vrot.slane %v1697, 2
      %v1699 = vrot.slane %v1684, 7
      %v1700 = vsel %vm602, %v1698, %v1699
      %s1701 = scalar_lea.vmem %s1, 512
      %v1702 = vld [vmem:[%s1701] sm:$0xf]
      %v1703 = vld [vmem:[%s1701 + $0x4] sm:$0xf]
      %v1704 = vld [vmem:[%s1701 + $0x8] sm:$0xf]
      %v1705 = vld [vmem:[%s1701 + $0xc] sm:$0xf]
      %v1706 = vld [vmem:[%s1701 + $0x10] sm:$0xf]
      %v1707 = vld [vmem:[%s1701 + $0x14] sm:$0xf]
      %v1708 = vld [vmem:[%s1701 + $0x18] sm:$0xf]
      %v1709 = vld [vmem:[%s1701 + $0x1c] sm:$0xf]
      %v1710 = vld [vmem:[%s1701 + $0x20] sm:$0xf]
      %v1711 = vld [vmem:[%s1701 + $0x24] sm:$0xf]
      %v1712 = vld [vmem:[%s1701 + $0x28] sm:$0xf]
      %v1713 = vld [vmem:[%s1701 + $0x2c] sm:$0xf]
      %v1714 = vld [vmem:[%s1701 + $0x30] sm:$0xf]
      %v1715 = vld [vmem:[%s1701 + $0x34] sm:$0xf]
      %v1716 = vld [vmem:[%s1701 + $0x38] sm:$0xf]
      %v1717 = vld [vmem:[%s1701 + $0x3c] sm:$0xf]
      %v1718 = vcombine.low %v1688, %v1692
      %v1719 = vcombine.low %v1696, %v1700
      %v1721 = vunpack.c.l.s4 1983009808
      %v1722 = vunpack.c.0.s8 %v1721
      %v1723 = vlaneseq
      %v1724 = vshrl.u32 %v1723, 7
      %v1725 = vsub.s32 %v1722, %v1724
      %v1726 = vrot.slane %v1718, %v1725
      %v1728 = vunpack.c.l.s4 1983009808
      %v1729 = vunpack.c.0.s8 %v1728
      %v1730 = vlaneseq
      %v1731 = vshrl.u32 %v1730, 7
      %v1732 = vsub.s32 %v1729, %v1731
      %v1733 = vrot.slane %v1719, %v1732
      %v1734 = vcombine.low %v1726, %v1733
      %v1752 = vunpack.c.l.b16 %v1702
      %v1753 = vunpack.c.l.b16 %v1703
      %v1754 = vunpack.c.l.b16 %v1704
      %v1755 = vunpack.c.l.b16 %v1705
      %v1756 = vunpack.c.l.b16 %v1706
      %v1757 = vunpack.c.l.b16 %v1707
      %v1758 = vunpack.c.l.b16 %v1708
      %v1759 = vunpack.c.l.b16 %v1709
      %v1760 = vunpack.c.l.b16 %v1710
      %v1761 = vunpack.c.l.b16 %v1711
      %v1762 = vunpack.c.l.b16 %v1712
      %v1763 = vunpack.c.l.b16 %v1713
      %v1764 = vunpack.c.l.b16 %v1714
      %v1765 = vunpack.c.l.b16 %v1715
      %v1766 = vunpack.c.l.b16 %v1716
      %v1767 = vunpack.c.l.b16 %v1717
      %v1768 = vpack.c.b16 %v1753, %v1752
      %v1769 = vpack.c.b16 %v1755, %v1754
      %v1770 = vpack.c.b16 %v1757, %v1756
      %v1771 = vpack.c.b16 %v1759, %v1758
      %v1772 = vpack.c.b16 %v1761, %v1760
      %v1773 = vpack.c.b16 %v1763, %v1762
      %v1774 = vpack.c.b16 %v1765, %v1764
      %v1775 = vpack.c.b16 %v1767, %v1766
      %1784 = vmatprep.subr.bf16.mxu0 0
      %1785 = vmatpush1.bf16.msra.mxu0 %v1775
      %1786 = vmatprep.subr.bf16.mxu0 0
      %1787 = vmatpush1.bf16.msra.mxu0 %v1774
      %1788 = vmatprep.subr.bf16.mxu0 0
      %1789 = vmatpush1.bf16.msra.mxu0 %v1773
      %1790 = vmatprep.subr.bf16.mxu0 0
      %1791 = vmatpush1.bf16.msra.mxu0 %v1772
      %1792 = vmatprep.subr.bf16.mxu0 0
      %1793 = vmatpush1.bf16.msra.mxu0 %v1771
      %1794 = vmatprep.subr.bf16.mxu0 0
      %1795 = vmatpush1.bf16.msra.mxu0 %v1770
      %1796 = vmatprep.subr.bf16.mxu0 0
      %1797 = vmatpush1.bf16.msra.mxu0 %v1769
      %1798 = vmatprep.subr.bf16.mxu0 0
      %1799 = vmatpush1.bf16.msra.mxu0 %v1768
      %1800 = vmatprep.subr.bf16.mxu0 0
      %1801 = vmatpush2.bf16.msra.mxu0 0
      %1802 = vmatprep.subr.bf16.mxu0 0
      %1803 = vmatpush2.bf16.msra.mxu0 0
      %1804 = vmatprep.subr.bf16.mxu0 0
      %1805 = vmatpush2.bf16.msra.mxu0 0
      %1806 = vmatprep.subr.bf16.mxu0 0
      %1807 = vmatpush2.bf16.msra.mxu0 0
      %1808 = vmatprep.subr.bf16.mxu0 0
      %1809 = vmatpush2.bf16.msra.mxu0 0
      %1810 = vmatprep.subr.bf16.mxu0 0
      %1811 = vmatpush2.bf16.msra.mxu0 0
      %1812 = vmatprep.subr.bf16.mxu0 0
      %1813 = vmatpush2.bf16.msra.mxu0 0
      %1814 = vmatprep.subr.bf16.mxu0 0
      %1815 = vmatpush2.bf16.msra.mxu0 0
      %1816 = vmatprep.mubr.bf16.mxu0 0
      %1817 = vmatmul.mubr.bf16.gmra.mxu0 %v1734
      %v1818 = vpop.f32.mrf.mxu0
      %v1819 = vadd.f32 0.0, %v1818
      %v1820 = vpop.f32.mrf.mxu0
      %v1821 = vpop.f32.mrf.mxu0
      %v1822 = vadd.f32 0.0, %v1821
      %v1823 = vpop.f32.mrf.mxu0
      %1824 = vdwg.mxu0
      %v1825 = vadd.f32 %v1643, %v1819
      %v1826 = vadd.f32 %v1644, %v1822
      %v1827 = vld [vmem:[%s2] sm:$0x1]
      %v1829 = vlaneseq
      %v1830 = vshrl.u32 %v1829, 7
      %v1831 = vsub.s32 0, %v1830
      %v1832 = vrot.slane %v1827, %v1831
      %v1834 = vadd.f32 %v1825, %v1832
      %v1835 = vadd.f32 %v1826, %v1832
      %v1836 = vmax.f32 %v1834, 0.0
      %v1837 = vmax.f32 %v1835, 0.0
      %v1838 = vpack.c.bf16 %v1837, %v1836
      %v1840 = vcombine.high %v1838, %v1838
      %v1842 = vunpack.c.l.s4 1983009808
      %v1843 = vunpack.c.0.s8 %v1842
      %v1844 = vlaneseq
      %v1845 = vshrl.u32 %v1844, 7
      %v1846 = vsub.s32 %v1843, %v1845
      %v1847 = vrot.slane %v1838, %v1846
      %v1849 = vunpack.c.l.s4 1983009808
      %v1850 = vunpack.c.0.s8 %v1849
      %v1851 = vlaneseq
      %v1852 = vshrl.u32 %v1851, 7
      %v1853 = vsub.s32 %v1850, %v1852
      %v1854 = vrot.slane %v1840, %v1853
      %v1855 = vcombine.high %v1847, %v1847
      %v1856 = vcombine.high %v1854, %v1854
      %1861 = vst [vmem:[%s192] sm:$0x3] %v1847
      %1862 = vst [vmem:[%s192 + $0x2] sm:$0x3] %v1855
      %1863 = vst [vmem:[%s192 + $0x4] sm:$0x3] %v1854
      %1864 = vst [vmem:[%s192 + $0x6] sm:$0x3] %v1856
      %s1865 = smul.u32 4, %s19
      %p1866 = scmp.lt.s32.totalorder %s18, 1
      %s1867 = scalar_select %p1866, %s18, 1
      %p1868 = scmp.lt.s32.totalorder %s1865, 3
      %s1869 = scalar_select %p1868, %s1865, 3
      %s1870 = smul.addr %s1867, 4
      %s1871 = sadd.s32 %s1869, %s1870
      %s1872 = smul.addr %s1871, 2
      %s1873 = scalar_lea.vmem %s3, %s1872
      // Predicated region
      $region33: #{_lambda_.14} parent=31 // pred_check
        %p1874 = pneg %p114
      $region34: #{_lambda_.14} parent=31 // pred_check_branch
        %1876 = sbr.rel (%p1874) target = $region36
      $region35: #{_lambda_.14} parent=31 // pred_region
        %s1877 = smul.u32 4, %s19
      $region36: #{_lambda_.14} parent=31 // pred_fallthru
        _
    $region32: #{_lambda_.14} parent=5 // pred_fallthru
      _
    %p1878 = scmp.le.s32.totalorder 2, %s9
    // Predicated region
    $region37: #{_lambda_.14} parent=5 // pred_check
      %p1879 = pneg %p1878
    $region38: #{_lambda_.14} parent=5 // pred_check_branch
      %1881 = sbr.rel (%p1879) target = $region40
    $region39: #{_lambda_.14} parent=5 // pred_region
      %s1882 = ssub.s32 %s9, 2
      // Predicated region
      $region41: #{_lambda_.14} parent=39 // pred_check
        %p1883 = pneg %p120
      $region42: #{_lambda_.14} parent=39 // pred_check_branch
        %1885 = sbr.rel (%p1883) target = $region44
      $region43: #{_lambda_.14} parent=39 // pred_region
        %s1886 = smul.u32 4, %s21
        %p1887 = scmp.lt.s32.totalorder %s20, 1
        %s1888 = scalar_select %p1887, %s20, 1
        %p1889 = scmp.lt.s32.totalorder %s1886, 3
        %s1890 = scalar_select %p1889, %s1886, 3
        %s1891 = smul.addr %s1888, 4
        %s1892 = sadd.s32 %s1890, %s1891
        %s1893 = smul.addr %s1892, 2
        %s1894 = scalar_lea.vmem %s3, %s1893
      $region44: #{_lambda_.14} parent=39 // pred_fallthru
        _
    $region40: #{_lambda_.14} parent=5 // pred_fallthru
      _
  $region6: #{_lambda_.14} parent=0 // loop_footer
    %s13 = sadd.s32 1, %s9
  $region7: #{_lambda_.14} parent=0 // loop_footer_branch
    %8 = sbr.rel target = $region3
  $region8: #{_lambda_.14} parent=0 // loop_exit
    _

</llo_original>
